<compile_context>
chip_gen: v7x
topology: tpu7x:2x2x1
jax: 0.10.0
libtpu: 0.0.40
codegen_flags: <defaults>
</compile_context>

<pallas_src>
import jax
import jax.numpy as jnp
from jax.experimental import pallas as pl
from jax.experimental.pallas import tpu as pltpu


# ----------------------------- Pallas kernels ------------------------------

def _enc_stage1_kernel(pts_ref, w1a_ref, b1a_ref, w1b_ref, b1b_ref, g1_ref):
    """mlp1 (3->128->256) fused with max-over-points; g1 is a resident output
    accumulator across the point-tile grid axis."""
    t = pl.program_id(1)

    x = pts_ref[0].astype(jnp.bfloat16)                                 # (tn, 3)
    h = jnp.dot(x, w1a_ref[...], preferred_element_type=jnp.float32) + b1a_ref[...]
    h = jnp.maximum(h, 0.0).astype(jnp.bfloat16)                        # (tn, 128)
    f1 = jnp.dot(h, w1b_ref[...], preferred_element_type=jnp.float32) + b1b_ref[...]
    tile_max = jnp.max(f1, axis=0, keepdims=True)                       # (1, 256)

    @pl.when(t == 0)
    def _():
        g1_ref[0] = tile_max

    @pl.when(t != 0)
    def _():
        g1_ref[0] = jnp.maximum(g1_ref[0], tile_max)


def _enc_stage2_head_kernel(pts_ref, g1_ref, gf_ref,
                            w1a_ref, b1a_ref, w1b_ref, b1b_ref,
                            w2l_ref, w2g_ref, b2a_ref, w2b_ref, b2b_ref,
                            wd0f_ref, wd0g_ref, bd0_ref,
                            wd1_ref, bd1_ref, wd2_ref, bd2_ref,
                            d_ref, gb_acc, gf2_acc):
    """Fused: recompute f1, mlp2 with split concat, max-pool into VMEM scratch,
    then (at the last point tile) the fused d_mlp head + sigmoid."""
    t = pl.program_id(1)
    nt = pl.num_programs(1)

    # --- per-batch grid-invariant bias: g1 @ W_global + b2a, computed once ---
    @pl.when(t == 0)
    def _():
        gb_acc[...] = (jnp.dot(g1_ref[0].astype(jnp.bfloat16), w2g_ref[...],
                               preferred_element_type=jnp.float32)
                       + b2a_ref[...])                                  # (1, 512)

    # --- recompute f1 for this tile (no [B,N,256] HBM round trip) ---
    x = pts_ref[0].astype(jnp.bfloat16)                                 # (tn, 3)
    h = jnp.dot(x, w1a_ref[...], preferred_element_type=jnp.float32) + b1a_ref[...]
    h = jnp.maximum(h, 0.0).astype(jnp.bfloat16)
    f1 = jnp.dot(h, w1b_ref[...], preferred_element_type=jnp.float32) + b1b_ref[...]

    # --- mlp2 layer 0 with the concat split:
    #     relu(concat(f1, g1) @ W) == relu(f1 @ W_local + (g1 @ W_global + b)) ---
    h2 = (jnp.dot(f1.astype(jnp.bfloat16), w2l_ref[...],
                  preferred_element_type=jnp.float32) + gb_acc[...])
    h2 = jnp.maximum(h2, 0.0).astype(jnp.bfloat16)                      # (tn, 512)
    f2 = jnp.dot(h2, w2b_ref[...], preferred_element_type=jnp.float32) + b2b_ref[...]
    tile_max = jnp.max(f2, axis=0, keepdims=True)                       # (1, 1024)

    @pl.when(t == 0)
    def _():
        gf2_acc[...] = tile_max

    @pl.when(t != 0)
    def _():
        gf2_acc[...] = jnp.maximum(gf2_acc[...], tile_max)

    # --- d_mlp head + sigmoid, once the per-batch max pool is complete ---
    @pl.when(t == nt - 1)
    def _():
        gf2 = gf2_acc[...].astype(jnp.bfloat16)                         # (1, 1024)
        gfb = gf_ref[0].astype(jnp.bfloat16)                            # (1, 256)
        z = (jnp.dot(gf2, wd0f_ref[...], preferred_element_type=jnp.float32)
             + jnp.dot(gfb, wd0g_ref[...], preferred_element_type=jnp.float32)
             + bd0_ref[...])
        z = jnp.maximum(z, 0.0).astype(jnp.bfloat16)
        z = jnp.dot(z, wd1_ref[...], preferred_element_type=jnp.float32) + bd1_ref[...]
        z = jnp.maximum(z, 0.0).astype(jnp.bfloat16)
        z = jnp.dot(z, wd2_ref[...], preferred_element_type=jnp.float32) + bd2_ref[...]
        d_ref[0] = jax.nn.sigmoid(z)                                    # (1, 1)


# ------------------------------ pallas_call wrappers ------------------------

def _wspec(shape):
    # Grid-invariant weight/bias block (constant index_map).
    return pl.BlockSpec(shape, lambda b, t: (0, 0))


def pcn_stage1(pts, p, tn):
    B, N, _ = pts.shape
    w1a, b1a = p["e1_0"]
    w1b, b1b = p["e1_1"]
    return pl.pallas_call(
        _enc_stage1_kernel,
        out_shape=jax.ShapeDtypeStruct((B, 1, 256), jnp.float32),
        grid=(B, N // tn),
        in_specs=[
            pl.BlockSpec((1, tn, 3), lambda b, t: (b, t, 0)),
            _wspec(w1a.shape), _wspec(b1a.shape),
            _wspec(w1b.shape), _wspec(b1b.shape),
        ],
        out_specs=pl.BlockSpec((1, 1, 256), lambda b, t: (b, 0, 0)),
        compiler_params=pltpu.CompilerParams(
            dimension_semantics=("parallel", "arbitrary")),
    )(pts, w1a, b1a, w1b, b1b)


def pcn_stage2_head(pts, g1, gf, p, tn):
    B, N, _ = pts.shape
    ws = [p["e1_0"][0], p["e1_0"][1], p["e1_1"][0], p["e1_1"][1],
          p["e2_w_local"], p["e2_w_global"], p["e2_b0"],
          p["e2_1"][0], p["e2_1"][1],
          p["d_w0_feat"], p["d_w0_gf"], p["d_b0"],
          p["d_1"][0], p["d_1"][1], p["d_2"][0], p["d_2"][1]]
    return pl.pallas_call(
        _enc_stage2_head_kernel,
        out_shape=jax.ShapeDtypeStruct((B, 1, 1), jnp.float32),
        grid=(B, N // tn),
        in_specs=[
            pl.BlockSpec((1, tn, 3), lambda b, t: (b, t, 0)),
            pl.BlockSpec((1, 1, 256), lambda b, t: (b, 0, 0)),
            pl.BlockSpec((1, 1, 256), lambda b, t: (b, 0, 0)),
        ] + [_wspec(w.shape) for w in ws],
        out_specs=pl.BlockSpec((1, 1, 1), lambda b, t: (b, 0, 0)),
        scratch_shapes=[pltpu.VMEM((1, 512), jnp.float32),    # hoisted g1@W_global + b
                        pltpu.VMEM((1, 1024), jnp.float32)],  # running max of f2
        compiler_params=pltpu.CompilerParams(
            dimension_semantics=("parallel", "arbitrary")),
    )(pts, g1, gf, *ws)


# ------------------------- parameters (deterministic) -----------------------

def _dense(key, cin, cout):
    kw, kb = jax.random.split(key)
    w = jax.random.normal(kw, (cin, cout), jnp.float32) * (float(cin) ** -0.5)
    b = 0.01 * jax.random.normal(kb, (cout,), jnp.float32)
    return w.astype(jnp.bfloat16), b.reshape(1, cout)  # bf16 weight, f32 bias


def init_params(key):
    ks = jax.random.split(key, 7)
    # PcnEncoder.mlp1 = MlpConv(3, [128, 256])
    e1_0 = _dense(ks[0], 3, 128)
    e1_1 = _dense(ks[1], 128, 256)
    # PcnEncoder.mlp2 = MlpConv(512, [512, 1024]); layer-0 weight split so
    # concat(f1_local, g1_global) never has to be materialized.
    w2_full, e2_b0 = _dense(ks[2], 512, 512)
    e2_1 = _dense(ks[3], 512, 1024)
    # d_mlp = MlpConv(1024 + 256, [64, 64, 1]); layer-0 split the same way
    # for torch.cat([encoder_feature, gf], dim=1).
    wd0_full, d_b0 = _dense(ks[4], 1024 + 256, 64)
    d_1 = _dense(ks[5], 64, 64)
    d_2 = _dense(ks[6], 64, 1)
    return {
        "e1_0": e1_0, "e1_1": e1_1,
        "e2_w_local": w2_full[:256], "e2_w_global": w2_full[256:], "e2_b0": e2_b0,
        "e2_1": e2_1,
        "d_w0_feat": wd0_full[:1024], "d_w0_gf": wd0_full[1024:], "d_b0": d_b0,
        "d_1": d_1, "d_2": d_2,
    }


# --------------------------------- forward ----------------------------------

def _pick_point_tile(N):
    # Largest of {512, 256, 128} that divides N; else the whole cloud as one
    # tile.  512 fills the 256x256 MXU (2 passes on the M axis) and amortizes
    # per-grid-step overhead, while the per-tile f32 temporaries stay well
    # under v7x's 32 MiB scoped VMEM (f2 at tn=512 is 2 MiB).
    for cand in (512, 256, 128):
        if N >= cand and N % cand == 0:
            return cand
    return N  # TODO(synk): ragged / non-multiple-of-128 N takes the whole-cloud path.


def ugaan_d_forward(params, gf, points):
    """UGAAN_D.forward.  gf: [B, 256, 1], points: [B, 3, N]  ->  d: [B]."""
    B, _, N = points.shape
    pts = jnp.transpose(points, (0, 2, 1))            # [B, N, 3] channels-last
    gf_r = jnp.transpose(gf, (0, 2, 1))               # [B, 1, 256]
    tn = _pick_point_tile(N)
    g1 = pcn_stage1(pts, params, tn)                  # [B, 1, 256]
    d = pcn_stage2_head(pts, g1, gf_r, params, tn)    # [B, 1, 1]
    return d[:, 0, 0]                                 # matches d[:, 0, 0]


# ----------------------------------- main ------------------------------------

if __name__ == "__main__":
    key = jax.random.PRNGKey(0)
    k_pts, k_gf, k_par = jax.random.split(key, 3)
    B, N = 2, 256
    points = jax.random.normal(k_pts, (B, 3, N), jnp.float32)   # PyTorch NCW layout
    gf = jax.random.normal(k_gf, (B, 256, 1), jnp.float32)      # conditioning feature
    params = init_params(k_par)

    fwd = jax.jit(ugaan_d_forward)
    d = jax.block_until_ready(fwd(params, gf, points))

    assert d.shape == (B,)
    assert bool(jnp.all((d >= 0.0) & (d <= 1.0)))
    print("KERNEL_OK")
</pallas_src>

<mosaic_0001>
module attributes {stable_mosaic.version = 11 : i64} {
  func.func @_enc_stage1_kernel(%arg0: i32, %arg1: i32, %arg2: memref<1x256x3xf32, #tpu.memory_space<vmem>>, %arg3: memref<3x128xbf16, #tpu.memory_space<vmem>>, %arg4: memref<1x128xf32, #tpu.memory_space<vmem>>, %arg5: memref<128x256xbf16, #tpu.memory_space<vmem>>, %arg6: memref<1x256xf32, #tpu.memory_space<vmem>>, %arg7: memref<1x1x256xf32, #tpu.memory_space<vmem>>) attributes {dimension_semantics = [#tpu.dimension_semantics<parallel>, #tpu.dimension_semantics<arbitrary>], iteration_bounds = array<i64: 2, 1>, scalar_prefetch = 0 : i64, scratch_operands = 0 : i64, tpu.core_type = #tpu.core_type<tc>, window_params = [{transform_indices = @transform_0, window_bounds = array<i64: 1, 256, 3>}, {pipeline_mode = #tpu.pipeline_mode<synchronous>, transform_indices = @transform_1, window_bounds = array<i64: 3, 128>}, {pipeline_mode = #tpu.pipeline_mode<synchronous>, transform_indices = @transform_2, window_bounds = array<i64: 1, 128>}, {pipeline_mode = #tpu.pipeline_mode<synchronous>, transform_indices = @transform_3, window_bounds = array<i64: 128, 256>}, {pipeline_mode = #tpu.pipeline_mode<synchronous>, transform_indices = @transform_4, window_bounds = array<i64: 1, 256>}, {transform_indices = @transform_5, window_bounds = array<i64: 1, 1, 256>}]} {
    %c0 = arith.constant 0 : index
    %c0_0 = arith.constant 0 : index
    %c0_1 = arith.constant 0 : index
    %0 = vector.load %arg2[%c0, %c0_0, %c0_1] : memref<1x256x3xf32, #tpu.memory_space<vmem>>, vector<1x256x3xf32>
    %1 = vector.shape_cast %0 : vector<1x256x3xf32> to vector<256x3xf32>
    %2 = arith.truncf %1 : vector<256x3xf32> to vector<256x3xbf16>
    %c0_2 = arith.constant 0 : index
    %c0_3 = arith.constant 0 : index
    %3 = vector.load %arg3[%c0_2, %c0_3] : memref<3x128xbf16, #tpu.memory_space<vmem>>, vector<3x128xbf16>
    %cst = arith.constant dense<0.000000e+00> : vector<256x128xf32>
    %4 = tpu.matmul %2, %3, %cst {dimension_numbers = #tpu.dot_dimension_numbers<[1], [0], [0], [1], [0, 0, 1, 1], [], []>} : vector<256x3xbf16>, vector<3x128xbf16>, vector<256x128xf32> -> vector<256x128xf32>
    %c0_4 = arith.constant 0 : index
    %c0_5 = arith.constant 0 : index
    %5 = vector.load %arg4[%c0_4, %c0_5] : memref<1x128xf32, #tpu.memory_space<vmem>>, vector<1x128xf32>
    %6 = vector.broadcast %5 : vector<1x128xf32> to vector<256x128xf32>
    %7 = arith.addf %4, %6 : vector<256x128xf32>
    %cst_6 = arith.constant 0.000000e+00 : f32
    %8 = vector.broadcast %cst_6 : f32 to vector<256x128xf32>
    %9 = arith.maximumf %7, %8 : vector<256x128xf32>
    %10 = arith.truncf %9 : vector<256x128xf32> to vector<256x128xbf16>
    %c0_7 = arith.constant 0 : index
    %c0_8 = arith.constant 0 : index
    %11 = vector.load %arg5[%c0_7, %c0_8] : memref<128x256xbf16, #tpu.memory_space<vmem>>, vector<128x256xbf16>
    %cst_9 = arith.constant dense<0.000000e+00> : vector<256x256xf32>
    %12 = tpu.matmul %10, %11, %cst_9 {dimension_numbers = #tpu.dot_dimension_numbers<[1], [0], [0], [1], [0, 0, 1, 1], [], []>} : vector<256x128xbf16>, vector<128x256xbf16>, vector<256x256xf32> -> vector<256x256xf32>
    %c0_10 = arith.constant 0 : index
    %c0_11 = arith.constant 0 : index
    %13 = vector.load %arg6[%c0_10, %c0_11] : memref<1x256xf32, #tpu.memory_space<vmem>>, vector<1x256xf32>
    %14 = vector.broadcast %13 : vector<1x256xf32> to vector<256x256xf32>
    %15 = arith.addf %12, %14 : vector<256x256xf32>
    %cst_12 = arith.constant dense<0xFF800000> : vector<256xf32>
    %16 = vector.multi_reduction <maximumf>, %15, %cst_12 [0] : vector<256x256xf32> to vector<256xf32>
    %17 = vector.shape_cast %16 : vector<256xf32> to vector<1x256xf32>
    %c0_i32 = arith.constant 0 : i32
    %18 = arith.cmpi eq, %arg1, %c0_i32 : i32
    %19 = arith.extui %18 : i1 to i32
    %c0_i32_13 = arith.constant 0 : i32
    %20 = arith.cmpi ne, %19, %c0_i32_13 : i32
    scf.if %20 {
      %c0_16 = arith.constant 0 : index
      %c0_17 = arith.constant 0 : index
      %c0_18 = arith.constant 0 : index
      %24 = vector.load %arg7[%c0_16, %c0_17, %c0_18] : memref<1x1x256xf32, #tpu.memory_space<vmem>>, vector<1x1x256xf32>
      %25 = vector.shape_cast %24 : vector<1x1x256xf32> to vector<1x256xf32>
      %26 = vector.shape_cast %17 : vector<1x256xf32> to vector<1x1x256xf32>
      tpu.vector_store %arg7[%c0_16, %c0_17, %c0_18], %26 {strides = array<i32>} : memref<1x1x256xf32, #tpu.memory_space<vmem>>, vector<1x1x256xf32>,
    } else {
    }
    %c0_i32_14 = arith.constant 0 : i32
    %21 = arith.cmpi ne, %arg1, %c0_i32_14 : i32
    %22 = arith.extui %21 : i1 to i32
    %c0_i32_15 = arith.constant 0 : i32
    %23 = arith.cmpi ne, %22, %c0_i32_15 : i32
    scf.if %23 {
      %c0_16 = arith.constant 0 : index
      %c0_17 = arith.constant 0 : index
      %c0_18 = arith.constant 0 : index
      %24 = vector.load %arg7[%c0_16, %c0_17, %c0_18] : memref<1x1x256xf32, #tpu.memory_space<vmem>>, vector<1x1x256xf32>
      %25 = vector.shape_cast %24 : vector<1x1x256xf32> to vector<1x256xf32>
      %26 = arith.maximumf %25, %17 : vector<1x256xf32>
      %c0_19 = arith.constant 0 : index
      %c0_20 = arith.constant 0 : index
      %c0_21 = arith.constant 0 : index
      %27 = vector.load %arg7[%c0_19, %c0_20, %c0_21] : memref<1x1x256xf32, #tpu.memory_space<vmem>>, vector<1x1x256xf32>
      %28 = vector.shape_cast %27 : vector<1x1x256xf32> to vector<1x256xf32>
      %29 = vector.shape_cast %26 : vector<1x256xf32> to vector<1x1x256xf32>
      tpu.vector_store %arg7[%c0_19, %c0_20, %c0_21], %29 {strides = array<i32>} : memref<1x1x256xf32, #tpu.memory_space<vmem>>, vector<1x1x256xf32>,
    } else {
    }
    return
  }
  func.func @transform_0(%arg0: i32, %arg1: i32) -> (i32, i32, i32) {
    %c0_i32 = arith.constant 0 : i32
    %c0_i32_0 = arith.constant 0 : i32
    return %arg0, %arg1, %c0_i32 : i32, i32, i32
  }
  func.func @transform_1(%arg0: i32, %arg1: i32) -> (i32, i32) {
    %c0_i32 = arith.constant 0 : i32
    %c0_i32_0 = arith.constant 0 : i32
    %c0_i32_1 = arith.constant 0 : i32
    return %c0_i32, %c0_i32_0 : i32, i32
  }
  func.func @transform_2(%arg0: i32, %arg1: i32) -> (i32, i32) {
    %c0_i32 = arith.constant 0 : i32
    %c0_i32_0 = arith.constant 0 : i32
    %c0_i32_1 = arith.constant 0 : i32
    return %c0_i32, %c0_i32_0 : i32, i32
  }
  func.func @transform_3(%arg0: i32, %arg1: i32) -> (i32, i32) {
    %c0_i32 = arith.constant 0 : i32
    %c0_i32_0 = arith.constant 0 : i32
    %c0_i32_1 = arith.constant 0 : i32
    return %c0_i32, %c0_i32_0 : i32, i32
  }
  func.func @transform_4(%arg0: i32, %arg1: i32) -> (i32, i32) {
    %c0_i32 = arith.constant 0 : i32
    %c0_i32_0 = arith.constant 0 : i32
    %c0_i32_1 = arith.constant 0 : i32
    return %c0_i32, %c0_i32_0 : i32, i32
  }
  func.func @transform_5(%arg0: i32, %arg1: i32) -> (i32, i32, i32) {
    %c0_i32 = arith.constant 0 : i32
    %c0_i32_0 = arith.constant 0 : i32
    %c0_i32_1 = arith.constant 0 : i32
    return %arg0, %c0_i32, %c0_i32_0 : i32, i32, i32
  }
}

module attributes {stable_mosaic.version = 11 : i64} {
  func.func @_enc_stage2_head_kernel(%arg0: i32, %arg1: i32, %arg2: memref<1x256x3xf32, #tpu.memory_space<vmem>>, %arg3: memref<1x1x256xf32, #tpu.memory_space<vmem>>, %arg4: memref<1x1x256xf32, #tpu.memory_space<vmem>>, %arg5: memref<3x128xbf16, #tpu.memory_space<vmem>>, %arg6: memref<1x128xf32, #tpu.memory_space<vmem>>, %arg7: memref<128x256xbf16, #tpu.memory_space<vmem>>, %arg8: memref<1x256xf32, #tpu.memory_space<vmem>>, %arg9: memref<256x512xbf16, #tpu.memory_space<vmem>>, %arg10: memref<256x512xbf16, #tpu.memory_space<vmem>>, %arg11: memref<1x512xf32, #tpu.memory_space<vmem>>, %arg12: memref<512x1024xbf16, #tpu.memory_space<vmem>>, %arg13: memref<1x1024xf32, #tpu.memory_space<vmem>>, %arg14: memref<1024x64xbf16, #tpu.memory_space<vmem>>, %arg15: memref<256x64xbf16, #tpu.memory_space<vmem>>, %arg16: memref<1x64xf32, #tpu.memory_space<vmem>>, %arg17: memref<64x64xbf16, #tpu.memory_space<vmem>>, %arg18: memref<1x64xf32, #tpu.memory_space<vmem>>, %arg19: memref<64x1xbf16, #tpu.memory_space<vmem>>, %arg20: memref<1x1xf32, #tpu.memory_space<vmem>>, %arg21: memref<1x1x1xf32, #tpu.memory_space<vmem>>, %arg22: memref<1x512xf32, #tpu.memory_space<vmem>>, %arg23: memref<1x1024xf32, #tpu.memory_space<vmem>>) attributes {dimension_semantics = [#tpu.dimension_semantics<parallel>, #tpu.dimension_semantics<arbitrary>], iteration_bounds = array<i64: 2, 1>, scalar_prefetch = 0 : i64, scratch_operands = 2 : i64, tpu.core_type = #tpu.core_type<tc>, window_params = [{transform_indices = @transform_0, window_bounds = array<i64: 1, 256, 3>}, {transform_indices = @transform_1, window_bounds = array<i64: 1, 1, 256>}, {transform_indices = @transform_2, window_bounds = array<i64: 1, 1, 256>}, {pipeline_mode = #tpu.pipeline_mode<synchronous>, transform_indices = @transform_3, window_bounds = array<i64: 3, 128>}, {pipeline_mode = #tpu.pipeline_mode<synchronous>, transform_indices = @transform_4, window_bounds = array<i64: 1, 128>}, {pipeline_mode = #tpu.pipeline_mode<synchronous>, transform_indices = @transform_5, window_bounds = array<i64: 128, 256>}, {pipeline_mode = #tpu.pipeline_mode<synchronous>, transform_indices = @transform_6, window_bounds = array<i64: 1, 256>}, {pipeline_mode = #tpu.pipeline_mode<synchronous>, transform_indices = @transform_7, window_bounds = array<i64: 256, 512>}, {pipeline_mode = #tpu.pipeline_mode<synchronous>, transform_indices = @transform_8, window_bounds = array<i64: 256, 512>}, {pipeline_mode = #tpu.pipeline_mode<synchronous>, transform_indices = @transform_9, window_bounds = array<i64: 1, 512>}, {pipeline_mode = #tpu.pipeline_mode<synchronous>, transform_indices = @transform_10, window_bounds = array<i64: 512, 1024>}, {pipeline_mode = #tpu.pipeline_mode<synchronous>, transform_indices = @transform_11, window_bounds = array<i64: 1, 1024>}, {pipeline_mode = #tpu.pipeline_mode<synchronous>, transform_indices = @transform_12, window_bounds = array<i64: 1024, 64>}, {pipeline_mode = #tpu.pipeline_mode<synchronous>, transform_indices = @transform_13, window_bounds = array<i64: 256, 64>}, {pipeline_mode = #tpu.pipeline_mode<synchronous>, transform_indices = @transform_14, window_bounds = array<i64: 1, 64>}, {pipeline_mode = #tpu.pipeline_mode<synchronous>, transform_indices = @transform_15, window_bounds = array<i64: 64, 64>}, {pipeline_mode = #tpu.pipeline_mode<synchronous>, transform_indices = @transform_16, window_bounds = array<i64: 1, 64>}, {pipeline_mode = #tpu.pipeline_mode<synchronous>, transform_indices = @transform_17, window_bounds = array<i64: 64, 1>}, {pipeline_mode = #tpu.pipeline_mode<synchronous>, transform_indices = @transform_18, window_bounds = array<i64: 1, 1>}, {transform_indices = @transform_19, window_bounds = array<i64: 1, 1, 1>}]} {
    %c0_i32 = arith.constant 0 : i32
    %0 = arith.cmpi eq, %arg1, %c0_i32 : i32
    %1 = arith.extui %0 : i1 to i32
    %c0_i32_0 = arith.constant 0 : i32
    %2 = arith.cmpi ne, %1, %c0_i32_0 : i32
    scf.if %2 {
      %c0_31 = arith.constant 0 : index
      %c0_32 = arith.constant 0 : index
      %c0_33 = arith.constant 0 : index
      %44 = vector.load %arg3[%c0_31, %c0_32, %c0_33] : memref<1x1x256xf32, #tpu.memory_space<vmem>>, vector<1x1x256xf32>
      %45 = vector.shape_cast %44 : vector<1x1x256xf32> to vector<1x256xf32>
      %46 = arith.truncf %45 : vector<1x256xf32> to vector<1x256xbf16>
      %c0_34 = arith.constant 0 : index
      %c0_35 = arith.constant 0 : index
      %47 = vector.load %arg10[%c0_34, %c0_35] : memref<256x512xbf16, #tpu.memory_space<vmem>>, vector<256x512xbf16>
      %cst_36 = arith.constant dense<0.000000e+00> : vector<1x512xf32>
      %48 = tpu.matmul %46, %47, %cst_36 {dimension_numbers = #tpu.dot_dimension_numbers<[1], [0], [0], [1], [0, 0, 1, 1], [], []>} : vector<1x256xbf16>, vector<256x512xbf16>, vector<1x512xf32> -> vector<1x512xf32>
      %c0_37 = arith.constant 0 : index
      %c0_38 = arith.constant 0 : index
      %49 = vector.load %arg11[%c0_37, %c0_38] : memref<1x512xf32, #tpu.memory_space<vmem>>, vector<1x512xf32>
      %50 = arith.addf %48, %49 : vector<1x512xf32>
      %c0_39 = arith.constant 0 : index
      %c0_40 = arith.constant 0 : index
      %51 = vector.load %arg22[%c0_39, %c0_40] : memref<1x512xf32, #tpu.memory_space<vmem>>, vector<1x512xf32>
      tpu.vector_store %arg22[%c0_39, %c0_40], %50 {strides = array<i32>} : memref<1x512xf32, #tpu.memory_space<vmem>>, vector<1x512xf32>,
    } else {
    }
    %c0 = arith.constant 0 : index
    %c0_1 = arith.constant 0 : index
    %c0_2 = arith.constant 0 : index
    %3 = vector.load %arg2[%c0, %c0_1, %c0_2] : memref<1x256x3xf32, #tpu.memory_space<vmem>>, vector<1x256x3xf32>
    %4 = vector.shape_cast %3 : vector<1x256x3xf32> to vector<256x3xf32>
    %5 = arith.truncf %4 : vector<256x3xf32> to vector<256x3xbf16>
    %c0_3 = arith.constant 0 : index
    %c0_4 = arith.constant 0 : index
    %6 = vector.load %arg5[%c0_3, %c0_4] : memref<3x128xbf16, #tpu.memory_space<vmem>>, vector<3x128xbf16>
    %cst = arith.constant dense<0.000000e+00> : vector<256x128xf32>
    %7 = tpu.matmul %5, %6, %cst {dimension_numbers = #tpu.dot_dimension_numbers<[1], [0], [0], [1], [0, 0, 1, 1], [], []>} : vector<256x3xbf16>, vector<3x128xbf16>, vector<256x128xf32> -> vector<256x128xf32>
    %c0_5 = arith.constant 0 : index
    %c0_6 = arith.constant 0 : index
    %8 = vector.load %arg6[%c0_5, %c0_6] : memref<1x128xf32, #tpu.memory_space<vmem>>, vector<1x128xf32>
    %9 = vector.broadcast %8 : vector<1x128xf32> to vector<256x128xf32>
    %10 = arith.addf %7, %9 : vector<256x128xf32>
    %cst_7 = arith.constant 0.000000e+00 : f32
    %11 = vector.broadcast %cst_7 : f32 to vector<256x128xf32>
    %12 = arith.maximumf %10, %11 : vector<256x128xf32>
    %13 = arith.truncf %12 : vector<256x128xf32> to vector<256x128xbf16>
    %c0_8 = arith.constant 0 : index
    %c0_9 = arith.constant 0 : index
    %14 = vector.load %arg7[%c0_8, %c0_9] : memref<128x256xbf16, #tpu.memory_space<vmem>>, vector<128x256xbf16>
    %cst_10 = arith.constant dense<0.000000e+00> : vector<256x256xf32>
    %15 = tpu.matmul %13, %14, %cst_10 {dimension_numbers = #tpu.dot_dimension_numbers<[1], [0], [0], [1], [0, 0, 1, 1], [], []>} : vector<256x128xbf16>, vector<128x256xbf16>, vector<256x256xf32> -> vector<256x256xf32>
    %c0_11 = arith.constant 0 : index
    %c0_12 = arith.constant 0 : index
    %16 = vector.load %arg8[%c0_11, %c0_12] : memref<1x256xf32, #tpu.memory_space<vmem>>, vector<1x256xf32>
    %17 = vector.broadcast %16 : vector<1x256xf32> to vector<256x256xf32>
    %18 = arith.addf %15, %17 : vector<256x256xf32>
    %19 = arith.truncf %18 : vector<256x256xf32> to vector<256x256xbf16>
    %c0_13 = arith.constant 0 : index
    %c0_14 = arith.constant 0 : index
    %20 = vector.load %arg9[%c0_13, %c0_14] : memref<256x512xbf16, #tpu.memory_space<vmem>>, vector<256x512xbf16>
    %cst_15 = arith.constant dense<0.000000e+00> : vector<256x512xf32>
    %21 = tpu.matmul %19, %20, %cst_15 {dimension_numbers = #tpu.dot_dimension_numbers<[1], [0], [0], [1], [0, 0, 1, 1], [], []>} : vector<256x256xbf16>, vector<256x512xbf16>, vector<256x512xf32> -> vector<256x512xf32>
    %c0_16 = arith.constant 0 : index
    %c0_17 = arith.constant 0 : index
    %22 = vector.load %arg22[%c0_16, %c0_17] : memref<1x512xf32, #tpu.memory_space<vmem>>, vector<1x512xf32>
    %23 = vector.broadcast %22 : vector<1x512xf32> to vector<256x512xf32>
    %24 = arith.addf %21, %23 : vector<256x512xf32>
    %cst_18 = arith.constant 0.000000e+00 : f32
    %25 = vector.broadcast %cst_18 : f32 to vector<256x512xf32>
    %26 = arith.maximumf %24, %25 : vector<256x512xf32>
    %27 = arith.truncf %26 : vector<256x512xf32> to vector<256x512xbf16>
    %c0_19 = arith.constant 0 : index
    %c0_20 = arith.constant 0 : index
    %28 = vector.load %arg12[%c0_19, %c0_20] : memref<512x1024xbf16, #tpu.memory_space<vmem>>, vector<512x1024xbf16>
    %cst_21 = arith.constant dense<0.000000e+00> : vector<256x1024xf32>
    %29 = tpu.matmul %27, %28, %cst_21 {dimension_numbers = #tpu.dot_dimension_numbers<[1], [0], [0], [1], [0, 0, 1, 1], [], []>} : vector<256x512xbf16>, vector<512x1024xbf16>, vector<256x1024xf32> -> vector<256x1024xf32>
    %c0_22 = arith.constant 0 : index
    %c0_23 = arith.constant 0 : index
    %30 = vector.load %arg13[%c0_22, %c0_23] : memref<1x1024xf32, #tpu.memory_space<vmem>>, vector<1x1024xf32>
    %31 = vector.broadcast %30 : vector<1x1024xf32> to vector<256x1024xf32>
    %32 = arith.addf %29, %31 : vector<256x1024xf32>
    %cst_24 = arith.constant dense<0xFF800000> : vector<1024xf32>
    %33 = vector.multi_reduction <maximumf>, %32, %cst_24 [0] : vector<256x1024xf32> to vector<1024xf32>
    %34 = vector.shape_cast %33 : vector<1024xf32> to vector<1x1024xf32>
    %c0_i32_25 = arith.constant 0 : i32
    %35 = arith.cmpi eq, %arg1, %c0_i32_25 : i32
    %36 = arith.extui %35 : i1 to i32
    %c0_i32_26 = arith.constant 0 : i32
    %37 = arith.cmpi ne, %36, %c0_i32_26 : i32
    scf.if %37 {
      %c0_31 = arith.constant 0 : index
      %c0_32 = arith.constant 0 : index
      %44 = vector.load %arg23[%c0_31, %c0_32] : memref<1x1024xf32, #tpu.memory_space<vmem>>, vector<1x1024xf32>
      tpu.vector_store %arg23[%c0_31, %c0_32], %34 {strides = array<i32>} : memref<1x1024xf32, #tpu.memory_space<vmem>>, vector<1x1024xf32>,
    } else {
    }
    %c0_i32_27 = arith.constant 0 : i32
    %38 = arith.cmpi ne, %arg1, %c0_i32_27 : i32
    %39 = arith.extui %38 : i1 to i32
    %c0_i32_28 = arith.constant 0 : i32
    %40 = arith.cmpi ne, %39, %c0_i32_28 : i32
    scf.if %40 {
      %c0_31 = arith.constant 0 : index
      %c0_32 = arith.constant 0 : index
      %44 = vector.load %arg23[%c0_31, %c0_32] : memref<1x1024xf32, #tpu.memory_space<vmem>>, vector<1x1024xf32>
      %45 = arith.maximumf %44, %34 : vector<1x1024xf32>
      %c0_33 = arith.constant 0 : index
      %c0_34 = arith.constant 0 : index
      %46 = vector.load %arg23[%c0_33, %c0_34] : memref<1x1024xf32, #tpu.memory_space<vmem>>, vector<1x1024xf32>
      tpu.vector_store %arg23[%c0_33, %c0_34], %45 {strides = array<i32>} : memref<1x1024xf32, #tpu.memory_space<vmem>>, vector<1x1024xf32>,
    } else {
    }
    %c0_i32_29 = arith.constant 0 : i32
    %41 = arith.cmpi eq, %arg1, %c0_i32_29 : i32
    %42 = arith.extui %41 : i1 to i32
    %c0_i32_30 = arith.constant 0 : i32
    %43 = arith.cmpi ne, %42, %c0_i32_30 : i32
    scf.if %43 {
      %c0_31 = arith.constant 0 : index
      %c0_32 = arith.constant 0 : index
      %44 = vector.load %arg23[%c0_31, %c0_32] : memref<1x1024xf32, #tpu.memory_space<vmem>>, vector<1x1024xf32>
      %45 = arith.truncf %44 : vector<1x1024xf32> to vector<1x1024xbf16>
      %c0_33 = arith.constant 0 : index
      %c0_34 = arith.constant 0 : index
      %c0_35 = arith.constant 0 : index
      %46 = vector.load %arg4[%c0_33, %c0_34, %c0_35] : memref<1x1x256xf32, #tpu.memory_space<vmem>>, vector<1x1x256xf32>
      %47 = vector.shape_cast %46 : vector<1x1x256xf32> to vector<1x256xf32>
      %48 = arith.truncf %47 : vector<1x256xf32> to vector<1x256xbf16>
      %c0_36 = arith.constant 0 : index
      %c0_37 = arith.constant 0 : index
      %49 = vector.load %arg14[%c0_36, %c0_37] : memref<1024x64xbf16, #tpu.memory_space<vmem>>, vector<1024x64xbf16>
      %cst_38 = arith.constant dense<0.000000e+00> : vector<1x64xf32>
      %50 = tpu.matmul %45, %49, %cst_38 {dimension_numbers = #tpu.dot_dimension_numbers<[1], [0], [0], [1], [0, 0, 1, 1], [], []>} : vector<1x1024xbf16>, vector<1024x64xbf16>, vector<1x64xf32> -> vector<1x64xf32>
      %c0_39 = arith.constant 0 : index
      %c0_40 = arith.constant 0 : index
      %51 = vector.load %arg15[%c0_39, %c0_40] : memref<256x64xbf16, #tpu.memory_space<vmem>>, vector<256x64xbf16>
      %cst_41 = arith.constant dense<0.000000e+00> : vector<1x64xf32>
      %52 = tpu.matmul %48, %51, %cst_41 {dimension_numbers = #tpu.dot_dimension_numbers<[1], [0], [0], [1], [0, 0, 1, 1], [], []>} : vector<1x256xbf16>, vector<256x64xbf16>, vector<1x64xf32> -> vector<1x64xf32>
      %53 = arith.addf %50, %52 : vector<1x64xf32>
      %c0_42 = arith.constant 0 : index
      %c0_43 = arith.constant 0 : index
      %54 = vector.load %arg16[%c0_42, %c0_43] : memref<1x64xf32, #tpu.memory_space<vmem>>, vector<1x64xf32>
      %55 = arith.addf %53, %54 : vector<1x64xf32>
      %cst_44 = arith.constant 0.000000e+00 : f32
      %56 = vector.broadcast %cst_44 : f32 to vector<1x64xf32>
      %57 = arith.maximumf %55, %56 : vector<1x64xf32>
      %58 = arith.truncf %57 : vector<1x64xf32> to vector<1x64xbf16>
      %c0_45 = arith.constant 0 : index
      %c0_46 = arith.constant 0 : index
      %59 = vector.load %arg17[%c0_45, %c0_46] : memref<64x64xbf16, #tpu.memory_space<vmem>>, vector<64x64xbf16>
      %cst_47 = arith.constant dense<0.000000e+00> : vector<1x64xf32>
      %60 = tpu.matmul %58, %59, %cst_47 {dimension_numbers = #tpu.dot_dimension_numbers<[1], [0], [0], [1], [0, 0, 1, 1], [], []>} : vector<1x64xbf16>, vector<64x64xbf16>, vector<1x64xf32> -> vector<1x64xf32>
      %c0_48 = arith.constant 0 : index
      %c0_49 = arith.constant 0 : index
      %61 = vector.load %arg18[%c0_48, %c0_49] : memref<1x64xf32, #tpu.memory_space<vmem>>, vector<1x64xf32>
      %62 = arith.addf %60, %61 : vector<1x64xf32>
      %cst_50 = arith.constant 0.000000e+00 : f32
      %63 = vector.broadcast %cst_50 : f32 to vector<1x64xf32>
      %64 = arith.maximumf %62, %63 : vector<1x64xf32>
      %65 = arith.truncf %64 : vector<1x64xf32> to vector<1x64xbf16>
      %c0_51 = arith.constant 0 : index
      %c0_52 = arith.constant 0 : index
      %66 = vector.load %arg19[%c0_51, %c0_52] : memref<64x1xbf16, #tpu.memory_space<vmem>>, vector<64x1xbf16>
      %cst_53 = arith.constant dense<0.000000e+00> : vector<1x1xf32>
      %67 = tpu.matmul %65, %66, %cst_53 {dimension_numbers = #tpu.dot_dimension_numbers<[1], [0], [0], [1], [0, 0, 1, 1], [], []>} : vector<1x64xbf16>, vector<64x1xbf16>, vector<1x1xf32> -> vector<1x1xf32>
      %c0_54 = arith.constant 0 : index
      %c0_55 = arith.constant 0 : index
      %68 = vector.load %arg20[%c0_54, %c0_55] : memref<1x1xf32, #tpu.memory_space<vmem>>, vector<1x1xf32>
      %69 = arith.addf %67, %68 : vector<1x1xf32>
      %70 = arith.negf %69 : vector<1x1xf32>
      %71 = math.exp %70 : vector<1x1xf32>
      %cst_56 = arith.constant 1.000000e+00 : f32
      %72 = vector.broadcast %cst_56 : f32 to vector<1x1xf32>
      %73 = arith.addf %72, %71 : vector<1x1xf32>
      %74 = arith.divf %72, %73 : vector<1x1xf32>
      %c0_57 = arith.constant 0 : index
      %c0_58 = arith.constant 0 : index
      %c0_59 = arith.constant 0 : index
      %75 = vector.load %arg21[%c0_57, %c0_58, %c0_59] : memref<1x1x1xf32, #tpu.memory_space<vmem>>, vector<1x1x1xf32>
      %76 = vector.shape_cast %75 : vector<1x1x1xf32> to vector<1x1xf32>
      %77 = vector.shape_cast %74 : vector<1x1xf32> to vector<1x1x1xf32>
      tpu.vector_store %arg21[%c0_57, %c0_58, %c0_59], %77 {strides = array<i32>} : memref<1x1x1xf32, #tpu.memory_space<vmem>>, vector<1x1x1xf32>,
    } else {
    }
    return
  }
  func.func @transform_0(%arg0: i32, %arg1: i32) -> (i32, i32, i32) {
    %c0_i32 = arith.constant 0 : i32
    %c0_i32_0 = arith.constant 0 : i32
    return %arg0, %arg1, %c0_i32 : i32, i32, i32
  }
  func.func @transform_1(%arg0: i32, %arg1: i32) -> (i32, i32, i32) {
    %c0_i32 = arith.constant 0 : i32
    %c0_i32_0 = arith.constant 0 : i32
    %c0_i32_1 = arith.constant 0 : i32
    return %arg0, %c0_i32, %c0_i32_0 : i32, i32, i32
  }
  func.func @transform_2(%arg0: i32, %arg1: i32) -> (i32, i32, i32) {
    %c0_i32 = arith.constant 0 : i32
    %c0_i32_0 = arith.constant 0 : i32
    %c0_i32_1 = arith.constant 0 : i32
    return %arg0, %c0_i32, %c0_i32_0 : i32, i32, i32
  }
  func.func @transform_3(%arg0: i32, %arg1: i32) -> (i32, i32) {
    %c0_i32 = arith.constant 0 : i32
    %c0_i32_0 = arith.constant 0 : i32
    %c0_i32_1 = arith.constant 0 : i32
    return %c0_i32, %c0_i32_0 : i32, i32
  }
  func.func @transform_4(%arg0: i32, %arg1: i32) -> (i32, i32) {
    %c0_i32 = arith.constant 0 : i32
    %c0_i32_0 = arith.constant 0 : i32
    %c0_i32_1 = arith.constant 0 : i32
    return %c0_i32, %c0_i32_0 : i32, i32
  }
  func.func @transform_5(%arg0: i32, %arg1: i32) -> (i32, i32) {
    %c0_i32 = arith.constant 0 : i32
    %c0_i32_0 = arith.constant 0 : i32
    %c0_i32_1 = arith.constant 0 : i32
    return %c0_i32, %c0_i32_0 : i32, i32
  }
  func.func @transform_6(%arg0: i32, %arg1: i32) -> (i32, i32) {
    %c0_i32 = arith.constant 0 : i32
    %c0_i32_0 = arith.constant 0 : i32
    %c0_i32_1 = arith.constant 0 : i32
    return %c0_i32, %c0_i32_0 : i32, i32
  }
  func.func @transform_7(%arg0: i32, %arg1: i32) -> (i32, i32) {
    %c0_i32 = arith.constant 0 : i32
    %c0_i32_0 = arith.constant 0 : i32
    %c0_i32_1 = arith.constant 0 : i32
    return %c0_i32, %c0_i32_0 : i32, i32
  }
  func.func @transform_8(%arg0: i32, %arg1: i32) -> (i32, i32) {
    %c0_i32 = arith.constant 0 : i32
    %c0_i32_0 = arith.constant 0 : i32
    %c0_i32_1 = arith.constant 0 : i32
    return %c0_i32, %c0_i32_0 : i32, i32
  }
  func.func @transform_9(%arg0: i32, %arg1: i32) -> (i32, i32) {
    %c0_i32 = arith.constant 0 : i32
    %c0_i32_0 = arith.constant 0 : i32
    %c0_i32_1 = arith.constant 0 : i32
    return %c0_i32, %c0_i32_0 : i32, i32
  }
  func.func @transform_10(%arg0: i32, %arg1: i32) -> (i32, i32) {
    %c0_i32 = arith.constant 0 : i32
    %c0_i32_0 = arith.constant 0 : i32
    %c0_i32_1 = arith.constant 0 : i32
    return %c0_i32, %c0_i32_0 : i32, i32
  }
  func.func @transform_11(%arg0: i32, %arg1: i32) -> (i32, i32) {
    %c0_i32 = arith.constant 0 : i32
    %c0_i32_0 = arith.constant 0 : i32
    %c0_i32_1 = arith.constant 0 : i32
    return %c0_i32, %c0_i32_0 : i32, i32
  }
  func.func @transform_12(%arg0: i32, %arg1: i32) -> (i32, i32) {
    %c0_i32 = arith.constant 0 : i32
    %c0_i32_0 = arith.constant 0 : i32
    %c0_i32_1 = arith.constant 0 : i32
    return %c0_i32, %c0_i32_0 : i32, i32
  }
  func.func @transform_13(%arg0: i32, %arg1: i32) -> (i32, i32) {
    %c0_i32 = arith.constant 0 : i32
    %c0_i32_0 = arith.constant 0 : i32
    %c0_i32_1 = arith.constant 0 : i32
    return %c0_i32, %c0_i32_0 : i32, i32
  }
  func.func @transform_14(%arg0: i32, %arg1: i32) -> (i32, i32) {
    %c0_i32 = arith.constant 0 : i32
    %c0_i32_0 = arith.constant 0 : i32
    %c0_i32_1 = arith.constant 0 : i32
    return %c0_i32, %c0_i32_0 : i32, i32
  }
  func.func @transform_15(%arg0: i32, %arg1: i32) -> (i32, i32) {
    %c0_i32 = arith.constant 0 : i32
    %c0_i32_0 = arith.constant 0 : i32
    %c0_i32_1 = arith.constant 0 : i32
    return %c0_i32, %c0_i32_0 : i32, i32
  }
  func.func @transform_16(%arg0: i32, %arg1: i32) -> (i32, i32) {
    %c0_i32 = arith.constant 0 : i32
    %c0_i32_0 = arith.constant 0 : i32
    %c0_i32_1 = arith.constant 0 : i32
    return %c0_i32, %c0_i32_0 : i32, i32
  }
  func.func @transform_17(%arg0: i32, %arg1: i32) -> (i32, i32) {
    %c0_i32 = arith.constant 0 : i32
    %c0_i32_0 = arith.constant 0 : i32
    %c0_i32_1 = arith.constant 0 : i32
    return %c0_i32, %c0_i32_0 : i32, i32
  }
  func.func @transform_18(%arg0: i32, %arg1: i32) -> (i32, i32) {
    %c0_i32 = arith.constant 0 : i32
    %c0_i32_0 = arith.constant 0 : i32
    %c0_i32_1 = arith.constant 0 : i32
    return %c0_i32, %c0_i32_0 : i32, i32
  }
  func.func @transform_19(%arg0: i32, %arg1: i32) -> (i32, i32, i32) {
    %c0_i32 = arith.constant 0 : i32
    %c0_i32_0 = arith.constant 0 : i32
    %c0_i32_1 = arith.constant 0 : i32
    return %arg0, %c0_i32, %c0_i32_0 : i32, i32, i32
  }
}

</mosaic_0001>

<llo_original>
// kernel: ugaan_d_forward.2
$region0: #{ugaan_d_forward.2}
  #allocation0 [shape = 'u32[]', space=smem, size = 0x4, offset = 0x4, fixed_abs, tag = 'smem constant byte address 0x4 - core index']
  #allocation1 [shape = 'u32[144,128]{1,0:T(1,128)}', space=vmem, size = 0x12000, scoped, tag = 'internal scratch']
  %s0 = inlined_call_operand.vmem [shape: f32[2,256,3], index: 0, kind: input, shape index: {}]
  %s1 = inlined_call_operand.vmem [shape: bf16[3,128], index: 1, kind: input, shape index: {}]
  %s2 = inlined_call_operand.vmem [shape: f32[1,128], index: 2, kind: input, shape index: {}]
  %s3 = inlined_call_operand.vmem [shape: bf16[128,256], index: 3, kind: input, shape index: {}]
  %s4 = inlined_call_operand.vmem [shape: f32[1,256], index: 4, kind: input, shape index: {}]
  %s5 = inlined_call_operand.vmem [shape: f32[2,1,256], index: 5, kind: output, shape index: {}]
  %s6 = sld [smem:[#allocation0]]
  $region61: #{ugaan_d_forward.2} parent=0
    _
  %s8 = ssub.s32 1, %s6
  %s9 = scalar_select 0, %s8, %s6
  loop: start=0, step=1, limit=4
  $region2: #{ugaan_d_forward.2} parent=0 // loop_pre_header
    _
  $region3: #{ugaan_d_forward.2} parent=0 // loop_header
    %s11 = sphi 0, %s15
    %p12 = scmp.ge.s32.totalorder %s11, 4
    %s18 = sphi 0, %s30
    %s19 = sphi 0, %s26
    %s20 = sphi 0, %s18
    %s21 = sphi 0, %s19
    %s22 = sphi 0, %s20
    %s23 = sphi 0, %s21
    %s35 = sphi 0, %s37
    %s38 = sphi 0, %s35
    %s39 = sphi 0, %s38
    %s55 = sphi 0, %s39
    %s59 = sphi 0, %s59
    %s61 = sphi 0, %s59
    %s62 = sphi 0, %s61
    %s76 = sphi 0, %s62
    %s80 = sphi 0, %s80
    %s82 = sphi 0, %s80
    %s83 = sphi 0, %s82
    %s97 = sphi 0, %s83
    %s101 = sphi 0, %s101
    %s103 = sphi 0, %s101
    %s104 = sphi 0, %s103
    %s118 = sphi 0, %s104
    %s122 = sphi 0, %s122
    %s124 = sphi 0, %s122
    %s125 = sphi 0, %s124
    %s139 = sphi 0, %s125
    %s145 = sphi 0, %s147
    %s148 = sphi 0, %s145
    %s149 = sphi 0, %s148
    %s165 = sphi 0, %s149
  $region4: #{ugaan_d_forward.2} parent=0 // loop_header_branch
    %14 = sbr.rel (%p12) target = $region8
  $region5: #{ugaan_d_forward.2} parent=0 // loop_body
    %s16 = ssub.s32 %s11, 1
    %s17 = ssub.s32 %s11, 2
    %s24 = sadd.s32 1, %s19
    %p25 = scmp.ge.s32.totalorder %s24, 1
    %s26 = scalar_select %p25, 0, %s24
    %s27 = sadd.s32 1, %s18
    %s28 = scalar_select %p25, %s27, %s18
    %p29 = scmp.ge.s32.totalorder %s28, 2
    %s30 = scalar_select %p29, 0, %s28
    %s31 = ssub.s32 %s18, %s30
    %s32 = ssub.s32 %s19, %s26
    %s33 = sor.u32 %s31, %s32
    %p34 = scmp.eq.s32.totalorder %s33, 0
    %s36 = sadd.s32 %s35, 1
    %s37 = scalar_select %p34, %s35, %s36
    %p40 = pneg %p34
    %p41 = scmp.eq.s32.totalorder %s11, 1
    %p42 = por %p40, %p41
    %p43 = scmp.ne.s32.totalorder %s35, %s38
    %p44 = scmp.eq.s32.totalorder %s11, 0
    %p45 = por %p43, %p44
    %p46 = scmp.ne.s32.totalorder %s35, %s38
    %p47 = scmp.eq.s32.totalorder %s16, 1
    %p48 = por %p46, %p47
    %p49 = scmp.ne.s32.totalorder %s38, %s39
    %p50 = scmp.eq.s32.totalorder %s16, 0
    %p51 = por %p49, %p50
    %p52 = scmp.ne.s32.totalorder %s38, %s39
    %p53 = scmp.eq.s32.totalorder %s17, 1
    %p54 = por %p52, %p53
    %p56 = scmp.ne.s32.totalorder %s39, %s55
    %p57 = scmp.eq.s32.totalorder %s17, 0
    %p58 = por %p56, %p57
    %s60 = sadd.s32 %s59, 1
    %p63 = scmp.eq.s32.totalorder %s11, 1
    %p64 = scmp.ne.s32.totalorder %s59, %s61
    %p65 = scmp.eq.s32.totalorder %s11, 0
    %p66 = por %p64, %p65
    %p67 = scmp.ne.s32.totalorder %s59, %s61
    %p68 = scmp.eq.s32.totalorder %s16, 1
    %p69 = por %p67, %p68
    %p70 = scmp.ne.s32.totalorder %s61, %s62
    %p71 = scmp.eq.s32.totalorder %s16, 0
    %p72 = por %p70, %p71
    %p73 = scmp.ne.s32.totalorder %s61, %s62
    %p74 = scmp.eq.s32.totalorder %s17, 1
    %p75 = por %p73, %p74
    %p77 = scmp.ne.s32.totalorder %s62, %s76
    %p78 = scmp.eq.s32.totalorder %s17, 0
    %p79 = por %p77, %p78
    %s81 = sadd.s32 %s80, 1
    %p84 = scmp.eq.s32.totalorder %s11, 1
    %p85 = scmp.ne.s32.totalorder %s80, %s82
    %p86 = scmp.eq.s32.totalorder %s11, 0
    %p87 = por %p85, %p86
    %p88 = scmp.ne.s32.totalorder %s80, %s82
    %p89 = scmp.eq.s32.totalorder %s16, 1
    %p90 = por %p88, %p89
    %p91 = scmp.ne.s32.totalorder %s82, %s83
    %p92 = scmp.eq.s32.totalorder %s16, 0
    %p93 = por %p91, %p92
    %p94 = scmp.ne.s32.totalorder %s82, %s83
    %p95 = scmp.eq.s32.totalorder %s17, 1
    %p96 = por %p94, %p95
    %p98 = scmp.ne.s32.totalorder %s83, %s97
    %p99 = scmp.eq.s32.totalorder %s17, 0
    %p100 = por %p98, %p99
    %s102 = sadd.s32 %s101, 1
    %p105 = scmp.eq.s32.totalorder %s11, 1
    %p106 = scmp.ne.s32.totalorder %s101, %s103
    %p107 = scmp.eq.s32.totalorder %s11, 0
    %p108 = por %p106, %p107
    %p109 = scmp.ne.s32.totalorder %s101, %s103
    %p110 = scmp.eq.s32.totalorder %s16, 1
    %p111 = por %p109, %p110
    %p112 = scmp.ne.s32.totalorder %s103, %s104
    %p113 = scmp.eq.s32.totalorder %s16, 0
    %p114 = por %p112, %p113
    %p115 = scmp.ne.s32.totalorder %s103, %s104
    %p116 = scmp.eq.s32.totalorder %s17, 1
    %p117 = por %p115, %p116
    %p119 = scmp.ne.s32.totalorder %s104, %s118
    %p120 = scmp.eq.s32.totalorder %s17, 0
    %p121 = por %p119, %p120
    %s123 = sadd.s32 %s122, 1
    %p126 = scmp.eq.s32.totalorder %s11, 1
    %p127 = scmp.ne.s32.totalorder %s122, %s124
    %p128 = scmp.eq.s32.totalorder %s11, 0
    %p129 = por %p127, %p128
    %p130 = scmp.ne.s32.totalorder %s122, %s124
    %p131 = scmp.eq.s32.totalorder %s16, 1
    %p132 = por %p130, %p131
    %p133 = scmp.ne.s32.totalorder %s124, %s125
    %p134 = scmp.eq.s32.totalorder %s16, 0
    %p135 = por %p133, %p134
    %p136 = scmp.ne.s32.totalorder %s124, %s125
    %p137 = scmp.eq.s32.totalorder %s17, 1
    %p138 = por %p136, %p137
    %p140 = scmp.ne.s32.totalorder %s125, %s139
    %p141 = scmp.eq.s32.totalorder %s17, 0
    %p142 = por %p140, %p141
    %s143 = ssub.s32 %s18, %s30
    %p144 = scmp.eq.s32.totalorder %s143, 0
    %s146 = sadd.s32 %s145, 1
    %s147 = scalar_select %p144, %s145, %s146
    %p150 = pneg %p144
    %p151 = scmp.eq.s32.totalorder %s11, 1
    %p152 = por %p150, %p151
    %p153 = scmp.ne.s32.totalorder %s145, %s148
    %p154 = scmp.eq.s32.totalorder %s11, 0
    %p155 = por %p153, %p154
    %p156 = scmp.ne.s32.totalorder %s145, %s148
    %p157 = scmp.eq.s32.totalorder %s16, 1
    %p158 = por %p156, %p157
    %p159 = scmp.ne.s32.totalorder %s148, %s149
    %p160 = scmp.eq.s32.totalorder %s16, 0
    %p161 = por %p159, %p160
    %p162 = scmp.ne.s32.totalorder %s148, %s149
    %p163 = scmp.eq.s32.totalorder %s17, 1
    %p164 = por %p162, %p163
    %p166 = scmp.ne.s32.totalorder %s149, %s165
    %p167 = scmp.eq.s32.totalorder %s17, 0
    %p168 = por %p166, %p167
    %p169 = scmp.le.s32.totalorder 1, %s11
    %p170 = scmp.lt.s32.totalorder %s11, 3
    %p171 = pnand %p169, %p170
    %p172 = pneg %p171
    // Predicated region
    $region9: #{ugaan_d_forward.2} parent=5 // pred_check
      _
    $region10: #{ugaan_d_forward.2} parent=5 // pred_check_branch
      %174 = sbr.rel (%p171) target = $region12
    $region11: #{ugaan_d_forward.2} parent=5 // pred_region
      %s175 = ssub.s32 %s11, 1
      // Predicated region
      $region13: #{ugaan_d_forward.2} parent=11 // pred_check
        %p176 = pneg %p72
      $region14: #{ugaan_d_forward.2} parent=11 // pred_check_branch
        %178 = sbr.rel (%p176) target = $region16
      $region15: #{ugaan_d_forward.2} parent=11 // pred_region
        _
      $region16: #{ugaan_d_forward.2} parent=11 // pred_fallthru
        _
      // Predicated region
      $region17: #{ugaan_d_forward.2} parent=11 // pred_check
        %p179 = pneg %p93
      $region18: #{ugaan_d_forward.2} parent=11 // pred_check_branch
        %181 = sbr.rel (%p179) target = $region20
      $region19: #{ugaan_d_forward.2} parent=11 // pred_region
        _
      $region20: #{ugaan_d_forward.2} parent=11 // pred_fallthru
        _
      // Predicated region
      $region21: #{ugaan_d_forward.2} parent=11 // pred_check
        %p182 = pneg %p114
      $region22: #{ugaan_d_forward.2} parent=11 // pred_check_branch
        %184 = sbr.rel (%p182) target = $region24
      $region23: #{ugaan_d_forward.2} parent=11 // pred_region
        _
      $region24: #{ugaan_d_forward.2} parent=11 // pred_fallthru
        _
      // Predicated region
      $region25: #{ugaan_d_forward.2} parent=11 // pred_check
        %p185 = pneg %p135
      $region26: #{ugaan_d_forward.2} parent=11 // pred_check_branch
        %187 = sbr.rel (%p185) target = $region28
      $region27: #{ugaan_d_forward.2} parent=11 // pred_region
        _
      $region28: #{ugaan_d_forward.2} parent=11 // pred_fallthru
        _
    $region12: #{ugaan_d_forward.2} parent=5 // pred_fallthru
      _
    %p188 = scmp.lt.s32.totalorder %s11, 2
    // Predicated region
    $region29: #{ugaan_d_forward.2} parent=5 // pred_check
      %p189 = pneg %p188
    $region30: #{ugaan_d_forward.2} parent=5 // pred_check_branch
      %191 = sbr.rel (%p189) target = $region32
    $region31: #{ugaan_d_forward.2} parent=5 // pred_region
      // Predicated region
      $region33: #{ugaan_d_forward.2} parent=31 // pred_check
        %p192 = pneg %p45
      $region34: #{ugaan_d_forward.2} parent=31 // pred_check_branch
        %194 = sbr.rel (%p192) target = $region36
      $region35: #{ugaan_d_forward.2} parent=31 // pred_region
        %s195 = smul.u32 32, %s19
        %p196 = scmp.lt.s32.totalorder %s18, 1
        %s197 = scalar_select %p196, %s18, 1
        %p198 = scmp.lt.s32.totalorder %s195, 31
        %s199 = scalar_select %p198, %s195, 31
        %s200 = smul.addr %s197, 32
        %s201 = sadd.s32 %s199, %s200
        %s202 = smul.addr %s201, 8
        %s203 = scalar_lea.vmem %s0, %s202
        %s204 = smul.u32 32, %s19
      $region36: #{ugaan_d_forward.2} parent=31 // pred_fallthru
        _
    $region32: #{ugaan_d_forward.2} parent=5 // pred_fallthru
      _
    %p205 = scmp.le.s32.totalorder 1, %s11
    %p206 = scmp.lt.s32.totalorder %s11, 3
    %p207 = pnand %p205, %p206
    %p208 = pneg %p207
    // Predicated region
    $region37: #{ugaan_d_forward.2} parent=5 // pred_check
      _
    $region38: #{ugaan_d_forward.2} parent=5 // pred_check_branch
      %210 = sbr.rel (%p207) target = $region40
    $region39: #{ugaan_d_forward.2} parent=5 // pred_region
      %s211 = ssub.s32 %s11, 1
      %s212 = smul.u32 32, %s21
      %p213 = scmp.lt.s32.totalorder %s20, 1
      %s214 = scalar_select %p213, %s20, 1
      %p215 = scmp.lt.s32.totalorder %s212, 31
      %s216 = scalar_select %p215, %s212, 31
      %s217 = smul.addr %s214, 32
      %s218 = sadd.s32 %s216, %s217
      %s219 = smul.addr %s218, 8
      %s220 = scalar_lea.vmem %s0, %s219
      %p221 = pneg %p51
      %p222 = pneg %p48
      %p223 = pneg %p72
      %p224 = pneg %p69
      %p225 = pneg %p93
      %p226 = pneg %p90
      %p227 = pneg %p114
      %p228 = pneg %p111
      %p229 = pneg %p135
      %p230 = pneg %p132
      %p231 = pneg %p161
      %p232 = pneg %p158
      %p233 = scmp.lt.s32.totalorder %s20, 1
      %s234 = scalar_select %p233, %s20, 1
      %s235 = smul.addr %s234, 2
      %s236 = scalar_lea.vmem %s5, %s235
      %s237 = smul.u32 32, %s21
      %p238 = scmp.lt.s32.totalorder %s20, 1
      %s239 = scalar_select %p238, %s20, 1
      %p240 = scmp.lt.s32.totalorder %s237, 31
      %s241 = scalar_select %p240, %s237, 31
      %s242 = smul.addr %s239, 32
      %s243 = sadd.s32 %s241, %s242
      %s244 = smul.addr %s243, 8
      %s245 = scalar_lea.vmem %s0, %s244
      %s246 = smul.u32 32, %s21
      %p247 = scmp.lt.s32.totalorder %s20, 1
      %s248 = scalar_select %p247, %s20, 1
      %s249 = smul.addr %s248, 2
      %s250 = scalar_lea.vmem %s5, %s249
      %v252 = vld [vmem:[%s245] sm:$0xff]
      %v253 = vld [vmem:[%s245 + $0x8] sm:$0xff]
      %v254 = vld [vmem:[%s245 + $0x10] sm:$0xff]
      %v255 = vld [vmem:[%s245 + $0x18] sm:$0xff]
      %v256 = vld [vmem:[%s245 + $0x20] sm:$0xff]
      %v257 = vld [vmem:[%s245 + $0x28] sm:$0xff]
      %v258 = vld [vmem:[%s245 + $0x30] sm:$0xff]
      %v259 = vld [vmem:[%s245 + $0x38] sm:$0xff]
      %v260 = vld [vmem:[%s245 + $0x40] sm:$0xff]
      %v261 = vld [vmem:[%s245 + $0x48] sm:$0xff]
      %v262 = vld [vmem:[%s245 + $0x50] sm:$0xff]
      %v263 = vld [vmem:[%s245 + $0x58] sm:$0xff]
      %v264 = vld [vmem:[%s245 + $0x60] sm:$0xff]
      %v265 = vld [vmem:[%s245 + $0x68] sm:$0xff]
      %v266 = vld [vmem:[%s245 + $0x70] sm:$0xff]
      %v267 = vld [vmem:[%s245 + $0x78] sm:$0xff]
      %v268 = vld [vmem:[%s245 + $0x80] sm:$0xff]
      %v269 = vld [vmem:[%s245 + $0x88] sm:$0xff]
      %v270 = vld [vmem:[%s245 + $0x90] sm:$0xff]
      %v271 = vld [vmem:[%s245 + $0x98] sm:$0xff]
      %v272 = vld [vmem:[%s245 + $0xa0] sm:$0xff]
      %v273 = vld [vmem:[%s245 + $0xa8] sm:$0xff]
      %v274 = vld [vmem:[%s245 + $0xb0] sm:$0xff]
      %v275 = vld [vmem:[%s245 + $0xb8] sm:$0xff]
      %v276 = vld [vmem:[%s245 + $0xc0] sm:$0xff]
      %v277 = vld [vmem:[%s245 + $0xc8] sm:$0xff]
      %v278 = vld [vmem:[%s245 + $0xd0] sm:$0xff]
      %v279 = vld [vmem:[%s245 + $0xd8] sm:$0xff]
      %v280 = vld [vmem:[%s245 + $0xe0] sm:$0xff]
      %v281 = vld [vmem:[%s245 + $0xe8] sm:$0xff]
      %v282 = vld [vmem:[%s245 + $0xf0] sm:$0xff]
      %v283 = vld [vmem:[%s245 + $0xf8] sm:$0xff]
      %v284 = vpack.c.bf16 %v253, %v252
      %v285 = vpack.c.bf16 %v255, %v254
      %v286 = vpack.c.bf16 %v257, %v256
      %v287 = vpack.c.bf16 %v259, %v258
      %v288 = vpack.c.bf16 %v261, %v260
      %v289 = vpack.c.bf16 %v263, %v262
      %v290 = vpack.c.bf16 %v265, %v264
      %v291 = vpack.c.bf16 %v267, %v266
      %v292 = vpack.c.bf16 %v269, %v268
      %v293 = vpack.c.bf16 %v271, %v270
      %v294 = vpack.c.bf16 %v273, %v272
      %v295 = vpack.c.bf16 %v275, %v274
      %v296 = vpack.c.bf16 %v277, %v276
      %v297 = vpack.c.bf16 %v279, %v278
      %v298 = vpack.c.bf16 %v281, %v280
      %v299 = vpack.c.bf16 %v283, %v282
      %v300 = vld [vmem:[%s1] sm:$0x3]
      %v301 = vld [vmem:[%s2] sm:$0x1]
      %v303 = vlaneseq
      %v304 = vshrl.u32 %v303, 7
      %v305 = vsub.s32 0, %v304
      %v306 = vrot.slane %v301, %v305
      %vm308 = vcmask 23552
      %v310 = vsel %vm308, %v284, 0
      %v313 = vsel %vm308, %v285, 0
      %v316 = vsel %vm308, %v286, 0
      %v319 = vsel %vm308, %v287, 0
      %v322 = vsel %vm308, %v288, 0
      %v325 = vsel %vm308, %v289, 0
      %v328 = vsel %vm308, %v290, 0
      %v331 = vsel %vm308, %v291, 0
      %v334 = vsel %vm308, %v292, 0
      %v337 = vsel %vm308, %v293, 0
      %v340 = vsel %vm308, %v294, 0
      %v343 = vsel %vm308, %v295, 0
      %v346 = vsel %vm308, %v296, 0
      %v349 = vsel %vm308, %v297, 0
      %v352 = vsel %vm308, %v298, 0
      %v355 = vsel %vm308, %v299, 0
      %vm357 = vcmask 1040384
      %vm358 = vcmask 1041408
      %v359 = vsel %vm357, 4294967295, 65535
      %v360 = vsel %vm358, %v359, 0
      %v362 = vand.u32 %v300, %v360
      %364 = vmatprep.subr.bf16.mxu0 0
      %365 = vmatpush1.bf16.msra.mxu0 %v362
      %366 = vmatprep.subr.bf16.mxu0 0
      %367 = vmatpush1.bf16.msra.mxu0 0
      %368 = vmatprep.subr.bf16.mxu0 0
      %369 = vmatpush1.bf16.msra.mxu0 0
      %370 = vmatprep.subr.bf16.mxu0 0
      %371 = vmatpush1.bf16.msra.mxu0 0
      %372 = vmatprep.subr.bf16.mxu0 0
      %373 = vmatpush1.bf16.msra.mxu0 0
      %374 = vmatprep.subr.bf16.mxu0 0
      %375 = vmatpush1.bf16.msra.mxu0 0
      %376 = vmatprep.subr.bf16.mxu0 0
      %377 = vmatpush1.bf16.msra.mxu0 0
      %378 = vmatprep.subr.bf16.mxu0 0
      %379 = vmatpush1.bf16.msra.mxu0 0
      %380 = vmatprep.subr.bf16.mxu0 0
      %381 = vmatpush1.bf16.msra.mxu0 0
      %382 = vmatprep.subr.bf16.mxu0 0
      %383 = vmatpush1.bf16.msra.mxu0 0
      %384 = vmatprep.subr.bf16.mxu0 0
      %385 = vmatpush1.bf16.msra.mxu0 0
      %386 = vmatprep.subr.bf16.mxu0 0
      %387 = vmatpush1.bf16.msra.mxu0 0
      %388 = vmatprep.subr.bf16.mxu0 0
      %389 = vmatpush1.bf16.msra.mxu0 0
      %390 = vmatprep.subr.bf16.mxu0 0
      %391 = vmatpush1.bf16.msra.mxu0 0
      %392 = vmatprep.subr.bf16.mxu0 0
      %393 = vmatpush1.bf16.msra.mxu0 0
      %394 = vmatprep.subr.bf16.mxu0 0
      %395 = vmatpush1.bf16.msra.mxu0 0
      %396 = vmatprep.mubr.bf16.mxu0 0
      %397 = vmatmul.mubr.bf16.gmra.mrb[0].mxu0 %v310
      %v398 = vpop.f32.mrb[0].mxu0
      %v399 = vadd.f32 %v306, %v398
      %v400 = vpop.f32.mrb[0].mxu0
      %v401 = vpop.f32.mrb[0].mxu0
      %v402 = vadd.f32 %v306, %v401
      %v403 = vpop.f32.mrb[0].mxu0
      %404 = vmatprep.mubr.bf16.mxu0 0
      %405 = vmatmul.mubr.bf16.gmra.mrb[0].mxu0 %v313
      %v406 = vpop.f32.mrb[0].mxu0
      %v407 = vadd.f32 %v306, %v406
      %v408 = vpop.f32.mrb[0].mxu0
      %v409 = vpop.f32.mrb[0].mxu0
      %v410 = vadd.f32 %v306, %v409
      %v411 = vpop.f32.mrb[0].mxu0
      %412 = vmatprep.mubr.bf16.mxu0 0
      %413 = vmatmul.mubr.bf16.gmra.mrb[0].mxu0 %v316
      %v414 = vpop.f32.mrb[0].mxu0
      %v415 = vadd.f32 %v306, %v414
      %v416 = vpop.f32.mrb[0].mxu0
      %v417 = vpop.f32.mrb[0].mxu0
      %v418 = vadd.f32 %v306, %v417
      %v419 = vpop.f32.mrb[0].mxu0
      %420 = vmatprep.mubr.bf16.mxu0 0
      %421 = vmatmul.mubr.bf16.gmra.mrb[0].mxu0 %v319
      %v422 = vpop.f32.mrb[0].mxu0
      %v423 = vadd.f32 %v306, %v422
      %v424 = vpop.f32.mrb[0].mxu0
      %v425 = vpop.f32.mrb[0].mxu0
      %v426 = vadd.f32 %v306, %v425
      %v427 = vpop.f32.mrb[0].mxu0
      %428 = vmatprep.mubr.bf16.mxu0 0
      %429 = vmatmul.mubr.bf16.gmra.mrb[0].mxu0 %v322
      %v430 = vpop.f32.mrb[0].mxu0
      %v431 = vadd.f32 %v306, %v430
      %v432 = vpop.f32.mrb[0].mxu0
      %v433 = vpop.f32.mrb[0].mxu0
      %v434 = vadd.f32 %v306, %v433
      %v435 = vpop.f32.mrb[0].mxu0
      %436 = vmatprep.mubr.bf16.mxu0 0
      %437 = vmatmul.mubr.bf16.gmra.mrb[0].mxu0 %v325
      %v438 = vpop.f32.mrb[0].mxu0
      %v439 = vadd.f32 %v306, %v438
      %v440 = vpop.f32.mrb[0].mxu0
      %v441 = vpop.f32.mrb[0].mxu0
      %v442 = vadd.f32 %v306, %v441
      %v443 = vpop.f32.mrb[0].mxu0
      %444 = vmatprep.mubr.bf16.mxu0 0
      %445 = vmatmul.mubr.bf16.gmra.mrb[0].mxu0 %v328
      %v446 = vpop.f32.mrb[0].mxu0
      %v447 = vadd.f32 %v306, %v446
      %v448 = vpop.f32.mrb[0].mxu0
      %v449 = vpop.f32.mrb[0].mxu0
      %v450 = vadd.f32 %v306, %v449
      %v451 = vpop.f32.mrb[0].mxu0
      %452 = vmatprep.mubr.bf16.mxu0 0
      %453 = vmatmul.mubr.bf16.gmra.mrb[0].mxu0 %v331
      %v454 = vpop.f32.mrb[0].mxu0
      %v455 = vadd.f32 %v306, %v454
      %v456 = vpop.f32.mrb[0].mxu0
      %v457 = vpop.f32.mrb[0].mxu0
      %v458 = vadd.f32 %v306, %v457
      %v459 = vpop.f32.mrb[0].mxu0
      %460 = vmatprep.mubr.bf16.mxu0 0
      %461 = vmatmul.mubr.bf16.gmra.mrb[0].mxu0 %v334
      %v462 = vpop.f32.mrb[0].mxu0
      %v463 = vadd.f32 %v306, %v462
      %v464 = vpop.f32.mrb[0].mxu0
      %v465 = vpop.f32.mrb[0].mxu0
      %v466 = vadd.f32 %v306, %v465
      %v467 = vpop.f32.mrb[0].mxu0
      %468 = vmatprep.mubr.bf16.mxu0 0
      %469 = vmatmul.mubr.bf16.gmra.mrb[0].mxu0 %v337
      %v470 = vpop.f32.mrb[0].mxu0
      %v471 = vadd.f32 %v306, %v470
      %v472 = vpop.f32.mrb[0].mxu0
      %v473 = vpop.f32.mrb[0].mxu0
      %v474 = vadd.f32 %v306, %v473
      %v475 = vpop.f32.mrb[0].mxu0
      %476 = vmatprep.mubr.bf16.mxu0 0
      %477 = vmatmul.mubr.bf16.gmra.mrb[0].mxu0 %v340
      %v478 = vpop.f32.mrb[0].mxu0
      %v479 = vadd.f32 %v306, %v478
      %v480 = vpop.f32.mrb[0].mxu0
      %v481 = vpop.f32.mrb[0].mxu0
      %v482 = vadd.f32 %v306, %v481
      %v483 = vpop.f32.mrb[0].mxu0
      %484 = vmatprep.mubr.bf16.mxu0 0
      %485 = vmatmul.mubr.bf16.gmra.mrb[0].mxu0 %v343
      %v486 = vpop.f32.mrb[0].mxu0
      %v487 = vadd.f32 %v306, %v486
      %v488 = vpop.f32.mrb[0].mxu0
      %v489 = vpop.f32.mrb[0].mxu0
      %v490 = vadd.f32 %v306, %v489
      %v491 = vpop.f32.mrb[0].mxu0
      %492 = vmatprep.mubr.bf16.mxu0 0
      %493 = vmatmul.mubr.bf16.gmra.mrb[0].mxu0 %v346
      %v494 = vpop.f32.mrb[0].mxu0
      %v495 = vadd.f32 %v306, %v494
      %v496 = vpop.f32.mrb[0].mxu0
      %v497 = vpop.f32.mrb[0].mxu0
      %v498 = vadd.f32 %v306, %v497
      %v499 = vpop.f32.mrb[0].mxu0
      %500 = vmatprep.mubr.bf16.mxu0 0
      %501 = vmatmul.mubr.bf16.gmra.mrb[0].mxu0 %v349
      %v502 = vpop.f32.mrb[0].mxu0
      %v503 = vadd.f32 %v306, %v502
      %v504 = vpop.f32.mrb[0].mxu0
      %v505 = vpop.f32.mrb[0].mxu0
      %v506 = vadd.f32 %v306, %v505
      %v507 = vpop.f32.mrb[0].mxu0
      %508 = vmatprep.mubr.bf16.mxu0 0
      %509 = vmatmul.mubr.bf16.gmra.mrb[0].mxu0 %v352
      %v510 = vpop.f32.mrb[0].mxu0
      %v511 = vadd.f32 %v306, %v510
      %v512 = vpop.f32.mrb[0].mxu0
      %v513 = vpop.f32.mrb[0].mxu0
      %v514 = vadd.f32 %v306, %v513
      %v515 = vpop.f32.mrb[0].mxu0
      %516 = vmatprep.mubr.bf16.mxu0 0
      %517 = vmatmul.mubr.bf16.gmra.mrb[0].mxu0 %v355
      %v518 = vpop.f32.mrb[0].mxu0
      %v519 = vadd.f32 %v306, %v518
      %v520 = vpop.f32.mrb[0].mxu0
      %v521 = vpop.f32.mrb[0].mxu0
      %v522 = vadd.f32 %v306, %v521
      %v523 = vpop.f32.mrb[0].mxu0
      %524 = vdwg.mxu0
      %v525 = vmax.f32 %v399, 0.0
      %v526 = vmax.f32 %v402, 0.0
      %v527 = vmax.f32 %v407, 0.0
      %v528 = vmax.f32 %v410, 0.0
      %v529 = vmax.f32 %v415, 0.0
      %v530 = vmax.f32 %v418, 0.0
      %v531 = vmax.f32 %v423, 0.0
      %v532 = vmax.f32 %v426, 0.0
      %v533 = vmax.f32 %v431, 0.0
      %v534 = vmax.f32 %v434, 0.0
      %v535 = vmax.f32 %v439, 0.0
      %v536 = vmax.f32 %v442, 0.0
      %v537 = vmax.f32 %v447, 0.0
      %v538 = vmax.f32 %v450, 0.0
      %v539 = vmax.f32 %v455, 0.0
      %v540 = vmax.f32 %v458, 0.0
      %v541 = vmax.f32 %v463, 0.0
      %v542 = vmax.f32 %v466, 0.0
      %v543 = vmax.f32 %v471, 0.0
      %v544 = vmax.f32 %v474, 0.0
      %v545 = vmax.f32 %v479, 0.0
      %v546 = vmax.f32 %v482, 0.0
      %v547 = vmax.f32 %v487, 0.0
      %v548 = vmax.f32 %v490, 0.0
      %v549 = vmax.f32 %v495, 0.0
      %v550 = vmax.f32 %v498, 0.0
      %v551 = vmax.f32 %v503, 0.0
      %v552 = vmax.f32 %v506, 0.0
      %v553 = vmax.f32 %v511, 0.0
      %v554 = vmax.f32 %v514, 0.0
      %v555 = vmax.f32 %v519, 0.0
      %v556 = vmax.f32 %v522, 0.0
      %v557 = vpack.c.bf16 %v526, %v525
      %v558 = vpack.c.bf16 %v528, %v527
      %v559 = vpack.c.bf16 %v530, %v529
      %v560 = vpack.c.bf16 %v532, %v531
      %v561 = vpack.c.bf16 %v534, %v533
      %v562 = vpack.c.bf16 %v536, %v535
      %v563 = vpack.c.bf16 %v538, %v537
      %v564 = vpack.c.bf16 %v540, %v539
      %v565 = vpack.c.bf16 %v542, %v541
      %v566 = vpack.c.bf16 %v544, %v543
      %v567 = vpack.c.bf16 %v546, %v545
      %v568 = vpack.c.bf16 %v548, %v547
      %v569 = vpack.c.bf16 %v550, %v549
      %v570 = vpack.c.bf16 %v552, %v551
      %v571 = vpack.c.bf16 %v554, %v553
      %v572 = vpack.c.bf16 %v556, %v555
      %v573 = vld [vmem:[%s3] sm:$0xff]
      %v574 = vld [vmem:[%s3 + $0x8] sm:$0xff]
      %v575 = vld [vmem:[%s3 + $0x10] sm:$0xff]
      %v576 = vld [vmem:[%s3 + $0x18] sm:$0xff]
      %v577 = vld [vmem:[%s3 + $0x20] sm:$0xff]
      %v578 = vld [vmem:[%s3 + $0x28] sm:$0xff]
      %v579 = vld [vmem:[%s3 + $0x30] sm:$0xff]
      %v580 = vld [vmem:[%s3 + $0x38] sm:$0xff]
      %v581 = vld [vmem:[%s3 + $0x40] sm:$0xff]
      %v582 = vld [vmem:[%s3 + $0x48] sm:$0xff]
      %v583 = vld [vmem:[%s3 + $0x50] sm:$0xff]
      %v584 = vld [vmem:[%s3 + $0x58] sm:$0xff]
      %v585 = vld [vmem:[%s3 + $0x60] sm:$0xff]
      %v586 = vld [vmem:[%s3 + $0x68] sm:$0xff]
      %v587 = vld [vmem:[%s3 + $0x70] sm:$0xff]
      %v588 = vld [vmem:[%s3 + $0x78] sm:$0xff]
      %v589 = vld [vmem:[%s4] sm:$0x3]
      %v591 = vlaneseq
      %v592 = vshrl.u32 %v591, 7
      %v593 = vsub.s32 0, %v592
      %v594 = vrot.slane %v589, %v593
      %v595 = vlaneseq
      %v596 = vshrl.u32 %v595, 7
      %v597 = vsub.s32 1, %v596
      %v598 = vrot.slane %v589, %v597
      %v617 = vunpack.c.l.b16 %v573
      %v618 = vunpack.c.h.b16 %v573
      %v619 = vunpack.c.l.b16 %v574
      %v620 = vunpack.c.h.b16 %v574
      %v621 = vunpack.c.l.b16 %v575
      %v622 = vunpack.c.h.b16 %v575
      %v623 = vunpack.c.l.b16 %v576
      %v624 = vunpack.c.h.b16 %v576
      %v625 = vunpack.c.l.b16 %v577
      %v626 = vunpack.c.h.b16 %v577
      %v627 = vunpack.c.l.b16 %v578
      %v628 = vunpack.c.h.b16 %v578
      %v629 = vunpack.c.l.b16 %v579
      %v630 = vunpack.c.h.b16 %v579
      %v631 = vunpack.c.l.b16 %v580
      %v632 = vunpack.c.h.b16 %v580
      %v633 = vunpack.c.l.b16 %v581
      %v634 = vunpack.c.h.b16 %v581
      %v635 = vunpack.c.l.b16 %v582
      %v636 = vunpack.c.h.b16 %v582
      %v637 = vunpack.c.l.b16 %v583
      %v638 = vunpack.c.h.b16 %v583
      %v639 = vunpack.c.l.b16 %v584
      %v640 = vunpack.c.h.b16 %v584
      %v641 = vunpack.c.l.b16 %v585
      %v642 = vunpack.c.h.b16 %v585
      %v643 = vunpack.c.l.b16 %v586
      %v644 = vunpack.c.h.b16 %v586
      %v645 = vunpack.c.l.b16 %v587
      %v646 = vunpack.c.h.b16 %v587
      %v647 = vunpack.c.l.b16 %v588
      %v648 = vunpack.c.h.b16 %v588
      %v649 = vpack.c.b16 %v619, %v617
      %v650 = vpack.c.b16 %v620, %v618
      %v651 = vpack.c.b16 %v623, %v621
      %v652 = vpack.c.b16 %v624, %v622
      %v653 = vpack.c.b16 %v627, %v625
      %v654 = vpack.c.b16 %v628, %v626
      %v655 = vpack.c.b16 %v631, %v629
      %v656 = vpack.c.b16 %v632, %v630
      %v657 = vpack.c.b16 %v635, %v633
      %v658 = vpack.c.b16 %v636, %v634
      %v659 = vpack.c.b16 %v639, %v637
      %v660 = vpack.c.b16 %v640, %v638
      %v661 = vpack.c.b16 %v643, %v641
      %v662 = vpack.c.b16 %v644, %v642
      %v663 = vpack.c.b16 %v647, %v645
      %v664 = vpack.c.b16 %v648, %v646
      %681 = vmatprep.subr.bf16.mxu0 %v650
      %682 = vmatpush1.bf16.msra.mxu0 %v649
      %683 = vmatprep.subr.bf16.mxu0 %v652
      %684 = vmatpush1.bf16.msra.mxu0 %v651
      %685 = vmatprep.subr.bf16.mxu0 %v654
      %686 = vmatpush1.bf16.msra.mxu0 %v653
      %687 = vmatprep.subr.bf16.mxu0 %v656
      %688 = vmatpush1.bf16.msra.mxu0 %v655
      %689 = vmatprep.subr.bf16.mxu0 %v658
      %690 = vmatpush1.bf16.msra.mxu0 %v657
      %691 = vmatprep.subr.bf16.mxu0 %v660
      %692 = vmatpush1.bf16.msra.mxu0 %v659
      %693 = vmatprep.subr.bf16.mxu0 %v662
      %694 = vmatpush1.bf16.msra.mxu0 %v661
      %695 = vmatprep.subr.bf16.mxu0 %v664
      %696 = vmatpush1.bf16.msra.mxu0 %v663
      %697 = vmatprep.subr.bf16.mxu0 0
      %698 = vmatpush1.bf16.msra.mxu0 0
      %699 = vmatprep.subr.bf16.mxu0 0
      %700 = vmatpush1.bf16.msra.mxu0 0
      %701 = vmatprep.subr.bf16.mxu0 0
      %702 = vmatpush1.bf16.msra.mxu0 0
      %703 = vmatprep.subr.bf16.mxu0 0
      %704 = vmatpush1.bf16.msra.mxu0 0
      %705 = vmatprep.subr.bf16.mxu0 0
      %706 = vmatpush1.bf16.msra.mxu0 0
      %707 = vmatprep.subr.bf16.mxu0 0
      %708 = vmatpush1.bf16.msra.mxu0 0
      %709 = vmatprep.subr.bf16.mxu0 0
      %710 = vmatpush1.bf16.msra.mxu0 0
      %711 = vmatprep.subr.bf16.mxu0 0
      %712 = vmatpush1.bf16.msra.mxu0 0
      %713 = vmatprep.mubr.bf16.mxu0 0
      %714 = vmatmul.mubr.bf16.gmra.mrb[0].mxu0 %v557
      %v715 = vpop.f32.mrb[0].mxu0
      %v716 = vadd.f32 %v594, %v715
      %v717 = vpop.f32.mrb[0].mxu0
      %v718 = vadd.f32 %v598, %v717
      %v719 = vpop.f32.mrb[0].mxu0
      %v720 = vadd.f32 %v594, %v719
      %v721 = vpop.f32.mrb[0].mxu0
      %v722 = vadd.f32 %v598, %v721
      %723 = vmatprep.mubr.bf16.mxu0 0
      %724 = vmatmul.mubr.bf16.gmra.mrb[0].mxu0 %v558
      %v725 = vpop.f32.mrb[0].mxu0
      %v726 = vadd.f32 %v594, %v725
      %v727 = vpop.f32.mrb[0].mxu0
      %v728 = vadd.f32 %v598, %v727
      %v729 = vpop.f32.mrb[0].mxu0
      %v730 = vadd.f32 %v594, %v729
      %v731 = vpop.f32.mrb[0].mxu0
      %v732 = vadd.f32 %v598, %v731
      %733 = vmatprep.mubr.bf16.mxu0 0
      %734 = vmatmul.mubr.bf16.gmra.mrb[0].mxu0 %v559
      %v735 = vpop.f32.mrb[0].mxu0
      %v736 = vadd.f32 %v594, %v735
      %v737 = vpop.f32.mrb[0].mxu0
      %v738 = vadd.f32 %v598, %v737
      %v739 = vpop.f32.mrb[0].mxu0
      %v740 = vadd.f32 %v594, %v739
      %v741 = vpop.f32.mrb[0].mxu0
      %v742 = vadd.f32 %v598, %v741
      %743 = vmatprep.mubr.bf16.mxu0 0
      %744 = vmatmul.mubr.bf16.gmra.mrb[0].mxu0 %v560
      %v745 = vpop.f32.mrb[0].mxu0
      %v746 = vadd.f32 %v594, %v745
      %v747 = vpop.f32.mrb[0].mxu0
      %v748 = vadd.f32 %v598, %v747
      %v749 = vpop.f32.mrb[0].mxu0
      %v750 = vadd.f32 %v594, %v749
      %v751 = vpop.f32.mrb[0].mxu0
      %v752 = vadd.f32 %v598, %v751
      %753 = vmatprep.mubr.bf16.mxu0 0
      %754 = vmatmul.mubr.bf16.gmra.mrb[0].mxu0 %v561
      %v755 = vpop.f32.mrb[0].mxu0
      %v756 = vadd.f32 %v594, %v755
      %v757 = vpop.f32.mrb[0].mxu0
      %v758 = vadd.f32 %v598, %v757
      %v759 = vpop.f32.mrb[0].mxu0
      %v760 = vadd.f32 %v594, %v759
      %v761 = vpop.f32.mrb[0].mxu0
      %v762 = vadd.f32 %v598, %v761
      %763 = vmatprep.mubr.bf16.mxu0 0
      %764 = vmatmul.mubr.bf16.gmra.mrb[0].mxu0 %v562
      %v765 = vpop.f32.mrb[0].mxu0
      %v766 = vadd.f32 %v594, %v765
      %v767 = vpop.f32.mrb[0].mxu0
      %v768 = vadd.f32 %v598, %v767
      %v769 = vpop.f32.mrb[0].mxu0
      %v770 = vadd.f32 %v594, %v769
      %v771 = vpop.f32.mrb[0].mxu0
      %v772 = vadd.f32 %v598, %v771
      %773 = vmatprep.mubr.bf16.mxu0 0
      %774 = vmatmul.mubr.bf16.gmra.mrb[0].mxu0 %v563
      %v775 = vpop.f32.mrb[0].mxu0
      %v776 = vadd.f32 %v594, %v775
      %v777 = vpop.f32.mrb[0].mxu0
      %v778 = vadd.f32 %v598, %v777
      %v779 = vpop.f32.mrb[0].mxu0
      %v780 = vadd.f32 %v594, %v779
      %v781 = vpop.f32.mrb[0].mxu0
      %v782 = vadd.f32 %v598, %v781
      %783 = vmatprep.mubr.bf16.mxu0 0
      %784 = vmatmul.mubr.bf16.gmra.mrb[0].mxu0 %v564
      %v785 = vpop.f32.mrb[0].mxu0
      %v786 = vadd.f32 %v594, %v785
      %v787 = vpop.f32.mrb[0].mxu0
      %v788 = vadd.f32 %v598, %v787
      %v789 = vpop.f32.mrb[0].mxu0
      %v790 = vadd.f32 %v594, %v789
      %v791 = vpop.f32.mrb[0].mxu0
      %v792 = vadd.f32 %v598, %v791
      %793 = vmatprep.mubr.bf16.mxu0 0
      %794 = vmatmul.mubr.bf16.gmra.mrb[0].mxu0 %v565
      %v795 = vpop.f32.mrb[0].mxu0
      %v796 = vadd.f32 %v594, %v795
      %v797 = vpop.f32.mrb[0].mxu0
      %v798 = vadd.f32 %v598, %v797
      %v799 = vpop.f32.mrb[0].mxu0
      %v800 = vadd.f32 %v594, %v799
      %v801 = vpop.f32.mrb[0].mxu0
      %v802 = vadd.f32 %v598, %v801
      %803 = vmatprep.mubr.bf16.mxu0 0
      %804 = vmatmul.mubr.bf16.gmra.mrb[0].mxu0 %v566
      %v805 = vpop.f32.mrb[0].mxu0
      %v806 = vadd.f32 %v594, %v805
      %v807 = vpop.f32.mrb[0].mxu0
      %v808 = vadd.f32 %v598, %v807
      %v809 = vpop.f32.mrb[0].mxu0
      %v810 = vadd.f32 %v594, %v809
      %v811 = vpop.f32.mrb[0].mxu0
      %v812 = vadd.f32 %v598, %v811
      %813 = vmatprep.mubr.bf16.mxu0 0
      %814 = vmatmul.mubr.bf16.gmra.mrb[0].mxu0 %v567
      %v815 = vpop.f32.mrb[0].mxu0
      %v816 = vadd.f32 %v594, %v815
      %v817 = vpop.f32.mrb[0].mxu0
      %v818 = vadd.f32 %v598, %v817
      %v819 = vpop.f32.mrb[0].mxu0
      %v820 = vadd.f32 %v594, %v819
      %v821 = vpop.f32.mrb[0].mxu0
      %v822 = vadd.f32 %v598, %v821
      %823 = vmatprep.mubr.bf16.mxu0 0
      %824 = vmatmul.mubr.bf16.gmra.mrb[0].mxu0 %v568
      %v825 = vpop.f32.mrb[0].mxu0
      %v826 = vadd.f32 %v594, %v825
      %v827 = vpop.f32.mrb[0].mxu0
      %v828 = vadd.f32 %v598, %v827
      %v829 = vpop.f32.mrb[0].mxu0
      %v830 = vadd.f32 %v594, %v829
      %v831 = vpop.f32.mrb[0].mxu0
      %v832 = vadd.f32 %v598, %v831
      %833 = vmatprep.mubr.bf16.mxu0 0
      %834 = vmatmul.mubr.bf16.gmra.mrb[0].mxu0 %v569
      %v835 = vpop.f32.mrb[0].mxu0
      %v836 = vadd.f32 %v594, %v835
      %v837 = vpop.f32.mrb[0].mxu0
      %v838 = vadd.f32 %v598, %v837
      %v839 = vpop.f32.mrb[0].mxu0
      %v840 = vadd.f32 %v594, %v839
      %v841 = vpop.f32.mrb[0].mxu0
      %v842 = vadd.f32 %v598, %v841
      %843 = vmatprep.mubr.bf16.mxu0 0
      %844 = vmatmul.mubr.bf16.gmra.mrb[0].mxu0 %v570
      %v845 = vpop.f32.mrb[0].mxu0
      %v846 = vadd.f32 %v594, %v845
      %v847 = vpop.f32.mrb[0].mxu0
      %v848 = vadd.f32 %v598, %v847
      %v849 = vpop.f32.mrb[0].mxu0
      %v850 = vadd.f32 %v594, %v849
      %v851 = vpop.f32.mrb[0].mxu0
      %v852 = vadd.f32 %v598, %v851
      %853 = vmatprep.mubr.bf16.mxu0 0
      %854 = vmatmul.mubr.bf16.gmra.mrb[0].mxu0 %v571
      %v855 = vpop.f32.mrb[0].mxu0
      %v856 = vadd.f32 %v594, %v855
      %v857 = vpop.f32.mrb[0].mxu0
      %v858 = vadd.f32 %v598, %v857
      %v859 = vpop.f32.mrb[0].mxu0
      %v860 = vadd.f32 %v594, %v859
      %v861 = vpop.f32.mrb[0].mxu0
      %v862 = vadd.f32 %v598, %v861
      %863 = vmatprep.mubr.bf16.mxu0 0
      %864 = vmatmul.mubr.bf16.gmra.mrb[0].mxu0 %v572
      %v865 = vpop.f32.mrb[0].mxu0
      %v866 = vadd.f32 %v594, %v865
      %v867 = vpop.f32.mrb[0].mxu0
      %v868 = vadd.f32 %v598, %v867
      %v869 = vpop.f32.mrb[0].mxu0
      %v870 = vadd.f32 %v594, %v869
      %v871 = vpop.f32.mrb[0].mxu0
      %v872 = vadd.f32 %v598, %v871
      %873 = vdwg.mxu0
      %v874 = vmax.f32 %v716, %v726
      %v875 = vmax.f32 %v720, %v730
      %v876 = vmax.f32 %v874, %v736
      %v877 = vmax.f32 %v875, %v740
      %v878 = vmax.f32 %v876, %v746
      %v879 = vmax.f32 %v877, %v750
      %v880 = vmax.f32 %v878, %v756
      %v881 = vmax.f32 %v879, %v760
      %v882 = vmax.f32 %v880, %v766
      %v883 = vmax.f32 %v881, %v770
      %v884 = vmax.f32 %v882, %v776
      %v885 = vmax.f32 %v883, %v780
      %v886 = vmax.f32 %v884, %v786
      %v887 = vmax.f32 %v885, %v790
      %v888 = vmax.f32 %v886, %v796
      %v889 = vmax.f32 %v887, %v800
      %v890 = vmax.f32 %v888, %v806
      %v891 = vmax.f32 %v889, %v810
      %v892 = vmax.f32 %v890, %v816
      %v893 = vmax.f32 %v891, %v820
      %v894 = vmax.f32 %v892, %v826
      %v895 = vmax.f32 %v893, %v830
      %v896 = vmax.f32 %v894, %v836
      %v897 = vmax.f32 %v895, %v840
      %v898 = vmax.f32 %v896, %v846
      %v899 = vmax.f32 %v897, %v850
      %v900 = vmax.f32 %v898, %v856
      %v901 = vmax.f32 %v899, %v860
      %v902 = vmax.f32 %v900, %v866
      %v903 = vmax.f32 %v901, %v870
      %v904 = vmax.f32 %v902, %v903
      %v905 = vrot.slane %v904, 4
      %v906 = vmax.f32 %v904, %v905
      %v907 = vrot.slane %v906, 2
      %v908 = vmax.f32 %v906, %v907
      %v909 = vrot.slane %v908, 1
      %v910 = vmax.f32 %v908, %v909
      %v911 = vmax.f32 %v718, %v728
      %v912 = vmax.f32 %v722, %v732
      %v913 = vmax.f32 %v911, %v738
      %v914 = vmax.f32 %v912, %v742
      %v915 = vmax.f32 %v913, %v748
      %v916 = vmax.f32 %v914, %v752
      %v917 = vmax.f32 %v915, %v758
      %v918 = vmax.f32 %v916, %v762
      %v919 = vmax.f32 %v917, %v768
      %v920 = vmax.f32 %v918, %v772
      %v921 = vmax.f32 %v919, %v778
      %v922 = vmax.f32 %v920, %v782
      %v923 = vmax.f32 %v921, %v788
      %v924 = vmax.f32 %v922, %v792
      %v925 = vmax.f32 %v923, %v798
      %v926 = vmax.f32 %v924, %v802
      %v927 = vmax.f32 %v925, %v808
      %v928 = vmax.f32 %v926, %v812
      %v929 = vmax.f32 %v927, %v818
      %v930 = vmax.f32 %v928, %v822
      %v931 = vmax.f32 %v929, %v828
      %v932 = vmax.f32 %v930, %v832
      %v933 = vmax.f32 %v931, %v838
      %v934 = vmax.f32 %v932, %v842
      %v935 = vmax.f32 %v933, %v848
      %v936 = vmax.f32 %v934, %v852
      %v937 = vmax.f32 %v935, %v858
      %v938 = vmax.f32 %v936, %v862
      %v939 = vmax.f32 %v937, %v868
      %v940 = vmax.f32 %v938, %v872
      %v941 = vmax.f32 %v939, %v940
      %v942 = vrot.slane %v941, 4
      %v943 = vmax.f32 %v941, %v942
      %v944 = vrot.slane %v943, 2
      %v945 = vmax.f32 %v943, %v944
      %v946 = vrot.slane %v945, 1
      %v947 = vmax.f32 %v945, %v946
      %p948 = scmp.eq.s32.totalorder %s21, 0
      // Predicated region
      $region41: #{ugaan_d_forward.2} parent=39 // pred_check
        %p949 = pneg %p948
      $region42: #{ugaan_d_forward.2} parent=39 // pred_check_branch
        %951 = sbr.rel (%p949) target = $region44
      $region43: #{ugaan_d_forward.2} parent=39 // pred_region
        %v954 = vcombine.low %v910, %v947
        %v956 = vunpack.c.l.s4 1966171168
        %v957 = vunpack.c.0.s8 %v956
        %v958 = vlaneseq
        %v959 = vshrl.u32 %v958, 7
        %v960 = vsub.s32 %v957, %v959
        %v961 = vrot.slane %v954, %v960
        %v963 = vunpack.c.l.s4 1966171168
        %v964 = vunpack.c.0.s8 %v963
        %v965 = vlaneseq
        %v966 = vshrl.u32 %v965, 7
        %v967 = vsub.s32 %v964, %v966
        %v968 = vrot.slane %v961, %v967
        %v970 = vlaneseq
        %vm971 = vcmp.ge.s32.totalorder %v970, 0
        %vm972 = vcmp.lt.s32.totalorder %v970, 256
        %vm973 = vmand %vm971, %vm972
        %974 = vst.msk [vmem:[%s250] sm:$0x3] %vm973, %v968
      $region44: #{ugaan_d_forward.2} parent=39 // pred_fallthru
        _
      %p975 = scmp.ne.s32.totalorder %s21, 0
      // Predicated region
      $region45: #{ugaan_d_forward.2} parent=39 // pred_check
        %p976 = pneg %p975
      $region46: #{ugaan_d_forward.2} parent=39 // pred_check_branch
        %978 = sbr.rel (%p976) target = $region48
      $region47: #{ugaan_d_forward.2} parent=39 // pred_region
        %v979 = vld [vmem:[%s250] sm:$0x3]
        %v982 = vcombine.low %v910, %v947
        %v984 = vunpack.c.l.s4 1966171168
        %v985 = vunpack.c.0.s8 %v984
        %v986 = vlaneseq
        %v987 = vshrl.u32 %v986, 7
        %v988 = vsub.s32 %v985, %v987
        %v989 = vrot.slane %v982, %v988
        %v991 = vunpack.c.l.s4 1966171168
        %v992 = vunpack.c.0.s8 %v991
        %v993 = vlaneseq
        %v994 = vshrl.u32 %v993, 7
        %v995 = vsub.s32 %v992, %v994
        %v996 = vrot.slane %v989, %v995
        %v998 = vmax.f32 %v979, %v996
        %v999 = vlaneseq
        %vm1000 = vcmp.ge.s32.totalorder %v999, 0
        %vm1001 = vcmp.lt.s32.totalorder %v999, 256
        %vm1002 = vmand %vm1000, %vm1001
        %1003 = vst.msk [vmem:[%s250] sm:$0x3] %vm1002, %v998
      $region48: #{ugaan_d_forward.2} parent=39 // pred_fallthru
        _
      %p1004 = scmp.lt.s32.totalorder %s20, 1
      %s1005 = scalar_select %p1004, %s20, 1
      %s1006 = smul.addr %s1005, 2
      %s1007 = scalar_lea.vmem %s5, %s1006
      // Predicated region
      $region49: #{ugaan_d_forward.2} parent=39 // pred_check
        %p1008 = pneg %p158
      $region50: #{ugaan_d_forward.2} parent=39 // pred_check_branch
        %1010 = sbr.rel (%p1008) target = $region52
      $region51: #{ugaan_d_forward.2} parent=39 // pred_region
        _
      $region52: #{ugaan_d_forward.2} parent=39 // pred_fallthru
        _
    $region40: #{ugaan_d_forward.2} parent=5 // pred_fallthru
      _
    %p1011 = scmp.le.s32.totalorder 2, %s11
    // Predicated region
    $region53: #{ugaan_d_forward.2} parent=5 // pred_check
      %p1012 = pneg %p1011
    $region54: #{ugaan_d_forward.2} parent=5 // pred_check_branch
      %1014 = sbr.rel (%p1012) target = $region56
    $region55: #{ugaan_d_forward.2} parent=5 // pred_region
      %s1015 = ssub.s32 %s11, 2
      // Predicated region
      $region57: #{ugaan_d_forward.2} parent=55 // pred_check
        %p1016 = pneg %p164
      $region58: #{ugaan_d_forward.2} parent=55 // pred_check_branch
        %1018 = sbr.rel (%p1016) target = $region60
      $region59: #{ugaan_d_forward.2} parent=55 // pred_region
        %p1019 = scmp.lt.s32.totalorder %s22, 1
        %s1020 = scalar_select %p1019, %s22, 1
        %s1021 = smul.addr %s1020, 2
        %s1022 = scalar_lea.vmem %s5, %s1021
      $region60: #{ugaan_d_forward.2} parent=55 // pred_fallthru
        _
    $region56: #{ugaan_d_forward.2} parent=5 // pred_fallthru
      _
  $region6: #{ugaan_d_forward.2} parent=0 // loop_footer
    %s15 = sadd.s32 1, %s11
  $region7: #{ugaan_d_forward.2} parent=0 // loop_footer_branch
    %10 = sbr.rel target = $region3
  $region8: #{ugaan_d_forward.2} parent=0 // loop_exit
    _

// kernel: ugaan_d_forward.3
$region0: #{ugaan_d_forward.3}
  #allocation0 [shape = 'u32[]', space=smem, size = 0x4, offset = 0x4, fixed_abs, tag = 'smem constant byte address 0x4 - core index']
  #allocation1 [shape = 'u32[144,128]{1,0:T(1,128)}', space=vmem, size = 0x12000, scoped, tag = 'internal scratch']
  #allocation2 [shape = 'f32[1,512]{1,0:T(1,128)}', space=vmem, size = 0x800, scoped, tag = 'scratch operand']
  #allocation3 [shape = 'f32[1,1024]{1,0:T(1,128)}', space=vmem, size = 0x1000, scoped, tag = 'scratch operand']
  #allocation4 [shape = 'f32[1,1]{1,0:T(1,128)S(1)}', space=vmem, size = 0x200, scoped, tag = 'scoped memory for ugaan_d_forward.3']
  %s0 = inlined_call_operand.vmem [shape: f32[2,256,3], index: 0, kind: input, shape index: {}]
  %s1 = inlined_call_operand.vmem [shape: f32[2,1,256], index: 1, kind: input, shape index: {}]
  %s2 = inlined_call_operand.vmem [shape: f32[2,1,256], index: 2, kind: input, shape index: {}]
  %s3 = inlined_call_operand.vmem [shape: bf16[3,128], index: 3, kind: input, shape index: {}]
  %s4 = inlined_call_operand.vmem [shape: f32[1,128], index: 4, kind: input, shape index: {}]
  %s5 = inlined_call_operand.vmem [shape: bf16[128,256], index: 5, kind: input, shape index: {}]
  %s6 = inlined_call_operand.vmem [shape: f32[1,256], index: 6, kind: input, shape index: {}]
  %s7 = inlined_call_operand.hbm [shape: bf16[256,512], index: 7, kind: input, shape index: {}]
  %s8 = inlined_call_operand.hbm [shape: bf16[256,512], index: 8, kind: input, shape index: {}]
  %s9 = inlined_call_operand.hbm [shape: f32[1,512], index: 9, kind: input, shape index: {}]
  %s10 = inlined_call_operand.vmem [shape: bf16[512,1024], index: 10, kind: input, shape index: {}]
  %s11 = inlined_call_operand.vmem [shape: f32[1,1024], index: 11, kind: input, shape index: {}]
  %s12 = inlined_call_operand.vmem [shape: bf16[1024,64], index: 12, kind: input, shape index: {}]
  %s13 = inlined_call_operand.vmem [shape: bf16[256,64], index: 13, kind: input, shape index: {}]
  %s14 = inlined_call_operand.vmem [shape: f32[1,64], index: 14, kind: input, shape index: {}]
  %s15 = inlined_call_operand.hbm [shape: bf16[64,64], index: 15, kind: input, shape index: {}]
  %s16 = inlined_call_operand.vmem [shape: f32[1,64], index: 16, kind: input, shape index: {}]
  %s17 = inlined_call_operand.vmem [shape: bf16[64,1], index: 17, kind: input, shape index: {}]
  %s18 = inlined_call_operand.<no memory space> [shape: f32[1,1], index: 18, kind: input, shape index: {}]
  %s19 = inlined_call_operand.vmem [shape: f32[2,1,1], index: 19, kind: output, shape index: {}]
  %s20 = sld [smem:[#allocation0]]
  $region141: #{ugaan_d_forward.3} parent=0
    _
  %s22 = ssub.s32 1, %s20
  %s23 = scalar_select 0, %s22, %s20
  %v24 = vstv %s18
  %25 = vst [vmem:[#allocation4] sm:$0x1] %v24
  $region1: #{ugaan_d_forward.3} parent=0
    #allocation5 [shape = 'u8[262144]{0}', space=vmem, size = 0x40000, scoped, tag = 'input window, operand 7, single buffered']
    #allocation6 [shape = 's32[2]{0}', space=sflag, size = 0x8, scoped, tag = 'scoped memory for ugaan_d_forward.3']
    #allocation7 [shape = 'u8[262144]{0}', space=vmem, size = 0x40000, scoped, tag = 'input window, operand 8, single buffered']
    #allocation8 [shape = 's32[1]{0}', space=sflag, size = 0x4, scoped, tag = 'scoped memory for ugaan_d_forward.3']
    #allocation9 [shape = 'u8[2048]{0}', space=vmem, size = 0x800, scoped, tag = 'input window, operand 9, single buffered']
    #allocation10 [shape = 'u8[16384]{0}', space=vmem, size = 0x4000, scoped, tag = 'input window, operand 15, single buffered']
    #allocation11 [shape = 's32[1]{0}', space=sflag, size = 0x4, scoped, tag = 'scoped memory for ugaan_d_forward.3']
    %26 = vsyncpa [#allocation6], 0
    %27 = vsyncpa [#allocation8], 0
    %28 = vsyncpa [#allocation11], 0
    loop: start=0, step=1, limit=4
    $region2: #{ugaan_d_forward.3} parent=1 // loop_pre_header
      _
    $region3: #{ugaan_d_forward.3} parent=1 // loop_header
      %s30 = sphi 0, %s34
      %p31 = scmp.ge.s32.totalorder %s30, 4
      %s37 = sphi 0, %s49
      %s38 = sphi 0, %s45
      %s39 = sphi 0, %s37
      %s40 = sphi 0, %s38
      %s41 = sphi 0, %s39
      %s42 = sphi 0, %s40
      %s54 = sphi 0, %s56
      %s57 = sphi 0, %s54
      %s58 = sphi 0, %s57
      %s74 = sphi 0, %s58
      %s80 = sphi 0, %s82
      %s83 = sphi 0, %s80
      %s84 = sphi 0, %s83
      %s100 = sphi 0, %s84
      %s106 = sphi 0, %s108
      %s109 = sphi 0, %s106
      %s110 = sphi 0, %s109
      %s126 = sphi 0, %s110
      %s130 = sphi 0, %s130
      %s132 = sphi 0, %s130
      %s133 = sphi 0, %s132
      %s147 = sphi 0, %s133
      %s151 = sphi 0, %s151
      %s153 = sphi 0, %s151
      %s154 = sphi 0, %s153
      %s168 = sphi 0, %s154
      %s172 = sphi 0, %s172
      %s174 = sphi 0, %s172
      %s175 = sphi 0, %s174
      %s189 = sphi 0, %s175
      %s193 = sphi 0, %s193
      %s195 = sphi 0, %s193
      %s196 = sphi 0, %s195
      %s210 = sphi 0, %s196
      %s214 = sphi 0, %s214
      %s216 = sphi 0, %s214
      %s217 = sphi 0, %s216
      %s231 = sphi 0, %s217
      %s235 = sphi 0, %s235
      %s237 = sphi 0, %s235
      %s238 = sphi 0, %s237
      %s252 = sphi 0, %s238
      %s256 = sphi 0, %s256
      %s258 = sphi 0, %s256
      %s259 = sphi 0, %s258
      %s273 = sphi 0, %s259
      %s277 = sphi 0, %s277
      %s279 = sphi 0, %s277
      %s280 = sphi 0, %s279
      %s294 = sphi 0, %s280
      %s298 = sphi 0, %s298
      %s300 = sphi 0, %s298
      %s301 = sphi 0, %s300
      %s315 = sphi 0, %s301
      %s319 = sphi 0, %s319
      %s321 = sphi 0, %s319
      %s322 = sphi 0, %s321
      %s336 = sphi 0, %s322
      %s340 = sphi 0, %s340
      %s342 = sphi 0, %s340
      %s343 = sphi 0, %s342
      %s357 = sphi 0, %s343
      %s361 = sphi 0, %s361
      %s363 = sphi 0, %s361
      %s364 = sphi 0, %s363
      %s378 = sphi 0, %s364
      %s382 = sphi 0, %s382
      %s384 = sphi 0, %s382
      %s385 = sphi 0, %s384
      %s399 = sphi 0, %s385
      %s403 = sphi 0, %s403
      %s405 = sphi 0, %s403
      %s406 = sphi 0, %s405
      %s420 = sphi 0, %s406
      %s424 = sphi 0, %s424
      %s426 = sphi 0, %s424
      %s427 = sphi 0, %s426
      %s441 = sphi 0, %s427
      %s445 = sphi 0, %s445
      %s447 = sphi 0, %s445
      %s448 = sphi 0, %s447
      %s462 = sphi 0, %s448
      %s468 = sphi 0, %s470
      %s471 = sphi 0, %s468
      %s472 = sphi 0, %s471
      %s488 = sphi 0, %s472
    $region4: #{ugaan_d_forward.3} parent=1 // loop_header_branch
      %33 = sbr.rel (%p31) target = $region8
    $region5: #{ugaan_d_forward.3} parent=1 // loop_body
      %s35 = ssub.s32 %s30, 1
      %s36 = ssub.s32 %s30, 2
      %s43 = sadd.s32 1, %s38
      %p44 = scmp.ge.s32.totalorder %s43, 1
      %s45 = scalar_select %p44, 0, %s43
      %s46 = sadd.s32 1, %s37
      %s47 = scalar_select %p44, %s46, %s37
      %p48 = scmp.ge.s32.totalorder %s47, 2
      %s49 = scalar_select %p48, 0, %s47
      %s50 = ssub.s32 %s37, %s49
      %s51 = ssub.s32 %s38, %s45
      %s52 = sor.u32 %s50, %s51
      %p53 = scmp.eq.s32.totalorder %s52, 0
      %s55 = sadd.s32 %s54, 1
      %s56 = scalar_select %p53, %s54, %s55
      %p59 = pneg %p53
      %p60 = scmp.eq.s32.totalorder %s30, 1
      %p61 = por %p59, %p60
      %p62 = scmp.ne.s32.totalorder %s54, %s57
      %p63 = scmp.eq.s32.totalorder %s30, 0
      %p64 = por %p62, %p63
      %p65 = scmp.ne.s32.totalorder %s54, %s57
      %p66 = scmp.eq.s32.totalorder %s35, 1
      %p67 = por %p65, %p66
      %p68 = scmp.ne.s32.totalorder %s57, %s58
      %p69 = scmp.eq.s32.totalorder %s35, 0
      %p70 = por %p68, %p69
      %p71 = scmp.ne.s32.totalorder %s57, %s58
      %p72 = scmp.eq.s32.totalorder %s36, 1
      %p73 = por %p71, %p72
      %p75 = scmp.ne.s32.totalorder %s58, %s74
      %p76 = scmp.eq.s32.totalorder %s36, 0
      %p77 = por %p75, %p76
      %s78 = ssub.s32 %s37, %s49
      %p79 = scmp.eq.s32.totalorder %s78, 0
      %s81 = sadd.s32 %s80, 1
      %s82 = scalar_select %p79, %s80, %s81
      %p85 = pneg %p79
      %p86 = scmp.eq.s32.totalorder %s30, 1
      %p87 = por %p85, %p86
      %p88 = scmp.ne.s32.totalorder %s80, %s83
      %p89 = scmp.eq.s32.totalorder %s30, 0
      %p90 = por %p88, %p89
      %p91 = scmp.ne.s32.totalorder %s80, %s83
      %p92 = scmp.eq.s32.totalorder %s35, 1
      %p93 = por %p91, %p92
      %p94 = scmp.ne.s32.totalorder %s83, %s84
      %p95 = scmp.eq.s32.totalorder %s35, 0
      %p96 = por %p94, %p95
      %p97 = scmp.ne.s32.totalorder %s83, %s84
      %p98 = scmp.eq.s32.totalorder %s36, 1
      %p99 = por %p97, %p98
      %p101 = scmp.ne.s32.totalorder %s84, %s100
      %p102 = scmp.eq.s32.totalorder %s36, 0
      %p103 = por %p101, %p102
      %s104 = ssub.s32 %s37, %s49
      %p105 = scmp.eq.s32.totalorder %s104, 0
      %s107 = sadd.s32 %s106, 1
      %s108 = scalar_select %p105, %s106, %s107
      %p111 = pneg %p105
      %p112 = scmp.eq.s32.totalorder %s30, 1
      %p113 = por %p111, %p112
      %p114 = scmp.ne.s32.totalorder %s106, %s109
      %p115 = scmp.eq.s32.totalorder %s30, 0
      %p116 = por %p114, %p115
      %p117 = scmp.ne.s32.totalorder %s106, %s109
      %p118 = scmp.eq.s32.totalorder %s35, 1
      %p119 = por %p117, %p118
      %p120 = scmp.ne.s32.totalorder %s109, %s110
      %p121 = scmp.eq.s32.totalorder %s35, 0
      %p122 = por %p120, %p121
      %p123 = scmp.ne.s32.totalorder %s109, %s110
      %p124 = scmp.eq.s32.totalorder %s36, 1
      %p125 = por %p123, %p124
      %p127 = scmp.ne.s32.totalorder %s110, %s126
      %p128 = scmp.eq.s32.totalorder %s36, 0
      %p129 = por %p127, %p128
      %s131 = sadd.s32 %s130, 1
      %p134 = scmp.eq.s32.totalorder %s30, 1
      %p135 = scmp.ne.s32.totalorder %s130, %s132
      %p136 = scmp.eq.s32.totalorder %s30, 0
      %p137 = por %p135, %p136
      %p138 = scmp.ne.s32.totalorder %s130, %s132
      %p139 = scmp.eq.s32.totalorder %s35, 1
      %p140 = por %p138, %p139
      %p141 = scmp.ne.s32.totalorder %s132, %s133
      %p142 = scmp.eq.s32.totalorder %s35, 0
      %p143 = por %p141, %p142
      %p144 = scmp.ne.s32.totalorder %s132, %s133
      %p145 = scmp.eq.s32.totalorder %s36, 1
      %p146 = por %p144, %p145
      %p148 = scmp.ne.s32.totalorder %s133, %s147
      %p149 = scmp.eq.s32.totalorder %s36, 0
      %p150 = por %p148, %p149
      %s152 = sadd.s32 %s151, 1
      %p155 = scmp.eq.s32.totalorder %s30, 1
      %p156 = scmp.ne.s32.totalorder %s151, %s153
      %p157 = scmp.eq.s32.totalorder %s30, 0
      %p158 = por %p156, %p157
      %p159 = scmp.ne.s32.totalorder %s151, %s153
      %p160 = scmp.eq.s32.totalorder %s35, 1
      %p161 = por %p159, %p160
      %p162 = scmp.ne.s32.totalorder %s153, %s154
      %p163 = scmp.eq.s32.totalorder %s35, 0
      %p164 = por %p162, %p163
      %p165 = scmp.ne.s32.totalorder %s153, %s154
      %p166 = scmp.eq.s32.totalorder %s36, 1
      %p167 = por %p165, %p166
      %p169 = scmp.ne.s32.totalorder %s154, %s168
      %p170 = scmp.eq.s32.totalorder %s36, 0
      %p171 = por %p169, %p170
      %s173 = sadd.s32 %s172, 1
      %p176 = scmp.eq.s32.totalorder %s30, 1
      %p177 = scmp.ne.s32.totalorder %s172, %s174
      %p178 = scmp.eq.s32.totalorder %s30, 0
      %p179 = por %p177, %p178
      %p180 = scmp.ne.s32.totalorder %s172, %s174
      %p181 = scmp.eq.s32.totalorder %s35, 1
      %p182 = por %p180, %p181
      %p183 = scmp.ne.s32.totalorder %s174, %s175
      %p184 = scmp.eq.s32.totalorder %s35, 0
      %p185 = por %p183, %p184
      %p186 = scmp.ne.s32.totalorder %s174, %s175
      %p187 = scmp.eq.s32.totalorder %s36, 1
      %p188 = por %p186, %p187
      %p190 = scmp.ne.s32.totalorder %s175, %s189
      %p191 = scmp.eq.s32.totalorder %s36, 0
      %p192 = por %p190, %p191
      %s194 = sadd.s32 %s193, 1
      %p197 = scmp.eq.s32.totalorder %s30, 1
      %p198 = scmp.ne.s32.totalorder %s193, %s195
      %p199 = scmp.eq.s32.totalorder %s30, 0
      %p200 = por %p198, %p199
      %p201 = scmp.ne.s32.totalorder %s193, %s195
      %p202 = scmp.eq.s32.totalorder %s35, 1
      %p203 = por %p201, %p202
      %p204 = scmp.ne.s32.totalorder %s195, %s196
      %p205 = scmp.eq.s32.totalorder %s35, 0
      %p206 = por %p204, %p205
      %p207 = scmp.ne.s32.totalorder %s195, %s196
      %p208 = scmp.eq.s32.totalorder %s36, 1
      %p209 = por %p207, %p208
      %p211 = scmp.ne.s32.totalorder %s196, %s210
      %p212 = scmp.eq.s32.totalorder %s36, 0
      %p213 = por %p211, %p212
      %s215 = sadd.s32 %s214, 1
      %p218 = scmp.eq.s32.totalorder %s30, 1
      %p219 = scmp.ne.s32.totalorder %s214, %s216
      %p220 = scmp.eq.s32.totalorder %s30, 0
      %p221 = por %p219, %p220
      %p222 = scmp.ne.s32.totalorder %s214, %s216
      %p223 = scmp.eq.s32.totalorder %s35, 1
      %p224 = por %p222, %p223
      %p225 = scmp.ne.s32.totalorder %s216, %s217
      %p226 = scmp.eq.s32.totalorder %s35, 0
      %p227 = por %p225, %p226
      %p228 = scmp.ne.s32.totalorder %s216, %s217
      %p229 = scmp.eq.s32.totalorder %s36, 1
      %p230 = por %p228, %p229
      %p232 = scmp.ne.s32.totalorder %s217, %s231
      %p233 = scmp.eq.s32.totalorder %s36, 0
      %p234 = por %p232, %p233
      %s236 = sadd.s32 %s235, 1
      %p239 = scmp.eq.s32.totalorder %s30, 1
      %p240 = scmp.ne.s32.totalorder %s235, %s237
      %p241 = scmp.eq.s32.totalorder %s30, 0
      %p242 = por %p240, %p241
      %p243 = scmp.ne.s32.totalorder %s235, %s237
      %p244 = scmp.eq.s32.totalorder %s35, 1
      %p245 = por %p243, %p244
      %p246 = scmp.ne.s32.totalorder %s237, %s238
      %p247 = scmp.eq.s32.totalorder %s35, 0
      %p248 = por %p246, %p247
      %p249 = scmp.ne.s32.totalorder %s237, %s238
      %p250 = scmp.eq.s32.totalorder %s36, 1
      %p251 = por %p249, %p250
      %p253 = scmp.ne.s32.totalorder %s238, %s252
      %p254 = scmp.eq.s32.totalorder %s36, 0
      %p255 = por %p253, %p254
      %s257 = sadd.s32 %s256, 1
      %p260 = scmp.eq.s32.totalorder %s30, 1
      %p261 = scmp.ne.s32.totalorder %s256, %s258
      %p262 = scmp.eq.s32.totalorder %s30, 0
      %p263 = por %p261, %p262
      %p264 = scmp.ne.s32.totalorder %s256, %s258
      %p265 = scmp.eq.s32.totalorder %s35, 1
      %p266 = por %p264, %p265
      %p267 = scmp.ne.s32.totalorder %s258, %s259
      %p268 = scmp.eq.s32.totalorder %s35, 0
      %p269 = por %p267, %p268
      %p270 = scmp.ne.s32.totalorder %s258, %s259
      %p271 = scmp.eq.s32.totalorder %s36, 1
      %p272 = por %p270, %p271
      %p274 = scmp.ne.s32.totalorder %s259, %s273
      %p275 = scmp.eq.s32.totalorder %s36, 0
      %p276 = por %p274, %p275
      %s278 = sadd.s32 %s277, 1
      %p281 = scmp.eq.s32.totalorder %s30, 1
      %p282 = scmp.ne.s32.totalorder %s277, %s279
      %p283 = scmp.eq.s32.totalorder %s30, 0
      %p284 = por %p282, %p283
      %p285 = scmp.ne.s32.totalorder %s277, %s279
      %p286 = scmp.eq.s32.totalorder %s35, 1
      %p287 = por %p285, %p286
      %p288 = scmp.ne.s32.totalorder %s279, %s280
      %p289 = scmp.eq.s32.totalorder %s35, 0
      %p290 = por %p288, %p289
      %p291 = scmp.ne.s32.totalorder %s279, %s280
      %p292 = scmp.eq.s32.totalorder %s36, 1
      %p293 = por %p291, %p292
      %p295 = scmp.ne.s32.totalorder %s280, %s294
      %p296 = scmp.eq.s32.totalorder %s36, 0
      %p297 = por %p295, %p296
      %s299 = sadd.s32 %s298, 1
      %p302 = scmp.eq.s32.totalorder %s30, 1
      %p303 = scmp.ne.s32.totalorder %s298, %s300
      %p304 = scmp.eq.s32.totalorder %s30, 0
      %p305 = por %p303, %p304
      %p306 = scmp.ne.s32.totalorder %s298, %s300
      %p307 = scmp.eq.s32.totalorder %s35, 1
      %p308 = por %p306, %p307
      %p309 = scmp.ne.s32.totalorder %s300, %s301
      %p310 = scmp.eq.s32.totalorder %s35, 0
      %p311 = por %p309, %p310
      %p312 = scmp.ne.s32.totalorder %s300, %s301
      %p313 = scmp.eq.s32.totalorder %s36, 1
      %p314 = por %p312, %p313
      %p316 = scmp.ne.s32.totalorder %s301, %s315
      %p317 = scmp.eq.s32.totalorder %s36, 0
      %p318 = por %p316, %p317
      %s320 = sadd.s32 %s319, 1
      %p323 = scmp.eq.s32.totalorder %s30, 1
      %p324 = scmp.ne.s32.totalorder %s319, %s321
      %p325 = scmp.eq.s32.totalorder %s30, 0
      %p326 = por %p324, %p325
      %p327 = scmp.ne.s32.totalorder %s319, %s321
      %p328 = scmp.eq.s32.totalorder %s35, 1
      %p329 = por %p327, %p328
      %p330 = scmp.ne.s32.totalorder %s321, %s322
      %p331 = scmp.eq.s32.totalorder %s35, 0
      %p332 = por %p330, %p331
      %p333 = scmp.ne.s32.totalorder %s321, %s322
      %p334 = scmp.eq.s32.totalorder %s36, 1
      %p335 = por %p333, %p334
      %p337 = scmp.ne.s32.totalorder %s322, %s336
      %p338 = scmp.eq.s32.totalorder %s36, 0
      %p339 = por %p337, %p338
      %s341 = sadd.s32 %s340, 1
      %p344 = scmp.eq.s32.totalorder %s30, 1
      %p345 = scmp.ne.s32.totalorder %s340, %s342
      %p346 = scmp.eq.s32.totalorder %s30, 0
      %p347 = por %p345, %p346
      %p348 = scmp.ne.s32.totalorder %s340, %s342
      %p349 = scmp.eq.s32.totalorder %s35, 1
      %p350 = por %p348, %p349
      %p351 = scmp.ne.s32.totalorder %s342, %s343
      %p352 = scmp.eq.s32.totalorder %s35, 0
      %p353 = por %p351, %p352
      %p354 = scmp.ne.s32.totalorder %s342, %s343
      %p355 = scmp.eq.s32.totalorder %s36, 1
      %p356 = por %p354, %p355
      %p358 = scmp.ne.s32.totalorder %s343, %s357
      %p359 = scmp.eq.s32.totalorder %s36, 0
      %p360 = por %p358, %p359
      %s362 = sadd.s32 %s361, 1
      %p365 = scmp.eq.s32.totalorder %s30, 1
      %p366 = scmp.ne.s32.totalorder %s361, %s363
      %p367 = scmp.eq.s32.totalorder %s30, 0
      %p368 = por %p366, %p367
      %p369 = scmp.ne.s32.totalorder %s361, %s363
      %p370 = scmp.eq.s32.totalorder %s35, 1
      %p371 = por %p369, %p370
      %p372 = scmp.ne.s32.totalorder %s363, %s364
      %p373 = scmp.eq.s32.totalorder %s35, 0
      %p374 = por %p372, %p373
      %p375 = scmp.ne.s32.totalorder %s363, %s364
      %p376 = scmp.eq.s32.totalorder %s36, 1
      %p377 = por %p375, %p376
      %p379 = scmp.ne.s32.totalorder %s364, %s378
      %p380 = scmp.eq.s32.totalorder %s36, 0
      %p381 = por %p379, %p380
      %s383 = sadd.s32 %s382, 1
      %p386 = scmp.eq.s32.totalorder %s30, 1
      %p387 = scmp.ne.s32.totalorder %s382, %s384
      %p388 = scmp.eq.s32.totalorder %s30, 0
      %p389 = por %p387, %p388
      %p390 = scmp.ne.s32.totalorder %s382, %s384
      %p391 = scmp.eq.s32.totalorder %s35, 1
      %p392 = por %p390, %p391
      %p393 = scmp.ne.s32.totalorder %s384, %s385
      %p394 = scmp.eq.s32.totalorder %s35, 0
      %p395 = por %p393, %p394
      %p396 = scmp.ne.s32.totalorder %s384, %s385
      %p397 = scmp.eq.s32.totalorder %s36, 1
      %p398 = por %p396, %p397
      %p400 = scmp.ne.s32.totalorder %s385, %s399
      %p401 = scmp.eq.s32.totalorder %s36, 0
      %p402 = por %p400, %p401
      %s404 = sadd.s32 %s403, 1
      %p407 = scmp.eq.s32.totalorder %s30, 1
      %p408 = scmp.ne.s32.totalorder %s403, %s405
      %p409 = scmp.eq.s32.totalorder %s30, 0
      %p410 = por %p408, %p409
      %p411 = scmp.ne.s32.totalorder %s403, %s405
      %p412 = scmp.eq.s32.totalorder %s35, 1
      %p413 = por %p411, %p412
      %p414 = scmp.ne.s32.totalorder %s405, %s406
      %p415 = scmp.eq.s32.totalorder %s35, 0
      %p416 = por %p414, %p415
      %p417 = scmp.ne.s32.totalorder %s405, %s406
      %p418 = scmp.eq.s32.totalorder %s36, 1
      %p419 = por %p417, %p418
      %p421 = scmp.ne.s32.totalorder %s406, %s420
      %p422 = scmp.eq.s32.totalorder %s36, 0
      %p423 = por %p421, %p422
      %s425 = sadd.s32 %s424, 1
      %p428 = scmp.eq.s32.totalorder %s30, 1
      %p429 = scmp.ne.s32.totalorder %s424, %s426
      %p430 = scmp.eq.s32.totalorder %s30, 0
      %p431 = por %p429, %p430
      %p432 = scmp.ne.s32.totalorder %s424, %s426
      %p433 = scmp.eq.s32.totalorder %s35, 1
      %p434 = por %p432, %p433
      %p435 = scmp.ne.s32.totalorder %s426, %s427
      %p436 = scmp.eq.s32.totalorder %s35, 0
      %p437 = por %p435, %p436
      %p438 = scmp.ne.s32.totalorder %s426, %s427
      %p439 = scmp.eq.s32.totalorder %s36, 1
      %p440 = por %p438, %p439
      %p442 = scmp.ne.s32.totalorder %s427, %s441
      %p443 = scmp.eq.s32.totalorder %s36, 0
      %p444 = por %p442, %p443
      %s446 = sadd.s32 %s445, 1
      %p449 = scmp.eq.s32.totalorder %s30, 1
      %p450 = scmp.ne.s32.totalorder %s445, %s447
      %p451 = scmp.eq.s32.totalorder %s30, 0
      %p452 = por %p450, %p451
      %p453 = scmp.ne.s32.totalorder %s445, %s447
      %p454 = scmp.eq.s32.totalorder %s35, 1
      %p455 = por %p453, %p454
      %p456 = scmp.ne.s32.totalorder %s447, %s448
      %p457 = scmp.eq.s32.totalorder %s35, 0
      %p458 = por %p456, %p457
      %p459 = scmp.ne.s32.totalorder %s447, %s448
      %p460 = scmp.eq.s32.totalorder %s36, 1
      %p461 = por %p459, %p460
      %p463 = scmp.ne.s32.totalorder %s448, %s462
      %p464 = scmp.eq.s32.totalorder %s36, 0
      %p465 = por %p463, %p464
      %s466 = ssub.s32 %s37, %s49
      %p467 = scmp.eq.s32.totalorder %s466, 0
      %s469 = sadd.s32 %s468, 1
      %s470 = scalar_select %p467, %s468, %s469
      %p473 = pneg %p467
      %p474 = scmp.eq.s32.totalorder %s30, 1
      %p475 = por %p473, %p474
      %p476 = scmp.ne.s32.totalorder %s468, %s471
      %p477 = scmp.eq.s32.totalorder %s30, 0
      %p478 = por %p476, %p477
      %p479 = scmp.ne.s32.totalorder %s468, %s471
      %p480 = scmp.eq.s32.totalorder %s35, 1
      %p481 = por %p479, %p480
      %p482 = scmp.ne.s32.totalorder %s471, %s472
      %p483 = scmp.eq.s32.totalorder %s35, 0
      %p484 = por %p482, %p483
      %p485 = scmp.ne.s32.totalorder %s471, %s472
      %p486 = scmp.eq.s32.totalorder %s36, 1
      %p487 = por %p485, %p486
      %p489 = scmp.ne.s32.totalorder %s472, %s488
      %p490 = scmp.eq.s32.totalorder %s36, 0
      %p491 = por %p489, %p490
      %p492 = scmp.le.s32.totalorder 1, %s30
      %p493 = scmp.lt.s32.totalorder %s30, 3
      %p494 = pnand %p492, %p493
      %p495 = pneg %p494
      // Predicated region
      $region9: #{ugaan_d_forward.3} parent=5 // pred_check
        _
      $region10: #{ugaan_d_forward.3} parent=5 // pred_check_branch
        %497 = sbr.rel (%p494) target = $region12
      $region11: #{ugaan_d_forward.3} parent=5 // pred_region
        %s498 = ssub.s32 %s30, 1
        // Predicated region
        $region13: #{ugaan_d_forward.3} parent=11 // pred_check
          %p499 = pneg %p143
        $region14: #{ugaan_d_forward.3} parent=11 // pred_check_branch
          %501 = sbr.rel (%p499) target = $region16
        $region15: #{ugaan_d_forward.3} parent=11 // pred_region
          _
        $region16: #{ugaan_d_forward.3} parent=11 // pred_fallthru
          _
        // Predicated region
        $region17: #{ugaan_d_forward.3} parent=11 // pred_check
          %p502 = pneg %p164
        $region18: #{ugaan_d_forward.3} parent=11 // pred_check_branch
          %504 = sbr.rel (%p502) target = $region20
        $region19: #{ugaan_d_forward.3} parent=11 // pred_region
          _
        $region20: #{ugaan_d_forward.3} parent=11 // pred_fallthru
          _
        // Predicated region
        $region21: #{ugaan_d_forward.3} parent=11 // pred_check
          %p505 = pneg %p185
        $region22: #{ugaan_d_forward.3} parent=11 // pred_check_branch
          %507 = sbr.rel (%p505) target = $region24
        $region23: #{ugaan_d_forward.3} parent=11 // pred_region
          _
        $region24: #{ugaan_d_forward.3} parent=11 // pred_fallthru
          _
        // Predicated region
        $region25: #{ugaan_d_forward.3} parent=11 // pred_check
          %p508 = pneg %p206
        $region26: #{ugaan_d_forward.3} parent=11 // pred_check_branch
          %510 = sbr.rel (%p508) target = $region28
        $region27: #{ugaan_d_forward.3} parent=11 // pred_region
          _
        $region28: #{ugaan_d_forward.3} parent=11 // pred_fallthru
          _
        // Predicated region
        $region29: #{ugaan_d_forward.3} parent=11 // pred_check
          %p511 = pneg %p227
        $region30: #{ugaan_d_forward.3} parent=11 // pred_check_branch
          %513 = sbr.rel (%p511) target = $region32
        $region31: #{ugaan_d_forward.3} parent=11 // pred_region
          %s515 = ssub.s32 8192, 8192
          %516 = vsyncadd [#allocation6], %s515
          %s517 = sshll.u32 [#allocation5], 4
          %s518 = int_to_ptr.vmem [resolvable:$true] %s517
          %523 = dma.hbm_to_vmem [thread:$0]  %s7, 8192, %s518, [#allocation6], 256, 256, 16
        $region32: #{ugaan_d_forward.3} parent=11 // pred_fallthru
          _
        // Predicated region
        $region33: #{ugaan_d_forward.3} parent=11 // pred_check
          %p524 = pneg %p248
        $region34: #{ugaan_d_forward.3} parent=11 // pred_check_branch
          %526 = sbr.rel (%p524) target = $region36
        $region35: #{ugaan_d_forward.3} parent=11 // pred_region
          %s528 = ssub.s32 8192, 8192
          %529 = vsyncadd [#allocation8], %s528
          %s530 = sshll.u32 [#allocation7], 4
          %s531 = int_to_ptr.vmem [resolvable:$true] %s530
          %536 = dma.hbm_to_vmem [thread:$0]  %s8, 8192, %s531, [#allocation8], 256, 256, 16
        $region36: #{ugaan_d_forward.3} parent=11 // pred_fallthru
          _
        // Predicated region
        $region37: #{ugaan_d_forward.3} parent=11 // pred_check
          %p537 = pneg %p269
        $region38: #{ugaan_d_forward.3} parent=11 // pred_check_branch
          %539 = sbr.rel (%p537) target = $region40
        $region39: #{ugaan_d_forward.3} parent=11 // pred_region
          %s541 = ssub.s32 64, 64
          %542 = vsyncadd [#allocation8], %s541
          %s544 = sshll.u32 [#allocation9], 4
          %s545 = int_to_ptr.vmem [resolvable:$true] %s544
          %547 = dma.hbm_to_vmem [thread:$0]  %s9, 64, %s545, [#allocation8]
        $region40: #{ugaan_d_forward.3} parent=11 // pred_fallthru
          _
        // Predicated region
        $region41: #{ugaan_d_forward.3} parent=11 // pred_check
          %p548 = pneg %p290
        $region42: #{ugaan_d_forward.3} parent=11 // pred_check_branch
          %550 = sbr.rel (%p548) target = $region44
        $region43: #{ugaan_d_forward.3} parent=11 // pred_region
          _
        $region44: #{ugaan_d_forward.3} parent=11 // pred_fallthru
          _
        // Predicated region
        $region45: #{ugaan_d_forward.3} parent=11 // pred_check
          %p551 = pneg %p311
        $region46: #{ugaan_d_forward.3} parent=11 // pred_check_branch
          %553 = sbr.rel (%p551) target = $region48
        $region47: #{ugaan_d_forward.3} parent=11 // pred_region
          _
        $region48: #{ugaan_d_forward.3} parent=11 // pred_fallthru
          _
        // Predicated region
        $region49: #{ugaan_d_forward.3} parent=11 // pred_check
          %p554 = pneg %p332
        $region50: #{ugaan_d_forward.3} parent=11 // pred_check_branch
          %556 = sbr.rel (%p554) target = $region52
        $region51: #{ugaan_d_forward.3} parent=11 // pred_region
          _
        $region52: #{ugaan_d_forward.3} parent=11 // pred_fallthru
          _
        // Predicated region
        $region53: #{ugaan_d_forward.3} parent=11 // pred_check
          %p557 = pneg %p353
        $region54: #{ugaan_d_forward.3} parent=11 // pred_check_branch
          %559 = sbr.rel (%p557) target = $region56
        $region55: #{ugaan_d_forward.3} parent=11 // pred_region
          _
        $region56: #{ugaan_d_forward.3} parent=11 // pred_fallthru
          _
        // Predicated region
        $region57: #{ugaan_d_forward.3} parent=11 // pred_check
          %p560 = pneg %p374
        $region58: #{ugaan_d_forward.3} parent=11 // pred_check_branch
          %562 = sbr.rel (%p560) target = $region60
        $region59: #{ugaan_d_forward.3} parent=11 // pred_region
          _
        $region60: #{ugaan_d_forward.3} parent=11 // pred_fallthru
          _
        // Predicated region
        $region61: #{ugaan_d_forward.3} parent=11 // pred_check
          %p563 = pneg %p395
        $region62: #{ugaan_d_forward.3} parent=11 // pred_check_branch
          %565 = sbr.rel (%p563) target = $region64
        $region63: #{ugaan_d_forward.3} parent=11 // pred_region
          %s567 = ssub.s32 512, 512
          %568 = vsyncadd [#allocation11], %s567
          %s569 = sshll.u32 [#allocation10], 4
          %s570 = int_to_ptr.vmem [resolvable:$true] %s569
          %575 = dma.hbm_to_vmem [thread:$0]  %s15, 512, %s570, [#allocation11], 64, 64, 4
        $region64: #{ugaan_d_forward.3} parent=11 // pred_fallthru
          _
        // Predicated region
        $region65: #{ugaan_d_forward.3} parent=11 // pred_check
          %p576 = pneg %p416
        $region66: #{ugaan_d_forward.3} parent=11 // pred_check_branch
          %578 = sbr.rel (%p576) target = $region68
        $region67: #{ugaan_d_forward.3} parent=11 // pred_region
          _
        $region68: #{ugaan_d_forward.3} parent=11 // pred_fallthru
          _
        // Predicated region
        $region69: #{ugaan_d_forward.3} parent=11 // pred_check
          %p579 = pneg %p437
        $region70: #{ugaan_d_forward.3} parent=11 // pred_check_branch
          %581 = sbr.rel (%p579) target = $region72
        $region71: #{ugaan_d_forward.3} parent=11 // pred_region
          _
        $region72: #{ugaan_d_forward.3} parent=11 // pred_fallthru
          _
        // Predicated region
        $region73: #{ugaan_d_forward.3} parent=11 // pred_check
          %p582 = pneg %p458
        $region74: #{ugaan_d_forward.3} parent=11 // pred_check_branch
          %584 = sbr.rel (%p582) target = $region76
        $region75: #{ugaan_d_forward.3} parent=11 // pred_region
          _
        $region76: #{ugaan_d_forward.3} parent=11 // pred_fallthru
          _
      $region12: #{ugaan_d_forward.3} parent=5 // pred_fallthru
        _
      %p585 = scmp.lt.s32.totalorder %s30, 2
      // Predicated region
      $region77: #{ugaan_d_forward.3} parent=5 // pred_check
        %p586 = pneg %p585
      $region78: #{ugaan_d_forward.3} parent=5 // pred_check_branch
        %588 = sbr.rel (%p586) target = $region80
      $region79: #{ugaan_d_forward.3} parent=5 // pred_region
        // Predicated region
        $region81: #{ugaan_d_forward.3} parent=79 // pred_check
          %p589 = pneg %p64
        $region82: #{ugaan_d_forward.3} parent=79 // pred_check_branch
          %591 = sbr.rel (%p589) target = $region84
        $region83: #{ugaan_d_forward.3} parent=79 // pred_region
          %s592 = smul.u32 32, %s38
          %p593 = scmp.lt.s32.totalorder %s37, 1
          %s594 = scalar_select %p593, %s37, 1
          %p595 = scmp.lt.s32.totalorder %s592, 31
          %s596 = scalar_select %p595, %s592, 31
          %s597 = smul.addr %s594, 32
          %s598 = sadd.s32 %s596, %s597
          %s599 = smul.addr %s598, 8
          %s600 = scalar_lea.vmem %s0, %s599
          %s601 = smul.u32 32, %s38
        $region84: #{ugaan_d_forward.3} parent=79 // pred_fallthru
          _
        // Predicated region
        $region85: #{ugaan_d_forward.3} parent=79 // pred_check
          %p602 = pneg %p90
        $region86: #{ugaan_d_forward.3} parent=79 // pred_check_branch
          %604 = sbr.rel (%p602) target = $region88
        $region87: #{ugaan_d_forward.3} parent=79 // pred_region
          %p605 = scmp.lt.s32.totalorder %s37, 1
          %s606 = scalar_select %p605, %s37, 1
          %s607 = smul.addr %s606, 2
          %s608 = scalar_lea.vmem %s1, %s607
        $region88: #{ugaan_d_forward.3} parent=79 // pred_fallthru
          _
        // Predicated region
        $region89: #{ugaan_d_forward.3} parent=79 // pred_check
          %p609 = pneg %p116
        $region90: #{ugaan_d_forward.3} parent=79 // pred_check_branch
          %611 = sbr.rel (%p609) target = $region92
        $region91: #{ugaan_d_forward.3} parent=79 // pred_region
          %p612 = scmp.lt.s32.totalorder %s37, 1
          %s613 = scalar_select %p612, %s37, 1
          %s614 = smul.addr %s613, 2
          %s615 = scalar_lea.vmem %s2, %s614
        $region92: #{ugaan_d_forward.3} parent=79 // pred_fallthru
          _
      $region80: #{ugaan_d_forward.3} parent=5 // pred_fallthru
        _
      %p616 = scmp.le.s32.totalorder 1, %s30
      %p617 = scmp.lt.s32.totalorder %s30, 3
      %p618 = pnand %p616, %p617
      %p619 = pneg %p618
      // Predicated region
      $region93: #{ugaan_d_forward.3} parent=5 // pred_check
        _
      $region94: #{ugaan_d_forward.3} parent=5 // pred_check_branch
        %621 = sbr.rel (%p618) target = $region96
      $region95: #{ugaan_d_forward.3} parent=5 // pred_region
        %s622 = ssub.s32 %s30, 1
        // Predicated region
        $region97: #{ugaan_d_forward.3} parent=95 // pred_check
          %p623 = pneg %p227
        $region98: #{ugaan_d_forward.3} parent=95 // pred_check_branch
          %625 = sbr.rel (%p623) target = $region100
        $region99: #{ugaan_d_forward.3} parent=95 // pred_region
          %626 = dma.done [#allocation6], 8192
        $region100: #{ugaan_d_forward.3} parent=95 // pred_fallthru
          _
        // Predicated region
        $region101: #{ugaan_d_forward.3} parent=95 // pred_check
          %p627 = pneg %p248
        $region102: #{ugaan_d_forward.3} parent=95 // pred_check_branch
          %629 = sbr.rel (%p627) target = $region104
        $region103: #{ugaan_d_forward.3} parent=95 // pred_region
          %630 = dma.done [#allocation8], 8192
        $region104: #{ugaan_d_forward.3} parent=95 // pred_fallthru
          _
        // Predicated region
        $region105: #{ugaan_d_forward.3} parent=95 // pred_check
          %p631 = pneg %p269
        $region106: #{ugaan_d_forward.3} parent=95 // pred_check_branch
          %633 = sbr.rel (%p631) target = $region108
        $region107: #{ugaan_d_forward.3} parent=95 // pred_region
          %634 = dma.done [#allocation8], 64
        $region108: #{ugaan_d_forward.3} parent=95 // pred_fallthru
          _
        // Predicated region
        $region109: #{ugaan_d_forward.3} parent=95 // pred_check
          %p635 = pneg %p395
        $region110: #{ugaan_d_forward.3} parent=95 // pred_check_branch
          %637 = sbr.rel (%p635) target = $region112
        $region111: #{ugaan_d_forward.3} parent=95 // pred_region
          %638 = dma.done [#allocation11], 512
        $region112: #{ugaan_d_forward.3} parent=95 // pred_fallthru
          _
        %s639 = smul.u32 32, %s40
        %p640 = scmp.lt.s32.totalorder %s39, 1
        %s641 = scalar_select %p640, %s39, 1
        %p642 = scmp.lt.s32.totalorder %s639, 31
        %s643 = scalar_select %p642, %s639, 31
        %s644 = smul.addr %s641, 32
        %s645 = sadd.s32 %s643, %s644
        %s646 = smul.addr %s645, 8
        %s647 = scalar_lea.vmem %s0, %s646
        %p648 = pneg %p70
        %p649 = pneg %p67
        %p650 = scmp.lt.s32.totalorder %s39, 1
        %s651 = scalar_select %p650, %s39, 1
        %s652 = smul.addr %s651, 2
        %s653 = scalar_lea.vmem %s1, %s652
        %p654 = pneg %p96
        %p655 = pneg %p93
        %p656 = scmp.lt.s32.totalorder %s39, 1
        %s657 = scalar_select %p656, %s39, 1
        %s658 = smul.addr %s657, 2
        %s659 = scalar_lea.vmem %s2, %s658
        %p660 = pneg %p122
        %p661 = pneg %p119
        %p662 = pneg %p143
        %p663 = pneg %p140
        %p664 = pneg %p164
        %p665 = pneg %p161
        %p666 = pneg %p185
        %p667 = pneg %p182
        %p668 = pneg %p206
        %p669 = pneg %p203
        %p670 = pneg %p227
        %p671 = pneg %p224
        %p672 = pneg %p248
        %p673 = pneg %p245
        %p674 = pneg %p269
        %p675 = pneg %p266
        %p676 = pneg %p290
        %p677 = pneg %p287
        %p678 = pneg %p311
        %p679 = pneg %p308
        %p680 = pneg %p332
        %p681 = pneg %p329
        %p682 = pneg %p353
        %p683 = pneg %p350
        %p684 = pneg %p374
        %p685 = pneg %p371
        %p686 = pneg %p395
        %p687 = pneg %p392
        %p688 = pneg %p416
        %p689 = pneg %p413
        %p690 = pneg %p437
        %p691 = pneg %p434
        %p692 = pneg %p458
        %p693 = pneg %p455
        %p694 = pneg %p484
        %p695 = pneg %p481
        %p696 = scmp.lt.s32.totalorder %s39, 1
        %s697 = scalar_select %p696, %s39, 1
        %s698 = scalar_lea.vmem %s19, %s697
        %s699 = smul.u32 32, %s40
        %p700 = scmp.lt.s32.totalorder %s39, 1
        %s701 = scalar_select %p700, %s39, 1
        %p702 = scmp.lt.s32.totalorder %s699, 31
        %s703 = scalar_select %p702, %s699, 31
        %s704 = smul.addr %s701, 32
        %s705 = sadd.s32 %s703, %s704
        %s706 = smul.addr %s705, 8
        %s707 = scalar_lea.vmem %s0, %s706
        %s708 = smul.u32 32, %s40
        %p709 = scmp.lt.s32.totalorder %s39, 1
        %s710 = scalar_select %p709, %s39, 1
        %s711 = smul.addr %s710, 2
        %s712 = scalar_lea.vmem %s1, %s711
        %p713 = scmp.lt.s32.totalorder %s39, 1
        %s714 = scalar_select %p713, %s39, 1
        %s715 = smul.addr %s714, 2
        %s716 = scalar_lea.vmem %s2, %s715
        %p717 = scmp.lt.s32.totalorder %s39, 1
        %s718 = scalar_select %p717, %s39, 1
        %s719 = scalar_lea.vmem %s19, %s718
        %p721 = scmp.eq.s32.totalorder %s40, 0
        // Predicated region
        $region113: #{ugaan_d_forward.3} parent=95 // pred_check
          %p722 = pneg %p721
        $region114: #{ugaan_d_forward.3} parent=95 // pred_check_branch
          %724 = sbr.rel (%p722) target = $region116
        $region115: #{ugaan_d_forward.3} parent=95 // pred_region
          %v725 = vld [vmem:[%s712] sm:$0x3]
          %v727 = vlaneseq
          %v728 = vshrl.u32 %v727, 7
          %v729 = vsub.s32 0, %v728
          %v730 = vrot.slane %v725, %v729
          %v731 = vlaneseq
          %v732 = vshrl.u32 %v731, 7
          %v733 = vsub.s32 1, %v732
          %v734 = vrot.slane %v725, %v733
          %v737 = vpack.c.bf16 %v730, %v730
          %v738 = vpack.c.bf16 %v734, %v734
          %v739 = vld [vmem:[#allocation7] sm:$0xff]
          %v740 = vld [vmem:[#allocation7 + $0x8] sm:$0xff]
          %v741 = vld [vmem:[#allocation7 + $0x10] sm:$0xff]
          %v742 = vld [vmem:[#allocation7 + $0x18] sm:$0xff]
          %v743 = vld [vmem:[#allocation7 + $0x20] sm:$0xff]
          %v744 = vld [vmem:[#allocation7 + $0x28] sm:$0xff]
          %v745 = vld [vmem:[#allocation7 + $0x30] sm:$0xff]
          %v746 = vld [vmem:[#allocation7 + $0x38] sm:$0xff]
          %v747 = vld [vmem:[#allocation7 + $0x40] sm:$0xff]
          %v748 = vld [vmem:[#allocation7 + $0x48] sm:$0xff]
          %v749 = vld [vmem:[#allocation7 + $0x50] sm:$0xff]
          %v750 = vld [vmem:[#allocation7 + $0x58] sm:$0xff]
          %v751 = vld [vmem:[#allocation7 + $0x60] sm:$0xff]
          %v752 = vld [vmem:[#allocation7 + $0x68] sm:$0xff]
          %v753 = vld [vmem:[#allocation7 + $0x70] sm:$0xff]
          %v754 = vld [vmem:[#allocation7 + $0x78] sm:$0xff]
          %v755 = vld [vmem:[#allocation7 + $0x80] sm:$0xff]
          %v756 = vld [vmem:[#allocation7 + $0x88] sm:$0xff]
          %v757 = vld [vmem:[#allocation7 + $0x90] sm:$0xff]
          %v758 = vld [vmem:[#allocation7 + $0x98] sm:$0xff]
          %v759 = vld [vmem:[#allocation7 + $0xa0] sm:$0xff]
          %v760 = vld [vmem:[#allocation7 + $0xa8] sm:$0xff]
          %v761 = vld [vmem:[#allocation7 + $0xb0] sm:$0xff]
          %v762 = vld [vmem:[#allocation7 + $0xb8] sm:$0xff]
          %v763 = vld [vmem:[#allocation7 + $0xc0] sm:$0xff]
          %v764 = vld [vmem:[#allocation7 + $0xc8] sm:$0xff]
          %v765 = vld [vmem:[#allocation7 + $0xd0] sm:$0xff]
          %v766 = vld [vmem:[#allocation7 + $0xd8] sm:$0xff]
          %v767 = vld [vmem:[#allocation7 + $0xe0] sm:$0xff]
          %v768 = vld [vmem:[#allocation7 + $0xe8] sm:$0xff]
          %v769 = vld [vmem:[#allocation7 + $0xf0] sm:$0xff]
          %v770 = vld [vmem:[#allocation7 + $0xf8] sm:$0xff]
          %v771 = vld [vmem:[#allocation7 + $0x100] sm:$0xff]
          %v772 = vld [vmem:[#allocation7 + $0x108] sm:$0xff]
          %v773 = vld [vmem:[#allocation7 + $0x110] sm:$0xff]
          %v774 = vld [vmem:[#allocation7 + $0x118] sm:$0xff]
          %v775 = vld [vmem:[#allocation7 + $0x120] sm:$0xff]
          %v776 = vld [vmem:[#allocation7 + $0x128] sm:$0xff]
          %v777 = vld [vmem:[#allocation7 + $0x130] sm:$0xff]
          %v778 = vld [vmem:[#allocation7 + $0x138] sm:$0xff]
          %v779 = vld [vmem:[#allocation7 + $0x140] sm:$0xff]
          %v780 = vld [vmem:[#allocation7 + $0x148] sm:$0xff]
          %v781 = vld [vmem:[#allocation7 + $0x150] sm:$0xff]
          %v782 = vld [vmem:[#allocation7 + $0x158] sm:$0xff]
          %v783 = vld [vmem:[#allocation7 + $0x160] sm:$0xff]
          %v784 = vld [vmem:[#allocation7 + $0x168] sm:$0xff]
          %v785 = vld [vmem:[#allocation7 + $0x170] sm:$0xff]
          %v786 = vld [vmem:[#allocation7 + $0x178] sm:$0xff]
          %v787 = vld [vmem:[#allocation7 + $0x180] sm:$0xff]
          %v788 = vld [vmem:[#allocation7 + $0x188] sm:$0xff]
          %v789 = vld [vmem:[#allocation7 + $0x190] sm:$0xff]
          %v790 = vld [vmem:[#allocation7 + $0x198] sm:$0xff]
          %v791 = vld [vmem:[#allocation7 + $0x1a0] sm:$0xff]
          %v792 = vld [vmem:[#allocation7 + $0x1a8] sm:$0xff]
          %v793 = vld [vmem:[#allocation7 + $0x1b0] sm:$0xff]
          %v794 = vld [vmem:[#allocation7 + $0x1b8] sm:$0xff]
          %v795 = vld [vmem:[#allocation7 + $0x1c0] sm:$0xff]
          %v796 = vld [vmem:[#allocation7 + $0x1c8] sm:$0xff]
          %v797 = vld [vmem:[#allocation7 + $0x1d0] sm:$0xff]
          %v798 = vld [vmem:[#allocation7 + $0x1d8] sm:$0xff]
          %v799 = vld [vmem:[#allocation7 + $0x1e0] sm:$0xff]
          %v800 = vld [vmem:[#allocation7 + $0x1e8] sm:$0xff]
          %v801 = vld [vmem:[#allocation7 + $0x1f0] sm:$0xff]
          %v802 = vld [vmem:[#allocation7 + $0x1f8] sm:$0xff]
          %v803 = vld [vmem:[#allocation9] sm:$0xf]
          %v868 = vunpack.c.l.b16 %v739
          %v869 = vunpack.c.h.b16 %v739
          %v870 = vunpack.c.l.b16 %v740
          %v871 = vunpack.c.h.b16 %v740
          %v872 = vunpack.c.l.b16 %v741
          %v873 = vunpack.c.h.b16 %v741
          %v874 = vunpack.c.l.b16 %v742
          %v875 = vunpack.c.h.b16 %v742
          %v876 = vunpack.c.l.b16 %v743
          %v877 = vunpack.c.h.b16 %v743
          %v878 = vunpack.c.l.b16 %v744
          %v879 = vunpack.c.h.b16 %v744
          %v880 = vunpack.c.l.b16 %v745
          %v881 = vunpack.c.h.b16 %v745
          %v882 = vunpack.c.l.b16 %v746
          %v883 = vunpack.c.h.b16 %v746
          %v884 = vunpack.c.l.b16 %v747
          %v885 = vunpack.c.h.b16 %v747
          %v886 = vunpack.c.l.b16 %v748
          %v887 = vunpack.c.h.b16 %v748
          %v888 = vunpack.c.l.b16 %v749
          %v889 = vunpack.c.h.b16 %v749
          %v890 = vunpack.c.l.b16 %v750
          %v891 = vunpack.c.h.b16 %v750
          %v892 = vunpack.c.l.b16 %v751
          %v893 = vunpack.c.h.b16 %v751
          %v894 = vunpack.c.l.b16 %v752
          %v895 = vunpack.c.h.b16 %v752
          %v896 = vunpack.c.l.b16 %v753
          %v897 = vunpack.c.h.b16 %v753
          %v898 = vunpack.c.l.b16 %v754
          %v899 = vunpack.c.h.b16 %v754
          %v900 = vunpack.c.l.b16 %v755
          %v901 = vunpack.c.h.b16 %v755
          %v902 = vunpack.c.l.b16 %v756
          %v903 = vunpack.c.h.b16 %v756
          %v904 = vunpack.c.l.b16 %v757
          %v905 = vunpack.c.h.b16 %v757
          %v906 = vunpack.c.l.b16 %v758
          %v907 = vunpack.c.h.b16 %v758
          %v908 = vunpack.c.l.b16 %v759
          %v909 = vunpack.c.h.b16 %v759
          %v910 = vunpack.c.l.b16 %v760
          %v911 = vunpack.c.h.b16 %v760
          %v912 = vunpack.c.l.b16 %v761
          %v913 = vunpack.c.h.b16 %v761
          %v914 = vunpack.c.l.b16 %v762
          %v915 = vunpack.c.h.b16 %v762
          %v916 = vunpack.c.l.b16 %v763
          %v917 = vunpack.c.h.b16 %v763
          %v918 = vunpack.c.l.b16 %v764
          %v919 = vunpack.c.h.b16 %v764
          %v920 = vunpack.c.l.b16 %v765
          %v921 = vunpack.c.h.b16 %v765
          %v922 = vunpack.c.l.b16 %v766
          %v923 = vunpack.c.h.b16 %v766
          %v924 = vunpack.c.l.b16 %v767
          %v925 = vunpack.c.h.b16 %v767
          %v926 = vunpack.c.l.b16 %v768
          %v927 = vunpack.c.h.b16 %v768
          %v928 = vunpack.c.l.b16 %v769
          %v929 = vunpack.c.h.b16 %v769
          %v930 = vunpack.c.l.b16 %v770
          %v931 = vunpack.c.h.b16 %v770
          %v932 = vunpack.c.l.b16 %v771
          %v933 = vunpack.c.h.b16 %v771
          %v934 = vunpack.c.l.b16 %v772
          %v935 = vunpack.c.h.b16 %v772
          %v936 = vunpack.c.l.b16 %v773
          %v937 = vunpack.c.h.b16 %v773
          %v938 = vunpack.c.l.b16 %v774
          %v939 = vunpack.c.h.b16 %v774
          %v940 = vunpack.c.l.b16 %v775
          %v941 = vunpack.c.h.b16 %v775
          %v942 = vunpack.c.l.b16 %v776
          %v943 = vunpack.c.h.b16 %v776
          %v944 = vunpack.c.l.b16 %v777
          %v945 = vunpack.c.h.b16 %v777
          %v946 = vunpack.c.l.b16 %v778
          %v947 = vunpack.c.h.b16 %v778
          %v948 = vunpack.c.l.b16 %v779
          %v949 = vunpack.c.h.b16 %v779
          %v950 = vunpack.c.l.b16 %v780
          %v951 = vunpack.c.h.b16 %v780
          %v952 = vunpack.c.l.b16 %v781
          %v953 = vunpack.c.h.b16 %v781
          %v954 = vunpack.c.l.b16 %v782
          %v955 = vunpack.c.h.b16 %v782
          %v956 = vunpack.c.l.b16 %v783
          %v957 = vunpack.c.h.b16 %v783
          %v958 = vunpack.c.l.b16 %v784
          %v959 = vunpack.c.h.b16 %v784
          %v960 = vunpack.c.l.b16 %v785
          %v961 = vunpack.c.h.b16 %v785
          %v962 = vunpack.c.l.b16 %v786
          %v963 = vunpack.c.h.b16 %v786
          %v964 = vunpack.c.l.b16 %v787
          %v965 = vunpack.c.h.b16 %v787
          %v966 = vunpack.c.l.b16 %v788
          %v967 = vunpack.c.h.b16 %v788
          %v968 = vunpack.c.l.b16 %v789
          %v969 = vunpack.c.h.b16 %v789
          %v970 = vunpack.c.l.b16 %v790
          %v971 = vunpack.c.h.b16 %v790
          %v972 = vunpack.c.l.b16 %v791
          %v973 = vunpack.c.h.b16 %v791
          %v974 = vunpack.c.l.b16 %v792
          %v975 = vunpack.c.h.b16 %v792
          %v976 = vunpack.c.l.b16 %v793
          %v977 = vunpack.c.h.b16 %v793
          %v978 = vunpack.c.l.b16 %v794
          %v979 = vunpack.c.h.b16 %v794
          %v980 = vunpack.c.l.b16 %v795
          %v981 = vunpack.c.h.b16 %v795
          %v982 = vunpack.c.l.b16 %v796
          %v983 = vunpack.c.h.b16 %v796
          %v984 = vunpack.c.l.b16 %v797
          %v985 = vunpack.c.h.b16 %v797
          %v986 = vunpack.c.l.b16 %v798
          %v987 = vunpack.c.h.b16 %v798
          %v988 = vunpack.c.l.b16 %v799
          %v989 = vunpack.c.h.b16 %v799
          %v990 = vunpack.c.l.b16 %v800
          %v991 = vunpack.c.h.b16 %v800
          %v992 = vunpack.c.l.b16 %v801
          %v993 = vunpack.c.h.b16 %v801
          %v994 = vunpack.c.l.b16 %v802
          %v995 = vunpack.c.h.b16 %v802
          %v996 = vpack.c.b16 %v872, %v868
          %v997 = vpack.c.b16 %v873, %v869
          %v998 = vpack.c.b16 %v874, %v870
          %v999 = vpack.c.b16 %v875, %v871
          %v1000 = vpack.c.b16 %v880, %v876
          %v1001 = vpack.c.b16 %v881, %v877
          %v1002 = vpack.c.b16 %v882, %v878
          %v1003 = vpack.c.b16 %v883, %v879
          %v1004 = vpack.c.b16 %v888, %v884
          %v1005 = vpack.c.b16 %v889, %v885
          %v1006 = vpack.c.b16 %v890, %v886
          %v1007 = vpack.c.b16 %v891, %v887
          %v1008 = vpack.c.b16 %v896, %v892
          %v1009 = vpack.c.b16 %v897, %v893
          %v1010 = vpack.c.b16 %v898, %v894
          %v1011 = vpack.c.b16 %v899, %v895
          %v1012 = vpack.c.b16 %v904, %v900
          %v1013 = vpack.c.b16 %v905, %v901
          %v1014 = vpack.c.b16 %v906, %v902
          %v1015 = vpack.c.b16 %v907, %v903
          %v1016 = vpack.c.b16 %v912, %v908
          %v1017 = vpack.c.b16 %v913, %v909
          %v1018 = vpack.c.b16 %v914, %v910
          %v1019 = vpack.c.b16 %v915, %v911
          %v1020 = vpack.c.b16 %v920, %v916
          %v1021 = vpack.c.b16 %v921, %v917
          %v1022 = vpack.c.b16 %v922, %v918
          %v1023 = vpack.c.b16 %v923, %v919
          %v1024 = vpack.c.b16 %v928, %v924
          %v1025 = vpack.c.b16 %v929, %v925
          %v1026 = vpack.c.b16 %v930, %v926
          %v1027 = vpack.c.b16 %v931, %v927
          %v1028 = vpack.c.b16 %v936, %v932
          %v1029 = vpack.c.b16 %v937, %v933
          %v1030 = vpack.c.b16 %v938, %v934
          %v1031 = vpack.c.b16 %v939, %v935
          %v1032 = vpack.c.b16 %v944, %v940
          %v1033 = vpack.c.b16 %v945, %v941
          %v1034 = vpack.c.b16 %v946, %v942
          %v1035 = vpack.c.b16 %v947, %v943
          %v1036 = vpack.c.b16 %v952, %v948
          %v1037 = vpack.c.b16 %v953, %v949
          %v1038 = vpack.c.b16 %v954, %v950
          %v1039 = vpack.c.b16 %v955, %v951
          %v1040 = vpack.c.b16 %v960, %v956
          %v1041 = vpack.c.b16 %v961, %v957
          %v1042 = vpack.c.b16 %v962, %v958
          %v1043 = vpack.c.b16 %v963, %v959
          %v1044 = vpack.c.b16 %v968, %v964
          %v1045 = vpack.c.b16 %v969, %v965
          %v1046 = vpack.c.b16 %v970, %v966
          %v1047 = vpack.c.b16 %v971, %v967
          %v1048 = vpack.c.b16 %v976, %v972
          %v1049 = vpack.c.b16 %v977, %v973
          %v1050 = vpack.c.b16 %v978, %v974
          %v1051 = vpack.c.b16 %v979, %v975
          %v1052 = vpack.c.b16 %v984, %v980
          %v1053 = vpack.c.b16 %v985, %v981
          %v1054 = vpack.c.b16 %v986, %v982
          %v1055 = vpack.c.b16 %v987, %v983
          %v1056 = vpack.c.b16 %v992, %v988
          %v1057 = vpack.c.b16 %v993, %v989
          %v1058 = vpack.c.b16 %v994, %v990
          %v1059 = vpack.c.b16 %v995, %v991
          %v1125 = vlaneseq
          %v1126 = vshrl.u32 %v1125, 7
          %v1127 = vsub.s32 0, %v1126
          %v1128 = vrot.slane %v803, %v1127
          %v1129 = vlaneseq
          %v1130 = vshrl.u32 %v1129, 7
          %v1131 = vsub.s32 1, %v1130
          %v1132 = vrot.slane %v803, %v1131
          %v1133 = vlaneseq
          %v1134 = vshrl.u32 %v1133, 7
          %v1135 = vsub.s32 2, %v1134
          %v1136 = vrot.slane %v803, %v1135
          %v1137 = vlaneseq
          %v1138 = vshrl.u32 %v1137, 7
          %v1139 = vsub.s32 3, %v1138
          %v1140 = vrot.slane %v803, %v1139
          %1145 = vmatprep.subr.bf16.mxu0 %v997
          %1146 = vmatpush1.bf16.msra.mxu0 %v996
          %1147 = vmatprep.subr.bf16.mxu0 %v1001
          %1148 = vmatpush1.bf16.msra.mxu0 %v1000
          %1149 = vmatprep.subr.bf16.mxu0 %v1005
          %1150 = vmatpush1.bf16.msra.mxu0 %v1004
          %1151 = vmatprep.subr.bf16.mxu0 %v1009
          %1152 = vmatpush1.bf16.msra.mxu0 %v1008
          %1153 = vmatprep.subr.bf16.mxu0 %v1013
          %1154 = vmatpush1.bf16.msra.mxu0 %v1012
          %1155 = vmatprep.subr.bf16.mxu0 %v1017
          %1156 = vmatpush1.bf16.msra.mxu0 %v1016
          %1157 = vmatprep.subr.bf16.mxu0 %v1021
          %1158 = vmatpush1.bf16.msra.mxu0 %v1020
          %1159 = vmatprep.subr.bf16.mxu0 %v1025
          %1160 = vmatpush1.bf16.msra.mxu0 %v1024
          %1161 = vmatprep.subr.bf16.mxu0 %v1029
          %1162 = vmatpush1.bf16.msra.mxu0 %v1028
          %1163 = vmatprep.subr.bf16.mxu0 %v1033
          %1164 = vmatpush1.bf16.msra.mxu0 %v1032
          %1165 = vmatprep.subr.bf16.mxu0 %v1037
          %1166 = vmatpush1.bf16.msra.mxu0 %v1036
          %1167 = vmatprep.subr.bf16.mxu0 %v1041
          %1168 = vmatpush1.bf16.msra.mxu0 %v1040
          %1169 = vmatprep.subr.bf16.mxu0 %v1045
          %1170 = vmatpush1.bf16.msra.mxu0 %v1044
          %1171 = vmatprep.subr.bf16.mxu0 %v1049
          %1172 = vmatpush1.bf16.msra.mxu0 %v1048
          %1173 = vmatprep.subr.bf16.mxu0 %v1053
          %1174 = vmatpush1.bf16.msra.mxu0 %v1052
          %1175 = vmatprep.subr.bf16.mxu0 %v1057
          %1176 = vmatpush1.bf16.msra.mxu0 %v1056
          %1177 = vmatprep.mubr.bf16.mxu0 %v738
          %1178 = vmatmul.mubr.bf16.gmra.mrb[0].mxu0 %v737
          %v1179 = vpop.f32.mrb[0].mxu0
          %v1180 = vadd.f32 %v1128, %v1179
          %v1181 = vpop.f32.mrb[0].mxu0
          %v1182 = vadd.f32 %v1132, %v1181
          %v1183 = vpop.f32.mrb[0].mxu0
          %v1184 = vpop.f32.mrb[0].mxu0
          %1185 = vdwg.mxu0
          %1186 = vmatprep.subr.bf16.mxu0 %v999
          %1187 = vmatpush1.bf16.msra.mxu0 %v998
          %1188 = vmatprep.subr.bf16.mxu0 %v1003
          %1189 = vmatpush1.bf16.msra.mxu0 %v1002
          %1190 = vmatprep.subr.bf16.mxu0 %v1007
          %1191 = vmatpush1.bf16.msra.mxu0 %v1006
          %1192 = vmatprep.subr.bf16.mxu0 %v1011
          %1193 = vmatpush1.bf16.msra.mxu0 %v1010
          %1194 = vmatprep.subr.bf16.mxu0 %v1015
          %1195 = vmatpush1.bf16.msra.mxu0 %v1014
          %1196 = vmatprep.subr.bf16.mxu0 %v1019
          %1197 = vmatpush1.bf16.msra.mxu0 %v1018
          %1198 = vmatprep.subr.bf16.mxu0 %v1023
          %1199 = vmatpush1.bf16.msra.mxu0 %v1022
          %1200 = vmatprep.subr.bf16.mxu0 %v1027
          %1201 = vmatpush1.bf16.msra.mxu0 %v1026
          %1202 = vmatprep.subr.bf16.mxu0 %v1031
          %1203 = vmatpush1.bf16.msra.mxu0 %v1030
          %1204 = vmatprep.subr.bf16.mxu0 %v1035
          %1205 = vmatpush1.bf16.msra.mxu0 %v1034
          %1206 = vmatprep.subr.bf16.mxu0 %v1039
          %1207 = vmatpush1.bf16.msra.mxu0 %v1038
          %1208 = vmatprep.subr.bf16.mxu0 %v1043
          %1209 = vmatpush1.bf16.msra.mxu0 %v1042
          %1210 = vmatprep.subr.bf16.mxu0 %v1047
          %1211 = vmatpush1.bf16.msra.mxu0 %v1046
          %1212 = vmatprep.subr.bf16.mxu0 %v1051
          %1213 = vmatpush1.bf16.msra.mxu0 %v1050
          %1214 = vmatprep.subr.bf16.mxu0 %v1055
          %1215 = vmatpush1.bf16.msra.mxu0 %v1054
          %1216 = vmatprep.subr.bf16.mxu0 %v1059
          %1217 = vmatpush1.bf16.msra.mxu0 %v1058
          %1218 = vmatprep.mubr.bf16.mxu0 %v738
          %1219 = vmatmul.mubr.bf16.gmra.mrb[0].mxu0 %v737
          %v1220 = vpop.f32.mrb[0].mxu0
          %v1221 = vadd.f32 %v1136, %v1220
          %v1222 = vpop.f32.mrb[0].mxu0
          %v1223 = vadd.f32 %v1140, %v1222
          %v1224 = vpop.f32.mrb[0].mxu0
          %v1225 = vpop.f32.mrb[0].mxu0
          %1226 = vdwg.mxu0
          %v1231 = vcombine.low %v1180, %v1182
          %v1232 = vcombine.low %v1221, %v1223
          %v1234 = vunpack.c.l.s4 1966171168
          %v1235 = vunpack.c.0.s8 %v1234
          %v1236 = vlaneseq
          %v1237 = vshrl.u32 %v1236, 7
          %v1238 = vsub.s32 %v1235, %v1237
          %v1239 = vrot.slane %v1231, %v1238
          %v1241 = vunpack.c.l.s4 1966171168
          %v1242 = vunpack.c.0.s8 %v1241
          %v1243 = vlaneseq
          %v1244 = vshrl.u32 %v1243, 7
          %v1245 = vsub.s32 %v1242, %v1244
          %v1246 = vrot.slane %v1232, %v1245
          %v1247 = vcombine.low %v1239, %v1246
          %v1249 = vunpack.c.l.s4 1966171168
          %v1250 = vunpack.c.0.s8 %v1249
          %v1251 = vlaneseq
          %v1252 = vshrl.u32 %v1251, 7
          %v1253 = vsub.s32 %v1250, %v1252
          %v1254 = vrot.slane %v1247, %v1253
          %v1256 = vlaneseq
          %vm1257 = vcmp.ge.s32.totalorder %v1256, 0
          %vm1258 = vcmp.lt.s32.totalorder %v1256, 512
          %vm1259 = vmand %vm1257, %vm1258
          %1260 = vst.msk [vmem:[#allocation2] sm:$0xf] %vm1259, %v1254
        $region116: #{ugaan_d_forward.3} parent=95 // pred_fallthru
          _
        %v1261 = vld [vmem:[%s707] sm:$0xff]
        %v1262 = vld [vmem:[%s707 + $0x8] sm:$0xff]
        %v1263 = vld [vmem:[%s707 + $0x10] sm:$0xff]
        %v1264 = vld [vmem:[%s707 + $0x18] sm:$0xff]
        %v1265 = vld [vmem:[%s707 + $0x20] sm:$0xff]
        %v1266 = vld [vmem:[%s707 + $0x28] sm:$0xff]
        %v1267 = vld [vmem:[%s707 + $0x30] sm:$0xff]
        %v1268 = vld [vmem:[%s707 + $0x38] sm:$0xff]
        %v1269 = vld [vmem:[%s707 + $0x40] sm:$0xff]
        %v1270 = vld [vmem:[%s707 + $0x48] sm:$0xff]
        %v1271 = vld [vmem:[%s707 + $0x50] sm:$0xff]
        %v1272 = vld [vmem:[%s707 + $0x58] sm:$0xff]
        %v1273 = vld [vmem:[%s707 + $0x60] sm:$0xff]
        %v1274 = vld [vmem:[%s707 + $0x68] sm:$0xff]
        %v1275 = vld [vmem:[%s707 + $0x70] sm:$0xff]
        %v1276 = vld [vmem:[%s707 + $0x78] sm:$0xff]
        %v1277 = vld [vmem:[%s707 + $0x80] sm:$0xff]
        %v1278 = vld [vmem:[%s707 + $0x88] sm:$0xff]
        %v1279 = vld [vmem:[%s707 + $0x90] sm:$0xff]
        %v1280 = vld [vmem:[%s707 + $0x98] sm:$0xff]
        %v1281 = vld [vmem:[%s707 + $0xa0] sm:$0xff]
        %v1282 = vld [vmem:[%s707 + $0xa8] sm:$0xff]
        %v1283 = vld [vmem:[%s707 + $0xb0] sm:$0xff]
        %v1284 = vld [vmem:[%s707 + $0xb8] sm:$0xff]
        %v1285 = vld [vmem:[%s707 + $0xc0] sm:$0xff]
        %v1286 = vld [vmem:[%s707 + $0xc8] sm:$0xff]
        %v1287 = vld [vmem:[%s707 + $0xd0] sm:$0xff]
        %v1288 = vld [vmem:[%s707 + $0xd8] sm:$0xff]
        %v1289 = vld [vmem:[%s707 + $0xe0] sm:$0xff]
        %v1290 = vld [vmem:[%s707 + $0xe8] sm:$0xff]
        %v1291 = vld [vmem:[%s707 + $0xf0] sm:$0xff]
        %v1292 = vld [vmem:[%s707 + $0xf8] sm:$0xff]
        %v1293 = vpack.c.bf16 %v1262, %v1261
        %v1294 = vpack.c.bf16 %v1264, %v1263
        %v1295 = vpack.c.bf16 %v1266, %v1265
        %v1296 = vpack.c.bf16 %v1268, %v1267
        %v1297 = vpack.c.bf16 %v1270, %v1269
        %v1298 = vpack.c.bf16 %v1272, %v1271
        %v1299 = vpack.c.bf16 %v1274, %v1273
        %v1300 = vpack.c.bf16 %v1276, %v1275
        %v1301 = vpack.c.bf16 %v1278, %v1277
        %v1302 = vpack.c.bf16 %v1280, %v1279
        %v1303 = vpack.c.bf16 %v1282, %v1281
        %v1304 = vpack.c.bf16 %v1284, %v1283
        %v1305 = vpack.c.bf16 %v1286, %v1285
        %v1306 = vpack.c.bf16 %v1288, %v1287
        %v1307 = vpack.c.bf16 %v1290, %v1289
        %v1308 = vpack.c.bf16 %v1292, %v1291
        %v1309 = vld [vmem:[%s3] sm:$0x3]
        %v1310 = vld [vmem:[%s4] sm:$0x1]
        %v1312 = vlaneseq
        %v1313 = vshrl.u32 %v1312, 7
        %v1314 = vsub.s32 0, %v1313
        %v1315 = vrot.slane %v1310, %v1314
        %vm1317 = vcmask 23552
        %v1319 = vsel %vm1317, %v1293, 0
        %v1322 = vsel %vm1317, %v1294, 0
        %v1325 = vsel %vm1317, %v1295, 0
        %v1328 = vsel %vm1317, %v1296, 0
        %v1331 = vsel %vm1317, %v1297, 0
        %v1334 = vsel %vm1317, %v1298, 0
        %v1337 = vsel %vm1317, %v1299, 0
        %v1340 = vsel %vm1317, %v1300, 0
        %v1343 = vsel %vm1317, %v1301, 0
        %v1346 = vsel %vm1317, %v1302, 0
        %v1349 = vsel %vm1317, %v1303, 0
        %v1352 = vsel %vm1317, %v1304, 0
        %v1355 = vsel %vm1317, %v1305, 0
        %v1358 = vsel %vm1317, %v1306, 0
        %v1361 = vsel %vm1317, %v1307, 0
        %v1364 = vsel %vm1317, %v1308, 0
        %vm1366 = vcmask 1040384
        %vm1367 = vcmask 1041408
        %v1368 = vsel %vm1366, 4294967295, 65535
        %v1369 = vsel %vm1367, %v1368, 0
        %v1371 = vand.u32 %v1309, %v1369
        %1373 = vmatprep.subr.bf16.mxu0 0
        %1374 = vmatpush1.bf16.msra.mxu0 %v1371
        %1375 = vmatprep.subr.bf16.mxu0 0
        %1376 = vmatpush1.bf16.msra.mxu0 0
        %1377 = vmatprep.subr.bf16.mxu0 0
        %1378 = vmatpush1.bf16.msra.mxu0 0
        %1379 = vmatprep.subr.bf16.mxu0 0
        %1380 = vmatpush1.bf16.msra.mxu0 0
        %1381 = vmatprep.subr.bf16.mxu0 0
        %1382 = vmatpush1.bf16.msra.mxu0 0
        %1383 = vmatprep.subr.bf16.mxu0 0
        %1384 = vmatpush1.bf16.msra.mxu0 0
        %1385 = vmatprep.subr.bf16.mxu0 0
        %1386 = vmatpush1.bf16.msra.mxu0 0
        %1387 = vmatprep.subr.bf16.mxu0 0
        %1388 = vmatpush1.bf16.msra.mxu0 0
        %1389 = vmatprep.subr.bf16.mxu0 0
        %1390 = vmatpush1.bf16.msra.mxu0 0
        %1391 = vmatprep.subr.bf16.mxu0 0
        %1392 = vmatpush1.bf16.msra.mxu0 0
        %1393 = vmatprep.subr.bf16.mxu0 0
        %1394 = vmatpush1.bf16.msra.mxu0 0
        %1395 = vmatprep.subr.bf16.mxu0 0
        %1396 = vmatpush1.bf16.msra.mxu0 0
        %1397 = vmatprep.subr.bf16.mxu0 0
        %1398 = vmatpush1.bf16.msra.mxu0 0
        %1399 = vmatprep.subr.bf16.mxu0 0
        %1400 = vmatpush1.bf16.msra.mxu0 0
        %1401 = vmatprep.subr.bf16.mxu0 0
        %1402 = vmatpush1.bf16.msra.mxu0 0
        %1403 = vmatprep.subr.bf16.mxu0 0
        %1404 = vmatpush1.bf16.msra.mxu0 0
        %1405 = vmatprep.mubr.bf16.mxu0 0
        %1406 = vmatmul.mubr.bf16.gmra.mrb[0].mxu0 %v1319
        %v1407 = vpop.f32.mrb[0].mxu0
        %v1408 = vadd.f32 %v1315, %v1407
        %v1409 = vpop.f32.mrb[0].mxu0
        %v1410 = vpop.f32.mrb[0].mxu0
        %v1411 = vadd.f32 %v1315, %v1410
        %v1412 = vpop.f32.mrb[0].mxu0
        %1413 = vmatprep.mubr.bf16.mxu0 0
        %1414 = vmatmul.mubr.bf16.gmra.mrb[0].mxu0 %v1322
        %v1415 = vpop.f32.mrb[0].mxu0
        %v1416 = vadd.f32 %v1315, %v1415
        %v1417 = vpop.f32.mrb[0].mxu0
        %v1418 = vpop.f32.mrb[0].mxu0
        %v1419 = vadd.f32 %v1315, %v1418
        %v1420 = vpop.f32.mrb[0].mxu0
        %1421 = vmatprep.mubr.bf16.mxu0 0
        %1422 = vmatmul.mubr.bf16.gmra.mrb[0].mxu0 %v1325
        %v1423 = vpop.f32.mrb[0].mxu0
        %v1424 = vadd.f32 %v1315, %v1423
        %v1425 = vpop.f32.mrb[0].mxu0
        %v1426 = vpop.f32.mrb[0].mxu0
        %v1427 = vadd.f32 %v1315, %v1426
        %v1428 = vpop.f32.mrb[0].mxu0
        %1429 = vmatprep.mubr.bf16.mxu0 0
        %1430 = vmatmul.mubr.bf16.gmra.mrb[0].mxu0 %v1328
        %v1431 = vpop.f32.mrb[0].mxu0
        %v1432 = vadd.f32 %v1315, %v1431
        %v1433 = vpop.f32.mrb[0].mxu0
        %v1434 = vpop.f32.mrb[0].mxu0
        %v1435 = vadd.f32 %v1315, %v1434
        %v1436 = vpop.f32.mrb[0].mxu0
        %1437 = vmatprep.mubr.bf16.mxu0 0
        %1438 = vmatmul.mubr.bf16.gmra.mrb[0].mxu0 %v1331
        %v1439 = vpop.f32.mrb[0].mxu0
        %v1440 = vadd.f32 %v1315, %v1439
        %v1441 = vpop.f32.mrb[0].mxu0
        %v1442 = vpop.f32.mrb[0].mxu0
        %v1443 = vadd.f32 %v1315, %v1442
        %v1444 = vpop.f32.mrb[0].mxu0
        %1445 = vmatprep.mubr.bf16.mxu0 0
        %1446 = vmatmul.mubr.bf16.gmra.mrb[0].mxu0 %v1334
        %v1447 = vpop.f32.mrb[0].mxu0
        %v1448 = vadd.f32 %v1315, %v1447
        %v1449 = vpop.f32.mrb[0].mxu0
        %v1450 = vpop.f32.mrb[0].mxu0
        %v1451 = vadd.f32 %v1315, %v1450
        %v1452 = vpop.f32.mrb[0].mxu0
        %1453 = vmatprep.mubr.bf16.mxu0 0
        %1454 = vmatmul.mubr.bf16.gmra.mrb[0].mxu0 %v1337
        %v1455 = vpop.f32.mrb[0].mxu0
        %v1456 = vadd.f32 %v1315, %v1455
        %v1457 = vpop.f32.mrb[0].mxu0
        %v1458 = vpop.f32.mrb[0].mxu0
        %v1459 = vadd.f32 %v1315, %v1458
        %v1460 = vpop.f32.mrb[0].mxu0
        %1461 = vmatprep.mubr.bf16.mxu0 0
        %1462 = vmatmul.mubr.bf16.gmra.mrb[0].mxu0 %v1340
        %v1463 = vpop.f32.mrb[0].mxu0
        %v1464 = vadd.f32 %v1315, %v1463
        %v1465 = vpop.f32.mrb[0].mxu0
        %v1466 = vpop.f32.mrb[0].mxu0
        %v1467 = vadd.f32 %v1315, %v1466
        %v1468 = vpop.f32.mrb[0].mxu0
        %1469 = vmatprep.mubr.bf16.mxu0 0
        %1470 = vmatmul.mubr.bf16.gmra.mrb[0].mxu0 %v1343
        %v1471 = vpop.f32.mrb[0].mxu0
        %v1472 = vadd.f32 %v1315, %v1471
        %v1473 = vpop.f32.mrb[0].mxu0
        %v1474 = vpop.f32.mrb[0].mxu0
        %v1475 = vadd.f32 %v1315, %v1474
        %v1476 = vpop.f32.mrb[0].mxu0
        %1477 = vmatprep.mubr.bf16.mxu0 0
        %1478 = vmatmul.mubr.bf16.gmra.mrb[0].mxu0 %v1346
        %v1479 = vpop.f32.mrb[0].mxu0
        %v1480 = vadd.f32 %v1315, %v1479
        %v1481 = vpop.f32.mrb[0].mxu0
        %v1482 = vpop.f32.mrb[0].mxu0
        %v1483 = vadd.f32 %v1315, %v1482
        %v1484 = vpop.f32.mrb[0].mxu0
        %1485 = vmatprep.mubr.bf16.mxu0 0
        %1486 = vmatmul.mubr.bf16.gmra.mrb[0].mxu0 %v1349
        %v1487 = vpop.f32.mrb[0].mxu0
        %v1488 = vadd.f32 %v1315, %v1487
        %v1489 = vpop.f32.mrb[0].mxu0
        %v1490 = vpop.f32.mrb[0].mxu0
        %v1491 = vadd.f32 %v1315, %v1490
        %v1492 = vpop.f32.mrb[0].mxu0
        %1493 = vmatprep.mubr.bf16.mxu0 0
        %1494 = vmatmul.mubr.bf16.gmra.mrb[0].mxu0 %v1352
        %v1495 = vpop.f32.mrb[0].mxu0
        %v1496 = vadd.f32 %v1315, %v1495
        %v1497 = vpop.f32.mrb[0].mxu0
        %v1498 = vpop.f32.mrb[0].mxu0
        %v1499 = vadd.f32 %v1315, %v1498
        %v1500 = vpop.f32.mrb[0].mxu0
        %1501 = vmatprep.mubr.bf16.mxu0 0
        %1502 = vmatmul.mubr.bf16.gmra.mrb[0].mxu0 %v1355
        %v1503 = vpop.f32.mrb[0].mxu0
        %v1504 = vadd.f32 %v1315, %v1503
        %v1505 = vpop.f32.mrb[0].mxu0
        %v1506 = vpop.f32.mrb[0].mxu0
        %v1507 = vadd.f32 %v1315, %v1506
        %v1508 = vpop.f32.mrb[0].mxu0
        %1509 = vmatprep.mubr.bf16.mxu0 0
        %1510 = vmatmul.mubr.bf16.gmra.mrb[0].mxu0 %v1358
        %v1511 = vpop.f32.mrb[0].mxu0
        %v1512 = vadd.f32 %v1315, %v1511
        %v1513 = vpop.f32.mrb[0].mxu0
        %v1514 = vpop.f32.mrb[0].mxu0
        %v1515 = vadd.f32 %v1315, %v1514
        %v1516 = vpop.f32.mrb[0].mxu0
        %1517 = vmatprep.mubr.bf16.mxu0 0
        %1518 = vmatmul.mubr.bf16.gmra.mrb[0].mxu0 %v1361
        %v1519 = vpop.f32.mrb[0].mxu0
        %v1520 = vadd.f32 %v1315, %v1519
        %v1521 = vpop.f32.mrb[0].mxu0
        %v1522 = vpop.f32.mrb[0].mxu0
        %v1523 = vadd.f32 %v1315, %v1522
        %v1524 = vpop.f32.mrb[0].mxu0
        %1525 = vmatprep.mubr.bf16.mxu0 0
        %1526 = vmatmul.mubr.bf16.gmra.mrb[0].mxu0 %v1364
        %v1527 = vpop.f32.mrb[0].mxu0
        %v1528 = vadd.f32 %v1315, %v1527
        %v1529 = vpop.f32.mrb[0].mxu0
        %v1530 = vpop.f32.mrb[0].mxu0
        %v1531 = vadd.f32 %v1315, %v1530
        %v1532 = vpop.f32.mrb[0].mxu0
        %1533 = vdwg.mxu0
        %v1534 = vmax.f32 %v1408, 0.0
        %v1535 = vmax.f32 %v1411, 0.0
        %v1536 = vmax.f32 %v1416, 0.0
        %v1537 = vmax.f32 %v1419, 0.0
        %v1538 = vmax.f32 %v1424, 0.0
        %v1539 = vmax.f32 %v1427, 0.0
        %v1540 = vmax.f32 %v1432, 0.0
        %v1541 = vmax.f32 %v1435, 0.0
        %v1542 = vmax.f32 %v1440, 0.0
        %v1543 = vmax.f32 %v1443, 0.0
        %v1544 = vmax.f32 %v1448, 0.0
        %v1545 = vmax.f32 %v1451, 0.0
        %v1546 = vmax.f32 %v1456, 0.0
        %v1547 = vmax.f32 %v1459, 0.0
        %v1548 = vmax.f32 %v1464, 0.0
        %v1549 = vmax.f32 %v1467, 0.0
        %v1550 = vmax.f32 %v1472, 0.0
        %v1551 = vmax.f32 %v1475, 0.0
        %v1552 = vmax.f32 %v1480, 0.0
        %v1553 = vmax.f32 %v1483, 0.0
        %v1554 = vmax.f32 %v1488, 0.0
        %v1555 = vmax.f32 %v1491, 0.0
        %v1556 = vmax.f32 %v1496, 0.0
        %v1557 = vmax.f32 %v1499, 0.0
        %v1558 = vmax.f32 %v1504, 0.0
        %v1559 = vmax.f32 %v1507, 0.0
        %v1560 = vmax.f32 %v1512, 0.0
        %v1561 = vmax.f32 %v1515, 0.0
        %v1562 = vmax.f32 %v1520, 0.0
        %v1563 = vmax.f32 %v1523, 0.0
        %v1564 = vmax.f32 %v1528, 0.0
        %v1565 = vmax.f32 %v1531, 0.0
        %v1566 = vpack.c.bf16 %v1535, %v1534
        %v1567 = vpack.c.bf16 %v1537, %v1536
        %v1568 = vpack.c.bf16 %v1539, %v1538
        %v1569 = vpack.c.bf16 %v1541, %v1540
        %v1570 = vpack.c.bf16 %v1543, %v1542
        %v1571 = vpack.c.bf16 %v1545, %v1544
        %v1572 = vpack.c.bf16 %v1547, %v1546
        %v1573 = vpack.c.bf16 %v1549, %v1548
        %v1574 = vpack.c.bf16 %v1551, %v1550
        %v1575 = vpack.c.bf16 %v1553, %v1552
        %v1576 = vpack.c.bf16 %v1555, %v1554
        %v1577 = vpack.c.bf16 %v1557, %v1556
        %v1578 = vpack.c.bf16 %v1559, %v1558
        %v1579 = vpack.c.bf16 %v1561, %v1560
        %v1580 = vpack.c.bf16 %v1563, %v1562
        %v1581 = vpack.c.bf16 %v1565, %v1564
        %v1582 = vld [vmem:[%s5] sm:$0xff]
        %v1583 = vld [vmem:[%s5 + $0x8] sm:$0xff]
        %v1584 = vld [vmem:[%s5 + $0x10] sm:$0xff]
        %v1585 = vld [vmem:[%s5 + $0x18] sm:$0xff]
        %v1586 = vld [vmem:[%s5 + $0x20] sm:$0xff]
        %v1587 = vld [vmem:[%s5 + $0x28] sm:$0xff]
        %v1588 = vld [vmem:[%s5 + $0x30] sm:$0xff]
        %v1589 = vld [vmem:[%s5 + $0x38] sm:$0xff]
        %v1590 = vld [vmem:[%s5 + $0x40] sm:$0xff]
        %v1591 = vld [vmem:[%s5 + $0x48] sm:$0xff]
        %v1592 = vld [vmem:[%s5 + $0x50] sm:$0xff]
        %v1593 = vld [vmem:[%s5 + $0x58] sm:$0xff]
        %v1594 = vld [vmem:[%s5 + $0x60] sm:$0xff]
        %v1595 = vld [vmem:[%s5 + $0x68] sm:$0xff]
        %v1596 = vld [vmem:[%s5 + $0x70] sm:$0xff]
        %v1597 = vld [vmem:[%s5 + $0x78] sm:$0xff]
        %v1598 = vld [vmem:[%s6] sm:$0x3]
        %v1600 = vlaneseq
        %v1601 = vshrl.u32 %v1600, 7
        %v1602 = vsub.s32 0, %v1601
        %v1603 = vrot.slane %v1598, %v1602
        %v1604 = vlaneseq
        %v1605 = vshrl.u32 %v1604, 7
        %v1606 = vsub.s32 1, %v1605
        %v1607 = vrot.slane %v1598, %v1606
        %v1626 = vunpack.c.l.b16 %v1582
        %v1627 = vunpack.c.h.b16 %v1582
        %v1628 = vunpack.c.l.b16 %v1583
        %v1629 = vunpack.c.h.b16 %v1583
        %v1630 = vunpack.c.l.b16 %v1584
        %v1631 = vunpack.c.h.b16 %v1584
        %v1632 = vunpack.c.l.b16 %v1585
        %v1633 = vunpack.c.h.b16 %v1585
        %v1634 = vunpack.c.l.b16 %v1586
        %v1635 = vunpack.c.h.b16 %v1586
        %v1636 = vunpack.c.l.b16 %v1587
        %v1637 = vunpack.c.h.b16 %v1587
        %v1638 = vunpack.c.l.b16 %v1588
        %v1639 = vunpack.c.h.b16 %v1588
        %v1640 = vunpack.c.l.b16 %v1589
        %v1641 = vunpack.c.h.b16 %v1589
        %v1642 = vunpack.c.l.b16 %v1590
        %v1643 = vunpack.c.h.b16 %v1590
        %v1644 = vunpack.c.l.b16 %v1591
        %v1645 = vunpack.c.h.b16 %v1591
        %v1646 = vunpack.c.l.b16 %v1592
        %v1647 = vunpack.c.h.b16 %v1592
        %v1648 = vunpack.c.l.b16 %v1593
        %v1649 = vunpack.c.h.b16 %v1593
        %v1650 = vunpack.c.l.b16 %v1594
        %v1651 = vunpack.c.h.b16 %v1594
        %v1652 = vunpack.c.l.b16 %v1595
        %v1653 = vunpack.c.h.b16 %v1595
        %v1654 = vunpack.c.l.b16 %v1596
        %v1655 = vunpack.c.h.b16 %v1596
        %v1656 = vunpack.c.l.b16 %v1597
        %v1657 = vunpack.c.h.b16 %v1597
        %v1658 = vpack.c.b16 %v1628, %v1626
        %v1659 = vpack.c.b16 %v1629, %v1627
        %v1660 = vpack.c.b16 %v1632, %v1630
        %v1661 = vpack.c.b16 %v1633, %v1631
        %v1662 = vpack.c.b16 %v1636, %v1634
        %v1663 = vpack.c.b16 %v1637, %v1635
        %v1664 = vpack.c.b16 %v1640, %v1638
        %v1665 = vpack.c.b16 %v1641, %v1639
        %v1666 = vpack.c.b16 %v1644, %v1642
        %v1667 = vpack.c.b16 %v1645, %v1643
        %v1668 = vpack.c.b16 %v1648, %v1646
        %v1669 = vpack.c.b16 %v1649, %v1647
        %v1670 = vpack.c.b16 %v1652, %v1650
        %v1671 = vpack.c.b16 %v1653, %v1651
        %v1672 = vpack.c.b16 %v1656, %v1654
        %v1673 = vpack.c.b16 %v1657, %v1655
        %1690 = vmatprep.subr.bf16.mxu0 %v1659
        %1691 = vmatpush1.bf16.msra.mxu0 %v1658
        %1692 = vmatprep.subr.bf16.mxu0 %v1661
        %1693 = vmatpush1.bf16.msra.mxu0 %v1660
        %1694 = vmatprep.subr.bf16.mxu0 %v1663
        %1695 = vmatpush1.bf16.msra.mxu0 %v1662
        %1696 = vmatprep.subr.bf16.mxu0 %v1665
        %1697 = vmatpush1.bf16.msra.mxu0 %v1664
        %1698 = vmatprep.subr.bf16.mxu0 %v1667
        %1699 = vmatpush1.bf16.msra.mxu0 %v1666
        %1700 = vmatprep.subr.bf16.mxu0 %v1669
        %1701 = vmatpush1.bf16.msra.mxu0 %v1668
        %1702 = vmatprep.subr.bf16.mxu0 %v1671
        %1703 = vmatpush1.bf16.msra.mxu0 %v1670
        %1704 = vmatprep.subr.bf16.mxu0 %v1673
        %1705 = vmatpush1.bf16.msra.mxu0 %v1672
        %1706 = vmatprep.subr.bf16.mxu0 0
        %1707 = vmatpush1.bf16.msra.mxu0 0
        %1708 = vmatprep.subr.bf16.mxu0 0
        %1709 = vmatpush1.bf16.msra.mxu0 0
        %1710 = vmatprep.subr.bf16.mxu0 0
        %1711 = vmatpush1.bf16.msra.mxu0 0
        %1712 = vmatprep.subr.bf16.mxu0 0
        %1713 = vmatpush1.bf16.msra.mxu0 0
        %1714 = vmatprep.subr.bf16.mxu0 0
        %1715 = vmatpush1.bf16.msra.mxu0 0
        %1716 = vmatprep.subr.bf16.mxu0 0
        %1717 = vmatpush1.bf16.msra.mxu0 0
        %1718 = vmatprep.subr.bf16.mxu0 0
        %1719 = vmatpush1.bf16.msra.mxu0 0
        %1720 = vmatprep.subr.bf16.mxu0 0
        %1721 = vmatpush1.bf16.msra.mxu0 0
        %1722 = vmatprep.mubr.bf16.mxu0 0
        %1723 = vmatmul.mubr.bf16.gmra.mrb[0].mxu0 %v1566
        %v1724 = vpop.f32.mrb[0].mxu0
        %v1725 = vadd.f32 %v1603, %v1724
        %v1726 = vpop.f32.mrb[0].mxu0
        %v1727 = vadd.f32 %v1607, %v1726
        %v1728 = vpop.f32.mrb[0].mxu0
        %v1729 = vadd.f32 %v1603, %v1728
        %v1730 = vpop.f32.mrb[0].mxu0
        %v1731 = vadd.f32 %v1607, %v1730
        %1732 = vmatprep.mubr.bf16.mxu0 0
        %1733 = vmatmul.mubr.bf16.gmra.mrb[0].mxu0 %v1567
        %v1734 = vpop.f32.mrb[0].mxu0
        %v1735 = vadd.f32 %v1603, %v1734
        %v1736 = vpop.f32.mrb[0].mxu0
        %v1737 = vadd.f32 %v1607, %v1736
        %v1738 = vpop.f32.mrb[0].mxu0
        %v1739 = vadd.f32 %v1603, %v1738
        %v1740 = vpop.f32.mrb[0].mxu0
        %v1741 = vadd.f32 %v1607, %v1740
        %1742 = vmatprep.mubr.bf16.mxu0 0
        %1743 = vmatmul.mubr.bf16.gmra.mrb[0].mxu0 %v1568
        %v1744 = vpop.f32.mrb[0].mxu0
        %v1745 = vadd.f32 %v1603, %v1744
        %v1746 = vpop.f32.mrb[0].mxu0
        %v1747 = vadd.f32 %v1607, %v1746
        %v1748 = vpop.f32.mrb[0].mxu0
        %v1749 = vadd.f32 %v1603, %v1748
        %v1750 = vpop.f32.mrb[0].mxu0
        %v1751 = vadd.f32 %v1607, %v1750
        %1752 = vmatprep.mubr.bf16.mxu0 0
        %1753 = vmatmul.mubr.bf16.gmra.mrb[0].mxu0 %v1569
        %v1754 = vpop.f32.mrb[0].mxu0
        %v1755 = vadd.f32 %v1603, %v1754
        %v1756 = vpop.f32.mrb[0].mxu0
        %v1757 = vadd.f32 %v1607, %v1756
        %v1758 = vpop.f32.mrb[0].mxu0
        %v1759 = vadd.f32 %v1603, %v1758
        %v1760 = vpop.f32.mrb[0].mxu0
        %v1761 = vadd.f32 %v1607, %v1760
        %1762 = vmatprep.mubr.bf16.mxu0 0
        %1763 = vmatmul.mubr.bf16.gmra.mrb[0].mxu0 %v1570
        %v1764 = vpop.f32.mrb[0].mxu0
        %v1765 = vadd.f32 %v1603, %v1764
        %v1766 = vpop.f32.mrb[0].mxu0
        %v1767 = vadd.f32 %v1607, %v1766
        %v1768 = vpop.f32.mrb[0].mxu0
        %v1769 = vadd.f32 %v1603, %v1768
        %v1770 = vpop.f32.mrb[0].mxu0
        %v1771 = vadd.f32 %v1607, %v1770
        %1772 = vmatprep.mubr.bf16.mxu0 0
        %1773 = vmatmul.mubr.bf16.gmra.mrb[0].mxu0 %v1571
        %v1774 = vpop.f32.mrb[0].mxu0
        %v1775 = vadd.f32 %v1603, %v1774
        %v1776 = vpop.f32.mrb[0].mxu0
        %v1777 = vadd.f32 %v1607, %v1776
        %v1778 = vpop.f32.mrb[0].mxu0
        %v1779 = vadd.f32 %v1603, %v1778
        %v1780 = vpop.f32.mrb[0].mxu0
        %v1781 = vadd.f32 %v1607, %v1780
        %1782 = vmatprep.mubr.bf16.mxu0 0
        %1783 = vmatmul.mubr.bf16.gmra.mrb[0].mxu0 %v1572
        %v1784 = vpop.f32.mrb[0].mxu0
        %v1785 = vadd.f32 %v1603, %v1784
        %v1786 = vpop.f32.mrb[0].mxu0
        %v1787 = vadd.f32 %v1607, %v1786
        %v1788 = vpop.f32.mrb[0].mxu0
        %v1789 = vadd.f32 %v1603, %v1788
        %v1790 = vpop.f32.mrb[0].mxu0
        %v1791 = vadd.f32 %v1607, %v1790
        %1792 = vmatprep.mubr.bf16.mxu0 0
        %1793 = vmatmul.mubr.bf16.gmra.mrb[0].mxu0 %v1573
        %v1794 = vpop.f32.mrb[0].mxu0
        %v1795 = vadd.f32 %v1603, %v1794
        %v1796 = vpop.f32.mrb[0].mxu0
        %v1797 = vadd.f32 %v1607, %v1796
        %v1798 = vpop.f32.mrb[0].mxu0
        %v1799 = vadd.f32 %v1603, %v1798
        %v1800 = vpop.f32.mrb[0].mxu0
        %v1801 = vadd.f32 %v1607, %v1800
        %1802 = vmatprep.mubr.bf16.mxu0 0
        %1803 = vmatmul.mubr.bf16.gmra.mrb[0].mxu0 %v1574
        %v1804 = vpop.f32.mrb[0].mxu0
        %v1805 = vadd.f32 %v1603, %v1804
        %v1806 = vpop.f32.mrb[0].mxu0
        %v1807 = vadd.f32 %v1607, %v1806
        %v1808 = vpop.f32.mrb[0].mxu0
        %v1809 = vadd.f32 %v1603, %v1808
        %v1810 = vpop.f32.mrb[0].mxu0
        %v1811 = vadd.f32 %v1607, %v1810
        %1812 = vmatprep.mubr.bf16.mxu0 0
        %1813 = vmatmul.mubr.bf16.gmra.mrb[0].mxu0 %v1575
        %v1814 = vpop.f32.mrb[0].mxu0
        %v1815 = vadd.f32 %v1603, %v1814
        %v1816 = vpop.f32.mrb[0].mxu0
        %v1817 = vadd.f32 %v1607, %v1816
        %v1818 = vpop.f32.mrb[0].mxu0
        %v1819 = vadd.f32 %v1603, %v1818
        %v1820 = vpop.f32.mrb[0].mxu0
        %v1821 = vadd.f32 %v1607, %v1820
        %1822 = vmatprep.mubr.bf16.mxu0 0
        %1823 = vmatmul.mubr.bf16.gmra.mrb[0].mxu0 %v1576
        %v1824 = vpop.f32.mrb[0].mxu0
        %v1825 = vadd.f32 %v1603, %v1824
        %v1826 = vpop.f32.mrb[0].mxu0
        %v1827 = vadd.f32 %v1607, %v1826
        %v1828 = vpop.f32.mrb[0].mxu0
        %v1829 = vadd.f32 %v1603, %v1828
        %v1830 = vpop.f32.mrb[0].mxu0
        %v1831 = vadd.f32 %v1607, %v1830
        %1832 = vmatprep.mubr.bf16.mxu0 0
        %1833 = vmatmul.mubr.bf16.gmra.mrb[0].mxu0 %v1577
        %v1834 = vpop.f32.mrb[0].mxu0
        %v1835 = vadd.f32 %v1603, %v1834
        %v1836 = vpop.f32.mrb[0].mxu0
        %v1837 = vadd.f32 %v1607, %v1836
        %v1838 = vpop.f32.mrb[0].mxu0
        %v1839 = vadd.f32 %v1603, %v1838
        %v1840 = vpop.f32.mrb[0].mxu0
        %v1841 = vadd.f32 %v1607, %v1840
        %1842 = vmatprep.mubr.bf16.mxu0 0
        %1843 = vmatmul.mubr.bf16.gmra.mrb[0].mxu0 %v1578
        %v1844 = vpop.f32.mrb[0].mxu0
        %v1845 = vadd.f32 %v1603, %v1844
        %v1846 = vpop.f32.mrb[0].mxu0
        %v1847 = vadd.f32 %v1607, %v1846
        %v1848 = vpop.f32.mrb[0].mxu0
        %v1849 = vadd.f32 %v1603, %v1848
        %v1850 = vpop.f32.mrb[0].mxu0
        %v1851 = vadd.f32 %v1607, %v1850
        %1852 = vmatprep.mubr.bf16.mxu0 0
        %1853 = vmatmul.mubr.bf16.gmra.mrb[0].mxu0 %v1579
        %v1854 = vpop.f32.mrb[0].mxu0
        %v1855 = vadd.f32 %v1603, %v1854
        %v1856 = vpop.f32.mrb[0].mxu0
        %v1857 = vadd.f32 %v1607, %v1856
        %v1858 = vpop.f32.mrb[0].mxu0
        %v1859 = vadd.f32 %v1603, %v1858
        %v1860 = vpop.f32.mrb[0].mxu0
        %v1861 = vadd.f32 %v1607, %v1860
        %1862 = vmatprep.mubr.bf16.mxu0 0
        %1863 = vmatmul.mubr.bf16.gmra.mrb[0].mxu0 %v1580
        %v1864 = vpop.f32.mrb[0].mxu0
        %v1865 = vadd.f32 %v1603, %v1864
        %v1866 = vpop.f32.mrb[0].mxu0
        %v1867 = vadd.f32 %v1607, %v1866
        %v1868 = vpop.f32.mrb[0].mxu0
        %v1869 = vadd.f32 %v1603, %v1868
        %v1870 = vpop.f32.mrb[0].mxu0
        %v1871 = vadd.f32 %v1607, %v1870
        %1872 = vmatprep.mubr.bf16.mxu0 0
        %1873 = vmatmul.mubr.bf16.gmra.mrb[0].mxu0 %v1581
        %v1874 = vpop.f32.mrb[0].mxu0
        %v1875 = vadd.f32 %v1603, %v1874
        %v1876 = vpop.f32.mrb[0].mxu0
        %v1877 = vadd.f32 %v1607, %v1876
        %v1878 = vpop.f32.mrb[0].mxu0
        %v1879 = vadd.f32 %v1603, %v1878
        %v1880 = vpop.f32.mrb[0].mxu0
        %v1881 = vadd.f32 %v1607, %v1880
        %1882 = vdwg.mxu0
        %v1883 = vpack.c.bf16 %v1729, %v1725
        %v1884 = vpack.c.bf16 %v1731, %v1727
        %v1885 = vpack.c.bf16 %v1739, %v1735
        %v1886 = vpack.c.bf16 %v1741, %v1737
        %v1887 = vpack.c.bf16 %v1749, %v1745
        %v1888 = vpack.c.bf16 %v1751, %v1747
        %v1889 = vpack.c.bf16 %v1759, %v1755
        %v1890 = vpack.c.bf16 %v1761, %v1757
        %v1891 = vpack.c.bf16 %v1769, %v1765
        %v1892 = vpack.c.bf16 %v1771, %v1767
        %v1893 = vpack.c.bf16 %v1779, %v1775
        %v1894 = vpack.c.bf16 %v1781, %v1777
        %v1895 = vpack.c.bf16 %v1789, %v1785
        %v1896 = vpack.c.bf16 %v1791, %v1787
        %v1897 = vpack.c.bf16 %v1799, %v1795
        %v1898 = vpack.c.bf16 %v1801, %v1797
        %v1899 = vpack.c.bf16 %v1809, %v1805
        %v1900 = vpack.c.bf16 %v1811, %v1807
        %v1901 = vpack.c.bf16 %v1819, %v1815
        %v1902 = vpack.c.bf16 %v1821, %v1817
        %v1903 = vpack.c.bf16 %v1829, %v1825
        %v1904 = vpack.c.bf16 %v1831, %v1827
        %v1905 = vpack.c.bf16 %v1839, %v1835
        %v1906 = vpack.c.bf16 %v1841, %v1837
        %v1907 = vpack.c.bf16 %v1849, %v1845
        %v1908 = vpack.c.bf16 %v1851, %v1847
        %v1909 = vpack.c.bf16 %v1859, %v1855
        %v1910 = vpack.c.bf16 %v1861, %v1857
        %v1911 = vpack.c.bf16 %v1869, %v1865
        %v1912 = vpack.c.bf16 %v1871, %v1867
        %v1913 = vpack.c.bf16 %v1879, %v1875
        %v1914 = vpack.c.bf16 %v1881, %v1877
        %v1915 = vld [vmem:[#allocation5] sm:$0xff]
        %v1916 = vld [vmem:[#allocation5 + $0x8] sm:$0xff]
        %v1917 = vld [vmem:[#allocation5 + $0x10] sm:$0xff]
        %v1918 = vld [vmem:[#allocation5 + $0x18] sm:$0xff]
        %v1919 = vld [vmem:[#allocation5 + $0x20] sm:$0xff]
        %v1920 = vld [vmem:[#allocation5 + $0x28] sm:$0xff]
        %v1921 = vld [vmem:[#allocation5 + $0x30] sm:$0xff]
        %v1922 = vld [vmem:[#allocation5 + $0x38] sm:$0xff]
        %v1923 = vld [vmem:[#allocation5 + $0x40] sm:$0xff]
        %v1924 = vld [vmem:[#allocation5 + $0x48] sm:$0xff]
        %v1925 = vld [vmem:[#allocation5 + $0x50] sm:$0xff]
        %v1926 = vld [vmem:[#allocation5 + $0x58] sm:$0xff]
        %v1927 = vld [vmem:[#allocation5 + $0x60] sm:$0xff]
        %v1928 = vld [vmem:[#allocation5 + $0x68] sm:$0xff]
        %v1929 = vld [vmem:[#allocation5 + $0x70] sm:$0xff]
        %v1930 = vld [vmem:[#allocation5 + $0x78] sm:$0xff]
        %v1931 = vld [vmem:[#allocation5 + $0x80] sm:$0xff]
        %v1932 = vld [vmem:[#allocation5 + $0x88] sm:$0xff]
        %v1933 = vld [vmem:[#allocation5 + $0x90] sm:$0xff]
        %v1934 = vld [vmem:[#allocation5 + $0x98] sm:$0xff]
        %v1935 = vld [vmem:[#allocation5 + $0xa0] sm:$0xff]
        %v1936 = vld [vmem:[#allocation5 + $0xa8] sm:$0xff]
        %v1937 = vld [vmem:[#allocation5 + $0xb0] sm:$0xff]
        %v1938 = vld [vmem:[#allocation5 + $0xb8] sm:$0xff]
        %v1939 = vld [vmem:[#allocation5 + $0xc0] sm:$0xff]
        %v1940 = vld [vmem:[#allocation5 + $0xc8] sm:$0xff]
        %v1941 = vld [vmem:[#allocation5 + $0xd0] sm:$0xff]
        %v1942 = vld [vmem:[#allocation5 + $0xd8] sm:$0xff]
        %v1943 = vld [vmem:[#allocation5 + $0xe0] sm:$0xff]
        %v1944 = vld [vmem:[#allocation5 + $0xe8] sm:$0xff]
        %v1945 = vld [vmem:[#allocation5 + $0xf0] sm:$0xff]
        %v1946 = vld [vmem:[#allocation5 + $0xf8] sm:$0xff]
        %v1947 = vld [vmem:[#allocation5 + $0x100] sm:$0xff]
        %v1948 = vld [vmem:[#allocation5 + $0x108] sm:$0xff]
        %v1949 = vld [vmem:[#allocation5 + $0x110] sm:$0xff]
        %v1950 = vld [vmem:[#allocation5 + $0x118] sm:$0xff]
        %v1951 = vld [vmem:[#allocation5 + $0x120] sm:$0xff]
        %v1952 = vld [vmem:[#allocation5 + $0x128] sm:$0xff]
        %v1953 = vld [vmem:[#allocation5 + $0x130] sm:$0xff]
        %v1954 = vld [vmem:[#allocation5 + $0x138] sm:$0xff]
        %v1955 = vld [vmem:[#allocation5 + $0x140] sm:$0xff]
        %v1956 = vld [vmem:[#allocation5 + $0x148] sm:$0xff]
        %v1957 = vld [vmem:[#allocation5 + $0x150] sm:$0xff]
        %v1958 = vld [vmem:[#allocation5 + $0x158] sm:$0xff]
        %v1959 = vld [vmem:[#allocation5 + $0x160] sm:$0xff]
        %v1960 = vld [vmem:[#allocation5 + $0x168] sm:$0xff]
        %v1961 = vld [vmem:[#allocation5 + $0x170] sm:$0xff]
        %v1962 = vld [vmem:[#allocation5 + $0x178] sm:$0xff]
        %v1963 = vld [vmem:[#allocation5 + $0x180] sm:$0xff]
        %v1964 = vld [vmem:[#allocation5 + $0x188] sm:$0xff]
        %v1965 = vld [vmem:[#allocation5 + $0x190] sm:$0xff]
        %v1966 = vld [vmem:[#allocation5 + $0x198] sm:$0xff]
        %v1967 = vld [vmem:[#allocation5 + $0x1a0] sm:$0xff]
        %v1968 = vld [vmem:[#allocation5 + $0x1a8] sm:$0xff]
        %v1969 = vld [vmem:[#allocation5 + $0x1b0] sm:$0xff]
        %v1970 = vld [vmem:[#allocation5 + $0x1b8] sm:$0xff]
        %v1971 = vld [vmem:[#allocation5 + $0x1c0] sm:$0xff]
        %v1972 = vld [vmem:[#allocation5 + $0x1c8] sm:$0xff]
        %v1973 = vld [vmem:[#allocation5 + $0x1d0] sm:$0xff]
        %v1974 = vld [vmem:[#allocation5 + $0x1d8] sm:$0xff]
        %v1975 = vld [vmem:[#allocation5 + $0x1e0] sm:$0xff]
        %v1976 = vld [vmem:[#allocation5 + $0x1e8] sm:$0xff]
        %v1977 = vld [vmem:[#allocation5 + $0x1f0] sm:$0xff]
        %v1978 = vld [vmem:[#allocation5 + $0x1f8] sm:$0xff]
        %v1979 = vld [vmem:[#allocation2] sm:$0xf]
        %v1981 = vlaneseq
        %v1982 = vshrl.u32 %v1981, 7
        %v1983 = vsub.s32 0, %v1982
        %v1984 = vrot.slane %v1979, %v1983
        %v1985 = vlaneseq
        %v1986 = vshrl.u32 %v1985, 7
        %v1987 = vsub.s32 1, %v1986
        %v1988 = vrot.slane %v1979, %v1987
        %v1989 = vlaneseq
        %v1990 = vshrl.u32 %v1989, 7
        %v1991 = vsub.s32 2, %v1990
        %v1992 = vrot.slane %v1979, %v1991
        %v1993 = vlaneseq
        %v1994 = vshrl.u32 %v1993, 7
        %v1995 = vsub.s32 3, %v1994
        %v1996 = vrot.slane %v1979, %v1995
        %v2065 = vunpack.c.l.b16 %v1915
        %v2066 = vunpack.c.h.b16 %v1915
        %v2067 = vunpack.c.l.b16 %v1916
        %v2068 = vunpack.c.h.b16 %v1916
        %v2069 = vunpack.c.l.b16 %v1917
        %v2070 = vunpack.c.h.b16 %v1917
        %v2071 = vunpack.c.l.b16 %v1918
        %v2072 = vunpack.c.h.b16 %v1918
        %v2073 = vunpack.c.l.b16 %v1919
        %v2074 = vunpack.c.h.b16 %v1919
        %v2075 = vunpack.c.l.b16 %v1920
        %v2076 = vunpack.c.h.b16 %v1920
        %v2077 = vunpack.c.l.b16 %v1921
        %v2078 = vunpack.c.h.b16 %v1921
        %v2079 = vunpack.c.l.b16 %v1922
        %v2080 = vunpack.c.h.b16 %v1922
        %v2081 = vunpack.c.l.b16 %v1923
        %v2082 = vunpack.c.h.b16 %v1923
        %v2083 = vunpack.c.l.b16 %v1924
        %v2084 = vunpack.c.h.b16 %v1924
        %v2085 = vunpack.c.l.b16 %v1925
        %v2086 = vunpack.c.h.b16 %v1925
        %v2087 = vunpack.c.l.b16 %v1926
        %v2088 = vunpack.c.h.b16 %v1926
        %v2089 = vunpack.c.l.b16 %v1927
        %v2090 = vunpack.c.h.b16 %v1927
        %v2091 = vunpack.c.l.b16 %v1928
        %v2092 = vunpack.c.h.b16 %v1928
        %v2093 = vunpack.c.l.b16 %v1929
        %v2094 = vunpack.c.h.b16 %v1929
        %v2095 = vunpack.c.l.b16 %v1930
        %v2096 = vunpack.c.h.b16 %v1930
        %v2097 = vunpack.c.l.b16 %v1931
        %v2098 = vunpack.c.h.b16 %v1931
        %v2099 = vunpack.c.l.b16 %v1932
        %v2100 = vunpack.c.h.b16 %v1932
        %v2101 = vunpack.c.l.b16 %v1933
        %v2102 = vunpack.c.h.b16 %v1933
        %v2103 = vunpack.c.l.b16 %v1934
        %v2104 = vunpack.c.h.b16 %v1934
        %v2105 = vunpack.c.l.b16 %v1935
        %v2106 = vunpack.c.h.b16 %v1935
        %v2107 = vunpack.c.l.b16 %v1936
        %v2108 = vunpack.c.h.b16 %v1936
        %v2109 = vunpack.c.l.b16 %v1937
        %v2110 = vunpack.c.h.b16 %v1937
        %v2111 = vunpack.c.l.b16 %v1938
        %v2112 = vunpack.c.h.b16 %v1938
        %v2113 = vunpack.c.l.b16 %v1939
        %v2114 = vunpack.c.h.b16 %v1939
        %v2115 = vunpack.c.l.b16 %v1940
        %v2116 = vunpack.c.h.b16 %v1940
        %v2117 = vunpack.c.l.b16 %v1941
        %v2118 = vunpack.c.h.b16 %v1941
        %v2119 = vunpack.c.l.b16 %v1942
        %v2120 = vunpack.c.h.b16 %v1942
        %v2121 = vunpack.c.l.b16 %v1943
        %v2122 = vunpack.c.h.b16 %v1943
        %v2123 = vunpack.c.l.b16 %v1944
        %v2124 = vunpack.c.h.b16 %v1944
        %v2125 = vunpack.c.l.b16 %v1945
        %v2126 = vunpack.c.h.b16 %v1945
        %v2127 = vunpack.c.l.b16 %v1946
        %v2128 = vunpack.c.h.b16 %v1946
        %v2129 = vunpack.c.l.b16 %v1947
        %v2130 = vunpack.c.h.b16 %v1947
        %v2131 = vunpack.c.l.b16 %v1948
        %v2132 = vunpack.c.h.b16 %v1948
        %v2133 = vunpack.c.l.b16 %v1949
        %v2134 = vunpack.c.h.b16 %v1949
        %v2135 = vunpack.c.l.b16 %v1950
        %v2136 = vunpack.c.h.b16 %v1950
        %v2137 = vunpack.c.l.b16 %v1951
        %v2138 = vunpack.c.h.b16 %v1951
        %v2139 = vunpack.c.l.b16 %v1952
        %v2140 = vunpack.c.h.b16 %v1952
        %v2141 = vunpack.c.l.b16 %v1953
        %v2142 = vunpack.c.h.b16 %v1953
        %v2143 = vunpack.c.l.b16 %v1954
        %v2144 = vunpack.c.h.b16 %v1954
        %v2145 = vunpack.c.l.b16 %v1955
        %v2146 = vunpack.c.h.b16 %v1955
        %v2147 = vunpack.c.l.b16 %v1956
        %v2148 = vunpack.c.h.b16 %v1956
        %v2149 = vunpack.c.l.b16 %v1957
        %v2150 = vunpack.c.h.b16 %v1957
        %v2151 = vunpack.c.l.b16 %v1958
        %v2152 = vunpack.c.h.b16 %v1958
        %v2153 = vunpack.c.l.b16 %v1959
        %v2154 = vunpack.c.h.b16 %v1959
        %v2155 = vunpack.c.l.b16 %v1960
        %v2156 = vunpack.c.h.b16 %v1960
        %v2157 = vunpack.c.l.b16 %v1961
        %v2158 = vunpack.c.h.b16 %v1961
        %v2159 = vunpack.c.l.b16 %v1962
        %v2160 = vunpack.c.h.b16 %v1962
        %v2161 = vunpack.c.l.b16 %v1963
        %v2162 = vunpack.c.h.b16 %v1963
        %v2163 = vunpack.c.l.b16 %v1964
        %v2164 = vunpack.c.h.b16 %v1964
        %v2165 = vunpack.c.l.b16 %v1965
        %v2166 = vunpack.c.h.b16 %v1965
        %v2167 = vunpack.c.l.b16 %v1966
        %v2168 = vunpack.c.h.b16 %v1966
        %v2169 = vunpack.c.l.b16 %v1967
        %v2170 = vunpack.c.h.b16 %v1967
        %v2171 = vunpack.c.l.b16 %v1968
        %v2172 = vunpack.c.h.b16 %v1968
        %v2173 = vunpack.c.l.b16 %v1969
        %v2174 = vunpack.c.h.b16 %v1969
        %v2175 = vunpack.c.l.b16 %v1970
        %v2176 = vunpack.c.h.b16 %v1970
        %v2177 = vunpack.c.l.b16 %v1971
        %v2178 = vunpack.c.h.b16 %v1971
        %v2179 = vunpack.c.l.b16 %v1972
        %v2180 = vunpack.c.h.b16 %v1972
        %v2181 = vunpack.c.l.b16 %v1973
        %v2182 = vunpack.c.h.b16 %v1973
        %v2183 = vunpack.c.l.b16 %v1974
        %v2184 = vunpack.c.h.b16 %v1974
        %v2185 = vunpack.c.l.b16 %v1975
        %v2186 = vunpack.c.h.b16 %v1975
        %v2187 = vunpack.c.l.b16 %v1976
        %v2188 = vunpack.c.h.b16 %v1976
        %v2189 = vunpack.c.l.b16 %v1977
        %v2190 = vunpack.c.h.b16 %v1977
        %v2191 = vunpack.c.l.b16 %v1978
        %v2192 = vunpack.c.h.b16 %v1978
        %v2193 = vpack.c.b16 %v2069, %v2065
        %v2194 = vpack.c.b16 %v2070, %v2066
        %v2195 = vpack.c.b16 %v2071, %v2067
        %v2196 = vpack.c.b16 %v2072, %v2068
        %v2197 = vpack.c.b16 %v2077, %v2073
        %v2198 = vpack.c.b16 %v2078, %v2074
        %v2199 = vpack.c.b16 %v2079, %v2075
        %v2200 = vpack.c.b16 %v2080, %v2076
        %v2201 = vpack.c.b16 %v2085, %v2081
        %v2202 = vpack.c.b16 %v2086, %v2082
        %v2203 = vpack.c.b16 %v2087, %v2083
        %v2204 = vpack.c.b16 %v2088, %v2084
        %v2205 = vpack.c.b16 %v2093, %v2089
        %v2206 = vpack.c.b16 %v2094, %v2090
        %v2207 = vpack.c.b16 %v2095, %v2091
        %v2208 = vpack.c.b16 %v2096, %v2092
        %v2209 = vpack.c.b16 %v2101, %v2097
        %v2210 = vpack.c.b16 %v2102, %v2098
        %v2211 = vpack.c.b16 %v2103, %v2099
        %v2212 = vpack.c.b16 %v2104, %v2100
        %v2213 = vpack.c.b16 %v2109, %v2105
        %v2214 = vpack.c.b16 %v2110, %v2106
        %v2215 = vpack.c.b16 %v2111, %v2107
        %v2216 = vpack.c.b16 %v2112, %v2108
        %v2217 = vpack.c.b16 %v2117, %v2113
        %v2218 = vpack.c.b16 %v2118, %v2114
        %v2219 = vpack.c.b16 %v2119, %v2115
        %v2220 = vpack.c.b16 %v2120, %v2116
        %v2221 = vpack.c.b16 %v2125, %v2121
        %v2222 = vpack.c.b16 %v2126, %v2122
        %v2223 = vpack.c.b16 %v2127, %v2123
        %v2224 = vpack.c.b16 %v2128, %v2124
        %v2225 = vpack.c.b16 %v2133, %v2129
        %v2226 = vpack.c.b16 %v2134, %v2130
        %v2227 = vpack.c.b16 %v2135, %v2131
        %v2228 = vpack.c.b16 %v2136, %v2132
        %v2229 = vpack.c.b16 %v2141, %v2137
        %v2230 = vpack.c.b16 %v2142, %v2138
        %v2231 = vpack.c.b16 %v2143, %v2139
        %v2232 = vpack.c.b16 %v2144, %v2140
        %v2233 = vpack.c.b16 %v2149, %v2145
        %v2234 = vpack.c.b16 %v2150, %v2146
        %v2235 = vpack.c.b16 %v2151, %v2147
        %v2236 = vpack.c.b16 %v2152, %v2148
        %v2237 = vpack.c.b16 %v2157, %v2153
        %v2238 = vpack.c.b16 %v2158, %v2154
        %v2239 = vpack.c.b16 %v2159, %v2155
        %v2240 = vpack.c.b16 %v2160, %v2156
        %v2241 = vpack.c.b16 %v2165, %v2161
        %v2242 = vpack.c.b16 %v2166, %v2162
        %v2243 = vpack.c.b16 %v2167, %v2163
        %v2244 = vpack.c.b16 %v2168, %v2164
        %v2245 = vpack.c.b16 %v2173, %v2169
        %v2246 = vpack.c.b16 %v2174, %v2170
        %v2247 = vpack.c.b16 %v2175, %v2171
        %v2248 = vpack.c.b16 %v2176, %v2172
        %v2249 = vpack.c.b16 %v2181, %v2177
        %v2250 = vpack.c.b16 %v2182, %v2178
        %v2251 = vpack.c.b16 %v2183, %v2179
        %v2252 = vpack.c.b16 %v2184, %v2180
        %v2253 = vpack.c.b16 %v2189, %v2185
        %v2254 = vpack.c.b16 %v2190, %v2186
        %v2255 = vpack.c.b16 %v2191, %v2187
        %v2256 = vpack.c.b16 %v2192, %v2188
        %2321 = vmatprep.subr.bf16.mxu0 %v2194
        %2322 = vmatpush1.bf16.msra.mxu0 %v2193
        %2323 = vmatprep.subr.bf16.mxu0 %v2198
        %2324 = vmatpush1.bf16.msra.mxu0 %v2197
        %2325 = vmatprep.subr.bf16.mxu0 %v2202
        %2326 = vmatpush1.bf16.msra.mxu0 %v2201
        %2327 = vmatprep.subr.bf16.mxu0 %v2206
        %2328 = vmatpush1.bf16.msra.mxu0 %v2205
        %2329 = vmatprep.subr.bf16.mxu0 %v2210
        %2330 = vmatpush1.bf16.msra.mxu0 %v2209
        %2331 = vmatprep.subr.bf16.mxu0 %v2214
        %2332 = vmatpush1.bf16.msra.mxu0 %v2213
        %2333 = vmatprep.subr.bf16.mxu0 %v2218
        %2334 = vmatpush1.bf16.msra.mxu0 %v2217
        %2335 = vmatprep.subr.bf16.mxu0 %v2222
        %2336 = vmatpush1.bf16.msra.mxu0 %v2221
        %2337 = vmatprep.subr.bf16.mxu0 %v2226
        %2338 = vmatpush1.bf16.msra.mxu0 %v2225
        %2339 = vmatprep.subr.bf16.mxu0 %v2230
        %2340 = vmatpush1.bf16.msra.mxu0 %v2229
        %2341 = vmatprep.subr.bf16.mxu0 %v2234
        %2342 = vmatpush1.bf16.msra.mxu0 %v2233
        %2343 = vmatprep.subr.bf16.mxu0 %v2238
        %2344 = vmatpush1.bf16.msra.mxu0 %v2237
        %2345 = vmatprep.subr.bf16.mxu0 %v2242
        %2346 = vmatpush1.bf16.msra.mxu0 %v2241
        %2347 = vmatprep.subr.bf16.mxu0 %v2246
        %2348 = vmatpush1.bf16.msra.mxu0 %v2245
        %2349 = vmatprep.subr.bf16.mxu0 %v2250
        %2350 = vmatpush1.bf16.msra.mxu0 %v2249
        %2351 = vmatprep.subr.bf16.mxu0 %v2254
        %2352 = vmatpush1.bf16.msra.mxu0 %v2253
        %2353 = vmatprep.mubr.bf16.mxu0 %v1884
        %2354 = vmatmul.mubr.bf16.gmra.mrb[0].mxu0 %v1883
        %v2355 = vpop.f32.mrb[0].mxu0
        %v2356 = vadd.f32 %v1984, %v2355
        %v2357 = vpop.f32.mrb[0].mxu0
        %v2358 = vadd.f32 %v1988, %v2357
        %v2359 = vpop.f32.mrb[0].mxu0
        %v2360 = vadd.f32 %v1984, %v2359
        %v2361 = vpop.f32.mrb[0].mxu0
        %v2362 = vadd.f32 %v1988, %v2361
        %2363 = vmatprep.mubr.bf16.mxu0 %v1886
        %2364 = vmatmul.mubr.bf16.gmra.mrb[0].mxu0 %v1885
        %v2365 = vpop.f32.mrb[0].mxu0
        %v2366 = vadd.f32 %v1984, %v2365
        %v2367 = vpop.f32.mrb[0].mxu0
        %v2368 = vadd.f32 %v1988, %v2367
        %v2369 = vpop.f32.mrb[0].mxu0
        %v2370 = vadd.f32 %v1984, %v2369
        %v2371 = vpop.f32.mrb[0].mxu0
        %v2372 = vadd.f32 %v1988, %v2371
        %2373 = vmatprep.mubr.bf16.mxu0 %v1888
        %2374 = vmatmul.mubr.bf16.gmra.mrb[0].mxu0 %v1887
        %v2375 = vpop.f32.mrb[0].mxu0
        %v2376 = vadd.f32 %v1984, %v2375
        %v2377 = vpop.f32.mrb[0].mxu0
        %v2378 = vadd.f32 %v1988, %v2377
        %v2379 = vpop.f32.mrb[0].mxu0
        %v2380 = vadd.f32 %v1984, %v2379
        %v2381 = vpop.f32.mrb[0].mxu0
        %v2382 = vadd.f32 %v1988, %v2381
        %2383 = vmatprep.mubr.bf16.mxu0 %v1890
        %2384 = vmatmul.mubr.bf16.gmra.mrb[0].mxu0 %v1889
        %v2385 = vpop.f32.mrb[0].mxu0
        %v2386 = vadd.f32 %v1984, %v2385
        %v2387 = vpop.f32.mrb[0].mxu0
        %v2388 = vadd.f32 %v1988, %v2387
        %v2389 = vpop.f32.mrb[0].mxu0
        %v2390 = vadd.f32 %v1984, %v2389
        %v2391 = vpop.f32.mrb[0].mxu0
        %v2392 = vadd.f32 %v1988, %v2391
        %2393 = vmatprep.mubr.bf16.mxu0 %v1892
        %2394 = vmatmul.mubr.bf16.gmra.mrb[0].mxu0 %v1891
        %v2395 = vpop.f32.mrb[0].mxu0
        %v2396 = vadd.f32 %v1984, %v2395
        %v2397 = vpop.f32.mrb[0].mxu0
        %v2398 = vadd.f32 %v1988, %v2397
        %v2399 = vpop.f32.mrb[0].mxu0
        %v2400 = vadd.f32 %v1984, %v2399
        %v2401 = vpop.f32.mrb[0].mxu0
        %v2402 = vadd.f32 %v1988, %v2401
        %2403 = vmatprep.mubr.bf16.mxu0 %v1894
        %2404 = vmatmul.mubr.bf16.gmra.mrb[0].mxu0 %v1893
        %v2405 = vpop.f32.mrb[0].mxu0
        %v2406 = vadd.f32 %v1984, %v2405
        %v2407 = vpop.f32.mrb[0].mxu0
        %v2408 = vadd.f32 %v1988, %v2407
        %v2409 = vpop.f32.mrb[0].mxu0
        %v2410 = vadd.f32 %v1984, %v2409
        %v2411 = vpop.f32.mrb[0].mxu0
        %v2412 = vadd.f32 %v1988, %v2411
        %2413 = vmatprep.mubr.bf16.mxu0 %v1896
        %2414 = vmatmul.mubr.bf16.gmra.mrb[0].mxu0 %v1895
        %v2415 = vpop.f32.mrb[0].mxu0
        %v2416 = vadd.f32 %v1984, %v2415
        %v2417 = vpop.f32.mrb[0].mxu0
        %v2418 = vadd.f32 %v1988, %v2417
        %v2419 = vpop.f32.mrb[0].mxu0
        %v2420 = vadd.f32 %v1984, %v2419
        %v2421 = vpop.f32.mrb[0].mxu0
        %v2422 = vadd.f32 %v1988, %v2421
        %2423 = vmatprep.mubr.bf16.mxu0 %v1898
        %2424 = vmatmul.mubr.bf16.gmra.mrb[0].mxu0 %v1897
        %v2425 = vpop.f32.mrb[0].mxu0
        %v2426 = vadd.f32 %v1984, %v2425
        %v2427 = vpop.f32.mrb[0].mxu0
        %v2428 = vadd.f32 %v1988, %v2427
        %v2429 = vpop.f32.mrb[0].mxu0
        %v2430 = vadd.f32 %v1984, %v2429
        %v2431 = vpop.f32.mrb[0].mxu0
        %v2432 = vadd.f32 %v1988, %v2431
        %2433 = vmatprep.mubr.bf16.mxu0 %v1900
        %2434 = vmatmul.mubr.bf16.gmra.mrb[0].mxu0 %v1899
        %v2435 = vpop.f32.mrb[0].mxu0
        %v2436 = vadd.f32 %v1984, %v2435
        %v2437 = vpop.f32.mrb[0].mxu0
        %v2438 = vadd.f32 %v1988, %v2437
        %v2439 = vpop.f32.mrb[0].mxu0
        %v2440 = vadd.f32 %v1984, %v2439
        %v2441 = vpop.f32.mrb[0].mxu0
        %v2442 = vadd.f32 %v1988, %v2441
        %2443 = vmatprep.mubr.bf16.mxu0 %v1902
        %2444 = vmatmul.mubr.bf16.gmra.mrb[0].mxu0 %v1901
        %v2445 = vpop.f32.mrb[0].mxu0
        %v2446 = vadd.f32 %v1984, %v2445
        %v2447 = vpop.f32.mrb[0].mxu0
        %v2448 = vadd.f32 %v1988, %v2447
        %v2449 = vpop.f32.mrb[0].mxu0
        %v2450 = vadd.f32 %v1984, %v2449
        %v2451 = vpop.f32.mrb[0].mxu0
        %v2452 = vadd.f32 %v1988, %v2451
        %2453 = vmatprep.mubr.bf16.mxu0 %v1904
        %2454 = vmatmul.mubr.bf16.gmra.mrb[0].mxu0 %v1903
        %v2455 = vpop.f32.mrb[0].mxu0
        %v2456 = vadd.f32 %v1984, %v2455
        %v2457 = vpop.f32.mrb[0].mxu0
        %v2458 = vadd.f32 %v1988, %v2457
        %v2459 = vpop.f32.mrb[0].mxu0
        %v2460 = vadd.f32 %v1984, %v2459
        %v2461 = vpop.f32.mrb[0].mxu0
        %v2462 = vadd.f32 %v1988, %v2461
        %2463 = vmatprep.mubr.bf16.mxu0 %v1906
        %2464 = vmatmul.mubr.bf16.gmra.mrb[0].mxu0 %v1905
        %v2465 = vpop.f32.mrb[0].mxu0
        %v2466 = vadd.f32 %v1984, %v2465
        %v2467 = vpop.f32.mrb[0].mxu0
        %v2468 = vadd.f32 %v1988, %v2467
        %v2469 = vpop.f32.mrb[0].mxu0
        %v2470 = vadd.f32 %v1984, %v2469
        %v2471 = vpop.f32.mrb[0].mxu0
        %v2472 = vadd.f32 %v1988, %v2471
        %2473 = vmatprep.mubr.bf16.mxu0 %v1908
        %2474 = vmatmul.mubr.bf16.gmra.mrb[0].mxu0 %v1907
        %v2475 = vpop.f32.mrb[0].mxu0
        %v2476 = vadd.f32 %v1984, %v2475
        %v2477 = vpop.f32.mrb[0].mxu0
        %v2478 = vadd.f32 %v1988, %v2477
        %v2479 = vpop.f32.mrb[0].mxu0
        %v2480 = vadd.f32 %v1984, %v2479
        %v2481 = vpop.f32.mrb[0].mxu0
        %v2482 = vadd.f32 %v1988, %v2481
        %2483 = vmatprep.mubr.bf16.mxu0 %v1910
        %2484 = vmatmul.mubr.bf16.gmra.mrb[0].mxu0 %v1909
        %v2485 = vpop.f32.mrb[0].mxu0
        %v2486 = vadd.f32 %v1984, %v2485
        %v2487 = vpop.f32.mrb[0].mxu0
        %v2488 = vadd.f32 %v1988, %v2487
        %v2489 = vpop.f32.mrb[0].mxu0
        %v2490 = vadd.f32 %v1984, %v2489
        %v2491 = vpop.f32.mrb[0].mxu0
        %v2492 = vadd.f32 %v1988, %v2491
        %2493 = vmatprep.mubr.bf16.mxu0 %v1912
        %2494 = vmatmul.mubr.bf16.gmra.mrb[0].mxu0 %v1911
        %v2495 = vpop.f32.mrb[0].mxu0
        %v2496 = vadd.f32 %v1984, %v2495
        %v2497 = vpop.f32.mrb[0].mxu0
        %v2498 = vadd.f32 %v1988, %v2497
        %v2499 = vpop.f32.mrb[0].mxu0
        %v2500 = vadd.f32 %v1984, %v2499
        %v2501 = vpop.f32.mrb[0].mxu0
        %v2502 = vadd.f32 %v1988, %v2501
        %2503 = vmatprep.mubr.bf16.mxu0 %v1914
        %2504 = vmatmul.mubr.bf16.gmra.mrb[0].mxu0 %v1913
        %v2505 = vpop.f32.mrb[0].mxu0
        %v2506 = vadd.f32 %v1984, %v2505
        %v2507 = vpop.f32.mrb[0].mxu0
        %v2508 = vadd.f32 %v1988, %v2507
        %v2509 = vpop.f32.mrb[0].mxu0
        %v2510 = vadd.f32 %v1984, %v2509
        %v2511 = vpop.f32.mrb[0].mxu0
        %v2512 = vadd.f32 %v1988, %v2511
        %2513 = vdwg.mxu0
        %2514 = vmatprep.subr.bf16.mxu0 %v2196
        %2515 = vmatpush1.bf16.msra.mxu0 %v2195
        %2516 = vmatprep.subr.bf16.mxu0 %v2200
        %2517 = vmatpush1.bf16.msra.mxu0 %v2199
        %2518 = vmatprep.subr.bf16.mxu0 %v2204
        %2519 = vmatpush1.bf16.msra.mxu0 %v2203
        %2520 = vmatprep.subr.bf16.mxu0 %v2208
        %2521 = vmatpush1.bf16.msra.mxu0 %v2207
        %2522 = vmatprep.subr.bf16.mxu0 %v2212
        %2523 = vmatpush1.bf16.msra.mxu0 %v2211
        %2524 = vmatprep.subr.bf16.mxu0 %v2216
        %2525 = vmatpush1.bf16.msra.mxu0 %v2215
        %2526 = vmatprep.subr.bf16.mxu0 %v2220
        %2527 = vmatpush1.bf16.msra.mxu0 %v2219
        %2528 = vmatprep.subr.bf16.mxu0 %v2224
        %2529 = vmatpush1.bf16.msra.mxu0 %v2223
        %2530 = vmatprep.subr.bf16.mxu0 %v2228
        %2531 = vmatpush1.bf16.msra.mxu0 %v2227
        %2532 = vmatprep.subr.bf16.mxu0 %v2232
        %2533 = vmatpush1.bf16.msra.mxu0 %v2231
        %2534 = vmatprep.subr.bf16.mxu0 %v2236
        %2535 = vmatpush1.bf16.msra.mxu0 %v2235
        %2536 = vmatprep.subr.bf16.mxu0 %v2240
        %2537 = vmatpush1.bf16.msra.mxu0 %v2239
        %2538 = vmatprep.subr.bf16.mxu0 %v2244
        %2539 = vmatpush1.bf16.msra.mxu0 %v2243
        %2540 = vmatprep.subr.bf16.mxu0 %v2248
        %2541 = vmatpush1.bf16.msra.mxu0 %v2247
        %2542 = vmatprep.subr.bf16.mxu0 %v2252
        %2543 = vmatpush1.bf16.msra.mxu0 %v2251
        %2544 = vmatprep.subr.bf16.mxu0 %v2256
        %2545 = vmatpush1.bf16.msra.mxu0 %v2255
        %2546 = vmatprep.mubr.bf16.mxu0 %v1884
        %2547 = vmatmul.mubr.bf16.gmra.mrb[0].mxu0 %v1883
        %v2548 = vpop.f32.mrb[0].mxu0
        %v2549 = vadd.f32 %v1992, %v2548
        %v2550 = vpop.f32.mrb[0].mxu0
        %v2551 = vadd.f32 %v1996, %v2550
        %v2552 = vpop.f32.mrb[0].mxu0
        %v2553 = vadd.f32 %v1992, %v2552
        %v2554 = vpop.f32.mrb[0].mxu0
        %v2555 = vadd.f32 %v1996, %v2554
        %2556 = vmatprep.mubr.bf16.mxu0 %v1886
        %2557 = vmatmul.mubr.bf16.gmra.mrb[0].mxu0 %v1885
        %v2558 = vpop.f32.mrb[0].mxu0
        %v2559 = vadd.f32 %v1992, %v2558
        %v2560 = vpop.f32.mrb[0].mxu0
        %v2561 = vadd.f32 %v1996, %v2560
        %v2562 = vpop.f32.mrb[0].mxu0
        %v2563 = vadd.f32 %v1992, %v2562
        %v2564 = vpop.f32.mrb[0].mxu0
        %v2565 = vadd.f32 %v1996, %v2564
        %2566 = vmatprep.mubr.bf16.mxu0 %v1888
        %2567 = vmatmul.mubr.bf16.gmra.mrb[0].mxu0 %v1887
        %v2568 = vpop.f32.mrb[0].mxu0
        %v2569 = vadd.f32 %v1992, %v2568
        %v2570 = vpop.f32.mrb[0].mxu0
        %v2571 = vadd.f32 %v1996, %v2570
        %v2572 = vpop.f32.mrb[0].mxu0
        %v2573 = vadd.f32 %v1992, %v2572
        %v2574 = vpop.f32.mrb[0].mxu0
        %v2575 = vadd.f32 %v1996, %v2574
        %2576 = vmatprep.mubr.bf16.mxu0 %v1890
        %2577 = vmatmul.mubr.bf16.gmra.mrb[0].mxu0 %v1889
        %v2578 = vpop.f32.mrb[0].mxu0
        %v2579 = vadd.f32 %v1992, %v2578
        %v2580 = vpop.f32.mrb[0].mxu0
        %v2581 = vadd.f32 %v1996, %v2580
        %v2582 = vpop.f32.mrb[0].mxu0
        %v2583 = vadd.f32 %v1992, %v2582
        %v2584 = vpop.f32.mrb[0].mxu0
        %v2585 = vadd.f32 %v1996, %v2584
        %2586 = vmatprep.mubr.bf16.mxu0 %v1892
        %2587 = vmatmul.mubr.bf16.gmra.mrb[0].mxu0 %v1891
        %v2588 = vpop.f32.mrb[0].mxu0
        %v2589 = vadd.f32 %v1992, %v2588
        %v2590 = vpop.f32.mrb[0].mxu0
        %v2591 = vadd.f32 %v1996, %v2590
        %v2592 = vpop.f32.mrb[0].mxu0
        %v2593 = vadd.f32 %v1992, %v2592
        %v2594 = vpop.f32.mrb[0].mxu0
        %v2595 = vadd.f32 %v1996, %v2594
        %2596 = vmatprep.mubr.bf16.mxu0 %v1894
        %2597 = vmatmul.mubr.bf16.gmra.mrb[0].mxu0 %v1893
        %v2598 = vpop.f32.mrb[0].mxu0
        %v2599 = vadd.f32 %v1992, %v2598
        %v2600 = vpop.f32.mrb[0].mxu0
        %v2601 = vadd.f32 %v1996, %v2600
        %v2602 = vpop.f32.mrb[0].mxu0
        %v2603 = vadd.f32 %v1992, %v2602
        %v2604 = vpop.f32.mrb[0].mxu0
        %v2605 = vadd.f32 %v1996, %v2604
        %2606 = vmatprep.mubr.bf16.mxu0 %v1896
        %2607 = vmatmul.mubr.bf16.gmra.mrb[0].mxu0 %v1895
        %v2608 = vpop.f32.mrb[0].mxu0
        %v2609 = vadd.f32 %v1992, %v2608
        %v2610 = vpop.f32.mrb[0].mxu0
        %v2611 = vadd.f32 %v1996, %v2610
        %v2612 = vpop.f32.mrb[0].mxu0
        %v2613 = vadd.f32 %v1992, %v2612
        %v2614 = vpop.f32.mrb[0].mxu0
        %v2615 = vadd.f32 %v1996, %v2614
        %2616 = vmatprep.mubr.bf16.mxu0 %v1898
        %2617 = vmatmul.mubr.bf16.gmra.mrb[0].mxu0 %v1897
        %v2618 = vpop.f32.mrb[0].mxu0
        %v2619 = vadd.f32 %v1992, %v2618
        %v2620 = vpop.f32.mrb[0].mxu0
        %v2621 = vadd.f32 %v1996, %v2620
        %v2622 = vpop.f32.mrb[0].mxu0
        %v2623 = vadd.f32 %v1992, %v2622
        %v2624 = vpop.f32.mrb[0].mxu0
        %v2625 = vadd.f32 %v1996, %v2624
        %2626 = vmatprep.mubr.bf16.mxu0 %v1900
        %2627 = vmatmul.mubr.bf16.gmra.mrb[0].mxu0 %v1899
        %v2628 = vpop.f32.mrb[0].mxu0
        %v2629 = vadd.f32 %v1992, %v2628
        %v2630 = vpop.f32.mrb[0].mxu0
        %v2631 = vadd.f32 %v1996, %v2630
        %v2632 = vpop.f32.mrb[0].mxu0
        %v2633 = vadd.f32 %v1992, %v2632
        %v2634 = vpop.f32.mrb[0].mxu0
        %v2635 = vadd.f32 %v1996, %v2634
        %2636 = vmatprep.mubr.bf16.mxu0 %v1902
        %2637 = vmatmul.mubr.bf16.gmra.mrb[0].mxu0 %v1901
        %v2638 = vpop.f32.mrb[0].mxu0
        %v2639 = vadd.f32 %v1992, %v2638
        %v2640 = vpop.f32.mrb[0].mxu0
        %v2641 = vadd.f32 %v1996, %v2640
        %v2642 = vpop.f32.mrb[0].mxu0
        %v2643 = vadd.f32 %v1992, %v2642
        %v2644 = vpop.f32.mrb[0].mxu0
        %v2645 = vadd.f32 %v1996, %v2644
        %2646 = vmatprep.mubr.bf16.mxu0 %v1904
        %2647 = vmatmul.mubr.bf16.gmra.mrb[0].mxu0 %v1903
        %v2648 = vpop.f32.mrb[0].mxu0
        %v2649 = vadd.f32 %v1992, %v2648
        %v2650 = vpop.f32.mrb[0].mxu0
        %v2651 = vadd.f32 %v1996, %v2650
        %v2652 = vpop.f32.mrb[0].mxu0
        %v2653 = vadd.f32 %v1992, %v2652
        %v2654 = vpop.f32.mrb[0].mxu0
        %v2655 = vadd.f32 %v1996, %v2654
        %2656 = vmatprep.mubr.bf16.mxu0 %v1906
        %2657 = vmatmul.mubr.bf16.gmra.mrb[0].mxu0 %v1905
        %v2658 = vpop.f32.mrb[0].mxu0
        %v2659 = vadd.f32 %v1992, %v2658
        %v2660 = vpop.f32.mrb[0].mxu0
        %v2661 = vadd.f32 %v1996, %v2660
        %v2662 = vpop.f32.mrb[0].mxu0
        %v2663 = vadd.f32 %v1992, %v2662
        %v2664 = vpop.f32.mrb[0].mxu0
        %v2665 = vadd.f32 %v1996, %v2664
        %2666 = vmatprep.mubr.bf16.mxu0 %v1908
        %2667 = vmatmul.mubr.bf16.gmra.mrb[0].mxu0 %v1907
        %v2668 = vpop.f32.mrb[0].mxu0
        %v2669 = vadd.f32 %v1992, %v2668
        %v2670 = vpop.f32.mrb[0].mxu0
        %v2671 = vadd.f32 %v1996, %v2670
        %v2672 = vpop.f32.mrb[0].mxu0
        %v2673 = vadd.f32 %v1992, %v2672
        %v2674 = vpop.f32.mrb[0].mxu0
        %v2675 = vadd.f32 %v1996, %v2674
        %2676 = vmatprep.mubr.bf16.mxu0 %v1910
        %2677 = vmatmul.mubr.bf16.gmra.mrb[0].mxu0 %v1909
        %v2678 = vpop.f32.mrb[0].mxu0
        %v2679 = vadd.f32 %v1992, %v2678
        %v2680 = vpop.f32.mrb[0].mxu0
        %v2681 = vadd.f32 %v1996, %v2680
        %v2682 = vpop.f32.mrb[0].mxu0
        %v2683 = vadd.f32 %v1992, %v2682
        %v2684 = vpop.f32.mrb[0].mxu0
        %v2685 = vadd.f32 %v1996, %v2684
        %2686 = vmatprep.mubr.bf16.mxu0 %v1912
        %2687 = vmatmul.mubr.bf16.gmra.mrb[0].mxu0 %v1911
        %v2688 = vpop.f32.mrb[0].mxu0
        %v2689 = vadd.f32 %v1992, %v2688
        %v2690 = vpop.f32.mrb[0].mxu0
        %v2691 = vadd.f32 %v1996, %v2690
        %v2692 = vpop.f32.mrb[0].mxu0
        %v2693 = vadd.f32 %v1992, %v2692
        %v2694 = vpop.f32.mrb[0].mxu0
        %v2695 = vadd.f32 %v1996, %v2694
        %2696 = vmatprep.mubr.bf16.mxu0 %v1914
        %2697 = vmatmul.mubr.bf16.gmra.mrb[0].mxu0 %v1913
        %v2698 = vpop.f32.mrb[0].mxu0
        %v2699 = vadd.f32 %v1992, %v2698
        %v2700 = vpop.f32.mrb[0].mxu0
        %v2701 = vadd.f32 %v1996, %v2700
        %v2702 = vpop.f32.mrb[0].mxu0
        %v2703 = vadd.f32 %v1992, %v2702
        %v2704 = vpop.f32.mrb[0].mxu0
        %v2705 = vadd.f32 %v1996, %v2704
        %2706 = vdwg.mxu0
        %v2707 = vmax.f32 %v2356, 0.0
        %v2708 = vmax.f32 %v2358, 0.0
        %v2709 = vmax.f32 %v2549, 0.0
        %v2710 = vmax.f32 %v2551, 0.0
        %v2711 = vmax.f32 %v2360, 0.0
        %v2712 = vmax.f32 %v2362, 0.0
        %v2713 = vmax.f32 %v2553, 0.0
        %v2714 = vmax.f32 %v2555, 0.0
        %v2715 = vmax.f32 %v2366, 0.0
        %v2716 = vmax.f32 %v2368, 0.0
        %v2717 = vmax.f32 %v2559, 0.0
        %v2718 = vmax.f32 %v2561, 0.0
        %v2719 = vmax.f32 %v2370, 0.0
        %v2720 = vmax.f32 %v2372, 0.0
        %v2721 = vmax.f32 %v2563, 0.0
        %v2722 = vmax.f32 %v2565, 0.0
        %v2723 = vmax.f32 %v2376, 0.0
        %v2724 = vmax.f32 %v2378, 0.0
        %v2725 = vmax.f32 %v2569, 0.0
        %v2726 = vmax.f32 %v2571, 0.0
        %v2727 = vmax.f32 %v2380, 0.0
        %v2728 = vmax.f32 %v2382, 0.0
        %v2729 = vmax.f32 %v2573, 0.0
        %v2730 = vmax.f32 %v2575, 0.0
        %v2731 = vmax.f32 %v2386, 0.0
        %v2732 = vmax.f32 %v2388, 0.0
        %v2733 = vmax.f32 %v2579, 0.0
        %v2734 = vmax.f32 %v2581, 0.0
        %v2735 = vmax.f32 %v2390, 0.0
        %v2736 = vmax.f32 %v2392, 0.0
        %v2737 = vmax.f32 %v2583, 0.0
        %v2738 = vmax.f32 %v2585, 0.0
        %v2739 = vmax.f32 %v2396, 0.0
        %v2740 = vmax.f32 %v2398, 0.0
        %v2741 = vmax.f32 %v2589, 0.0
        %v2742 = vmax.f32 %v2591, 0.0
        %v2743 = vmax.f32 %v2400, 0.0
        %v2744 = vmax.f32 %v2402, 0.0
        %v2745 = vmax.f32 %v2593, 0.0
        %v2746 = vmax.f32 %v2595, 0.0
        %v2747 = vmax.f32 %v2406, 0.0
        %v2748 = vmax.f32 %v2408, 0.0
        %v2749 = vmax.f32 %v2599, 0.0
        %v2750 = vmax.f32 %v2601, 0.0
        %v2751 = vmax.f32 %v2410, 0.0
        %v2752 = vmax.f32 %v2412, 0.0
        %v2753 = vmax.f32 %v2603, 0.0
        %v2754 = vmax.f32 %v2605, 0.0
        %v2755 = vmax.f32 %v2416, 0.0
        %v2756 = vmax.f32 %v2418, 0.0
        %v2757 = vmax.f32 %v2609, 0.0
        %v2758 = vmax.f32 %v2611, 0.0
        %v2759 = vmax.f32 %v2420, 0.0
        %v2760 = vmax.f32 %v2422, 0.0
        %v2761 = vmax.f32 %v2613, 0.0
        %v2762 = vmax.f32 %v2615, 0.0
        %v2763 = vmax.f32 %v2426, 0.0
        %v2764 = vmax.f32 %v2428, 0.0
        %v2765 = vmax.f32 %v2619, 0.0
        %v2766 = vmax.f32 %v2621, 0.0
        %v2767 = vmax.f32 %v2430, 0.0
        %v2768 = vmax.f32 %v2432, 0.0
        %v2769 = vmax.f32 %v2623, 0.0
        %v2770 = vmax.f32 %v2625, 0.0
        %v2771 = vmax.f32 %v2436, 0.0
        %v2772 = vmax.f32 %v2438, 0.0
        %v2773 = vmax.f32 %v2629, 0.0
        %v2774 = vmax.f32 %v2631, 0.0
        %v2775 = vmax.f32 %v2440, 0.0
        %v2776 = vmax.f32 %v2442, 0.0
        %v2777 = vmax.f32 %v2633, 0.0
        %v2778 = vmax.f32 %v2635, 0.0
        %v2779 = vmax.f32 %v2446, 0.0
        %v2780 = vmax.f32 %v2448, 0.0
        %v2781 = vmax.f32 %v2639, 0.0
        %v2782 = vmax.f32 %v2641, 0.0
        %v2783 = vmax.f32 %v2450, 0.0
        %v2784 = vmax.f32 %v2452, 0.0
        %v2785 = vmax.f32 %v2643, 0.0
        %v2786 = vmax.f32 %v2645, 0.0
        %v2787 = vmax.f32 %v2456, 0.0
        %v2788 = vmax.f32 %v2458, 0.0
        %v2789 = vmax.f32 %v2649, 0.0
        %v2790 = vmax.f32 %v2651, 0.0
        %v2791 = vmax.f32 %v2460, 0.0
        %v2792 = vmax.f32 %v2462, 0.0
        %v2793 = vmax.f32 %v2653, 0.0
        %v2794 = vmax.f32 %v2655, 0.0
        %v2795 = vmax.f32 %v2466, 0.0
        %v2796 = vmax.f32 %v2468, 0.0
        %v2797 = vmax.f32 %v2659, 0.0
        %v2798 = vmax.f32 %v2661, 0.0
        %v2799 = vmax.f32 %v2470, 0.0
        %v2800 = vmax.f32 %v2472, 0.0
        %v2801 = vmax.f32 %v2663, 0.0
        %v2802 = vmax.f32 %v2665, 0.0
        %v2803 = vmax.f32 %v2476, 0.0
        %v2804 = vmax.f32 %v2478, 0.0
        %v2805 = vmax.f32 %v2669, 0.0
        %v2806 = vmax.f32 %v2671, 0.0
        %v2807 = vmax.f32 %v2480, 0.0
        %v2808 = vmax.f32 %v2482, 0.0
        %v2809 = vmax.f32 %v2673, 0.0
        %v2810 = vmax.f32 %v2675, 0.0
        %v2811 = vmax.f32 %v2486, 0.0
        %v2812 = vmax.f32 %v2488, 0.0
        %v2813 = vmax.f32 %v2679, 0.0
        %v2814 = vmax.f32 %v2681, 0.0
        %v2815 = vmax.f32 %v2490, 0.0
        %v2816 = vmax.f32 %v2492, 0.0
        %v2817 = vmax.f32 %v2683, 0.0
        %v2818 = vmax.f32 %v2685, 0.0
        %v2819 = vmax.f32 %v2496, 0.0
        %v2820 = vmax.f32 %v2498, 0.0
        %v2821 = vmax.f32 %v2689, 0.0
        %v2822 = vmax.f32 %v2691, 0.0
        %v2823 = vmax.f32 %v2500, 0.0
        %v2824 = vmax.f32 %v2502, 0.0
        %v2825 = vmax.f32 %v2693, 0.0
        %v2826 = vmax.f32 %v2695, 0.0
        %v2827 = vmax.f32 %v2506, 0.0
        %v2828 = vmax.f32 %v2508, 0.0
        %v2829 = vmax.f32 %v2699, 0.0
        %v2830 = vmax.f32 %v2701, 0.0
        %v2831 = vmax.f32 %v2510, 0.0
        %v2832 = vmax.f32 %v2512, 0.0
        %v2833 = vmax.f32 %v2703, 0.0
        %v2834 = vmax.f32 %v2705, 0.0
        %v2835 = vpack.c.bf16 %v2711, %v2707
        %v2836 = vpack.c.bf16 %v2712, %v2708
        %v2837 = vpack.c.bf16 %v2713, %v2709
        %v2838 = vpack.c.bf16 %v2714, %v2710
        %v2839 = vpack.c.bf16 %v2719, %v2715
        %v2840 = vpack.c.bf16 %v2720, %v2716
        %v2841 = vpack.c.bf16 %v2721, %v2717
        %v2842 = vpack.c.bf16 %v2722, %v2718
        %v2843 = vpack.c.bf16 %v2727, %v2723
        %v2844 = vpack.c.bf16 %v2728, %v2724
        %v2845 = vpack.c.bf16 %v2729, %v2725
        %v2846 = vpack.c.bf16 %v2730, %v2726
        %v2847 = vpack.c.bf16 %v2735, %v2731
        %v2848 = vpack.c.bf16 %v2736, %v2732
        %v2849 = vpack.c.bf16 %v2737, %v2733
        %v2850 = vpack.c.bf16 %v2738, %v2734
        %v2851 = vpack.c.bf16 %v2743, %v2739
        %v2852 = vpack.c.bf16 %v2744, %v2740
        %v2853 = vpack.c.bf16 %v2745, %v2741
        %v2854 = vpack.c.bf16 %v2746, %v2742
        %v2855 = vpack.c.bf16 %v2751, %v2747
        %v2856 = vpack.c.bf16 %v2752, %v2748
        %v2857 = vpack.c.bf16 %v2753, %v2749
        %v2858 = vpack.c.bf16 %v2754, %v2750
        %v2859 = vpack.c.bf16 %v2759, %v2755
        %v2860 = vpack.c.bf16 %v2760, %v2756
        %v2861 = vpack.c.bf16 %v2761, %v2757
        %v2862 = vpack.c.bf16 %v2762, %v2758
        %v2863 = vpack.c.bf16 %v2767, %v2763
        %v2864 = vpack.c.bf16 %v2768, %v2764
        %v2865 = vpack.c.bf16 %v2769, %v2765
        %v2866 = vpack.c.bf16 %v2770, %v2766
        %v2867 = vpack.c.bf16 %v2775, %v2771
        %v2868 = vpack.c.bf16 %v2776, %v2772
        %v2869 = vpack.c.bf16 %v2777, %v2773
        %v2870 = vpack.c.bf16 %v2778, %v2774
        %v2871 = vpack.c.bf16 %v2783, %v2779
        %v2872 = vpack.c.bf16 %v2784, %v2780
        %v2873 = vpack.c.bf16 %v2785, %v2781
        %v2874 = vpack.c.bf16 %v2786, %v2782
        %v2875 = vpack.c.bf16 %v2791, %v2787
        %v2876 = vpack.c.bf16 %v2792, %v2788
        %v2877 = vpack.c.bf16 %v2793, %v2789
        %v2878 = vpack.c.bf16 %v2794, %v2790
        %v2879 = vpack.c.bf16 %v2799, %v2795
        %v2880 = vpack.c.bf16 %v2800, %v2796
        %v2881 = vpack.c.bf16 %v2801, %v2797
        %v2882 = vpack.c.bf16 %v2802, %v2798
        %v2883 = vpack.c.bf16 %v2807, %v2803
        %v2884 = vpack.c.bf16 %v2808, %v2804
        %v2885 = vpack.c.bf16 %v2809, %v2805
        %v2886 = vpack.c.bf16 %v2810, %v2806
        %v2887 = vpack.c.bf16 %v2815, %v2811
        %v2888 = vpack.c.bf16 %v2816, %v2812
        %v2889 = vpack.c.bf16 %v2817, %v2813
        %v2890 = vpack.c.bf16 %v2818, %v2814
        %v2891 = vpack.c.bf16 %v2823, %v2819
        %v2892 = vpack.c.bf16 %v2824, %v2820
        %v2893 = vpack.c.bf16 %v2825, %v2821
        %v2894 = vpack.c.bf16 %v2826, %v2822
        %v2895 = vpack.c.bf16 %v2831, %v2827
        %v2896 = vpack.c.bf16 %v2832, %v2828
        %v2897 = vpack.c.bf16 %v2833, %v2829
        %v2898 = vpack.c.bf16 %v2834, %v2830
        %v2899 = vld [vmem:[%s10] sm:$0xff]
        %v2900 = vld [vmem:[%s10 + $0x8] sm:$0xff]
        %v2901 = vld [vmem:[%s10 + $0x10] sm:$0xff]
        %v2902 = vld [vmem:[%s10 + $0x18] sm:$0xff]
        %v2903 = vld [vmem:[%s10 + $0x20] sm:$0xff]
        %v2904 = vld [vmem:[%s10 + $0x28] sm:$0xff]
        %v2905 = vld [vmem:[%s10 + $0x30] sm:$0xff]
        %v2906 = vld [vmem:[%s10 + $0x38] sm:$0xff]
        %v2907 = vld [vmem:[%s10 + $0x40] sm:$0xff]
        %v2908 = vld [vmem:[%s10 + $0x48] sm:$0xff]
        %v2909 = vld [vmem:[%s10 + $0x50] sm:$0xff]
        %v2910 = vld [vmem:[%s10 + $0x58] sm:$0xff]
        %v2911 = vld [vmem:[%s10 + $0x60] sm:$0xff]
        %v2912 = vld [vmem:[%s10 + $0x68] sm:$0xff]
        %v2913 = vld [vmem:[%s10 + $0x70] sm:$0xff]
        %v2914 = vld [vmem:[%s10 + $0x78] sm:$0xff]
        %v2915 = vld [vmem:[%s10 + $0x80] sm:$0xff]
        %v2916 = vld [vmem:[%s10 + $0x88] sm:$0xff]
        %v2917 = vld [vmem:[%s10 + $0x90] sm:$0xff]
        %v2918 = vld [vmem:[%s10 + $0x98] sm:$0xff]
        %v2919 = vld [vmem:[%s10 + $0xa0] sm:$0xff]
        %v2920 = vld [vmem:[%s10 + $0xa8] sm:$0xff]
        %v2921 = vld [vmem:[%s10 + $0xb0] sm:$0xff]
        %v2922 = vld [vmem:[%s10 + $0xb8] sm:$0xff]
        %v2923 = vld [vmem:[%s10 + $0xc0] sm:$0xff]
        %v2924 = vld [vmem:[%s10 + $0xc8] sm:$0xff]
        %v2925 = vld [vmem:[%s10 + $0xd0] sm:$0xff]
        %v2926 = vld [vmem:[%s10 + $0xd8] sm:$0xff]
        %v2927 = vld [vmem:[%s10 + $0xe0] sm:$0xff]
        %v2928 = vld [vmem:[%s10 + $0xe8] sm:$0xff]
        %v2929 = vld [vmem:[%s10 + $0xf0] sm:$0xff]
        %v2930 = vld [vmem:[%s10 + $0xf8] sm:$0xff]
        %v2931 = vld [vmem:[%s10 + $0x100] sm:$0xff]
        %v2932 = vld [vmem:[%s10 + $0x108] sm:$0xff]
        %v2933 = vld [vmem:[%s10 + $0x110] sm:$0xff]
        %v2934 = vld [vmem:[%s10 + $0x118] sm:$0xff]
        %v2935 = vld [vmem:[%s10 + $0x120] sm:$0xff]
        %v2936 = vld [vmem:[%s10 + $0x128] sm:$0xff]
        %v2937 = vld [vmem:[%s10 + $0x130] sm:$0xff]
        %v2938 = vld [vmem:[%s10 + $0x138] sm:$0xff]
        %v2939 = vld [vmem:[%s10 + $0x140] sm:$0xff]
        %v2940 = vld [vmem:[%s10 + $0x148] sm:$0xff]
        %v2941 = vld [vmem:[%s10 + $0x150] sm:$0xff]
        %v2942 = vld [vmem:[%s10 + $0x158] sm:$0xff]
        %v2943 = vld [vmem:[%s10 + $0x160] sm:$0xff]
        %v2944 = vld [vmem:[%s10 + $0x168] sm:$0xff]
        %v2945 = vld [vmem:[%s10 + $0x170] sm:$0xff]
        %v2946 = vld [vmem:[%s10 + $0x178] sm:$0xff]
        %v2947 = vld [vmem:[%s10 + $0x180] sm:$0xff]
        %v2948 = vld [vmem:[%s10 + $0x188] sm:$0xff]
        %v2949 = vld [vmem:[%s10 + $0x190] sm:$0xff]
        %v2950 = vld [vmem:[%s10 + $0x198] sm:$0xff]
        %v2951 = vld [vmem:[%s10 + $0x1a0] sm:$0xff]
        %v2952 = vld [vmem:[%s10 + $0x1a8] sm:$0xff]
        %v2953 = vld [vmem:[%s10 + $0x1b0] sm:$0xff]
        %v2954 = vld [vmem:[%s10 + $0x1b8] sm:$0xff]
        %v2955 = vld [vmem:[%s10 + $0x1c0] sm:$0xff]
        %v2956 = vld [vmem:[%s10 + $0x1c8] sm:$0xff]
        %v2957 = vld [vmem:[%s10 + $0x1d0] sm:$0xff]
        %v2958 = vld [vmem:[%s10 + $0x1d8] sm:$0xff]
        %v2959 = vld [vmem:[%s10 + $0x1e0] sm:$0xff]
        %v2960 = vld [vmem:[%s10 + $0x1e8] sm:$0xff]
        %v2961 = vld [vmem:[%s10 + $0x1f0] sm:$0xff]
        %v2962 = vld [vmem:[%s10 + $0x1f8] sm:$0xff]
        %v2963 = vld [vmem:[%s10 + $0x200] sm:$0xff]
        %v2964 = vld [vmem:[%s10 + $0x208] sm:$0xff]
        %v2965 = vld [vmem:[%s10 + $0x210] sm:$0xff]
        %v2966 = vld [vmem:[%s10 + $0x218] sm:$0xff]
        %v2967 = vld [vmem:[%s10 + $0x220] sm:$0xff]
        %v2968 = vld [vmem:[%s10 + $0x228] sm:$0xff]
        %v2969 = vld [vmem:[%s10 + $0x230] sm:$0xff]
        %v2970 = vld [vmem:[%s10 + $0x238] sm:$0xff]
        %v2971 = vld [vmem:[%s10 + $0x240] sm:$0xff]
        %v2972 = vld [vmem:[%s10 + $0x248] sm:$0xff]
        %v2973 = vld [vmem:[%s10 + $0x250] sm:$0xff]
        %v2974 = vld [vmem:[%s10 + $0x258] sm:$0xff]
        %v2975 = vld [vmem:[%s10 + $0x260] sm:$0xff]
        %v2976 = vld [vmem:[%s10 + $0x268] sm:$0xff]
        %v2977 = vld [vmem:[%s10 + $0x270] sm:$0xff]
        %v2978 = vld [vmem:[%s10 + $0x278] sm:$0xff]
        %v2979 = vld [vmem:[%s10 + $0x280] sm:$0xff]
        %v2980 = vld [vmem:[%s10 + $0x288] sm:$0xff]
        %v2981 = vld [vmem:[%s10 + $0x290] sm:$0xff]
        %v2982 = vld [vmem:[%s10 + $0x298] sm:$0xff]
        %v2983 = vld [vmem:[%s10 + $0x2a0] sm:$0xff]
        %v2984 = vld [vmem:[%s10 + $0x2a8] sm:$0xff]
        %v2985 = vld [vmem:[%s10 + $0x2b0] sm:$0xff]
        %v2986 = vld [vmem:[%s10 + $0x2b8] sm:$0xff]
        %v2987 = vld [vmem:[%s10 + $0x2c0] sm:$0xff]
        %v2988 = vld [vmem:[%s10 + $0x2c8] sm:$0xff]
        %v2989 = vld [vmem:[%s10 + $0x2d0] sm:$0xff]
        %v2990 = vld [vmem:[%s10 + $0x2d8] sm:$0xff]
        %v2991 = vld [vmem:[%s10 + $0x2e0] sm:$0xff]
        %v2992 = vld [vmem:[%s10 + $0x2e8] sm:$0xff]
        %v2993 = vld [vmem:[%s10 + $0x2f0] sm:$0xff]
        %v2994 = vld [vmem:[%s10 + $0x2f8] sm:$0xff]
        %v2995 = vld [vmem:[%s10 + $0x300] sm:$0xff]
        %v2996 = vld [vmem:[%s10 + $0x308] sm:$0xff]
        %v2997 = vld [vmem:[%s10 + $0x310] sm:$0xff]
        %v2998 = vld [vmem:[%s10 + $0x318] sm:$0xff]
        %v2999 = vld [vmem:[%s10 + $0x320] sm:$0xff]
        %v3000 = vld [vmem:[%s10 + $0x328] sm:$0xff]
        %v3001 = vld [vmem:[%s10 + $0x330] sm:$0xff]
        %v3002 = vld [vmem:[%s10 + $0x338] sm:$0xff]
        %v3003 = vld [vmem:[%s10 + $0x340] sm:$0xff]
        %v3004 = vld [vmem:[%s10 + $0x348] sm:$0xff]
        %v3005 = vld [vmem:[%s10 + $0x350] sm:$0xff]
        %v3006 = vld [vmem:[%s10 + $0x358] sm:$0xff]
        %v3007 = vld [vmem:[%s10 + $0x360] sm:$0xff]
        %v3008 = vld [vmem:[%s10 + $0x368] sm:$0xff]
        %v3009 = vld [vmem:[%s10 + $0x370] sm:$0xff]
        %v3010 = vld [vmem:[%s10 + $0x378] sm:$0xff]
        %v3011 = vld [vmem:[%s10 + $0x380] sm:$0xff]
        %v3012 = vld [vmem:[%s10 + $0x388] sm:$0xff]
        %v3013 = vld [vmem:[%s10 + $0x390] sm:$0xff]
        %v3014 = vld [vmem:[%s10 + $0x398] sm:$0xff]
        %v3015 = vld [vmem:[%s10 + $0x3a0] sm:$0xff]
        %v3016 = vld [vmem:[%s10 + $0x3a8] sm:$0xff]
        %v3017 = vld [vmem:[%s10 + $0x3b0] sm:$0xff]
        %v3018 = vld [vmem:[%s10 + $0x3b8] sm:$0xff]
        %v3019 = vld [vmem:[%s10 + $0x3c0] sm:$0xff]
        %v3020 = vld [vmem:[%s10 + $0x3c8] sm:$0xff]
        %v3021 = vld [vmem:[%s10 + $0x3d0] sm:$0xff]
        %v3022 = vld [vmem:[%s10 + $0x3d8] sm:$0xff]
        %v3023 = vld [vmem:[%s10 + $0x3e0] sm:$0xff]
        %v3024 = vld [vmem:[%s10 + $0x3e8] sm:$0xff]
        %v3025 = vld [vmem:[%s10 + $0x3f0] sm:$0xff]
        %v3026 = vld [vmem:[%s10 + $0x3f8] sm:$0xff]
        %v3027 = vld [vmem:[%s10 + $0x400] sm:$0xff]
        %v3028 = vld [vmem:[%s10 + $0x408] sm:$0xff]
        %v3029 = vld [vmem:[%s10 + $0x410] sm:$0xff]
        %v3030 = vld [vmem:[%s10 + $0x418] sm:$0xff]
        %v3031 = vld [vmem:[%s10 + $0x420] sm:$0xff]
        %v3032 = vld [vmem:[%s10 + $0x428] sm:$0xff]
        %v3033 = vld [vmem:[%s10 + $0x430] sm:$0xff]
        %v3034 = vld [vmem:[%s10 + $0x438] sm:$0xff]
        %v3035 = vld [vmem:[%s10 + $0x440] sm:$0xff]
        %v3036 = vld [vmem:[%s10 + $0x448] sm:$0xff]
        %v3037 = vld [vmem:[%s10 + $0x450] sm:$0xff]
        %v3038 = vld [vmem:[%s10 + $0x458] sm:$0xff]
        %v3039 = vld [vmem:[%s10 + $0x460] sm:$0xff]
        %v3040 = vld [vmem:[%s10 + $0x468] sm:$0xff]
        %v3041 = vld [vmem:[%s10 + $0x470] sm:$0xff]
        %v3042 = vld [vmem:[%s10 + $0x478] sm:$0xff]
        %v3043 = vld [vmem:[%s10 + $0x480] sm:$0xff]
        %v3044 = vld [vmem:[%s10 + $0x488] sm:$0xff]
        %v3045 = vld [vmem:[%s10 + $0x490] sm:$0xff]
        %v3046 = vld [vmem:[%s10 + $0x498] sm:$0xff]
        %v3047 = vld [vmem:[%s10 + $0x4a0] sm:$0xff]
        %v3048 = vld [vmem:[%s10 + $0x4a8] sm:$0xff]
        %v3049 = vld [vmem:[%s10 + $0x4b0] sm:$0xff]
        %v3050 = vld [vmem:[%s10 + $0x4b8] sm:$0xff]
        %v3051 = vld [vmem:[%s10 + $0x4c0] sm:$0xff]
        %v3052 = vld [vmem:[%s10 + $0x4c8] sm:$0xff]
        %v3053 = vld [vmem:[%s10 + $0x4d0] sm:$0xff]
        %v3054 = vld [vmem:[%s10 + $0x4d8] sm:$0xff]
        %v3055 = vld [vmem:[%s10 + $0x4e0] sm:$0xff]
        %v3056 = vld [vmem:[%s10 + $0x4e8] sm:$0xff]
        %v3057 = vld [vmem:[%s10 + $0x4f0] sm:$0xff]
        %v3058 = vld [vmem:[%s10 + $0x4f8] sm:$0xff]
        %v3059 = vld [vmem:[%s10 + $0x500] sm:$0xff]
        %v3060 = vld [vmem:[%s10 + $0x508] sm:$0xff]
        %v3061 = vld [vmem:[%s10 + $0x510] sm:$0xff]
        %v3062 = vld [vmem:[%s10 + $0x518] sm:$0xff]
        %v3063 = vld [vmem:[%s10 + $0x520] sm:$0xff]
        %v3064 = vld [vmem:[%s10 + $0x528] sm:$0xff]
        %v3065 = vld [vmem:[%s10 + $0x530] sm:$0xff]
        %v3066 = vld [vmem:[%s10 + $0x538] sm:$0xff]
        %v3067 = vld [vmem:[%s10 + $0x540] sm:$0xff]
        %v3068 = vld [vmem:[%s10 + $0x548] sm:$0xff]
        %v3069 = vld [vmem:[%s10 + $0x550] sm:$0xff]
        %v3070 = vld [vmem:[%s10 + $0x558] sm:$0xff]
        %v3071 = vld [vmem:[%s10 + $0x560] sm:$0xff]
        %v3072 = vld [vmem:[%s10 + $0x568] sm:$0xff]
        %v3073 = vld [vmem:[%s10 + $0x570] sm:$0xff]
        %v3074 = vld [vmem:[%s10 + $0x578] sm:$0xff]
        %v3075 = vld [vmem:[%s10 + $0x580] sm:$0xff]
        %v3076 = vld [vmem:[%s10 + $0x588] sm:$0xff]
        %v3077 = vld [vmem:[%s10 + $0x590] sm:$0xff]
        %v3078 = vld [vmem:[%s10 + $0x598] sm:$0xff]
        %v3079 = vld [vmem:[%s10 + $0x5a0] sm:$0xff]
        %v3080 = vld [vmem:[%s10 + $0x5a8] sm:$0xff]
        %v3081 = vld [vmem:[%s10 + $0x5b0] sm:$0xff]
        %v3082 = vld [vmem:[%s10 + $0x5b8] sm:$0xff]
        %v3083 = vld [vmem:[%s10 + $0x5c0] sm:$0xff]
        %v3084 = vld [vmem:[%s10 + $0x5c8] sm:$0xff]
        %v3085 = vld [vmem:[%s10 + $0x5d0] sm:$0xff]
        %v3086 = vld [vmem:[%s10 + $0x5d8] sm:$0xff]
        %v3087 = vld [vmem:[%s10 + $0x5e0] sm:$0xff]
        %v3088 = vld [vmem:[%s10 + $0x5e8] sm:$0xff]
        %v3089 = vld [vmem:[%s10 + $0x5f0] sm:$0xff]
        %v3090 = vld [vmem:[%s10 + $0x5f8] sm:$0xff]
        %v3091 = vld [vmem:[%s10 + $0x600] sm:$0xff]
        %v3092 = vld [vmem:[%s10 + $0x608] sm:$0xff]
        %v3093 = vld [vmem:[%s10 + $0x610] sm:$0xff]
        %v3094 = vld [vmem:[%s10 + $0x618] sm:$0xff]
        %v3095 = vld [vmem:[%s10 + $0x620] sm:$0xff]
        %v3096 = vld [vmem:[%s10 + $0x628] sm:$0xff]
        %v3097 = vld [vmem:[%s10 + $0x630] sm:$0xff]
        %v3098 = vld [vmem:[%s10 + $0x638] sm:$0xff]
        %v3099 = vld [vmem:[%s10 + $0x640] sm:$0xff]
        %v3100 = vld [vmem:[%s10 + $0x648] sm:$0xff]
        %v3101 = vld [vmem:[%s10 + $0x650] sm:$0xff]
        %v3102 = vld [vmem:[%s10 + $0x658] sm:$0xff]
        %v3103 = vld [vmem:[%s10 + $0x660] sm:$0xff]
        %v3104 = vld [vmem:[%s10 + $0x668] sm:$0xff]
        %v3105 = vld [vmem:[%s10 + $0x670] sm:$0xff]
        %v3106 = vld [vmem:[%s10 + $0x678] sm:$0xff]
        %v3107 = vld [vmem:[%s10 + $0x680] sm:$0xff]
        %v3108 = vld [vmem:[%s10 + $0x688] sm:$0xff]
        %v3109 = vld [vmem:[%s10 + $0x690] sm:$0xff]
        %v3110 = vld [vmem:[%s10 + $0x698] sm:$0xff]
        %v3111 = vld [vmem:[%s10 + $0x6a0] sm:$0xff]
        %v3112 = vld [vmem:[%s10 + $0x6a8] sm:$0xff]
        %v3113 = vld [vmem:[%s10 + $0x6b0] sm:$0xff]
        %v3114 = vld [vmem:[%s10 + $0x6b8] sm:$0xff]
        %v3115 = vld [vmem:[%s10 + $0x6c0] sm:$0xff]
        %v3116 = vld [vmem:[%s10 + $0x6c8] sm:$0xff]
        %v3117 = vld [vmem:[%s10 + $0x6d0] sm:$0xff]
        %v3118 = vld [vmem:[%s10 + $0x6d8] sm:$0xff]
        %v3119 = vld [vmem:[%s10 + $0x6e0] sm:$0xff]
        %v3120 = vld [vmem:[%s10 + $0x6e8] sm:$0xff]
        %v3121 = vld [vmem:[%s10 + $0x6f0] sm:$0xff]
        %v3122 = vld [vmem:[%s10 + $0x6f8] sm:$0xff]
        %v3123 = vld [vmem:[%s10 + $0x700] sm:$0xff]
        %v3124 = vld [vmem:[%s10 + $0x708] sm:$0xff]
        %v3125 = vld [vmem:[%s10 + $0x710] sm:$0xff]
        %v3126 = vld [vmem:[%s10 + $0x718] sm:$0xff]
        %v3127 = vld [vmem:[%s10 + $0x720] sm:$0xff]
        %v3128 = vld [vmem:[%s10 + $0x728] sm:$0xff]
        %v3129 = vld [vmem:[%s10 + $0x730] sm:$0xff]
        %v3130 = vld [vmem:[%s10 + $0x738] sm:$0xff]
        %v3131 = vld [vmem:[%s10 + $0x740] sm:$0xff]
        %v3132 = vld [vmem:[%s10 + $0x748] sm:$0xff]
        %v3133 = vld [vmem:[%s10 + $0x750] sm:$0xff]
        %v3134 = vld [vmem:[%s10 + $0x758] sm:$0xff]
        %v3135 = vld [vmem:[%s10 + $0x760] sm:$0xff]
        %v3136 = vld [vmem:[%s10 + $0x768] sm:$0xff]
        %v3137 = vld [vmem:[%s10 + $0x770] sm:$0xff]
        %v3138 = vld [vmem:[%s10 + $0x778] sm:$0xff]
        %v3139 = vld [vmem:[%s10 + $0x780] sm:$0xff]
        %v3140 = vld [vmem:[%s10 + $0x788] sm:$0xff]
        %v3141 = vld [vmem:[%s10 + $0x790] sm:$0xff]
        %v3142 = vld [vmem:[%s10 + $0x798] sm:$0xff]
        %v3143 = vld [vmem:[%s10 + $0x7a0] sm:$0xff]
        %v3144 = vld [vmem:[%s10 + $0x7a8] sm:$0xff]
        %v3145 = vld [vmem:[%s10 + $0x7b0] sm:$0xff]
        %v3146 = vld [vmem:[%s10 + $0x7b8] sm:$0xff]
        %v3147 = vld [vmem:[%s10 + $0x7c0] sm:$0xff]
        %v3148 = vld [vmem:[%s10 + $0x7c8] sm:$0xff]
        %v3149 = vld [vmem:[%s10 + $0x7d0] sm:$0xff]
        %v3150 = vld [vmem:[%s10 + $0x7d8] sm:$0xff]
        %v3151 = vld [vmem:[%s10 + $0x7e0] sm:$0xff]
        %v3152 = vld [vmem:[%s10 + $0x7e8] sm:$0xff]
        %v3153 = vld [vmem:[%s10 + $0x7f0] sm:$0xff]
        %v3154 = vld [vmem:[%s10 + $0x7f8] sm:$0xff]
        %v3155 = vld [vmem:[%s11] sm:$0xff]
        %v3157 = vlaneseq
        %v3158 = vshrl.u32 %v3157, 7
        %v3159 = vsub.s32 0, %v3158
        %v3160 = vrot.slane %v3155, %v3159
        %v3161 = vlaneseq
        %v3162 = vshrl.u32 %v3161, 7
        %v3163 = vsub.s32 1, %v3162
        %v3164 = vrot.slane %v3155, %v3163
        %v3165 = vlaneseq
        %v3166 = vshrl.u32 %v3165, 7
        %v3167 = vsub.s32 2, %v3166
        %v3168 = vrot.slane %v3155, %v3167
        %v3169 = vlaneseq
        %v3170 = vshrl.u32 %v3169, 7
        %v3171 = vsub.s32 3, %v3170
        %v3172 = vrot.slane %v3155, %v3171
        %v3173 = vlaneseq
        %v3174 = vshrl.u32 %v3173, 7
        %v3175 = vsub.s32 4, %v3174
        %v3176 = vrot.slane %v3155, %v3175
        %v3177 = vlaneseq
        %v3178 = vshrl.u32 %v3177, 7
        %v3179 = vsub.s32 5, %v3178
        %v3180 = vrot.slane %v3155, %v3179
        %v3181 = vlaneseq
        %v3182 = vshrl.u32 %v3181, 7
        %v3183 = vsub.s32 6, %v3182
        %v3184 = vrot.slane %v3155, %v3183
        %v3185 = vlaneseq
        %v3186 = vshrl.u32 %v3185, 7
        %v3187 = vsub.s32 7, %v3186
        %v3188 = vrot.slane %v3155, %v3187
        %v3453 = vunpack.c.l.b16 %v2899
        %v3454 = vunpack.c.h.b16 %v2899
        %v3455 = vunpack.c.l.b16 %v2900
        %v3456 = vunpack.c.h.b16 %v2900
        %v3457 = vunpack.c.l.b16 %v2901
        %v3458 = vunpack.c.h.b16 %v2901
        %v3459 = vunpack.c.l.b16 %v2902
        %v3460 = vunpack.c.h.b16 %v2902
        %v3461 = vunpack.c.l.b16 %v2903
        %v3462 = vunpack.c.h.b16 %v2903
        %v3463 = vunpack.c.l.b16 %v2904
        %v3464 = vunpack.c.h.b16 %v2904
        %v3465 = vunpack.c.l.b16 %v2905
        %v3466 = vunpack.c.h.b16 %v2905
        %v3467 = vunpack.c.l.b16 %v2906
        %v3468 = vunpack.c.h.b16 %v2906
        %v3469 = vunpack.c.l.b16 %v2907
        %v3470 = vunpack.c.h.b16 %v2907
        %v3471 = vunpack.c.l.b16 %v2908
        %v3472 = vunpack.c.h.b16 %v2908
        %v3473 = vunpack.c.l.b16 %v2909
        %v3474 = vunpack.c.h.b16 %v2909
        %v3475 = vunpack.c.l.b16 %v2910
        %v3476 = vunpack.c.h.b16 %v2910
        %v3477 = vunpack.c.l.b16 %v2911
        %v3478 = vunpack.c.h.b16 %v2911
        %v3479 = vunpack.c.l.b16 %v2912
        %v3480 = vunpack.c.h.b16 %v2912
        %v3481 = vunpack.c.l.b16 %v2913
        %v3482 = vunpack.c.h.b16 %v2913
        %v3483 = vunpack.c.l.b16 %v2914
        %v3484 = vunpack.c.h.b16 %v2914
        %v3485 = vunpack.c.l.b16 %v2915
        %v3486 = vunpack.c.h.b16 %v2915
        %v3487 = vunpack.c.l.b16 %v2916
        %v3488 = vunpack.c.h.b16 %v2916
        %v3489 = vunpack.c.l.b16 %v2917
        %v3490 = vunpack.c.h.b16 %v2917
        %v3491 = vunpack.c.l.b16 %v2918
        %v3492 = vunpack.c.h.b16 %v2918
        %v3493 = vunpack.c.l.b16 %v2919
        %v3494 = vunpack.c.h.b16 %v2919
        %v3495 = vunpack.c.l.b16 %v2920
        %v3496 = vunpack.c.h.b16 %v2920
        %v3497 = vunpack.c.l.b16 %v2921
        %v3498 = vunpack.c.h.b16 %v2921
        %v3499 = vunpack.c.l.b16 %v2922
        %v3500 = vunpack.c.h.b16 %v2922
        %v3501 = vunpack.c.l.b16 %v2923
        %v3502 = vunpack.c.h.b16 %v2923
        %v3503 = vunpack.c.l.b16 %v2924
        %v3504 = vunpack.c.h.b16 %v2924
        %v3505 = vunpack.c.l.b16 %v2925
        %v3506 = vunpack.c.h.b16 %v2925
        %v3507 = vunpack.c.l.b16 %v2926
        %v3508 = vunpack.c.h.b16 %v2926
        %v3509 = vunpack.c.l.b16 %v2927
        %v3510 = vunpack.c.h.b16 %v2927
        %v3511 = vunpack.c.l.b16 %v2928
        %v3512 = vunpack.c.h.b16 %v2928
        %v3513 = vunpack.c.l.b16 %v2929
        %v3514 = vunpack.c.h.b16 %v2929
        %v3515 = vunpack.c.l.b16 %v2930
        %v3516 = vunpack.c.h.b16 %v2930
        %v3517 = vunpack.c.l.b16 %v2931
        %v3518 = vunpack.c.h.b16 %v2931
        %v3519 = vunpack.c.l.b16 %v2932
        %v3520 = vunpack.c.h.b16 %v2932
        %v3521 = vunpack.c.l.b16 %v2933
        %v3522 = vunpack.c.h.b16 %v2933
        %v3523 = vunpack.c.l.b16 %v2934
        %v3524 = vunpack.c.h.b16 %v2934
        %v3525 = vunpack.c.l.b16 %v2935
        %v3526 = vunpack.c.h.b16 %v2935
        %v3527 = vunpack.c.l.b16 %v2936
        %v3528 = vunpack.c.h.b16 %v2936
        %v3529 = vunpack.c.l.b16 %v2937
        %v3530 = vunpack.c.h.b16 %v2937
        %v3531 = vunpack.c.l.b16 %v2938
        %v3532 = vunpack.c.h.b16 %v2938
        %v3533 = vunpack.c.l.b16 %v2939
        %v3534 = vunpack.c.h.b16 %v2939
        %v3535 = vunpack.c.l.b16 %v2940
        %v3536 = vunpack.c.h.b16 %v2940
        %v3537 = vunpack.c.l.b16 %v2941
        %v3538 = vunpack.c.h.b16 %v2941
        %v3539 = vunpack.c.l.b16 %v2942
        %v3540 = vunpack.c.h.b16 %v2942
        %v3541 = vunpack.c.l.b16 %v2943
        %v3542 = vunpack.c.h.b16 %v2943
        %v3543 = vunpack.c.l.b16 %v2944
        %v3544 = vunpack.c.h.b16 %v2944
        %v3545 = vunpack.c.l.b16 %v2945
        %v3546 = vunpack.c.h.b16 %v2945
        %v3547 = vunpack.c.l.b16 %v2946
        %v3548 = vunpack.c.h.b16 %v2946
        %v3549 = vunpack.c.l.b16 %v2947
        %v3550 = vunpack.c.h.b16 %v2947
        %v3551 = vunpack.c.l.b16 %v2948
        %v3552 = vunpack.c.h.b16 %v2948
        %v3553 = vunpack.c.l.b16 %v2949
        %v3554 = vunpack.c.h.b16 %v2949
        %v3555 = vunpack.c.l.b16 %v2950
        %v3556 = vunpack.c.h.b16 %v2950
        %v3557 = vunpack.c.l.b16 %v2951
        %v3558 = vunpack.c.h.b16 %v2951
        %v3559 = vunpack.c.l.b16 %v2952
        %v3560 = vunpack.c.h.b16 %v2952
        %v3561 = vunpack.c.l.b16 %v2953
        %v3562 = vunpack.c.h.b16 %v2953
        %v3563 = vunpack.c.l.b16 %v2954
        %v3564 = vunpack.c.h.b16 %v2954
        %v3565 = vunpack.c.l.b16 %v2955
        %v3566 = vunpack.c.h.b16 %v2955
        %v3567 = vunpack.c.l.b16 %v2956
        %v3568 = vunpack.c.h.b16 %v2956
        %v3569 = vunpack.c.l.b16 %v2957
        %v3570 = vunpack.c.h.b16 %v2957
        %v3571 = vunpack.c.l.b16 %v2958
        %v3572 = vunpack.c.h.b16 %v2958
        %v3573 = vunpack.c.l.b16 %v2959
        %v3574 = vunpack.c.h.b16 %v2959
        %v3575 = vunpack.c.l.b16 %v2960
        %v3576 = vunpack.c.h.b16 %v2960
        %v3577 = vunpack.c.l.b16 %v2961
        %v3578 = vunpack.c.h.b16 %v2961
        %v3579 = vunpack.c.l.b16 %v2962
        %v3580 = vunpack.c.h.b16 %v2962
        %v3581 = vunpack.c.l.b16 %v2963
        %v3582 = vunpack.c.h.b16 %v2963
        %v3583 = vunpack.c.l.b16 %v2964
        %v3584 = vunpack.c.h.b16 %v2964
        %v3585 = vunpack.c.l.b16 %v2965
        %v3586 = vunpack.c.h.b16 %v2965
        %v3587 = vunpack.c.l.b16 %v2966
        %v3588 = vunpack.c.h.b16 %v2966
        %v3589 = vunpack.c.l.b16 %v2967
        %v3590 = vunpack.c.h.b16 %v2967
        %v3591 = vunpack.c.l.b16 %v2968
        %v3592 = vunpack.c.h.b16 %v2968
        %v3593 = vunpack.c.l.b16 %v2969
        %v3594 = vunpack.c.h.b16 %v2969
        %v3595 = vunpack.c.l.b16 %v2970
        %v3596 = vunpack.c.h.b16 %v2970
        %v3597 = vunpack.c.l.b16 %v2971
        %v3598 = vunpack.c.h.b16 %v2971
        %v3599 = vunpack.c.l.b16 %v2972
        %v3600 = vunpack.c.h.b16 %v2972
        %v3601 = vunpack.c.l.b16 %v2973
        %v3602 = vunpack.c.h.b16 %v2973
        %v3603 = vunpack.c.l.b16 %v2974
        %v3604 = vunpack.c.h.b16 %v2974
        %v3605 = vunpack.c.l.b16 %v2975
        %v3606 = vunpack.c.h.b16 %v2975
        %v3607 = vunpack.c.l.b16 %v2976
        %v3608 = vunpack.c.h.b16 %v2976
        %v3609 = vunpack.c.l.b16 %v2977
        %v3610 = vunpack.c.h.b16 %v2977
        %v3611 = vunpack.c.l.b16 %v2978
        %v3612 = vunpack.c.h.b16 %v2978
        %v3613 = vunpack.c.l.b16 %v2979
        %v3614 = vunpack.c.h.b16 %v2979
        %v3615 = vunpack.c.l.b16 %v2980
        %v3616 = vunpack.c.h.b16 %v2980
        %v3617 = vunpack.c.l.b16 %v2981
        %v3618 = vunpack.c.h.b16 %v2981
        %v3619 = vunpack.c.l.b16 %v2982
        %v3620 = vunpack.c.h.b16 %v2982
        %v3621 = vunpack.c.l.b16 %v2983
        %v3622 = vunpack.c.h.b16 %v2983
        %v3623 = vunpack.c.l.b16 %v2984
        %v3624 = vunpack.c.h.b16 %v2984
        %v3625 = vunpack.c.l.b16 %v2985
        %v3626 = vunpack.c.h.b16 %v2985
        %v3627 = vunpack.c.l.b16 %v2986
        %v3628 = vunpack.c.h.b16 %v2986
        %v3629 = vunpack.c.l.b16 %v2987
        %v3630 = vunpack.c.h.b16 %v2987
        %v3631 = vunpack.c.l.b16 %v2988
        %v3632 = vunpack.c.h.b16 %v2988
        %v3633 = vunpack.c.l.b16 %v2989
        %v3634 = vunpack.c.h.b16 %v2989
        %v3635 = vunpack.c.l.b16 %v2990
        %v3636 = vunpack.c.h.b16 %v2990
        %v3637 = vunpack.c.l.b16 %v2991
        %v3638 = vunpack.c.h.b16 %v2991
        %v3639 = vunpack.c.l.b16 %v2992
        %v3640 = vunpack.c.h.b16 %v2992
        %v3641 = vunpack.c.l.b16 %v2993
        %v3642 = vunpack.c.h.b16 %v2993
        %v3643 = vunpack.c.l.b16 %v2994
        %v3644 = vunpack.c.h.b16 %v2994
        %v3645 = vunpack.c.l.b16 %v2995
        %v3646 = vunpack.c.h.b16 %v2995
        %v3647 = vunpack.c.l.b16 %v2996
        %v3648 = vunpack.c.h.b16 %v2996
        %v3649 = vunpack.c.l.b16 %v2997
        %v3650 = vunpack.c.h.b16 %v2997
        %v3651 = vunpack.c.l.b16 %v2998
        %v3652 = vunpack.c.h.b16 %v2998
        %v3653 = vunpack.c.l.b16 %v2999
        %v3654 = vunpack.c.h.b16 %v2999
        %v3655 = vunpack.c.l.b16 %v3000
        %v3656 = vunpack.c.h.b16 %v3000
        %v3657 = vunpack.c.l.b16 %v3001
        %v3658 = vunpack.c.h.b16 %v3001
        %v3659 = vunpack.c.l.b16 %v3002
        %v3660 = vunpack.c.h.b16 %v3002
        %v3661 = vunpack.c.l.b16 %v3003
        %v3662 = vunpack.c.h.b16 %v3003
        %v3663 = vunpack.c.l.b16 %v3004
        %v3664 = vunpack.c.h.b16 %v3004
        %v3665 = vunpack.c.l.b16 %v3005
        %v3666 = vunpack.c.h.b16 %v3005
        %v3667 = vunpack.c.l.b16 %v3006
        %v3668 = vunpack.c.h.b16 %v3006
        %v3669 = vunpack.c.l.b16 %v3007
        %v3670 = vunpack.c.h.b16 %v3007
        %v3671 = vunpack.c.l.b16 %v3008
        %v3672 = vunpack.c.h.b16 %v3008
        %v3673 = vunpack.c.l.b16 %v3009
        %v3674 = vunpack.c.h.b16 %v3009
        %v3675 = vunpack.c.l.b16 %v3010
        %v3676 = vunpack.c.h.b16 %v3010
        %v3677 = vunpack.c.l.b16 %v3011
        %v3678 = vunpack.c.h.b16 %v3011
        %v3679 = vunpack.c.l.b16 %v3012
        %v3680 = vunpack.c.h.b16 %v3012
        %v3681 = vunpack.c.l.b16 %v3013
        %v3682 = vunpack.c.h.b16 %v3013
        %v3683 = vunpack.c.l.b16 %v3014
        %v3684 = vunpack.c.h.b16 %v3014
        %v3685 = vunpack.c.l.b16 %v3015
        %v3686 = vunpack.c.h.b16 %v3015
        %v3687 = vunpack.c.l.b16 %v3016
        %v3688 = vunpack.c.h.b16 %v3016
        %v3689 = vunpack.c.l.b16 %v3017
        %v3690 = vunpack.c.h.b16 %v3017
        %v3691 = vunpack.c.l.b16 %v3018
        %v3692 = vunpack.c.h.b16 %v3018
        %v3693 = vunpack.c.l.b16 %v3019
        %v3694 = vunpack.c.h.b16 %v3019
        %v3695 = vunpack.c.l.b16 %v3020
        %v3696 = vunpack.c.h.b16 %v3020
        %v3697 = vunpack.c.l.b16 %v3021
        %v3698 = vunpack.c.h.b16 %v3021
        %v3699 = vunpack.c.l.b16 %v3022
        %v3700 = vunpack.c.h.b16 %v3022
        %v3701 = vunpack.c.l.b16 %v3023
        %v3702 = vunpack.c.h.b16 %v3023
        %v3703 = vunpack.c.l.b16 %v3024
        %v3704 = vunpack.c.h.b16 %v3024
        %v3705 = vunpack.c.l.b16 %v3025
        %v3706 = vunpack.c.h.b16 %v3025
        %v3707 = vunpack.c.l.b16 %v3026
        %v3708 = vunpack.c.h.b16 %v3026
        %v3709 = vunpack.c.l.b16 %v3027
        %v3710 = vunpack.c.h.b16 %v3027
        %v3711 = vunpack.c.l.b16 %v3028
        %v3712 = vunpack.c.h.b16 %v3028
        %v3713 = vunpack.c.l.b16 %v3029
        %v3714 = vunpack.c.h.b16 %v3029
        %v3715 = vunpack.c.l.b16 %v3030
        %v3716 = vunpack.c.h.b16 %v3030
        %v3717 = vunpack.c.l.b16 %v3031
        %v3718 = vunpack.c.h.b16 %v3031
        %v3719 = vunpack.c.l.b16 %v3032
        %v3720 = vunpack.c.h.b16 %v3032
        %v3721 = vunpack.c.l.b16 %v3033
        %v3722 = vunpack.c.h.b16 %v3033
        %v3723 = vunpack.c.l.b16 %v3034
        %v3724 = vunpack.c.h.b16 %v3034
        %v3725 = vunpack.c.l.b16 %v3035
        %v3726 = vunpack.c.h.b16 %v3035
        %v3727 = vunpack.c.l.b16 %v3036
        %v3728 = vunpack.c.h.b16 %v3036
        %v3729 = vunpack.c.l.b16 %v3037
        %v3730 = vunpack.c.h.b16 %v3037
        %v3731 = vunpack.c.l.b16 %v3038
        %v3732 = vunpack.c.h.b16 %v3038
        %v3733 = vunpack.c.l.b16 %v3039
        %v3734 = vunpack.c.h.b16 %v3039
        %v3735 = vunpack.c.l.b16 %v3040
        %v3736 = vunpack.c.h.b16 %v3040
        %v3737 = vunpack.c.l.b16 %v3041
        %v3738 = vunpack.c.h.b16 %v3041
        %v3739 = vunpack.c.l.b16 %v3042
        %v3740 = vunpack.c.h.b16 %v3042
        %v3741 = vunpack.c.l.b16 %v3043
        %v3742 = vunpack.c.h.b16 %v3043
        %v3743 = vunpack.c.l.b16 %v3044
        %v3744 = vunpack.c.h.b16 %v3044
        %v3745 = vunpack.c.l.b16 %v3045
        %v3746 = vunpack.c.h.b16 %v3045
        %v3747 = vunpack.c.l.b16 %v3046
        %v3748 = vunpack.c.h.b16 %v3046
        %v3749 = vunpack.c.l.b16 %v3047
        %v3750 = vunpack.c.h.b16 %v3047
        %v3751 = vunpack.c.l.b16 %v3048
        %v3752 = vunpack.c.h.b16 %v3048
        %v3753 = vunpack.c.l.b16 %v3049
        %v3754 = vunpack.c.h.b16 %v3049
        %v3755 = vunpack.c.l.b16 %v3050
        %v3756 = vunpack.c.h.b16 %v3050
        %v3757 = vunpack.c.l.b16 %v3051
        %v3758 = vunpack.c.h.b16 %v3051
        %v3759 = vunpack.c.l.b16 %v3052
        %v3760 = vunpack.c.h.b16 %v3052
        %v3761 = vunpack.c.l.b16 %v3053
        %v3762 = vunpack.c.h.b16 %v3053
        %v3763 = vunpack.c.l.b16 %v3054
        %v3764 = vunpack.c.h.b16 %v3054
        %v3765 = vunpack.c.l.b16 %v3055
        %v3766 = vunpack.c.h.b16 %v3055
        %v3767 = vunpack.c.l.b16 %v3056
        %v3768 = vunpack.c.h.b16 %v3056
        %v3769 = vunpack.c.l.b16 %v3057
        %v3770 = vunpack.c.h.b16 %v3057
        %v3771 = vunpack.c.l.b16 %v3058
        %v3772 = vunpack.c.h.b16 %v3058
        %v3773 = vunpack.c.l.b16 %v3059
        %v3774 = vunpack.c.h.b16 %v3059
        %v3775 = vunpack.c.l.b16 %v3060
        %v3776 = vunpack.c.h.b16 %v3060
        %v3777 = vunpack.c.l.b16 %v3061
        %v3778 = vunpack.c.h.b16 %v3061
        %v3779 = vunpack.c.l.b16 %v3062
        %v3780 = vunpack.c.h.b16 %v3062
        %v3781 = vunpack.c.l.b16 %v3063
        %v3782 = vunpack.c.h.b16 %v3063
        %v3783 = vunpack.c.l.b16 %v3064
        %v3784 = vunpack.c.h.b16 %v3064
        %v3785 = vunpack.c.l.b16 %v3065
        %v3786 = vunpack.c.h.b16 %v3065
        %v3787 = vunpack.c.l.b16 %v3066
        %v3788 = vunpack.c.h.b16 %v3066
        %v3789 = vunpack.c.l.b16 %v3067
        %v3790 = vunpack.c.h.b16 %v3067
        %v3791 = vunpack.c.l.b16 %v3068
        %v3792 = vunpack.c.h.b16 %v3068
        %v3793 = vunpack.c.l.b16 %v3069
        %v3794 = vunpack.c.h.b16 %v3069
        %v3795 = vunpack.c.l.b16 %v3070
        %v3796 = vunpack.c.h.b16 %v3070
        %v3797 = vunpack.c.l.b16 %v3071
        %v3798 = vunpack.c.h.b16 %v3071
        %v3799 = vunpack.c.l.b16 %v3072
        %v3800 = vunpack.c.h.b16 %v3072
        %v3801 = vunpack.c.l.b16 %v3073
        %v3802 = vunpack.c.h.b16 %v3073
        %v3803 = vunpack.c.l.b16 %v3074
        %v3804 = vunpack.c.h.b16 %v3074
        %v3805 = vunpack.c.l.b16 %v3075
        %v3806 = vunpack.c.h.b16 %v3075
        %v3807 = vunpack.c.l.b16 %v3076
        %v3808 = vunpack.c.h.b16 %v3076
        %v3809 = vunpack.c.l.b16 %v3077
        %v3810 = vunpack.c.h.b16 %v3077
        %v3811 = vunpack.c.l.b16 %v3078
        %v3812 = vunpack.c.h.b16 %v3078
        %v3813 = vunpack.c.l.b16 %v3079
        %v3814 = vunpack.c.h.b16 %v3079
        %v3815 = vunpack.c.l.b16 %v3080
        %v3816 = vunpack.c.h.b16 %v3080
        %v3817 = vunpack.c.l.b16 %v3081
        %v3818 = vunpack.c.h.b16 %v3081
        %v3819 = vunpack.c.l.b16 %v3082
        %v3820 = vunpack.c.h.b16 %v3082
        %v3821 = vunpack.c.l.b16 %v3083
        %v3822 = vunpack.c.h.b16 %v3083
        %v3823 = vunpack.c.l.b16 %v3084
        %v3824 = vunpack.c.h.b16 %v3084
        %v3825 = vunpack.c.l.b16 %v3085
        %v3826 = vunpack.c.h.b16 %v3085
        %v3827 = vunpack.c.l.b16 %v3086
        %v3828 = vunpack.c.h.b16 %v3086
        %v3829 = vunpack.c.l.b16 %v3087
        %v3830 = vunpack.c.h.b16 %v3087
        %v3831 = vunpack.c.l.b16 %v3088
        %v3832 = vunpack.c.h.b16 %v3088
        %v3833 = vunpack.c.l.b16 %v3089
        %v3834 = vunpack.c.h.b16 %v3089
        %v3835 = vunpack.c.l.b16 %v3090
        %v3836 = vunpack.c.h.b16 %v3090
        %v3837 = vunpack.c.l.b16 %v3091
        %v3838 = vunpack.c.h.b16 %v3091
        %v3839 = vunpack.c.l.b16 %v3092
        %v3840 = vunpack.c.h.b16 %v3092
        %v3841 = vunpack.c.l.b16 %v3093
        %v3842 = vunpack.c.h.b16 %v3093
        %v3843 = vunpack.c.l.b16 %v3094
        %v3844 = vunpack.c.h.b16 %v3094
        %v3845 = vunpack.c.l.b16 %v3095
        %v3846 = vunpack.c.h.b16 %v3095
        %v3847 = vunpack.c.l.b16 %v3096
        %v3848 = vunpack.c.h.b16 %v3096
        %v3849 = vunpack.c.l.b16 %v3097
        %v3850 = vunpack.c.h.b16 %v3097
        %v3851 = vunpack.c.l.b16 %v3098
        %v3852 = vunpack.c.h.b16 %v3098
        %v3853 = vunpack.c.l.b16 %v3099
        %v3854 = vunpack.c.h.b16 %v3099
        %v3855 = vunpack.c.l.b16 %v3100
        %v3856 = vunpack.c.h.b16 %v3100
        %v3857 = vunpack.c.l.b16 %v3101
        %v3858 = vunpack.c.h.b16 %v3101
        %v3859 = vunpack.c.l.b16 %v3102
        %v3860 = vunpack.c.h.b16 %v3102
        %v3861 = vunpack.c.l.b16 %v3103
        %v3862 = vunpack.c.h.b16 %v3103
        %v3863 = vunpack.c.l.b16 %v3104
        %v3864 = vunpack.c.h.b16 %v3104
        %v3865 = vunpack.c.l.b16 %v3105
        %v3866 = vunpack.c.h.b16 %v3105
        %v3867 = vunpack.c.l.b16 %v3106
        %v3868 = vunpack.c.h.b16 %v3106
        %v3869 = vunpack.c.l.b16 %v3107
        %v3870 = vunpack.c.h.b16 %v3107
        %v3871 = vunpack.c.l.b16 %v3108
        %v3872 = vunpack.c.h.b16 %v3108
        %v3873 = vunpack.c.l.b16 %v3109
        %v3874 = vunpack.c.h.b16 %v3109
        %v3875 = vunpack.c.l.b16 %v3110
        %v3876 = vunpack.c.h.b16 %v3110
        %v3877 = vunpack.c.l.b16 %v3111
        %v3878 = vunpack.c.h.b16 %v3111
        %v3879 = vunpack.c.l.b16 %v3112
        %v3880 = vunpack.c.h.b16 %v3112
        %v3881 = vunpack.c.l.b16 %v3113
        %v3882 = vunpack.c.h.b16 %v3113
        %v3883 = vunpack.c.l.b16 %v3114
        %v3884 = vunpack.c.h.b16 %v3114
        %v3885 = vunpack.c.l.b16 %v3115
        %v3886 = vunpack.c.h.b16 %v3115
        %v3887 = vunpack.c.l.b16 %v3116
        %v3888 = vunpack.c.h.b16 %v3116
        %v3889 = vunpack.c.l.b16 %v3117
        %v3890 = vunpack.c.h.b16 %v3117
        %v3891 = vunpack.c.l.b16 %v3118
        %v3892 = vunpack.c.h.b16 %v3118
        %v3893 = vunpack.c.l.b16 %v3119
        %v3894 = vunpack.c.h.b16 %v3119
        %v3895 = vunpack.c.l.b16 %v3120
        %v3896 = vunpack.c.h.b16 %v3120
        %v3897 = vunpack.c.l.b16 %v3121
        %v3898 = vunpack.c.h.b16 %v3121
        %v3899 = vunpack.c.l.b16 %v3122
        %v3900 = vunpack.c.h.b16 %v3122
        %v3901 = vunpack.c.l.b16 %v3123
        %v3902 = vunpack.c.h.b16 %v3123
        %v3903 = vunpack.c.l.b16 %v3124
        %v3904 = vunpack.c.h.b16 %v3124
        %v3905 = vunpack.c.l.b16 %v3125
        %v3906 = vunpack.c.h.b16 %v3125
        %v3907 = vunpack.c.l.b16 %v3126
        %v3908 = vunpack.c.h.b16 %v3126
        %v3909 = vunpack.c.l.b16 %v3127
        %v3910 = vunpack.c.h.b16 %v3127
        %v3911 = vunpack.c.l.b16 %v3128
        %v3912 = vunpack.c.h.b16 %v3128
        %v3913 = vunpack.c.l.b16 %v3129
        %v3914 = vunpack.c.h.b16 %v3129
        %v3915 = vunpack.c.l.b16 %v3130
        %v3916 = vunpack.c.h.b16 %v3130
        %v3917 = vunpack.c.l.b16 %v3131
        %v3918 = vunpack.c.h.b16 %v3131
        %v3919 = vunpack.c.l.b16 %v3132
        %v3920 = vunpack.c.h.b16 %v3132
        %v3921 = vunpack.c.l.b16 %v3133
        %v3922 = vunpack.c.h.b16 %v3133
        %v3923 = vunpack.c.l.b16 %v3134
        %v3924 = vunpack.c.h.b16 %v3134
        %v3925 = vunpack.c.l.b16 %v3135
        %v3926 = vunpack.c.h.b16 %v3135
        %v3927 = vunpack.c.l.b16 %v3136
        %v3928 = vunpack.c.h.b16 %v3136
        %v3929 = vunpack.c.l.b16 %v3137
        %v3930 = vunpack.c.h.b16 %v3137
        %v3931 = vunpack.c.l.b16 %v3138
        %v3932 = vunpack.c.h.b16 %v3138
        %v3933 = vunpack.c.l.b16 %v3139
        %v3934 = vunpack.c.h.b16 %v3139
        %v3935 = vunpack.c.l.b16 %v3140
        %v3936 = vunpack.c.h.b16 %v3140
        %v3937 = vunpack.c.l.b16 %v3141
        %v3938 = vunpack.c.h.b16 %v3141
        %v3939 = vunpack.c.l.b16 %v3142
        %v3940 = vunpack.c.h.b16 %v3142
        %v3941 = vunpack.c.l.b16 %v3143
        %v3942 = vunpack.c.h.b16 %v3143
        %v3943 = vunpack.c.l.b16 %v3144
        %v3944 = vunpack.c.h.b16 %v3144
        %v3945 = vunpack.c.l.b16 %v3145
        %v3946 = vunpack.c.h.b16 %v3145
        %v3947 = vunpack.c.l.b16 %v3146
        %v3948 = vunpack.c.h.b16 %v3146
        %v3949 = vunpack.c.l.b16 %v3147
        %v3950 = vunpack.c.h.b16 %v3147
        %v3951 = vunpack.c.l.b16 %v3148
        %v3952 = vunpack.c.h.b16 %v3148
        %v3953 = vunpack.c.l.b16 %v3149
        %v3954 = vunpack.c.h.b16 %v3149
        %v3955 = vunpack.c.l.b16 %v3150
        %v3956 = vunpack.c.h.b16 %v3150
        %v3957 = vunpack.c.l.b16 %v3151
        %v3958 = vunpack.c.h.b16 %v3151
        %v3959 = vunpack.c.l.b16 %v3152
        %v3960 = vunpack.c.h.b16 %v3152
        %v3961 = vunpack.c.l.b16 %v3153
        %v3962 = vunpack.c.h.b16 %v3153
        %v3963 = vunpack.c.l.b16 %v3154
        %v3964 = vunpack.c.h.b16 %v3154
        %v3965 = vpack.c.b16 %v3461, %v3453
        %v3966 = vpack.c.b16 %v3462, %v3454
        %v3967 = vpack.c.b16 %v3463, %v3455
        %v3968 = vpack.c.b16 %v3464, %v3456
        %v3969 = vpack.c.b16 %v3465, %v3457
        %v3970 = vpack.c.b16 %v3466, %v3458
        %v3971 = vpack.c.b16 %v3467, %v3459
        %v3972 = vpack.c.b16 %v3468, %v3460
        %v3973 = vpack.c.b16 %v3477, %v3469
        %v3974 = vpack.c.b16 %v3478, %v3470
        %v3975 = vpack.c.b16 %v3479, %v3471
        %v3976 = vpack.c.b16 %v3480, %v3472
        %v3977 = vpack.c.b16 %v3481, %v3473
        %v3978 = vpack.c.b16 %v3482, %v3474
        %v3979 = vpack.c.b16 %v3483, %v3475
        %v3980 = vpack.c.b16 %v3484, %v3476
        %v3981 = vpack.c.b16 %v3493, %v3485
        %v3982 = vpack.c.b16 %v3494, %v3486
        %v3983 = vpack.c.b16 %v3495, %v3487
        %v3984 = vpack.c.b16 %v3496, %v3488
        %v3985 = vpack.c.b16 %v3497, %v3489
        %v3986 = vpack.c.b16 %v3498, %v3490
        %v3987 = vpack.c.b16 %v3499, %v3491
        %v3988 = vpack.c.b16 %v3500, %v3492
        %v3989 = vpack.c.b16 %v3509, %v3501
        %v3990 = vpack.c.b16 %v3510, %v3502
        %v3991 = vpack.c.b16 %v3511, %v3503
        %v3992 = vpack.c.b16 %v3512, %v3504
        %v3993 = vpack.c.b16 %v3513, %v3505
        %v3994 = vpack.c.b16 %v3514, %v3506
        %v3995 = vpack.c.b16 %v3515, %v3507
        %v3996 = vpack.c.b16 %v3516, %v3508
        %v3997 = vpack.c.b16 %v3525, %v3517
        %v3998 = vpack.c.b16 %v3526, %v3518
        %v3999 = vpack.c.b16 %v3527, %v3519
        %v4000 = vpack.c.b16 %v3528, %v3520
        %v4001 = vpack.c.b16 %v3529, %v3521
        %v4002 = vpack.c.b16 %v3530, %v3522
        %v4003 = vpack.c.b16 %v3531, %v3523
        %v4004 = vpack.c.b16 %v3532, %v3524
        %v4005 = vpack.c.b16 %v3541, %v3533
        %v4006 = vpack.c.b16 %v3542, %v3534
        %v4007 = vpack.c.b16 %v3543, %v3535
        %v4008 = vpack.c.b16 %v3544, %v3536
        %v4009 = vpack.c.b16 %v3545, %v3537
        %v4010 = vpack.c.b16 %v3546, %v3538
        %v4011 = vpack.c.b16 %v3547, %v3539
        %v4012 = vpack.c.b16 %v3548, %v3540
        %v4013 = vpack.c.b16 %v3557, %v3549
        %v4014 = vpack.c.b16 %v3558, %v3550
        %v4015 = vpack.c.b16 %v3559, %v3551
        %v4016 = vpack.c.b16 %v3560, %v3552
        %v4017 = vpack.c.b16 %v3561, %v3553
        %v4018 = vpack.c.b16 %v3562, %v3554
        %v4019 = vpack.c.b16 %v3563, %v3555
        %v4020 = vpack.c.b16 %v3564, %v3556
        %v4021 = vpack.c.b16 %v3573, %v3565
        %v4022 = vpack.c.b16 %v3574, %v3566
        %v4023 = vpack.c.b16 %v3575, %v3567
        %v4024 = vpack.c.b16 %v3576, %v3568
        %v4025 = vpack.c.b16 %v3577, %v3569
        %v4026 = vpack.c.b16 %v3578, %v3570
        %v4027 = vpack.c.b16 %v3579, %v3571
        %v4028 = vpack.c.b16 %v3580, %v3572
        %v4029 = vpack.c.b16 %v3589, %v3581
        %v4030 = vpack.c.b16 %v3590, %v3582
        %v4031 = vpack.c.b16 %v3591, %v3583
        %v4032 = vpack.c.b16 %v3592, %v3584
        %v4033 = vpack.c.b16 %v3593, %v3585
        %v4034 = vpack.c.b16 %v3594, %v3586
        %v4035 = vpack.c.b16 %v3595, %v3587
        %v4036 = vpack.c.b16 %v3596, %v3588
        %v4037 = vpack.c.b16 %v3605, %v3597
        %v4038 = vpack.c.b16 %v3606, %v3598
        %v4039 = vpack.c.b16 %v3607, %v3599
        %v4040 = vpack.c.b16 %v3608, %v3600
        %v4041 = vpack.c.b16 %v3609, %v3601
        %v4042 = vpack.c.b16 %v3610, %v3602
        %v4043 = vpack.c.b16 %v3611, %v3603
        %v4044 = vpack.c.b16 %v3612, %v3604
        %v4045 = vpack.c.b16 %v3621, %v3613
        %v4046 = vpack.c.b16 %v3622, %v3614
        %v4047 = vpack.c.b16 %v3623, %v3615
        %v4048 = vpack.c.b16 %v3624, %v3616
        %v4049 = vpack.c.b16 %v3625, %v3617
        %v4050 = vpack.c.b16 %v3626, %v3618
        %v4051 = vpack.c.b16 %v3627, %v3619
        %v4052 = vpack.c.b16 %v3628, %v3620
        %v4053 = vpack.c.b16 %v3637, %v3629
        %v4054 = vpack.c.b16 %v3638, %v3630
        %v4055 = vpack.c.b16 %v3639, %v3631
        %v4056 = vpack.c.b16 %v3640, %v3632
        %v4057 = vpack.c.b16 %v3641, %v3633
        %v4058 = vpack.c.b16 %v3642, %v3634
        %v4059 = vpack.c.b16 %v3643, %v3635
        %v4060 = vpack.c.b16 %v3644, %v3636
        %v4061 = vpack.c.b16 %v3653, %v3645
        %v4062 = vpack.c.b16 %v3654, %v3646
        %v4063 = vpack.c.b16 %v3655, %v3647
        %v4064 = vpack.c.b16 %v3656, %v3648
        %v4065 = vpack.c.b16 %v3657, %v3649
        %v4066 = vpack.c.b16 %v3658, %v3650
        %v4067 = vpack.c.b16 %v3659, %v3651
        %v4068 = vpack.c.b16 %v3660, %v3652
        %v4069 = vpack.c.b16 %v3669, %v3661
        %v4070 = vpack.c.b16 %v3670, %v3662
        %v4071 = vpack.c.b16 %v3671, %v3663
        %v4072 = vpack.c.b16 %v3672, %v3664
        %v4073 = vpack.c.b16 %v3673, %v3665
        %v4074 = vpack.c.b16 %v3674, %v3666
        %v4075 = vpack.c.b16 %v3675, %v3667
        %v4076 = vpack.c.b16 %v3676, %v3668
        %v4077 = vpack.c.b16 %v3685, %v3677
        %v4078 = vpack.c.b16 %v3686, %v3678
        %v4079 = vpack.c.b16 %v3687, %v3679
        %v4080 = vpack.c.b16 %v3688, %v3680
        %v4081 = vpack.c.b16 %v3689, %v3681
        %v4082 = vpack.c.b16 %v3690, %v3682
        %v4083 = vpack.c.b16 %v3691, %v3683
        %v4084 = vpack.c.b16 %v3692, %v3684
        %v4085 = vpack.c.b16 %v3701, %v3693
        %v4086 = vpack.c.b16 %v3702, %v3694
        %v4087 = vpack.c.b16 %v3703, %v3695
        %v4088 = vpack.c.b16 %v3704, %v3696
        %v4089 = vpack.c.b16 %v3705, %v3697
        %v4090 = vpack.c.b16 %v3706, %v3698
        %v4091 = vpack.c.b16 %v3707, %v3699
        %v4092 = vpack.c.b16 %v3708, %v3700
        %v4093 = vpack.c.b16 %v3717, %v3709
        %v4094 = vpack.c.b16 %v3718, %v3710
        %v4095 = vpack.c.b16 %v3719, %v3711
        %v4096 = vpack.c.b16 %v3720, %v3712
        %v4097 = vpack.c.b16 %v3721, %v3713
        %v4098 = vpack.c.b16 %v3722, %v3714
        %v4099 = vpack.c.b16 %v3723, %v3715
        %v4100 = vpack.c.b16 %v3724, %v3716
        %v4101 = vpack.c.b16 %v3733, %v3725
        %v4102 = vpack.c.b16 %v3734, %v3726
        %v4103 = vpack.c.b16 %v3735, %v3727
        %v4104 = vpack.c.b16 %v3736, %v3728
        %v4105 = vpack.c.b16 %v3737, %v3729
        %v4106 = vpack.c.b16 %v3738, %v3730
        %v4107 = vpack.c.b16 %v3739, %v3731
        %v4108 = vpack.c.b16 %v3740, %v3732
        %v4109 = vpack.c.b16 %v3749, %v3741
        %v4110 = vpack.c.b16 %v3750, %v3742
        %v4111 = vpack.c.b16 %v3751, %v3743
        %v4112 = vpack.c.b16 %v3752, %v3744
        %v4113 = vpack.c.b16 %v3753, %v3745
        %v4114 = vpack.c.b16 %v3754, %v3746
        %v4115 = vpack.c.b16 %v3755, %v3747
        %v4116 = vpack.c.b16 %v3756, %v3748
        %v4117 = vpack.c.b16 %v3765, %v3757
        %v4118 = vpack.c.b16 %v3766, %v3758
        %v4119 = vpack.c.b16 %v3767, %v3759
        %v4120 = vpack.c.b16 %v3768, %v3760
        %v4121 = vpack.c.b16 %v3769, %v3761
        %v4122 = vpack.c.b16 %v3770, %v3762
        %v4123 = vpack.c.b16 %v3771, %v3763
        %v4124 = vpack.c.b16 %v3772, %v3764
        %v4125 = vpack.c.b16 %v3781, %v3773
        %v4126 = vpack.c.b16 %v3782, %v3774
        %v4127 = vpack.c.b16 %v3783, %v3775
        %v4128 = vpack.c.b16 %v3784, %v3776
        %v4129 = vpack.c.b16 %v3785, %v3777
        %v4130 = vpack.c.b16 %v3786, %v3778
        %v4131 = vpack.c.b16 %v3787, %v3779
        %v4132 = vpack.c.b16 %v3788, %v3780
        %v4133 = vpack.c.b16 %v3797, %v3789
        %v4134 = vpack.c.b16 %v3798, %v3790
        %v4135 = vpack.c.b16 %v3799, %v3791
        %v4136 = vpack.c.b16 %v3800, %v3792
        %v4137 = vpack.c.b16 %v3801, %v3793
        %v4138 = vpack.c.b16 %v3802, %v3794
        %v4139 = vpack.c.b16 %v3803, %v3795
        %v4140 = vpack.c.b16 %v3804, %v3796
        %v4141 = vpack.c.b16 %v3813, %v3805
        %v4142 = vpack.c.b16 %v3814, %v3806
        %v4143 = vpack.c.b16 %v3815, %v3807
        %v4144 = vpack.c.b16 %v3816, %v3808
        %v4145 = vpack.c.b16 %v3817, %v3809
        %v4146 = vpack.c.b16 %v3818, %v3810
        %v4147 = vpack.c.b16 %v3819, %v3811
        %v4148 = vpack.c.b16 %v3820, %v3812
        %v4149 = vpack.c.b16 %v3829, %v3821
        %v4150 = vpack.c.b16 %v3830, %v3822
        %v4151 = vpack.c.b16 %v3831, %v3823
        %v4152 = vpack.c.b16 %v3832, %v3824
        %v4153 = vpack.c.b16 %v3833, %v3825
        %v4154 = vpack.c.b16 %v3834, %v3826
        %v4155 = vpack.c.b16 %v3835, %v3827
        %v4156 = vpack.c.b16 %v3836, %v3828
        %v4157 = vpack.c.b16 %v3845, %v3837
        %v4158 = vpack.c.b16 %v3846, %v3838
        %v4159 = vpack.c.b16 %v3847, %v3839
        %v4160 = vpack.c.b16 %v3848, %v3840
        %v4161 = vpack.c.b16 %v3849, %v3841
        %v4162 = vpack.c.b16 %v3850, %v3842
        %v4163 = vpack.c.b16 %v3851, %v3843
        %v4164 = vpack.c.b16 %v3852, %v3844
        %v4165 = vpack.c.b16 %v3861, %v3853
        %v4166 = vpack.c.b16 %v3862, %v3854
        %v4167 = vpack.c.b16 %v3863, %v3855
        %v4168 = vpack.c.b16 %v3864, %v3856
        %v4169 = vpack.c.b16 %v3865, %v3857
        %v4170 = vpack.c.b16 %v3866, %v3858
        %v4171 = vpack.c.b16 %v3867, %v3859
        %v4172 = vpack.c.b16 %v3868, %v3860
        %v4173 = vpack.c.b16 %v3877, %v3869
        %v4174 = vpack.c.b16 %v3878, %v3870
        %v4175 = vpack.c.b16 %v3879, %v3871
        %v4176 = vpack.c.b16 %v3880, %v3872
        %v4177 = vpack.c.b16 %v3881, %v3873
        %v4178 = vpack.c.b16 %v3882, %v3874
        %v4179 = vpack.c.b16 %v3883, %v3875
        %v4180 = vpack.c.b16 %v3884, %v3876
        %v4181 = vpack.c.b16 %v3893, %v3885
        %v4182 = vpack.c.b16 %v3894, %v3886
        %v4183 = vpack.c.b16 %v3895, %v3887
        %v4184 = vpack.c.b16 %v3896, %v3888
        %v4185 = vpack.c.b16 %v3897, %v3889
        %v4186 = vpack.c.b16 %v3898, %v3890
        %v4187 = vpack.c.b16 %v3899, %v3891
        %v4188 = vpack.c.b16 %v3900, %v3892
        %v4189 = vpack.c.b16 %v3909, %v3901
        %v4190 = vpack.c.b16 %v3910, %v3902
        %v4191 = vpack.c.b16 %v3911, %v3903
        %v4192 = vpack.c.b16 %v3912, %v3904
        %v4193 = vpack.c.b16 %v3913, %v3905
        %v4194 = vpack.c.b16 %v3914, %v3906
        %v4195 = vpack.c.b16 %v3915, %v3907
        %v4196 = vpack.c.b16 %v3916, %v3908
        %v4197 = vpack.c.b16 %v3925, %v3917
        %v4198 = vpack.c.b16 %v3926, %v3918
        %v4199 = vpack.c.b16 %v3927, %v3919
        %v4200 = vpack.c.b16 %v3928, %v3920
        %v4201 = vpack.c.b16 %v3929, %v3921
        %v4202 = vpack.c.b16 %v3930, %v3922
        %v4203 = vpack.c.b16 %v3931, %v3923
        %v4204 = vpack.c.b16 %v3932, %v3924
        %v4205 = vpack.c.b16 %v3941, %v3933
        %v4206 = vpack.c.b16 %v3942, %v3934
        %v4207 = vpack.c.b16 %v3943, %v3935
        %v4208 = vpack.c.b16 %v3944, %v3936
        %v4209 = vpack.c.b16 %v3945, %v3937
        %v4210 = vpack.c.b16 %v3946, %v3938
        %v4211 = vpack.c.b16 %v3947, %v3939
        %v4212 = vpack.c.b16 %v3948, %v3940
        %v4213 = vpack.c.b16 %v3957, %v3949
        %v4214 = vpack.c.b16 %v3958, %v3950
        %v4215 = vpack.c.b16 %v3959, %v3951
        %v4216 = vpack.c.b16 %v3960, %v3952
        %v4217 = vpack.c.b16 %v3961, %v3953
        %v4218 = vpack.c.b16 %v3962, %v3954
        %v4219 = vpack.c.b16 %v3963, %v3955
        %v4220 = vpack.c.b16 %v3964, %v3956
        %4477 = vmatprep.subr.bf16.mxu0 %v3966
        %4478 = vmatpush1.bf16.msra.mxu0 %v3965
        %4479 = vmatprep.subr.bf16.mxu0 %v3974
        %4480 = vmatpush1.bf16.msra.mxu0 %v3973
        %4481 = vmatprep.subr.bf16.mxu0 %v3982
        %4482 = vmatpush1.bf16.msra.mxu0 %v3981
        %4483 = vmatprep.subr.bf16.mxu0 %v3990
        %4484 = vmatpush1.bf16.msra.mxu0 %v3989
        %4485 = vmatprep.subr.bf16.mxu0 %v3998
        %4486 = vmatpush1.bf16.msra.mxu0 %v3997
        %4487 = vmatprep.subr.bf16.mxu0 %v4006
        %4488 = vmatpush1.bf16.msra.mxu0 %v4005
        %4489 = vmatprep.subr.bf16.mxu0 %v4014
        %4490 = vmatpush1.bf16.msra.mxu0 %v4013
        %4491 = vmatprep.subr.bf16.mxu0 %v4022
        %4492 = vmatpush1.bf16.msra.mxu0 %v4021
        %4493 = vmatprep.subr.bf16.mxu0 %v4030
        %4494 = vmatpush1.bf16.msra.mxu0 %v4029
        %4495 = vmatprep.subr.bf16.mxu0 %v4038
        %4496 = vmatpush1.bf16.msra.mxu0 %v4037
        %4497 = vmatprep.subr.bf16.mxu0 %v4046
        %4498 = vmatpush1.bf16.msra.mxu0 %v4045
        %4499 = vmatprep.subr.bf16.mxu0 %v4054
        %4500 = vmatpush1.bf16.msra.mxu0 %v4053
        %4501 = vmatprep.subr.bf16.mxu0 %v4062
        %4502 = vmatpush1.bf16.msra.mxu0 %v4061
        %4503 = vmatprep.subr.bf16.mxu0 %v4070
        %4504 = vmatpush1.bf16.msra.mxu0 %v4069
        %4505 = vmatprep.subr.bf16.mxu0 %v4078
        %4506 = vmatpush1.bf16.msra.mxu0 %v4077
        %4507 = vmatprep.subr.bf16.mxu0 %v4086
        %4508 = vmatpush1.bf16.msra.mxu0 %v4085
        %4509 = vmatprep.mubr.bf16.mxu0 %v2836
        %4510 = vmatmul.mubr.bf16.gmra.mrb[0].mxu0 %v2835
        %v4511 = vpop.f32.mrb[0].mxu0
        %v4512 = vadd.f32 %v3160, %v4511
        %v4513 = vpop.f32.mrb[0].mxu0
        %v4514 = vadd.f32 %v3164, %v4513
        %v4515 = vpop.f32.mrb[0].mxu0
        %v4516 = vadd.f32 %v3160, %v4515
        %v4517 = vpop.f32.mrb[0].mxu0
        %v4518 = vadd.f32 %v3164, %v4517
        %4519 = vmatprep.mubr.bf16.mxu0 %v2840
        %4520 = vmatmul.mubr.bf16.gmra.mrb[0].mxu0 %v2839
        %v4521 = vpop.f32.mrb[0].mxu0
        %v4522 = vadd.f32 %v3160, %v4521
        %v4523 = vpop.f32.mrb[0].mxu0
        %v4524 = vadd.f32 %v3164, %v4523
        %v4525 = vpop.f32.mrb[0].mxu0
        %v4526 = vadd.f32 %v3160, %v4525
        %v4527 = vpop.f32.mrb[0].mxu0
        %v4528 = vadd.f32 %v3164, %v4527
        %4529 = vmatprep.mubr.bf16.mxu0 %v2844
        %4530 = vmatmul.mubr.bf16.gmra.mrb[0].mxu0 %v2843
        %v4531 = vpop.f32.mrb[0].mxu0
        %v4532 = vadd.f32 %v3160, %v4531
        %v4533 = vpop.f32.mrb[0].mxu0
        %v4534 = vadd.f32 %v3164, %v4533
        %v4535 = vpop.f32.mrb[0].mxu0
        %v4536 = vadd.f32 %v3160, %v4535
        %v4537 = vpop.f32.mrb[0].mxu0
        %v4538 = vadd.f32 %v3164, %v4537
        %4539 = vmatprep.mubr.bf16.mxu0 %v2848
        %4540 = vmatmul.mubr.bf16.gmra.mrb[0].mxu0 %v2847
        %v4541 = vpop.f32.mrb[0].mxu0
        %v4542 = vadd.f32 %v3160, %v4541
        %v4543 = vpop.f32.mrb[0].mxu0
        %v4544 = vadd.f32 %v3164, %v4543
        %v4545 = vpop.f32.mrb[0].mxu0
        %v4546 = vadd.f32 %v3160, %v4545
        %v4547 = vpop.f32.mrb[0].mxu0
        %v4548 = vadd.f32 %v3164, %v4547
        %4549 = vmatprep.mubr.bf16.mxu0 %v2852
        %4550 = vmatmul.mubr.bf16.gmra.mrb[0].mxu0 %v2851
        %v4551 = vpop.f32.mrb[0].mxu0
        %v4552 = vadd.f32 %v3160, %v4551
        %v4553 = vpop.f32.mrb[0].mxu0
        %v4554 = vadd.f32 %v3164, %v4553
        %v4555 = vpop.f32.mrb[0].mxu0
        %v4556 = vadd.f32 %v3160, %v4555
        %v4557 = vpop.f32.mrb[0].mxu0
        %v4558 = vadd.f32 %v3164, %v4557
        %4559 = vmatprep.mubr.bf16.mxu0 %v2856
        %4560 = vmatmul.mubr.bf16.gmra.mrb[0].mxu0 %v2855
        %v4561 = vpop.f32.mrb[0].mxu0
        %v4562 = vadd.f32 %v3160, %v4561
        %v4563 = vpop.f32.mrb[0].mxu0
        %v4564 = vadd.f32 %v3164, %v4563
        %v4565 = vpop.f32.mrb[0].mxu0
        %v4566 = vadd.f32 %v3160, %v4565
        %v4567 = vpop.f32.mrb[0].mxu0
        %v4568 = vadd.f32 %v3164, %v4567
        %4569 = vmatprep.mubr.bf16.mxu0 %v2860
        %4570 = vmatmul.mubr.bf16.gmra.mrb[0].mxu0 %v2859
        %v4571 = vpop.f32.mrb[0].mxu0
        %v4572 = vadd.f32 %v3160, %v4571
        %v4573 = vpop.f32.mrb[0].mxu0
        %v4574 = vadd.f32 %v3164, %v4573
        %v4575 = vpop.f32.mrb[0].mxu0
        %v4576 = vadd.f32 %v3160, %v4575
        %v4577 = vpop.f32.mrb[0].mxu0
        %v4578 = vadd.f32 %v3164, %v4577
        %4579 = vmatprep.mubr.bf16.mxu0 %v2864
        %4580 = vmatmul.mubr.bf16.gmra.mrb[0].mxu0 %v2863
        %v4581 = vpop.f32.mrb[0].mxu0
        %v4582 = vadd.f32 %v3160, %v4581
        %v4583 = vpop.f32.mrb[0].mxu0
        %v4584 = vadd.f32 %v3164, %v4583
        %v4585 = vpop.f32.mrb[0].mxu0
        %v4586 = vadd.f32 %v3160, %v4585
        %v4587 = vpop.f32.mrb[0].mxu0
        %v4588 = vadd.f32 %v3164, %v4587
        %4589 = vmatprep.mubr.bf16.mxu0 %v2868
        %4590 = vmatmul.mubr.bf16.gmra.mrb[0].mxu0 %v2867
        %v4591 = vpop.f32.mrb[0].mxu0
        %v4592 = vadd.f32 %v3160, %v4591
        %v4593 = vpop.f32.mrb[0].mxu0
        %v4594 = vadd.f32 %v3164, %v4593
        %v4595 = vpop.f32.mrb[0].mxu0
        %v4596 = vadd.f32 %v3160, %v4595
        %v4597 = vpop.f32.mrb[0].mxu0
        %v4598 = vadd.f32 %v3164, %v4597
        %4599 = vmatprep.mubr.bf16.mxu0 %v2872
        %4600 = vmatmul.mubr.bf16.gmra.mrb[0].mxu0 %v2871
        %v4601 = vpop.f32.mrb[0].mxu0
        %v4602 = vadd.f32 %v3160, %v4601
        %v4603 = vpop.f32.mrb[0].mxu0
        %v4604 = vadd.f32 %v3164, %v4603
        %v4605 = vpop.f32.mrb[0].mxu0
        %v4606 = vadd.f32 %v3160, %v4605
        %v4607 = vpop.f32.mrb[0].mxu0
        %v4608 = vadd.f32 %v3164, %v4607
        %4609 = vmatprep.mubr.bf16.mxu0 %v2876
        %4610 = vmatmul.mubr.bf16.gmra.mrb[0].mxu0 %v2875
        %v4611 = vpop.f32.mrb[0].mxu0
        %v4612 = vadd.f32 %v3160, %v4611
        %v4613 = vpop.f32.mrb[0].mxu0
        %v4614 = vadd.f32 %v3164, %v4613
        %v4615 = vpop.f32.mrb[0].mxu0
        %v4616 = vadd.f32 %v3160, %v4615
        %v4617 = vpop.f32.mrb[0].mxu0
        %v4618 = vadd.f32 %v3164, %v4617
        %4619 = vmatprep.mubr.bf16.mxu0 %v2880
        %4620 = vmatmul.mubr.bf16.gmra.mrb[0].mxu0 %v2879
        %v4621 = vpop.f32.mrb[0].mxu0
        %v4622 = vadd.f32 %v3160, %v4621
        %v4623 = vpop.f32.mrb[0].mxu0
        %v4624 = vadd.f32 %v3164, %v4623
        %v4625 = vpop.f32.mrb[0].mxu0
        %v4626 = vadd.f32 %v3160, %v4625
        %v4627 = vpop.f32.mrb[0].mxu0
        %v4628 = vadd.f32 %v3164, %v4627
        %4629 = vmatprep.mubr.bf16.mxu0 %v2884
        %4630 = vmatmul.mubr.bf16.gmra.mrb[0].mxu0 %v2883
        %v4631 = vpop.f32.mrb[0].mxu0
        %v4632 = vadd.f32 %v3160, %v4631
        %v4633 = vpop.f32.mrb[0].mxu0
        %v4634 = vadd.f32 %v3164, %v4633
        %v4635 = vpop.f32.mrb[0].mxu0
        %v4636 = vadd.f32 %v3160, %v4635
        %v4637 = vpop.f32.mrb[0].mxu0
        %v4638 = vadd.f32 %v3164, %v4637
        %4639 = vmatprep.mubr.bf16.mxu0 %v2888
        %4640 = vmatmul.mubr.bf16.gmra.mrb[0].mxu0 %v2887
        %v4641 = vpop.f32.mrb[0].mxu0
        %v4642 = vadd.f32 %v3160, %v4641
        %v4643 = vpop.f32.mrb[0].mxu0
        %v4644 = vadd.f32 %v3164, %v4643
        %v4645 = vpop.f32.mrb[0].mxu0
        %v4646 = vadd.f32 %v3160, %v4645
        %v4647 = vpop.f32.mrb[0].mxu0
        %v4648 = vadd.f32 %v3164, %v4647
        %4649 = vmatprep.mubr.bf16.mxu0 %v2892
        %4650 = vmatmul.mubr.bf16.gmra.mrb[0].mxu0 %v2891
        %v4651 = vpop.f32.mrb[0].mxu0
        %v4652 = vadd.f32 %v3160, %v4651
        %v4653 = vpop.f32.mrb[0].mxu0
        %v4654 = vadd.f32 %v3164, %v4653
        %v4655 = vpop.f32.mrb[0].mxu0
        %v4656 = vadd.f32 %v3160, %v4655
        %v4657 = vpop.f32.mrb[0].mxu0
        %v4658 = vadd.f32 %v3164, %v4657
        %4659 = vmatprep.mubr.bf16.mxu0 %v2896
        %4660 = vmatmul.mubr.bf16.gmra.mrb[0].mxu0 %v2895
        %v4661 = vpop.f32.mrb[0].mxu0
        %v4662 = vadd.f32 %v3160, %v4661
        %v4663 = vpop.f32.mrb[0].mxu0
        %v4664 = vadd.f32 %v3164, %v4663
        %v4665 = vpop.f32.mrb[0].mxu0
        %v4666 = vadd.f32 %v3160, %v4665
        %v4667 = vpop.f32.mrb[0].mxu0
        %v4668 = vadd.f32 %v3164, %v4667
        %4669 = vdwg.mxu0
        %4670 = vmatprep.subr.bf16.mxu0 %v4094
        %4671 = vmatpush1.bf16.msra.mxu0 %v4093
        %4672 = vmatprep.subr.bf16.mxu0 %v4102
        %4673 = vmatpush1.bf16.msra.mxu0 %v4101
        %4674 = vmatprep.subr.bf16.mxu0 %v4110
        %4675 = vmatpush1.bf16.msra.mxu0 %v4109
        %4676 = vmatprep.subr.bf16.mxu0 %v4118
        %4677 = vmatpush1.bf16.msra.mxu0 %v4117
        %4678 = vmatprep.subr.bf16.mxu0 %v4126
        %4679 = vmatpush1.bf16.msra.mxu0 %v4125
        %4680 = vmatprep.subr.bf16.mxu0 %v4134
        %4681 = vmatpush1.bf16.msra.mxu0 %v4133
        %4682 = vmatprep.subr.bf16.mxu0 %v4142
        %4683 = vmatpush1.bf16.msra.mxu0 %v4141
        %4684 = vmatprep.subr.bf16.mxu0 %v4150
        %4685 = vmatpush1.bf16.msra.mxu0 %v4149
        %4686 = vmatprep.subr.bf16.mxu0 %v4158
        %4687 = vmatpush1.bf16.msra.mxu0 %v4157
        %4688 = vmatprep.subr.bf16.mxu0 %v4166
        %4689 = vmatpush1.bf16.msra.mxu0 %v4165
        %4690 = vmatprep.subr.bf16.mxu0 %v4174
        %4691 = vmatpush1.bf16.msra.mxu0 %v4173
        %4692 = vmatprep.subr.bf16.mxu0 %v4182
        %4693 = vmatpush1.bf16.msra.mxu0 %v4181
        %4694 = vmatprep.subr.bf16.mxu0 %v4190
        %4695 = vmatpush1.bf16.msra.mxu0 %v4189
        %4696 = vmatprep.subr.bf16.mxu0 %v4198
        %4697 = vmatpush1.bf16.msra.mxu0 %v4197
        %4698 = vmatprep.subr.bf16.mxu0 %v4206
        %4699 = vmatpush1.bf16.msra.mxu0 %v4205
        %4700 = vmatprep.subr.bf16.mxu0 %v4214
        %4701 = vmatpush1.bf16.msra.mxu0 %v4213
        %4702 = vmatprep.mubr.bf16.mxu0 %v2838
        %4703 = vmatmul.mubr.bf16.gmra.mrb[0].mxu0 %v2837
        %v4704 = vpop.f32.mrb[0].mxu0
        %v4705 = vadd.f32 %v4512, %v4704
        %v4706 = vpop.f32.mrb[0].mxu0
        %v4707 = vadd.f32 %v4514, %v4706
        %v4708 = vpop.f32.mrb[0].mxu0
        %v4709 = vadd.f32 %v4516, %v4708
        %v4710 = vpop.f32.mrb[0].mxu0
        %v4711 = vadd.f32 %v4518, %v4710
        %4712 = vmatprep.mubr.bf16.mxu0 %v2842
        %4713 = vmatmul.mubr.bf16.gmra.mrb[0].mxu0 %v2841
        %v4714 = vpop.f32.mrb[0].mxu0
        %v4715 = vadd.f32 %v4522, %v4714
        %v4716 = vpop.f32.mrb[0].mxu0
        %v4717 = vadd.f32 %v4524, %v4716
        %v4718 = vpop.f32.mrb[0].mxu0
        %v4719 = vadd.f32 %v4526, %v4718
        %v4720 = vpop.f32.mrb[0].mxu0
        %v4721 = vadd.f32 %v4528, %v4720
        %4722 = vmatprep.mubr.bf16.mxu0 %v2846
        %4723 = vmatmul.mubr.bf16.gmra.mrb[0].mxu0 %v2845
        %v4724 = vpop.f32.mrb[0].mxu0
        %v4725 = vadd.f32 %v4532, %v4724
        %v4726 = vpop.f32.mrb[0].mxu0
        %v4727 = vadd.f32 %v4534, %v4726
        %v4728 = vpop.f32.mrb[0].mxu0
        %v4729 = vadd.f32 %v4536, %v4728
        %v4730 = vpop.f32.mrb[0].mxu0
        %v4731 = vadd.f32 %v4538, %v4730
        %4732 = vmatprep.mubr.bf16.mxu0 %v2850
        %4733 = vmatmul.mubr.bf16.gmra.mrb[0].mxu0 %v2849
        %v4734 = vpop.f32.mrb[0].mxu0
        %v4735 = vadd.f32 %v4542, %v4734
        %v4736 = vpop.f32.mrb[0].mxu0
        %v4737 = vadd.f32 %v4544, %v4736
        %v4738 = vpop.f32.mrb[0].mxu0
        %v4739 = vadd.f32 %v4546, %v4738
        %v4740 = vpop.f32.mrb[0].mxu0
        %v4741 = vadd.f32 %v4548, %v4740
        %4742 = vmatprep.mubr.bf16.mxu0 %v2854
        %4743 = vmatmul.mubr.bf16.gmra.mrb[0].mxu0 %v2853
        %v4744 = vpop.f32.mrb[0].mxu0
        %v4745 = vadd.f32 %v4552, %v4744
        %v4746 = vpop.f32.mrb[0].mxu0
        %v4747 = vadd.f32 %v4554, %v4746
        %v4748 = vpop.f32.mrb[0].mxu0
        %v4749 = vadd.f32 %v4556, %v4748
        %v4750 = vpop.f32.mrb[0].mxu0
        %v4751 = vadd.f32 %v4558, %v4750
        %4752 = vmatprep.mubr.bf16.mxu0 %v2858
        %4753 = vmatmul.mubr.bf16.gmra.mrb[0].mxu0 %v2857
        %v4754 = vpop.f32.mrb[0].mxu0
        %v4755 = vadd.f32 %v4562, %v4754
        %v4756 = vpop.f32.mrb[0].mxu0
        %v4757 = vadd.f32 %v4564, %v4756
        %v4758 = vpop.f32.mrb[0].mxu0
        %v4759 = vadd.f32 %v4566, %v4758
        %v4760 = vpop.f32.mrb[0].mxu0
        %v4761 = vadd.f32 %v4568, %v4760
        %4762 = vmatprep.mubr.bf16.mxu0 %v2862
        %4763 = vmatmul.mubr.bf16.gmra.mrb[0].mxu0 %v2861
        %v4764 = vpop.f32.mrb[0].mxu0
        %v4765 = vadd.f32 %v4572, %v4764
        %v4766 = vpop.f32.mrb[0].mxu0
        %v4767 = vadd.f32 %v4574, %v4766
        %v4768 = vpop.f32.mrb[0].mxu0
        %v4769 = vadd.f32 %v4576, %v4768
        %v4770 = vpop.f32.mrb[0].mxu0
        %v4771 = vadd.f32 %v4578, %v4770
        %4772 = vmatprep.mubr.bf16.mxu0 %v2866
        %4773 = vmatmul.mubr.bf16.gmra.mrb[0].mxu0 %v2865
        %v4774 = vpop.f32.mrb[0].mxu0
        %v4775 = vadd.f32 %v4582, %v4774
        %v4776 = vpop.f32.mrb[0].mxu0
        %v4777 = vadd.f32 %v4584, %v4776
        %v4778 = vpop.f32.mrb[0].mxu0
        %v4779 = vadd.f32 %v4586, %v4778
        %v4780 = vpop.f32.mrb[0].mxu0
        %v4781 = vadd.f32 %v4588, %v4780
        %4782 = vmatprep.mubr.bf16.mxu0 %v2870
        %4783 = vmatmul.mubr.bf16.gmra.mrb[0].mxu0 %v2869
        %v4784 = vpop.f32.mrb[0].mxu0
        %v4785 = vadd.f32 %v4592, %v4784
        %v4786 = vpop.f32.mrb[0].mxu0
        %v4787 = vadd.f32 %v4594, %v4786
        %v4788 = vpop.f32.mrb[0].mxu0
        %v4789 = vadd.f32 %v4596, %v4788
        %v4790 = vpop.f32.mrb[0].mxu0
        %v4791 = vadd.f32 %v4598, %v4790
        %4792 = vmatprep.mubr.bf16.mxu0 %v2874
        %4793 = vmatmul.mubr.bf16.gmra.mrb[0].mxu0 %v2873
        %v4794 = vpop.f32.mrb[0].mxu0
        %v4795 = vadd.f32 %v4602, %v4794
        %v4796 = vpop.f32.mrb[0].mxu0
        %v4797 = vadd.f32 %v4604, %v4796
        %v4798 = vpop.f32.mrb[0].mxu0
        %v4799 = vadd.f32 %v4606, %v4798
        %v4800 = vpop.f32.mrb[0].mxu0
        %v4801 = vadd.f32 %v4608, %v4800
        %4802 = vmatprep.mubr.bf16.mxu0 %v2878
        %4803 = vmatmul.mubr.bf16.gmra.mrb[0].mxu0 %v2877
        %v4804 = vpop.f32.mrb[0].mxu0
        %v4805 = vadd.f32 %v4612, %v4804
        %v4806 = vpop.f32.mrb[0].mxu0
        %v4807 = vadd.f32 %v4614, %v4806
        %v4808 = vpop.f32.mrb[0].mxu0
        %v4809 = vadd.f32 %v4616, %v4808
        %v4810 = vpop.f32.mrb[0].mxu0
        %v4811 = vadd.f32 %v4618, %v4810
        %4812 = vmatprep.mubr.bf16.mxu0 %v2882
        %4813 = vmatmul.mubr.bf16.gmra.mrb[0].mxu0 %v2881
        %v4814 = vpop.f32.mrb[0].mxu0
        %v4815 = vadd.f32 %v4622, %v4814
        %v4816 = vpop.f32.mrb[0].mxu0
        %v4817 = vadd.f32 %v4624, %v4816
        %v4818 = vpop.f32.mrb[0].mxu0
        %v4819 = vadd.f32 %v4626, %v4818
        %v4820 = vpop.f32.mrb[0].mxu0
        %v4821 = vadd.f32 %v4628, %v4820
        %4822 = vmatprep.mubr.bf16.mxu0 %v2886
        %4823 = vmatmul.mubr.bf16.gmra.mrb[0].mxu0 %v2885
        %v4824 = vpop.f32.mrb[0].mxu0
        %v4825 = vadd.f32 %v4632, %v4824
        %v4826 = vpop.f32.mrb[0].mxu0
        %v4827 = vadd.f32 %v4634, %v4826
        %v4828 = vpop.f32.mrb[0].mxu0
        %v4829 = vadd.f32 %v4636, %v4828
        %v4830 = vpop.f32.mrb[0].mxu0
        %v4831 = vadd.f32 %v4638, %v4830
        %4832 = vmatprep.mubr.bf16.mxu0 %v2890
        %4833 = vmatmul.mubr.bf16.gmra.mrb[0].mxu0 %v2889
        %v4834 = vpop.f32.mrb[0].mxu0
        %v4835 = vadd.f32 %v4642, %v4834
        %v4836 = vpop.f32.mrb[0].mxu0
        %v4837 = vadd.f32 %v4644, %v4836
        %v4838 = vpop.f32.mrb[0].mxu0
        %v4839 = vadd.f32 %v4646, %v4838
        %v4840 = vpop.f32.mrb[0].mxu0
        %v4841 = vadd.f32 %v4648, %v4840
        %4842 = vmatprep.mubr.bf16.mxu0 %v2894
        %4843 = vmatmul.mubr.bf16.gmra.mrb[0].mxu0 %v2893
        %v4844 = vpop.f32.mrb[0].mxu0
        %v4845 = vadd.f32 %v4652, %v4844
        %v4846 = vpop.f32.mrb[0].mxu0
        %v4847 = vadd.f32 %v4654, %v4846
        %v4848 = vpop.f32.mrb[0].mxu0
        %v4849 = vadd.f32 %v4656, %v4848
        %v4850 = vpop.f32.mrb[0].mxu0
        %v4851 = vadd.f32 %v4658, %v4850
        %4852 = vmatprep.mubr.bf16.mxu0 %v2898
        %4853 = vmatmul.mubr.bf16.gmra.mrb[0].mxu0 %v2897
        %v4854 = vpop.f32.mrb[0].mxu0
        %v4855 = vadd.f32 %v4662, %v4854
        %v4856 = vpop.f32.mrb[0].mxu0
        %v4857 = vadd.f32 %v4664, %v4856
        %v4858 = vpop.f32.mrb[0].mxu0
        %v4859 = vadd.f32 %v4666, %v4858
        %v4860 = vpop.f32.mrb[0].mxu0
        %v4861 = vadd.f32 %v4668, %v4860
        %4862 = vdwg.mxu0
        %4863 = vmatprep.subr.bf16.mxu0 %v3968
        %4864 = vmatpush1.bf16.msra.mxu0 %v3967
        %4865 = vmatprep.subr.bf16.mxu0 %v3976
        %4866 = vmatpush1.bf16.msra.mxu0 %v3975
        %4867 = vmatprep.subr.bf16.mxu0 %v3984
        %4868 = vmatpush1.bf16.msra.mxu0 %v3983
        %4869 = vmatprep.subr.bf16.mxu0 %v3992
        %4870 = vmatpush1.bf16.msra.mxu0 %v3991
        %4871 = vmatprep.subr.bf16.mxu0 %v4000
        %4872 = vmatpush1.bf16.msra.mxu0 %v3999
        %4873 = vmatprep.subr.bf16.mxu0 %v4008
        %4874 = vmatpush1.bf16.msra.mxu0 %v4007
        %4875 = vmatprep.subr.bf16.mxu0 %v4016
        %4876 = vmatpush1.bf16.msra.mxu0 %v4015
        %4877 = vmatprep.subr.bf16.mxu0 %v4024
        %4878 = vmatpush1.bf16.msra.mxu0 %v4023
        %4879 = vmatprep.subr.bf16.mxu0 %v4032
        %4880 = vmatpush1.bf16.msra.mxu0 %v4031
        %4881 = vmatprep.subr.bf16.mxu0 %v4040
        %4882 = vmatpush1.bf16.msra.mxu0 %v4039
        %4883 = vmatprep.subr.bf16.mxu0 %v4048
        %4884 = vmatpush1.bf16.msra.mxu0 %v4047
        %4885 = vmatprep.subr.bf16.mxu0 %v4056
        %4886 = vmatpush1.bf16.msra.mxu0 %v4055
        %4887 = vmatprep.subr.bf16.mxu0 %v4064
        %4888 = vmatpush1.bf16.msra.mxu0 %v4063
        %4889 = vmatprep.subr.bf16.mxu0 %v4072
        %4890 = vmatpush1.bf16.msra.mxu0 %v4071
        %4891 = vmatprep.subr.bf16.mxu0 %v4080
        %4892 = vmatpush1.bf16.msra.mxu0 %v4079
        %4893 = vmatprep.subr.bf16.mxu0 %v4088
        %4894 = vmatpush1.bf16.msra.mxu0 %v4087
        %4895 = vmatprep.mubr.bf16.mxu0 %v2836
        %4896 = vmatmul.mubr.bf16.gmra.mrb[0].mxu0 %v2835
        %v4897 = vpop.f32.mrb[0].mxu0
        %v4898 = vadd.f32 %v3168, %v4897
        %v4899 = vpop.f32.mrb[0].mxu0
        %v4900 = vadd.f32 %v3172, %v4899
        %v4901 = vpop.f32.mrb[0].mxu0
        %v4902 = vadd.f32 %v3168, %v4901
        %v4903 = vpop.f32.mrb[0].mxu0
        %v4904 = vadd.f32 %v3172, %v4903
        %4905 = vmatprep.mubr.bf16.mxu0 %v2840
        %4906 = vmatmul.mubr.bf16.gmra.mrb[0].mxu0 %v2839
        %v4907 = vpop.f32.mrb[0].mxu0
        %v4908 = vadd.f32 %v3168, %v4907
        %v4909 = vpop.f32.mrb[0].mxu0
        %v4910 = vadd.f32 %v3172, %v4909
        %v4911 = vpop.f32.mrb[0].mxu0
        %v4912 = vadd.f32 %v3168, %v4911
        %v4913 = vpop.f32.mrb[0].mxu0
        %v4914 = vadd.f32 %v3172, %v4913
        %4915 = vmatprep.mubr.bf16.mxu0 %v2844
        %4916 = vmatmul.mubr.bf16.gmra.mrb[0].mxu0 %v2843
        %v4917 = vpop.f32.mrb[0].mxu0
        %v4918 = vadd.f32 %v3168, %v4917
        %v4919 = vpop.f32.mrb[0].mxu0
        %v4920 = vadd.f32 %v3172, %v4919
        %v4921 = vpop.f32.mrb[0].mxu0
        %v4922 = vadd.f32 %v3168, %v4921
        %v4923 = vpop.f32.mrb[0].mxu0
        %v4924 = vadd.f32 %v3172, %v4923
        %4925 = vmatprep.mubr.bf16.mxu0 %v2848
        %4926 = vmatmul.mubr.bf16.gmra.mrb[0].mxu0 %v2847
        %v4927 = vpop.f32.mrb[0].mxu0
        %v4928 = vadd.f32 %v3168, %v4927
        %v4929 = vpop.f32.mrb[0].mxu0
        %v4930 = vadd.f32 %v3172, %v4929
        %v4931 = vpop.f32.mrb[0].mxu0
        %v4932 = vadd.f32 %v3168, %v4931
        %v4933 = vpop.f32.mrb[0].mxu0
        %v4934 = vadd.f32 %v3172, %v4933
        %4935 = vmatprep.mubr.bf16.mxu0 %v2852
        %4936 = vmatmul.mubr.bf16.gmra.mrb[0].mxu0 %v2851
        %v4937 = vpop.f32.mrb[0].mxu0
        %v4938 = vadd.f32 %v3168, %v4937
        %v4939 = vpop.f32.mrb[0].mxu0
        %v4940 = vadd.f32 %v3172, %v4939
        %v4941 = vpop.f32.mrb[0].mxu0
        %v4942 = vadd.f32 %v3168, %v4941
        %v4943 = vpop.f32.mrb[0].mxu0
        %v4944 = vadd.f32 %v3172, %v4943
        %4945 = vmatprep.mubr.bf16.mxu0 %v2856
        %4946 = vmatmul.mubr.bf16.gmra.mrb[0].mxu0 %v2855
        %v4947 = vpop.f32.mrb[0].mxu0
        %v4948 = vadd.f32 %v3168, %v4947
        %v4949 = vpop.f32.mrb[0].mxu0
        %v4950 = vadd.f32 %v3172, %v4949
        %v4951 = vpop.f32.mrb[0].mxu0
        %v4952 = vadd.f32 %v3168, %v4951
        %v4953 = vpop.f32.mrb[0].mxu0
        %v4954 = vadd.f32 %v3172, %v4953
        %4955 = vmatprep.mubr.bf16.mxu0 %v2860
        %4956 = vmatmul.mubr.bf16.gmra.mrb[0].mxu0 %v2859
        %v4957 = vpop.f32.mrb[0].mxu0
        %v4958 = vadd.f32 %v3168, %v4957
        %v4959 = vpop.f32.mrb[0].mxu0
        %v4960 = vadd.f32 %v3172, %v4959
        %v4961 = vpop.f32.mrb[0].mxu0
        %v4962 = vadd.f32 %v3168, %v4961
        %v4963 = vpop.f32.mrb[0].mxu0
        %v4964 = vadd.f32 %v3172, %v4963
        %4965 = vmatprep.mubr.bf16.mxu0 %v2864
        %4966 = vmatmul.mubr.bf16.gmra.mrb[0].mxu0 %v2863
        %v4967 = vpop.f32.mrb[0].mxu0
        %v4968 = vadd.f32 %v3168, %v4967
        %v4969 = vpop.f32.mrb[0].mxu0
        %v4970 = vadd.f32 %v3172, %v4969
        %v4971 = vpop.f32.mrb[0].mxu0
        %v4972 = vadd.f32 %v3168, %v4971
        %v4973 = vpop.f32.mrb[0].mxu0
        %v4974 = vadd.f32 %v3172, %v4973
        %4975 = vmatprep.mubr.bf16.mxu0 %v2868
        %4976 = vmatmul.mubr.bf16.gmra.mrb[0].mxu0 %v2867
        %v4977 = vpop.f32.mrb[0].mxu0
        %v4978 = vadd.f32 %v3168, %v4977
        %v4979 = vpop.f32.mrb[0].mxu0
        %v4980 = vadd.f32 %v3172, %v4979
        %v4981 = vpop.f32.mrb[0].mxu0
        %v4982 = vadd.f32 %v3168, %v4981
        %v4983 = vpop.f32.mrb[0].mxu0
        %v4984 = vadd.f32 %v3172, %v4983
        %4985 = vmatprep.mubr.bf16.mxu0 %v2872
        %4986 = vmatmul.mubr.bf16.gmra.mrb[0].mxu0 %v2871
        %v4987 = vpop.f32.mrb[0].mxu0
        %v4988 = vadd.f32 %v3168, %v4987
        %v4989 = vpop.f32.mrb[0].mxu0
        %v4990 = vadd.f32 %v3172, %v4989
        %v4991 = vpop.f32.mrb[0].mxu0
        %v4992 = vadd.f32 %v3168, %v4991
        %v4993 = vpop.f32.mrb[0].mxu0
        %v4994 = vadd.f32 %v3172, %v4993
        %4995 = vmatprep.mubr.bf16.mxu0 %v2876
        %4996 = vmatmul.mubr.bf16.gmra.mrb[0].mxu0 %v2875
        %v4997 = vpop.f32.mrb[0].mxu0
        %v4998 = vadd.f32 %v3168, %v4997
        %v4999 = vpop.f32.mrb[0].mxu0
        %v5000 = vadd.f32 %v3172, %v4999
        %v5001 = vpop.f32.mrb[0].mxu0
        %v5002 = vadd.f32 %v3168, %v5001
        %v5003 = vpop.f32.mrb[0].mxu0
        %v5004 = vadd.f32 %v3172, %v5003
        %5005 = vmatprep.mubr.bf16.mxu0 %v2880
        %5006 = vmatmul.mubr.bf16.gmra.mrb[0].mxu0 %v2879
        %v5007 = vpop.f32.mrb[0].mxu0
        %v5008 = vadd.f32 %v3168, %v5007
        %v5009 = vpop.f32.mrb[0].mxu0
        %v5010 = vadd.f32 %v3172, %v5009
        %v5011 = vpop.f32.mrb[0].mxu0
        %v5012 = vadd.f32 %v3168, %v5011
        %v5013 = vpop.f32.mrb[0].mxu0
        %v5014 = vadd.f32 %v3172, %v5013
        %5015 = vmatprep.mubr.bf16.mxu0 %v2884
        %5016 = vmatmul.mubr.bf16.gmra.mrb[0].mxu0 %v2883
        %v5017 = vpop.f32.mrb[0].mxu0
        %v5018 = vadd.f32 %v3168, %v5017
        %v5019 = vpop.f32.mrb[0].mxu0
        %v5020 = vadd.f32 %v3172, %v5019
        %v5021 = vpop.f32.mrb[0].mxu0
        %v5022 = vadd.f32 %v3168, %v5021
        %v5023 = vpop.f32.mrb[0].mxu0
        %v5024 = vadd.f32 %v3172, %v5023
        %5025 = vmatprep.mubr.bf16.mxu0 %v2888
        %5026 = vmatmul.mubr.bf16.gmra.mrb[0].mxu0 %v2887
        %v5027 = vpop.f32.mrb[0].mxu0
        %v5028 = vadd.f32 %v3168, %v5027
        %v5029 = vpop.f32.mrb[0].mxu0
        %v5030 = vadd.f32 %v3172, %v5029
        %v5031 = vpop.f32.mrb[0].mxu0
        %v5032 = vadd.f32 %v3168, %v5031
        %v5033 = vpop.f32.mrb[0].mxu0
        %v5034 = vadd.f32 %v3172, %v5033
        %5035 = vmatprep.mubr.bf16.mxu0 %v2892
        %5036 = vmatmul.mubr.bf16.gmra.mrb[0].mxu0 %v2891
        %v5037 = vpop.f32.mrb[0].mxu0
        %v5038 = vadd.f32 %v3168, %v5037
        %v5039 = vpop.f32.mrb[0].mxu0
        %v5040 = vadd.f32 %v3172, %v5039
        %v5041 = vpop.f32.mrb[0].mxu0
        %v5042 = vadd.f32 %v3168, %v5041
        %v5043 = vpop.f32.mrb[0].mxu0
        %v5044 = vadd.f32 %v3172, %v5043
        %5045 = vmatprep.mubr.bf16.mxu0 %v2896
        %5046 = vmatmul.mubr.bf16.gmra.mrb[0].mxu0 %v2895
        %v5047 = vpop.f32.mrb[0].mxu0
        %v5048 = vadd.f32 %v3168, %v5047
        %v5049 = vpop.f32.mrb[0].mxu0
        %v5050 = vadd.f32 %v3172, %v5049
        %v5051 = vpop.f32.mrb[0].mxu0
        %v5052 = vadd.f32 %v3168, %v5051
        %v5053 = vpop.f32.mrb[0].mxu0
        %v5054 = vadd.f32 %v3172, %v5053
        %5055 = vdwg.mxu0
        %5056 = vmatprep.subr.bf16.mxu0 %v4096
        %5057 = vmatpush1.bf16.msra.mxu0 %v4095
        %5058 = vmatprep.subr.bf16.mxu0 %v4104
        %5059 = vmatpush1.bf16.msra.mxu0 %v4103
        %5060 = vmatprep.subr.bf16.mxu0 %v4112
        %5061 = vmatpush1.bf16.msra.mxu0 %v4111
        %5062 = vmatprep.subr.bf16.mxu0 %v4120
        %5063 = vmatpush1.bf16.msra.mxu0 %v4119
        %5064 = vmatprep.subr.bf16.mxu0 %v4128
        %5065 = vmatpush1.bf16.msra.mxu0 %v4127
        %5066 = vmatprep.subr.bf16.mxu0 %v4136
        %5067 = vmatpush1.bf16.msra.mxu0 %v4135
        %5068 = vmatprep.subr.bf16.mxu0 %v4144
        %5069 = vmatpush1.bf16.msra.mxu0 %v4143
        %5070 = vmatprep.subr.bf16.mxu0 %v4152
        %5071 = vmatpush1.bf16.msra.mxu0 %v4151
        %5072 = vmatprep.subr.bf16.mxu0 %v4160
        %5073 = vmatpush1.bf16.msra.mxu0 %v4159
        %5074 = vmatprep.subr.bf16.mxu0 %v4168
        %5075 = vmatpush1.bf16.msra.mxu0 %v4167
        %5076 = vmatprep.subr.bf16.mxu0 %v4176
        %5077 = vmatpush1.bf16.msra.mxu0 %v4175
        %5078 = vmatprep.subr.bf16.mxu0 %v4184
        %5079 = vmatpush1.bf16.msra.mxu0 %v4183
        %5080 = vmatprep.subr.bf16.mxu0 %v4192
        %5081 = vmatpush1.bf16.msra.mxu0 %v4191
        %5082 = vmatprep.subr.bf16.mxu0 %v4200
        %5083 = vmatpush1.bf16.msra.mxu0 %v4199
        %5084 = vmatprep.subr.bf16.mxu0 %v4208
        %5085 = vmatpush1.bf16.msra.mxu0 %v4207
        %5086 = vmatprep.subr.bf16.mxu0 %v4216
        %5087 = vmatpush1.bf16.msra.mxu0 %v4215
        %5088 = vmatprep.mubr.bf16.mxu0 %v2838
        %5089 = vmatmul.mubr.bf16.gmra.mrb[0].mxu0 %v2837
        %v5090 = vpop.f32.mrb[0].mxu0
        %v5091 = vadd.f32 %v4898, %v5090
        %v5092 = vpop.f32.mrb[0].mxu0
        %v5093 = vadd.f32 %v4900, %v5092
        %v5094 = vpop.f32.mrb[0].mxu0
        %v5095 = vadd.f32 %v4902, %v5094
        %v5096 = vpop.f32.mrb[0].mxu0
        %v5097 = vadd.f32 %v4904, %v5096
        %5098 = vmatprep.mubr.bf16.mxu0 %v2842
        %5099 = vmatmul.mubr.bf16.gmra.mrb[0].mxu0 %v2841
        %v5100 = vpop.f32.mrb[0].mxu0
        %v5101 = vadd.f32 %v4908, %v5100
        %v5102 = vpop.f32.mrb[0].mxu0
        %v5103 = vadd.f32 %v4910, %v5102
        %v5104 = vpop.f32.mrb[0].mxu0
        %v5105 = vadd.f32 %v4912, %v5104
        %v5106 = vpop.f32.mrb[0].mxu0
        %v5107 = vadd.f32 %v4914, %v5106
        %5108 = vmatprep.mubr.bf16.mxu0 %v2846
        %5109 = vmatmul.mubr.bf16.gmra.mrb[0].mxu0 %v2845
        %v5110 = vpop.f32.mrb[0].mxu0
        %v5111 = vadd.f32 %v4918, %v5110
        %v5112 = vpop.f32.mrb[0].mxu0
        %v5113 = vadd.f32 %v4920, %v5112
        %v5114 = vpop.f32.mrb[0].mxu0
        %v5115 = vadd.f32 %v4922, %v5114
        %v5116 = vpop.f32.mrb[0].mxu0
        %v5117 = vadd.f32 %v4924, %v5116
        %5118 = vmatprep.mubr.bf16.mxu0 %v2850
        %5119 = vmatmul.mubr.bf16.gmra.mrb[0].mxu0 %v2849
        %v5120 = vpop.f32.mrb[0].mxu0
        %v5121 = vadd.f32 %v4928, %v5120
        %v5122 = vpop.f32.mrb[0].mxu0
        %v5123 = vadd.f32 %v4930, %v5122
        %v5124 = vpop.f32.mrb[0].mxu0
        %v5125 = vadd.f32 %v4932, %v5124
        %v5126 = vpop.f32.mrb[0].mxu0
        %v5127 = vadd.f32 %v4934, %v5126
        %5128 = vmatprep.mubr.bf16.mxu0 %v2854
        %5129 = vmatmul.mubr.bf16.gmra.mrb[0].mxu0 %v2853
        %v5130 = vpop.f32.mrb[0].mxu0
        %v5131 = vadd.f32 %v4938, %v5130
        %v5132 = vpop.f32.mrb[0].mxu0
        %v5133 = vadd.f32 %v4940, %v5132
        %v5134 = vpop.f32.mrb[0].mxu0
        %v5135 = vadd.f32 %v4942, %v5134
        %v5136 = vpop.f32.mrb[0].mxu0
        %v5137 = vadd.f32 %v4944, %v5136
        %5138 = vmatprep.mubr.bf16.mxu0 %v2858
        %5139 = vmatmul.mubr.bf16.gmra.mrb[0].mxu0 %v2857
        %v5140 = vpop.f32.mrb[0].mxu0
        %v5141 = vadd.f32 %v4948, %v5140
        %v5142 = vpop.f32.mrb[0].mxu0
        %v5143 = vadd.f32 %v4950, %v5142
        %v5144 = vpop.f32.mrb[0].mxu0
        %v5145 = vadd.f32 %v4952, %v5144
        %v5146 = vpop.f32.mrb[0].mxu0
        %v5147 = vadd.f32 %v4954, %v5146
        %5148 = vmatprep.mubr.bf16.mxu0 %v2862
        %5149 = vmatmul.mubr.bf16.gmra.mrb[0].mxu0 %v2861
        %v5150 = vpop.f32.mrb[0].mxu0
        %v5151 = vadd.f32 %v4958, %v5150
        %v5152 = vpop.f32.mrb[0].mxu0
        %v5153 = vadd.f32 %v4960, %v5152
        %v5154 = vpop.f32.mrb[0].mxu0
        %v5155 = vadd.f32 %v4962, %v5154
        %v5156 = vpop.f32.mrb[0].mxu0
        %v5157 = vadd.f32 %v4964, %v5156
        %5158 = vmatprep.mubr.bf16.mxu0 %v2866
        %5159 = vmatmul.mubr.bf16.gmra.mrb[0].mxu0 %v2865
        %v5160 = vpop.f32.mrb[0].mxu0
        %v5161 = vadd.f32 %v4968, %v5160
        %v5162 = vpop.f32.mrb[0].mxu0
        %v5163 = vadd.f32 %v4970, %v5162
        %v5164 = vpop.f32.mrb[0].mxu0
        %v5165 = vadd.f32 %v4972, %v5164
        %v5166 = vpop.f32.mrb[0].mxu0
        %v5167 = vadd.f32 %v4974, %v5166
        %5168 = vmatprep.mubr.bf16.mxu0 %v2870
        %5169 = vmatmul.mubr.bf16.gmra.mrb[0].mxu0 %v2869
        %v5170 = vpop.f32.mrb[0].mxu0
        %v5171 = vadd.f32 %v4978, %v5170
        %v5172 = vpop.f32.mrb[0].mxu0
        %v5173 = vadd.f32 %v4980, %v5172
        %v5174 = vpop.f32.mrb[0].mxu0
        %v5175 = vadd.f32 %v4982, %v5174
        %v5176 = vpop.f32.mrb[0].mxu0
        %v5177 = vadd.f32 %v4984, %v5176
        %5178 = vmatprep.mubr.bf16.mxu0 %v2874
        %5179 = vmatmul.mubr.bf16.gmra.mrb[0].mxu0 %v2873
        %v5180 = vpop.f32.mrb[0].mxu0
        %v5181 = vadd.f32 %v4988, %v5180
        %v5182 = vpop.f32.mrb[0].mxu0
        %v5183 = vadd.f32 %v4990, %v5182
        %v5184 = vpop.f32.mrb[0].mxu0
        %v5185 = vadd.f32 %v4992, %v5184
        %v5186 = vpop.f32.mrb[0].mxu0
        %v5187 = vadd.f32 %v4994, %v5186
        %5188 = vmatprep.mubr.bf16.mxu0 %v2878
        %5189 = vmatmul.mubr.bf16.gmra.mrb[0].mxu0 %v2877
        %v5190 = vpop.f32.mrb[0].mxu0
        %v5191 = vadd.f32 %v4998, %v5190
        %v5192 = vpop.f32.mrb[0].mxu0
        %v5193 = vadd.f32 %v5000, %v5192
        %v5194 = vpop.f32.mrb[0].mxu0
        %v5195 = vadd.f32 %v5002, %v5194
        %v5196 = vpop.f32.mrb[0].mxu0
        %v5197 = vadd.f32 %v5004, %v5196
        %5198 = vmatprep.mubr.bf16.mxu0 %v2882
        %5199 = vmatmul.mubr.bf16.gmra.mrb[0].mxu0 %v2881
        %v5200 = vpop.f32.mrb[0].mxu0
        %v5201 = vadd.f32 %v5008, %v5200
        %v5202 = vpop.f32.mrb[0].mxu0
        %v5203 = vadd.f32 %v5010, %v5202
        %v5204 = vpop.f32.mrb[0].mxu0
        %v5205 = vadd.f32 %v5012, %v5204
        %v5206 = vpop.f32.mrb[0].mxu0
        %v5207 = vadd.f32 %v5014, %v5206
        %5208 = vmatprep.mubr.bf16.mxu0 %v2886
        %5209 = vmatmul.mubr.bf16.gmra.mrb[0].mxu0 %v2885
        %v5210 = vpop.f32.mrb[0].mxu0
        %v5211 = vadd.f32 %v5018, %v5210
        %v5212 = vpop.f32.mrb[0].mxu0
        %v5213 = vadd.f32 %v5020, %v5212
        %v5214 = vpop.f32.mrb[0].mxu0
        %v5215 = vadd.f32 %v5022, %v5214
        %v5216 = vpop.f32.mrb[0].mxu0
        %v5217 = vadd.f32 %v5024, %v5216
        %5218 = vmatprep.mubr.bf16.mxu0 %v2890
        %5219 = vmatmul.mubr.bf16.gmra.mrb[0].mxu0 %v2889
        %v5220 = vpop.f32.mrb[0].mxu0
        %v5221 = vadd.f32 %v5028, %v5220
        %v5222 = vpop.f32.mrb[0].mxu0
        %v5223 = vadd.f32 %v5030, %v5222
        %v5224 = vpop.f32.mrb[0].mxu0
        %v5225 = vadd.f32 %v5032, %v5224
        %v5226 = vpop.f32.mrb[0].mxu0
        %v5227 = vadd.f32 %v5034, %v5226
        %5228 = vmatprep.mubr.bf16.mxu0 %v2894
        %5229 = vmatmul.mubr.bf16.gmra.mrb[0].mxu0 %v2893
        %v5230 = vpop.f32.mrb[0].mxu0
        %v5231 = vadd.f32 %v5038, %v5230
        %v5232 = vpop.f32.mrb[0].mxu0
        %v5233 = vadd.f32 %v5040, %v5232
        %v5234 = vpop.f32.mrb[0].mxu0
        %v5235 = vadd.f32 %v5042, %v5234
        %v5236 = vpop.f32.mrb[0].mxu0
        %v5237 = vadd.f32 %v5044, %v5236
        %5238 = vmatprep.mubr.bf16.mxu0 %v2898
        %5239 = vmatmul.mubr.bf16.gmra.mrb[0].mxu0 %v2897
        %v5240 = vpop.f32.mrb[0].mxu0
        %v5241 = vadd.f32 %v5048, %v5240
        %v5242 = vpop.f32.mrb[0].mxu0
        %v5243 = vadd.f32 %v5050, %v5242
        %v5244 = vpop.f32.mrb[0].mxu0
        %v5245 = vadd.f32 %v5052, %v5244
        %v5246 = vpop.f32.mrb[0].mxu0
        %v5247 = vadd.f32 %v5054, %v5246
        %5248 = vdwg.mxu0
        %5249 = vmatprep.subr.bf16.mxu0 %v3970
        %5250 = vmatpush1.bf16.msra.mxu0 %v3969
        %5251 = vmatprep.subr.bf16.mxu0 %v3978
        %5252 = vmatpush1.bf16.msra.mxu0 %v3977
        %5253 = vmatprep.subr.bf16.mxu0 %v3986
        %5254 = vmatpush1.bf16.msra.mxu0 %v3985
        %5255 = vmatprep.subr.bf16.mxu0 %v3994
        %5256 = vmatpush1.bf16.msra.mxu0 %v3993
        %5257 = vmatprep.subr.bf16.mxu0 %v4002
        %5258 = vmatpush1.bf16.msra.mxu0 %v4001
        %5259 = vmatprep.subr.bf16.mxu0 %v4010
        %5260 = vmatpush1.bf16.msra.mxu0 %v4009
        %5261 = vmatprep.subr.bf16.mxu0 %v4018
        %5262 = vmatpush1.bf16.msra.mxu0 %v4017
        %5263 = vmatprep.subr.bf16.mxu0 %v4026
        %5264 = vmatpush1.bf16.msra.mxu0 %v4025
        %5265 = vmatprep.subr.bf16.mxu0 %v4034
        %5266 = vmatpush1.bf16.msra.mxu0 %v4033
        %5267 = vmatprep.subr.bf16.mxu0 %v4042
        %5268 = vmatpush1.bf16.msra.mxu0 %v4041
        %5269 = vmatprep.subr.bf16.mxu0 %v4050
        %5270 = vmatpush1.bf16.msra.mxu0 %v4049
        %5271 = vmatprep.subr.bf16.mxu0 %v4058
        %5272 = vmatpush1.bf16.msra.mxu0 %v4057
        %5273 = vmatprep.subr.bf16.mxu0 %v4066
        %5274 = vmatpush1.bf16.msra.mxu0 %v4065
        %5275 = vmatprep.subr.bf16.mxu0 %v4074
        %5276 = vmatpush1.bf16.msra.mxu0 %v4073
        %5277 = vmatprep.subr.bf16.mxu0 %v4082
        %5278 = vmatpush1.bf16.msra.mxu0 %v4081
        %5279 = vmatprep.subr.bf16.mxu0 %v4090
        %5280 = vmatpush1.bf16.msra.mxu0 %v4089
        %5281 = vmatprep.mubr.bf16.mxu0 %v2836
        %5282 = vmatmul.mubr.bf16.gmra.mrb[0].mxu0 %v2835
        %v5283 = vpop.f32.mrb[0].mxu0
        %v5284 = vadd.f32 %v3176, %v5283
        %v5285 = vpop.f32.mrb[0].mxu0
        %v5286 = vadd.f32 %v3180, %v5285
        %v5287 = vpop.f32.mrb[0].mxu0
        %v5288 = vadd.f32 %v3176, %v5287
        %v5289 = vpop.f32.mrb[0].mxu0
        %v5290 = vadd.f32 %v3180, %v5289
        %5291 = vmatprep.mubr.bf16.mxu0 %v2840
        %5292 = vmatmul.mubr.bf16.gmra.mrb[0].mxu0 %v2839
        %v5293 = vpop.f32.mrb[0].mxu0
        %v5294 = vadd.f32 %v3176, %v5293
        %v5295 = vpop.f32.mrb[0].mxu0
        %v5296 = vadd.f32 %v3180, %v5295
        %v5297 = vpop.f32.mrb[0].mxu0
        %v5298 = vadd.f32 %v3176, %v5297
        %v5299 = vpop.f32.mrb[0].mxu0
        %v5300 = vadd.f32 %v3180, %v5299
        %5301 = vmatprep.mubr.bf16.mxu0 %v2844
        %5302 = vmatmul.mubr.bf16.gmra.mrb[0].mxu0 %v2843
        %v5303 = vpop.f32.mrb[0].mxu0
        %v5304 = vadd.f32 %v3176, %v5303
        %v5305 = vpop.f32.mrb[0].mxu0
        %v5306 = vadd.f32 %v3180, %v5305
        %v5307 = vpop.f32.mrb[0].mxu0
        %v5308 = vadd.f32 %v3176, %v5307
        %v5309 = vpop.f32.mrb[0].mxu0
        %v5310 = vadd.f32 %v3180, %v5309
        %5311 = vmatprep.mubr.bf16.mxu0 %v2848
        %5312 = vmatmul.mubr.bf16.gmra.mrb[0].mxu0 %v2847
        %v5313 = vpop.f32.mrb[0].mxu0
        %v5314 = vadd.f32 %v3176, %v5313
        %v5315 = vpop.f32.mrb[0].mxu0
        %v5316 = vadd.f32 %v3180, %v5315
        %v5317 = vpop.f32.mrb[0].mxu0
        %v5318 = vadd.f32 %v3176, %v5317
        %v5319 = vpop.f32.mrb[0].mxu0
        %v5320 = vadd.f32 %v3180, %v5319
        %5321 = vmatprep.mubr.bf16.mxu0 %v2852
        %5322 = vmatmul.mubr.bf16.gmra.mrb[0].mxu0 %v2851
        %v5323 = vpop.f32.mrb[0].mxu0
        %v5324 = vadd.f32 %v3176, %v5323
        %v5325 = vpop.f32.mrb[0].mxu0
        %v5326 = vadd.f32 %v3180, %v5325
        %v5327 = vpop.f32.mrb[0].mxu0
        %v5328 = vadd.f32 %v3176, %v5327
        %v5329 = vpop.f32.mrb[0].mxu0
        %v5330 = vadd.f32 %v3180, %v5329
        %5331 = vmatprep.mubr.bf16.mxu0 %v2856
        %5332 = vmatmul.mubr.bf16.gmra.mrb[0].mxu0 %v2855
        %v5333 = vpop.f32.mrb[0].mxu0
        %v5334 = vadd.f32 %v3176, %v5333
        %v5335 = vpop.f32.mrb[0].mxu0
        %v5336 = vadd.f32 %v3180, %v5335
        %v5337 = vpop.f32.mrb[0].mxu0
        %v5338 = vadd.f32 %v3176, %v5337
        %v5339 = vpop.f32.mrb[0].mxu0
        %v5340 = vadd.f32 %v3180, %v5339
        %5341 = vmatprep.mubr.bf16.mxu0 %v2860
        %5342 = vmatmul.mubr.bf16.gmra.mrb[0].mxu0 %v2859
        %v5343 = vpop.f32.mrb[0].mxu0
        %v5344 = vadd.f32 %v3176, %v5343
        %v5345 = vpop.f32.mrb[0].mxu0
        %v5346 = vadd.f32 %v3180, %v5345
        %v5347 = vpop.f32.mrb[0].mxu0
        %v5348 = vadd.f32 %v3176, %v5347
        %v5349 = vpop.f32.mrb[0].mxu0
        %v5350 = vadd.f32 %v3180, %v5349
        %5351 = vmatprep.mubr.bf16.mxu0 %v2864
        %5352 = vmatmul.mubr.bf16.gmra.mrb[0].mxu0 %v2863
        %v5353 = vpop.f32.mrb[0].mxu0
        %v5354 = vadd.f32 %v3176, %v5353
        %v5355 = vpop.f32.mrb[0].mxu0
        %v5356 = vadd.f32 %v3180, %v5355
        %v5357 = vpop.f32.mrb[0].mxu0
        %v5358 = vadd.f32 %v3176, %v5357
        %v5359 = vpop.f32.mrb[0].mxu0
        %v5360 = vadd.f32 %v3180, %v5359
        %5361 = vmatprep.mubr.bf16.mxu0 %v2868
        %5362 = vmatmul.mubr.bf16.gmra.mrb[0].mxu0 %v2867
        %v5363 = vpop.f32.mrb[0].mxu0
        %v5364 = vadd.f32 %v3176, %v5363
        %v5365 = vpop.f32.mrb[0].mxu0
        %v5366 = vadd.f32 %v3180, %v5365
        %v5367 = vpop.f32.mrb[0].mxu0
        %v5368 = vadd.f32 %v3176, %v5367
        %v5369 = vpop.f32.mrb[0].mxu0
        %v5370 = vadd.f32 %v3180, %v5369
        %5371 = vmatprep.mubr.bf16.mxu0 %v2872
        %5372 = vmatmul.mubr.bf16.gmra.mrb[0].mxu0 %v2871
        %v5373 = vpop.f32.mrb[0].mxu0
        %v5374 = vadd.f32 %v3176, %v5373
        %v5375 = vpop.f32.mrb[0].mxu0
        %v5376 = vadd.f32 %v3180, %v5375
        %v5377 = vpop.f32.mrb[0].mxu0
        %v5378 = vadd.f32 %v3176, %v5377
        %v5379 = vpop.f32.mrb[0].mxu0
        %v5380 = vadd.f32 %v3180, %v5379
        %5381 = vmatprep.mubr.bf16.mxu0 %v2876
        %5382 = vmatmul.mubr.bf16.gmra.mrb[0].mxu0 %v2875
        %v5383 = vpop.f32.mrb[0].mxu0
        %v5384 = vadd.f32 %v3176, %v5383
        %v5385 = vpop.f32.mrb[0].mxu0
        %v5386 = vadd.f32 %v3180, %v5385
        %v5387 = vpop.f32.mrb[0].mxu0
        %v5388 = vadd.f32 %v3176, %v5387
        %v5389 = vpop.f32.mrb[0].mxu0
        %v5390 = vadd.f32 %v3180, %v5389
        %5391 = vmatprep.mubr.bf16.mxu0 %v2880
        %5392 = vmatmul.mubr.bf16.gmra.mrb[0].mxu0 %v2879
        %v5393 = vpop.f32.mrb[0].mxu0
        %v5394 = vadd.f32 %v3176, %v5393
        %v5395 = vpop.f32.mrb[0].mxu0
        %v5396 = vadd.f32 %v3180, %v5395
        %v5397 = vpop.f32.mrb[0].mxu0
        %v5398 = vadd.f32 %v3176, %v5397
        %v5399 = vpop.f32.mrb[0].mxu0
        %v5400 = vadd.f32 %v3180, %v5399
        %5401 = vmatprep.mubr.bf16.mxu0 %v2884
        %5402 = vmatmul.mubr.bf16.gmra.mrb[0].mxu0 %v2883
        %v5403 = vpop.f32.mrb[0].mxu0
        %v5404 = vadd.f32 %v3176, %v5403
        %v5405 = vpop.f32.mrb[0].mxu0
        %v5406 = vadd.f32 %v3180, %v5405
        %v5407 = vpop.f32.mrb[0].mxu0
        %v5408 = vadd.f32 %v3176, %v5407
        %v5409 = vpop.f32.mrb[0].mxu0
        %v5410 = vadd.f32 %v3180, %v5409
        %5411 = vmatprep.mubr.bf16.mxu0 %v2888
        %5412 = vmatmul.mubr.bf16.gmra.mrb[0].mxu0 %v2887
        %v5413 = vpop.f32.mrb[0].mxu0
        %v5414 = vadd.f32 %v3176, %v5413
        %v5415 = vpop.f32.mrb[0].mxu0
        %v5416 = vadd.f32 %v3180, %v5415
        %v5417 = vpop.f32.mrb[0].mxu0
        %v5418 = vadd.f32 %v3176, %v5417
        %v5419 = vpop.f32.mrb[0].mxu0
        %v5420 = vadd.f32 %v3180, %v5419
        %5421 = vmatprep.mubr.bf16.mxu0 %v2892
        %5422 = vmatmul.mubr.bf16.gmra.mrb[0].mxu0 %v2891
        %v5423 = vpop.f32.mrb[0].mxu0
        %v5424 = vadd.f32 %v3176, %v5423
        %v5425 = vpop.f32.mrb[0].mxu0
        %v5426 = vadd.f32 %v3180, %v5425
        %v5427 = vpop.f32.mrb[0].mxu0
        %v5428 = vadd.f32 %v3176, %v5427
        %v5429 = vpop.f32.mrb[0].mxu0
        %v5430 = vadd.f32 %v3180, %v5429
        %5431 = vmatprep.mubr.bf16.mxu0 %v2896
        %5432 = vmatmul.mubr.bf16.gmra.mrb[0].mxu0 %v2895
        %v5433 = vpop.f32.mrb[0].mxu0
        %v5434 = vadd.f32 %v3176, %v5433
        %v5435 = vpop.f32.mrb[0].mxu0
        %v5436 = vadd.f32 %v3180, %v5435
        %v5437 = vpop.f32.mrb[0].mxu0
        %v5438 = vadd.f32 %v3176, %v5437
        %v5439 = vpop.f32.mrb[0].mxu0
        %v5440 = vadd.f32 %v3180, %v5439
        %5441 = vdwg.mxu0
        %5442 = vmatprep.subr.bf16.mxu0 %v4098
        %5443 = vmatpush1.bf16.msra.mxu0 %v4097
        %5444 = vmatprep.subr.bf16.mxu0 %v4106
        %5445 = vmatpush1.bf16.msra.mxu0 %v4105
        %5446 = vmatprep.subr.bf16.mxu0 %v4114
        %5447 = vmatpush1.bf16.msra.mxu0 %v4113
        %5448 = vmatprep.subr.bf16.mxu0 %v4122
        %5449 = vmatpush1.bf16.msra.mxu0 %v4121
        %5450 = vmatprep.subr.bf16.mxu0 %v4130
        %5451 = vmatpush1.bf16.msra.mxu0 %v4129
        %5452 = vmatprep.subr.bf16.mxu0 %v4138
        %5453 = vmatpush1.bf16.msra.mxu0 %v4137
        %5454 = vmatprep.subr.bf16.mxu0 %v4146
        %5455 = vmatpush1.bf16.msra.mxu0 %v4145
        %5456 = vmatprep.subr.bf16.mxu0 %v4154
        %5457 = vmatpush1.bf16.msra.mxu0 %v4153
        %5458 = vmatprep.subr.bf16.mxu0 %v4162
        %5459 = vmatpush1.bf16.msra.mxu0 %v4161
        %5460 = vmatprep.subr.bf16.mxu0 %v4170
        %5461 = vmatpush1.bf16.msra.mxu0 %v4169
        %5462 = vmatprep.subr.bf16.mxu0 %v4178
        %5463 = vmatpush1.bf16.msra.mxu0 %v4177
        %5464 = vmatprep.subr.bf16.mxu0 %v4186
        %5465 = vmatpush1.bf16.msra.mxu0 %v4185
        %5466 = vmatprep.subr.bf16.mxu0 %v4194
        %5467 = vmatpush1.bf16.msra.mxu0 %v4193
        %5468 = vmatprep.subr.bf16.mxu0 %v4202
        %5469 = vmatpush1.bf16.msra.mxu0 %v4201
        %5470 = vmatprep.subr.bf16.mxu0 %v4210
        %5471 = vmatpush1.bf16.msra.mxu0 %v4209
        %5472 = vmatprep.subr.bf16.mxu0 %v4218
        %5473 = vmatpush1.bf16.msra.mxu0 %v4217
        %5474 = vmatprep.mubr.bf16.mxu0 %v2838
        %5475 = vmatmul.mubr.bf16.gmra.mrb[0].mxu0 %v2837
        %v5476 = vpop.f32.mrb[0].mxu0
        %v5477 = vadd.f32 %v5284, %v5476
        %v5478 = vpop.f32.mrb[0].mxu0
        %v5479 = vadd.f32 %v5286, %v5478
        %v5480 = vpop.f32.mrb[0].mxu0
        %v5481 = vadd.f32 %v5288, %v5480
        %v5482 = vpop.f32.mrb[0].mxu0
        %v5483 = vadd.f32 %v5290, %v5482
        %5484 = vmatprep.mubr.bf16.mxu0 %v2842
        %5485 = vmatmul.mubr.bf16.gmra.mrb[0].mxu0 %v2841
        %v5486 = vpop.f32.mrb[0].mxu0
        %v5487 = vadd.f32 %v5294, %v5486
        %v5488 = vpop.f32.mrb[0].mxu0
        %v5489 = vadd.f32 %v5296, %v5488
        %v5490 = vpop.f32.mrb[0].mxu0
        %v5491 = vadd.f32 %v5298, %v5490
        %v5492 = vpop.f32.mrb[0].mxu0
        %v5493 = vadd.f32 %v5300, %v5492
        %5494 = vmatprep.mubr.bf16.mxu0 %v2846
        %5495 = vmatmul.mubr.bf16.gmra.mrb[0].mxu0 %v2845
        %v5496 = vpop.f32.mrb[0].mxu0
        %v5497 = vadd.f32 %v5304, %v5496
        %v5498 = vpop.f32.mrb[0].mxu0
        %v5499 = vadd.f32 %v5306, %v5498
        %v5500 = vpop.f32.mrb[0].mxu0
        %v5501 = vadd.f32 %v5308, %v5500
        %v5502 = vpop.f32.mrb[0].mxu0
        %v5503 = vadd.f32 %v5310, %v5502
        %5504 = vmatprep.mubr.bf16.mxu0 %v2850
        %5505 = vmatmul.mubr.bf16.gmra.mrb[0].mxu0 %v2849
        %v5506 = vpop.f32.mrb[0].mxu0
        %v5507 = vadd.f32 %v5314, %v5506
        %v5508 = vpop.f32.mrb[0].mxu0
        %v5509 = vadd.f32 %v5316, %v5508
        %v5510 = vpop.f32.mrb[0].mxu0
        %v5511 = vadd.f32 %v5318, %v5510
        %v5512 = vpop.f32.mrb[0].mxu0
        %v5513 = vadd.f32 %v5320, %v5512
        %5514 = vmatprep.mubr.bf16.mxu0 %v2854
        %5515 = vmatmul.mubr.bf16.gmra.mrb[0].mxu0 %v2853
        %v5516 = vpop.f32.mrb[0].mxu0
        %v5517 = vadd.f32 %v5324, %v5516
        %v5518 = vpop.f32.mrb[0].mxu0
        %v5519 = vadd.f32 %v5326, %v5518
        %v5520 = vpop.f32.mrb[0].mxu0
        %v5521 = vadd.f32 %v5328, %v5520
        %v5522 = vpop.f32.mrb[0].mxu0
        %v5523 = vadd.f32 %v5330, %v5522
        %5524 = vmatprep.mubr.bf16.mxu0 %v2858
        %5525 = vmatmul.mubr.bf16.gmra.mrb[0].mxu0 %v2857
        %v5526 = vpop.f32.mrb[0].mxu0
        %v5527 = vadd.f32 %v5334, %v5526
        %v5528 = vpop.f32.mrb[0].mxu0
        %v5529 = vadd.f32 %v5336, %v5528
        %v5530 = vpop.f32.mrb[0].mxu0
        %v5531 = vadd.f32 %v5338, %v5530
        %v5532 = vpop.f32.mrb[0].mxu0
        %v5533 = vadd.f32 %v5340, %v5532
        %5534 = vmatprep.mubr.bf16.mxu0 %v2862
        %5535 = vmatmul.mubr.bf16.gmra.mrb[0].mxu0 %v2861
        %v5536 = vpop.f32.mrb[0].mxu0
        %v5537 = vadd.f32 %v5344, %v5536
        %v5538 = vpop.f32.mrb[0].mxu0
        %v5539 = vadd.f32 %v5346, %v5538
        %v5540 = vpop.f32.mrb[0].mxu0
        %v5541 = vadd.f32 %v5348, %v5540
        %v5542 = vpop.f32.mrb[0].mxu0
        %v5543 = vadd.f32 %v5350, %v5542
        %5544 = vmatprep.mubr.bf16.mxu0 %v2866
        %5545 = vmatmul.mubr.bf16.gmra.mrb[0].mxu0 %v2865
        %v5546 = vpop.f32.mrb[0].mxu0
        %v5547 = vadd.f32 %v5354, %v5546
        %v5548 = vpop.f32.mrb[0].mxu0
        %v5549 = vadd.f32 %v5356, %v5548
        %v5550 = vpop.f32.mrb[0].mxu0
        %v5551 = vadd.f32 %v5358, %v5550
        %v5552 = vpop.f32.mrb[0].mxu0
        %v5553 = vadd.f32 %v5360, %v5552
        %5554 = vmatprep.mubr.bf16.mxu0 %v2870
        %5555 = vmatmul.mubr.bf16.gmra.mrb[0].mxu0 %v2869
        %v5556 = vpop.f32.mrb[0].mxu0
        %v5557 = vadd.f32 %v5364, %v5556
        %v5558 = vpop.f32.mrb[0].mxu0
        %v5559 = vadd.f32 %v5366, %v5558
        %v5560 = vpop.f32.mrb[0].mxu0
        %v5561 = vadd.f32 %v5368, %v5560
        %v5562 = vpop.f32.mrb[0].mxu0
        %v5563 = vadd.f32 %v5370, %v5562
        %5564 = vmatprep.mubr.bf16.mxu0 %v2874
        %5565 = vmatmul.mubr.bf16.gmra.mrb[0].mxu0 %v2873
        %v5566 = vpop.f32.mrb[0].mxu0
        %v5567 = vadd.f32 %v5374, %v5566
        %v5568 = vpop.f32.mrb[0].mxu0
        %v5569 = vadd.f32 %v5376, %v5568
        %v5570 = vpop.f32.mrb[0].mxu0
        %v5571 = vadd.f32 %v5378, %v5570
        %v5572 = vpop.f32.mrb[0].mxu0
        %v5573 = vadd.f32 %v5380, %v5572
        %5574 = vmatprep.mubr.bf16.mxu0 %v2878
        %5575 = vmatmul.mubr.bf16.gmra.mrb[0].mxu0 %v2877
        %v5576 = vpop.f32.mrb[0].mxu0
        %v5577 = vadd.f32 %v5384, %v5576
        %v5578 = vpop.f32.mrb[0].mxu0
        %v5579 = vadd.f32 %v5386, %v5578
        %v5580 = vpop.f32.mrb[0].mxu0
        %v5581 = vadd.f32 %v5388, %v5580
        %v5582 = vpop.f32.mrb[0].mxu0
        %v5583 = vadd.f32 %v5390, %v5582
        %5584 = vmatprep.mubr.bf16.mxu0 %v2882
        %5585 = vmatmul.mubr.bf16.gmra.mrb[0].mxu0 %v2881
        %v5586 = vpop.f32.mrb[0].mxu0
        %v5587 = vadd.f32 %v5394, %v5586
        %v5588 = vpop.f32.mrb[0].mxu0
        %v5589 = vadd.f32 %v5396, %v5588
        %v5590 = vpop.f32.mrb[0].mxu0
        %v5591 = vadd.f32 %v5398, %v5590
        %v5592 = vpop.f32.mrb[0].mxu0
        %v5593 = vadd.f32 %v5400, %v5592
        %5594 = vmatprep.mubr.bf16.mxu0 %v2886
        %5595 = vmatmul.mubr.bf16.gmra.mrb[0].mxu0 %v2885
        %v5596 = vpop.f32.mrb[0].mxu0
        %v5597 = vadd.f32 %v5404, %v5596
        %v5598 = vpop.f32.mrb[0].mxu0
        %v5599 = vadd.f32 %v5406, %v5598
        %v5600 = vpop.f32.mrb[0].mxu0
        %v5601 = vadd.f32 %v5408, %v5600
        %v5602 = vpop.f32.mrb[0].mxu0
        %v5603 = vadd.f32 %v5410, %v5602
        %5604 = vmatprep.mubr.bf16.mxu0 %v2890
        %5605 = vmatmul.mubr.bf16.gmra.mrb[0].mxu0 %v2889
        %v5606 = vpop.f32.mrb[0].mxu0
        %v5607 = vadd.f32 %v5414, %v5606
        %v5608 = vpop.f32.mrb[0].mxu0
        %v5609 = vadd.f32 %v5416, %v5608
        %v5610 = vpop.f32.mrb[0].mxu0
        %v5611 = vadd.f32 %v5418, %v5610
        %v5612 = vpop.f32.mrb[0].mxu0
        %v5613 = vadd.f32 %v5420, %v5612
        %5614 = vmatprep.mubr.bf16.mxu0 %v2894
        %5615 = vmatmul.mubr.bf16.gmra.mrb[0].mxu0 %v2893
        %v5616 = vpop.f32.mrb[0].mxu0
        %v5617 = vadd.f32 %v5424, %v5616
        %v5618 = vpop.f32.mrb[0].mxu0
        %v5619 = vadd.f32 %v5426, %v5618
        %v5620 = vpop.f32.mrb[0].mxu0
        %v5621 = vadd.f32 %v5428, %v5620
        %v5622 = vpop.f32.mrb[0].mxu0
        %v5623 = vadd.f32 %v5430, %v5622
        %5624 = vmatprep.mubr.bf16.mxu0 %v2898
        %5625 = vmatmul.mubr.bf16.gmra.mrb[0].mxu0 %v2897
        %v5626 = vpop.f32.mrb[0].mxu0
        %v5627 = vadd.f32 %v5434, %v5626
        %v5628 = vpop.f32.mrb[0].mxu0
        %v5629 = vadd.f32 %v5436, %v5628
        %v5630 = vpop.f32.mrb[0].mxu0
        %v5631 = vadd.f32 %v5438, %v5630
        %v5632 = vpop.f32.mrb[0].mxu0
        %v5633 = vadd.f32 %v5440, %v5632
        %5634 = vdwg.mxu0
        %5635 = vmatprep.subr.bf16.mxu0 %v3972
        %5636 = vmatpush1.bf16.msra.mxu0 %v3971
        %5637 = vmatprep.subr.bf16.mxu0 %v3980
        %5638 = vmatpush1.bf16.msra.mxu0 %v3979
        %5639 = vmatprep.subr.bf16.mxu0 %v3988
        %5640 = vmatpush1.bf16.msra.mxu0 %v3987
        %5641 = vmatprep.subr.bf16.mxu0 %v3996
        %5642 = vmatpush1.bf16.msra.mxu0 %v3995
        %5643 = vmatprep.subr.bf16.mxu0 %v4004
        %5644 = vmatpush1.bf16.msra.mxu0 %v4003
        %5645 = vmatprep.subr.bf16.mxu0 %v4012
        %5646 = vmatpush1.bf16.msra.mxu0 %v4011
        %5647 = vmatprep.subr.bf16.mxu0 %v4020
        %5648 = vmatpush1.bf16.msra.mxu0 %v4019
        %5649 = vmatprep.subr.bf16.mxu0 %v4028
        %5650 = vmatpush1.bf16.msra.mxu0 %v4027
        %5651 = vmatprep.subr.bf16.mxu0 %v4036
        %5652 = vmatpush1.bf16.msra.mxu0 %v4035
        %5653 = vmatprep.subr.bf16.mxu0 %v4044
        %5654 = vmatpush1.bf16.msra.mxu0 %v4043
        %5655 = vmatprep.subr.bf16.mxu0 %v4052
        %5656 = vmatpush1.bf16.msra.mxu0 %v4051
        %5657 = vmatprep.subr.bf16.mxu0 %v4060
        %5658 = vmatpush1.bf16.msra.mxu0 %v4059
        %5659 = vmatprep.subr.bf16.mxu0 %v4068
        %5660 = vmatpush1.bf16.msra.mxu0 %v4067
        %5661 = vmatprep.subr.bf16.mxu0 %v4076
        %5662 = vmatpush1.bf16.msra.mxu0 %v4075
        %5663 = vmatprep.subr.bf16.mxu0 %v4084
        %5664 = vmatpush1.bf16.msra.mxu0 %v4083
        %5665 = vmatprep.subr.bf16.mxu0 %v4092
        %5666 = vmatpush1.bf16.msra.mxu0 %v4091
        %5667 = vmatprep.mubr.bf16.mxu0 %v2836
        %5668 = vmatmul.mubr.bf16.gmra.mrb[0].mxu0 %v2835
        %v5669 = vpop.f32.mrb[0].mxu0
        %v5670 = vadd.f32 %v3184, %v5669
        %v5671 = vpop.f32.mrb[0].mxu0
        %v5672 = vadd.f32 %v3188, %v5671
        %v5673 = vpop.f32.mrb[0].mxu0
        %v5674 = vadd.f32 %v3184, %v5673
        %v5675 = vpop.f32.mrb[0].mxu0
        %v5676 = vadd.f32 %v3188, %v5675
        %5677 = vmatprep.mubr.bf16.mxu0 %v2840
        %5678 = vmatmul.mubr.bf16.gmra.mrb[0].mxu0 %v2839
        %v5679 = vpop.f32.mrb[0].mxu0
        %v5680 = vadd.f32 %v3184, %v5679
        %v5681 = vpop.f32.mrb[0].mxu0
        %v5682 = vadd.f32 %v3188, %v5681
        %v5683 = vpop.f32.mrb[0].mxu0
        %v5684 = vadd.f32 %v3184, %v5683
        %v5685 = vpop.f32.mrb[0].mxu0
        %v5686 = vadd.f32 %v3188, %v5685
        %5687 = vmatprep.mubr.bf16.mxu0 %v2844
        %5688 = vmatmul.mubr.bf16.gmra.mrb[0].mxu0 %v2843
        %v5689 = vpop.f32.mrb[0].mxu0
        %v5690 = vadd.f32 %v3184, %v5689
        %v5691 = vpop.f32.mrb[0].mxu0
        %v5692 = vadd.f32 %v3188, %v5691
        %v5693 = vpop.f32.mrb[0].mxu0
        %v5694 = vadd.f32 %v3184, %v5693
        %v5695 = vpop.f32.mrb[0].mxu0
        %v5696 = vadd.f32 %v3188, %v5695
        %5697 = vmatprep.mubr.bf16.mxu0 %v2848
        %5698 = vmatmul.mubr.bf16.gmra.mrb[0].mxu0 %v2847
        %v5699 = vpop.f32.mrb[0].mxu0
        %v5700 = vadd.f32 %v3184, %v5699
        %v5701 = vpop.f32.mrb[0].mxu0
        %v5702 = vadd.f32 %v3188, %v5701
        %v5703 = vpop.f32.mrb[0].mxu0
        %v5704 = vadd.f32 %v3184, %v5703
        %v5705 = vpop.f32.mrb[0].mxu0
        %v5706 = vadd.f32 %v3188, %v5705
        %5707 = vmatprep.mubr.bf16.mxu0 %v2852
        %5708 = vmatmul.mubr.bf16.gmra.mrb[0].mxu0 %v2851
        %v5709 = vpop.f32.mrb[0].mxu0
        %v5710 = vadd.f32 %v3184, %v5709
        %v5711 = vpop.f32.mrb[0].mxu0
        %v5712 = vadd.f32 %v3188, %v5711
        %v5713 = vpop.f32.mrb[0].mxu0
        %v5714 = vadd.f32 %v3184, %v5713
        %v5715 = vpop.f32.mrb[0].mxu0
        %v5716 = vadd.f32 %v3188, %v5715
        %5717 = vmatprep.mubr.bf16.mxu0 %v2856
        %5718 = vmatmul.mubr.bf16.gmra.mrb[0].mxu0 %v2855
        %v5719 = vpop.f32.mrb[0].mxu0
        %v5720 = vadd.f32 %v3184, %v5719
        %v5721 = vpop.f32.mrb[0].mxu0
        %v5722 = vadd.f32 %v3188, %v5721
        %v5723 = vpop.f32.mrb[0].mxu0
        %v5724 = vadd.f32 %v3184, %v5723
        %v5725 = vpop.f32.mrb[0].mxu0
        %v5726 = vadd.f32 %v3188, %v5725
        %5727 = vmatprep.mubr.bf16.mxu0 %v2860
        %5728 = vmatmul.mubr.bf16.gmra.mrb[0].mxu0 %v2859
        %v5729 = vpop.f32.mrb[0].mxu0
        %v5730 = vadd.f32 %v3184, %v5729
        %v5731 = vpop.f32.mrb[0].mxu0
        %v5732 = vadd.f32 %v3188, %v5731
        %v5733 = vpop.f32.mrb[0].mxu0
        %v5734 = vadd.f32 %v3184, %v5733
        %v5735 = vpop.f32.mrb[0].mxu0
        %v5736 = vadd.f32 %v3188, %v5735
        %5737 = vmatprep.mubr.bf16.mxu0 %v2864
        %5738 = vmatmul.mubr.bf16.gmra.mrb[0].mxu0 %v2863
        %v5739 = vpop.f32.mrb[0].mxu0
        %v5740 = vadd.f32 %v3184, %v5739
        %v5741 = vpop.f32.mrb[0].mxu0
        %v5742 = vadd.f32 %v3188, %v5741
        %v5743 = vpop.f32.mrb[0].mxu0
        %v5744 = vadd.f32 %v3184, %v5743
        %v5745 = vpop.f32.mrb[0].mxu0
        %v5746 = vadd.f32 %v3188, %v5745
        %5747 = vmatprep.mubr.bf16.mxu0 %v2868
        %5748 = vmatmul.mubr.bf16.gmra.mrb[0].mxu0 %v2867
        %v5749 = vpop.f32.mrb[0].mxu0
        %v5750 = vadd.f32 %v3184, %v5749
        %v5751 = vpop.f32.mrb[0].mxu0
        %v5752 = vadd.f32 %v3188, %v5751
        %v5753 = vpop.f32.mrb[0].mxu0
        %v5754 = vadd.f32 %v3184, %v5753
        %v5755 = vpop.f32.mrb[0].mxu0
        %v5756 = vadd.f32 %v3188, %v5755
        %5757 = vmatprep.mubr.bf16.mxu0 %v2872
        %5758 = vmatmul.mubr.bf16.gmra.mrb[0].mxu0 %v2871
        %v5759 = vpop.f32.mrb[0].mxu0
        %v5760 = vadd.f32 %v3184, %v5759
        %v5761 = vpop.f32.mrb[0].mxu0
        %v5762 = vadd.f32 %v3188, %v5761
        %v5763 = vpop.f32.mrb[0].mxu0
        %v5764 = vadd.f32 %v3184, %v5763
        %v5765 = vpop.f32.mrb[0].mxu0
        %v5766 = vadd.f32 %v3188, %v5765
        %5767 = vmatprep.mubr.bf16.mxu0 %v2876
        %5768 = vmatmul.mubr.bf16.gmra.mrb[0].mxu0 %v2875
        %v5769 = vpop.f32.mrb[0].mxu0
        %v5770 = vadd.f32 %v3184, %v5769
        %v5771 = vpop.f32.mrb[0].mxu0
        %v5772 = vadd.f32 %v3188, %v5771
        %v5773 = vpop.f32.mrb[0].mxu0
        %v5774 = vadd.f32 %v3184, %v5773
        %v5775 = vpop.f32.mrb[0].mxu0
        %v5776 = vadd.f32 %v3188, %v5775
        %5777 = vmatprep.mubr.bf16.mxu0 %v2880
        %5778 = vmatmul.mubr.bf16.gmra.mrb[0].mxu0 %v2879
        %v5779 = vpop.f32.mrb[0].mxu0
        %v5780 = vadd.f32 %v3184, %v5779
        %v5781 = vpop.f32.mrb[0].mxu0
        %v5782 = vadd.f32 %v3188, %v5781
        %v5783 = vpop.f32.mrb[0].mxu0
        %v5784 = vadd.f32 %v3184, %v5783
        %v5785 = vpop.f32.mrb[0].mxu0
        %v5786 = vadd.f32 %v3188, %v5785
        %5787 = vmatprep.mubr.bf16.mxu0 %v2884
        %5788 = vmatmul.mubr.bf16.gmra.mrb[0].mxu0 %v2883
        %v5789 = vpop.f32.mrb[0].mxu0
        %v5790 = vadd.f32 %v3184, %v5789
        %v5791 = vpop.f32.mrb[0].mxu0
        %v5792 = vadd.f32 %v3188, %v5791
        %v5793 = vpop.f32.mrb[0].mxu0
        %v5794 = vadd.f32 %v3184, %v5793
        %v5795 = vpop.f32.mrb[0].mxu0
        %v5796 = vadd.f32 %v3188, %v5795
        %5797 = vmatprep.mubr.bf16.mxu0 %v2888
        %5798 = vmatmul.mubr.bf16.gmra.mrb[0].mxu0 %v2887
        %v5799 = vpop.f32.mrb[0].mxu0
        %v5800 = vadd.f32 %v3184, %v5799
        %v5801 = vpop.f32.mrb[0].mxu0
        %v5802 = vadd.f32 %v3188, %v5801
        %v5803 = vpop.f32.mrb[0].mxu0
        %v5804 = vadd.f32 %v3184, %v5803
        %v5805 = vpop.f32.mrb[0].mxu0
        %v5806 = vadd.f32 %v3188, %v5805
        %5807 = vmatprep.mubr.bf16.mxu0 %v2892
        %5808 = vmatmul.mubr.bf16.gmra.mrb[0].mxu0 %v2891
        %v5809 = vpop.f32.mrb[0].mxu0
        %v5810 = vadd.f32 %v3184, %v5809
        %v5811 = vpop.f32.mrb[0].mxu0
        %v5812 = vadd.f32 %v3188, %v5811
        %v5813 = vpop.f32.mrb[0].mxu0
        %v5814 = vadd.f32 %v3184, %v5813
        %v5815 = vpop.f32.mrb[0].mxu0
        %v5816 = vadd.f32 %v3188, %v5815
        %5817 = vmatprep.mubr.bf16.mxu0 %v2896
        %5818 = vmatmul.mubr.bf16.gmra.mrb[0].mxu0 %v2895
        %v5819 = vpop.f32.mrb[0].mxu0
        %v5820 = vadd.f32 %v3184, %v5819
        %v5821 = vpop.f32.mrb[0].mxu0
        %v5822 = vadd.f32 %v3188, %v5821
        %v5823 = vpop.f32.mrb[0].mxu0
        %v5824 = vadd.f32 %v3184, %v5823
        %v5825 = vpop.f32.mrb[0].mxu0
        %v5826 = vadd.f32 %v3188, %v5825
        %5827 = vdwg.mxu0
        %5828 = vmatprep.subr.bf16.mxu0 %v4100
        %5829 = vmatpush1.bf16.msra.mxu0 %v4099
        %5830 = vmatprep.subr.bf16.mxu0 %v4108
        %5831 = vmatpush1.bf16.msra.mxu0 %v4107
        %5832 = vmatprep.subr.bf16.mxu0 %v4116
        %5833 = vmatpush1.bf16.msra.mxu0 %v4115
        %5834 = vmatprep.subr.bf16.mxu0 %v4124
        %5835 = vmatpush1.bf16.msra.mxu0 %v4123
        %5836 = vmatprep.subr.bf16.mxu0 %v4132
        %5837 = vmatpush1.bf16.msra.mxu0 %v4131
        %5838 = vmatprep.subr.bf16.mxu0 %v4140
        %5839 = vmatpush1.bf16.msra.mxu0 %v4139
        %5840 = vmatprep.subr.bf16.mxu0 %v4148
        %5841 = vmatpush1.bf16.msra.mxu0 %v4147
        %5842 = vmatprep.subr.bf16.mxu0 %v4156
        %5843 = vmatpush1.bf16.msra.mxu0 %v4155
        %5844 = vmatprep.subr.bf16.mxu0 %v4164
        %5845 = vmatpush1.bf16.msra.mxu0 %v4163
        %5846 = vmatprep.subr.bf16.mxu0 %v4172
        %5847 = vmatpush1.bf16.msra.mxu0 %v4171
        %5848 = vmatprep.subr.bf16.mxu0 %v4180
        %5849 = vmatpush1.bf16.msra.mxu0 %v4179
        %5850 = vmatprep.subr.bf16.mxu0 %v4188
        %5851 = vmatpush1.bf16.msra.mxu0 %v4187
        %5852 = vmatprep.subr.bf16.mxu0 %v4196
        %5853 = vmatpush1.bf16.msra.mxu0 %v4195
        %5854 = vmatprep.subr.bf16.mxu0 %v4204
        %5855 = vmatpush1.bf16.msra.mxu0 %v4203
        %5856 = vmatprep.subr.bf16.mxu0 %v4212
        %5857 = vmatpush1.bf16.msra.mxu0 %v4211
        %5858 = vmatprep.subr.bf16.mxu0 %v4220
        %5859 = vmatpush1.bf16.msra.mxu0 %v4219
        %5860 = vmatprep.mubr.bf16.mxu0 %v2838
        %5861 = vmatmul.mubr.bf16.gmra.mrb[0].mxu0 %v2837
        %v5862 = vpop.f32.mrb[0].mxu0
        %v5863 = vadd.f32 %v5670, %v5862
        %v5864 = vpop.f32.mrb[0].mxu0
        %v5865 = vadd.f32 %v5672, %v5864
        %v5866 = vpop.f32.mrb[0].mxu0
        %v5867 = vadd.f32 %v5674, %v5866
        %v5868 = vpop.f32.mrb[0].mxu0
        %v5869 = vadd.f32 %v5676, %v5868
        %5870 = vmatprep.mubr.bf16.mxu0 %v2842
        %5871 = vmatmul.mubr.bf16.gmra.mrb[0].mxu0 %v2841
        %v5872 = vpop.f32.mrb[0].mxu0
        %v5873 = vadd.f32 %v5680, %v5872
        %v5874 = vpop.f32.mrb[0].mxu0
        %v5875 = vadd.f32 %v5682, %v5874
        %v5876 = vpop.f32.mrb[0].mxu0
        %v5877 = vadd.f32 %v5684, %v5876
        %v5878 = vpop.f32.mrb[0].mxu0
        %v5879 = vadd.f32 %v5686, %v5878
        %5880 = vmatprep.mubr.bf16.mxu0 %v2846
        %5881 = vmatmul.mubr.bf16.gmra.mrb[0].mxu0 %v2845
        %v5882 = vpop.f32.mrb[0].mxu0
        %v5883 = vadd.f32 %v5690, %v5882
        %v5884 = vpop.f32.mrb[0].mxu0
        %v5885 = vadd.f32 %v5692, %v5884
        %v5886 = vpop.f32.mrb[0].mxu0
        %v5887 = vadd.f32 %v5694, %v5886
        %v5888 = vpop.f32.mrb[0].mxu0
        %v5889 = vadd.f32 %v5696, %v5888
        %5890 = vmatprep.mubr.bf16.mxu0 %v2850
        %5891 = vmatmul.mubr.bf16.gmra.mrb[0].mxu0 %v2849
        %v5892 = vpop.f32.mrb[0].mxu0
        %v5893 = vadd.f32 %v5700, %v5892
        %v5894 = vpop.f32.mrb[0].mxu0
        %v5895 = vadd.f32 %v5702, %v5894
        %v5896 = vpop.f32.mrb[0].mxu0
        %v5897 = vadd.f32 %v5704, %v5896
        %v5898 = vpop.f32.mrb[0].mxu0
        %v5899 = vadd.f32 %v5706, %v5898
        %5900 = vmatprep.mubr.bf16.mxu0 %v2854
        %5901 = vmatmul.mubr.bf16.gmra.mrb[0].mxu0 %v2853
        %v5902 = vpop.f32.mrb[0].mxu0
        %v5903 = vadd.f32 %v5710, %v5902
        %v5904 = vpop.f32.mrb[0].mxu0
        %v5905 = vadd.f32 %v5712, %v5904
        %v5906 = vpop.f32.mrb[0].mxu0
        %v5907 = vadd.f32 %v5714, %v5906
        %v5908 = vpop.f32.mrb[0].mxu0
        %v5909 = vadd.f32 %v5716, %v5908
        %5910 = vmatprep.mubr.bf16.mxu0 %v2858
        %5911 = vmatmul.mubr.bf16.gmra.mrb[0].mxu0 %v2857
        %v5912 = vpop.f32.mrb[0].mxu0
        %v5913 = vadd.f32 %v5720, %v5912
        %v5914 = vpop.f32.mrb[0].mxu0
        %v5915 = vadd.f32 %v5722, %v5914
        %v5916 = vpop.f32.mrb[0].mxu0
        %v5917 = vadd.f32 %v5724, %v5916
        %v5918 = vpop.f32.mrb[0].mxu0
        %v5919 = vadd.f32 %v5726, %v5918
        %5920 = vmatprep.mubr.bf16.mxu0 %v2862
        %5921 = vmatmul.mubr.bf16.gmra.mrb[0].mxu0 %v2861
        %v5922 = vpop.f32.mrb[0].mxu0
        %v5923 = vadd.f32 %v5730, %v5922
        %v5924 = vpop.f32.mrb[0].mxu0
        %v5925 = vadd.f32 %v5732, %v5924
        %v5926 = vpop.f32.mrb[0].mxu0
        %v5927 = vadd.f32 %v5734, %v5926
        %v5928 = vpop.f32.mrb[0].mxu0
        %v5929 = vadd.f32 %v5736, %v5928
        %5930 = vmatprep.mubr.bf16.mxu0 %v2866
        %5931 = vmatmul.mubr.bf16.gmra.mrb[0].mxu0 %v2865
        %v5932 = vpop.f32.mrb[0].mxu0
        %v5933 = vadd.f32 %v5740, %v5932
        %v5934 = vpop.f32.mrb[0].mxu0
        %v5935 = vadd.f32 %v5742, %v5934
        %v5936 = vpop.f32.mrb[0].mxu0
        %v5937 = vadd.f32 %v5744, %v5936
        %v5938 = vpop.f32.mrb[0].mxu0
        %v5939 = vadd.f32 %v5746, %v5938
        %5940 = vmatprep.mubr.bf16.mxu0 %v2870
        %5941 = vmatmul.mubr.bf16.gmra.mrb[0].mxu0 %v2869
        %v5942 = vpop.f32.mrb[0].mxu0
        %v5943 = vadd.f32 %v5750, %v5942
        %v5944 = vpop.f32.mrb[0].mxu0
        %v5945 = vadd.f32 %v5752, %v5944
        %v5946 = vpop.f32.mrb[0].mxu0
        %v5947 = vadd.f32 %v5754, %v5946
        %v5948 = vpop.f32.mrb[0].mxu0
        %v5949 = vadd.f32 %v5756, %v5948
        %5950 = vmatprep.mubr.bf16.mxu0 %v2874
        %5951 = vmatmul.mubr.bf16.gmra.mrb[0].mxu0 %v2873
        %v5952 = vpop.f32.mrb[0].mxu0
        %v5953 = vadd.f32 %v5760, %v5952
        %v5954 = vpop.f32.mrb[0].mxu0
        %v5955 = vadd.f32 %v5762, %v5954
        %v5956 = vpop.f32.mrb[0].mxu0
        %v5957 = vadd.f32 %v5764, %v5956
        %v5958 = vpop.f32.mrb[0].mxu0
        %v5959 = vadd.f32 %v5766, %v5958
        %5960 = vmatprep.mubr.bf16.mxu0 %v2878
        %5961 = vmatmul.mubr.bf16.gmra.mrb[0].mxu0 %v2877
        %v5962 = vpop.f32.mrb[0].mxu0
        %v5963 = vadd.f32 %v5770, %v5962
        %v5964 = vpop.f32.mrb[0].mxu0
        %v5965 = vadd.f32 %v5772, %v5964
        %v5966 = vpop.f32.mrb[0].mxu0
        %v5967 = vadd.f32 %v5774, %v5966
        %v5968 = vpop.f32.mrb[0].mxu0
        %v5969 = vadd.f32 %v5776, %v5968
        %5970 = vmatprep.mubr.bf16.mxu0 %v2882
        %5971 = vmatmul.mubr.bf16.gmra.mrb[0].mxu0 %v2881
        %v5972 = vpop.f32.mrb[0].mxu0
        %v5973 = vadd.f32 %v5780, %v5972
        %v5974 = vpop.f32.mrb[0].mxu0
        %v5975 = vadd.f32 %v5782, %v5974
        %v5976 = vpop.f32.mrb[0].mxu0
        %v5977 = vadd.f32 %v5784, %v5976
        %v5978 = vpop.f32.mrb[0].mxu0
        %v5979 = vadd.f32 %v5786, %v5978
        %5980 = vmatprep.mubr.bf16.mxu0 %v2886
        %5981 = vmatmul.mubr.bf16.gmra.mrb[0].mxu0 %v2885
        %v5982 = vpop.f32.mrb[0].mxu0
        %v5983 = vadd.f32 %v5790, %v5982
        %v5984 = vpop.f32.mrb[0].mxu0
        %v5985 = vadd.f32 %v5792, %v5984
        %v5986 = vpop.f32.mrb[0].mxu0
        %v5987 = vadd.f32 %v5794, %v5986
        %v5988 = vpop.f32.mrb[0].mxu0
        %v5989 = vadd.f32 %v5796, %v5988
        %5990 = vmatprep.mubr.bf16.mxu0 %v2890
        %5991 = vmatmul.mubr.bf16.gmra.mrb[0].mxu0 %v2889
        %v5992 = vpop.f32.mrb[0].mxu0
        %v5993 = vadd.f32 %v5800, %v5992
        %v5994 = vpop.f32.mrb[0].mxu0
        %v5995 = vadd.f32 %v5802, %v5994
        %v5996 = vpop.f32.mrb[0].mxu0
        %v5997 = vadd.f32 %v5804, %v5996
        %v5998 = vpop.f32.mrb[0].mxu0
        %v5999 = vadd.f32 %v5806, %v5998
        %6000 = vmatprep.mubr.bf16.mxu0 %v2894
        %6001 = vmatmul.mubr.bf16.gmra.mrb[0].mxu0 %v2893
        %v6002 = vpop.f32.mrb[0].mxu0
        %v6003 = vadd.f32 %v5810, %v6002
        %v6004 = vpop.f32.mrb[0].mxu0
        %v6005 = vadd.f32 %v5812, %v6004
        %v6006 = vpop.f32.mrb[0].mxu0
        %v6007 = vadd.f32 %v5814, %v6006
        %v6008 = vpop.f32.mrb[0].mxu0
        %v6009 = vadd.f32 %v5816, %v6008
        %6010 = vmatprep.mubr.bf16.mxu0 %v2898
        %6011 = vmatmul.mubr.bf16.gmra.mrb[0].mxu0 %v2897
        %v6012 = vpop.f32.mrb[0].mxu0
        %v6013 = vadd.f32 %v5820, %v6012
        %v6014 = vpop.f32.mrb[0].mxu0
        %v6015 = vadd.f32 %v5822, %v6014
        %v6016 = vpop.f32.mrb[0].mxu0
        %v6017 = vadd.f32 %v5824, %v6016
        %v6018 = vpop.f32.mrb[0].mxu0
        %v6019 = vadd.f32 %v5826, %v6018
        %6020 = vdwg.mxu0
        %v6021 = vmax.f32 %v4705, %v4709
        %v6022 = vmax.f32 %v6021, %v4715
        %v6023 = vmax.f32 %v6022, %v4719
        %v6024 = vmax.f32 %v6023, %v4725
        %v6025 = vmax.f32 %v6024, %v4729
        %v6026 = vmax.f32 %v6025, %v4735
        %v6027 = vmax.f32 %v6026, %v4739
        %v6028 = vmax.f32 %v6027, %v4745
        %v6029 = vmax.f32 %v6028, %v4749
        %v6030 = vmax.f32 %v6029, %v4755
        %v6031 = vmax.f32 %v6030, %v4759
        %v6032 = vmax.f32 %v6031, %v4765
        %v6033 = vmax.f32 %v6032, %v4769
        %v6034 = vmax.f32 %v6033, %v4775
        %v6035 = vmax.f32 %v6034, %v4779
        %v6036 = vmax.f32 %v6035, %v4785
        %v6037 = vmax.f32 %v6036, %v4789
        %v6038 = vmax.f32 %v6037, %v4795
        %v6039 = vmax.f32 %v6038, %v4799
        %v6040 = vmax.f32 %v6039, %v4805
        %v6041 = vmax.f32 %v6040, %v4809
        %v6042 = vmax.f32 %v6041, %v4815
        %v6043 = vmax.f32 %v6042, %v4819
        %v6044 = vmax.f32 %v6043, %v4825
        %v6045 = vmax.f32 %v6044, %v4829
        %v6046 = vmax.f32 %v6045, %v4835
        %v6047 = vmax.f32 %v6046, %v4839
        %v6048 = vmax.f32 %v6047, %v4845
        %v6049 = vmax.f32 %v6048, %v4849
        %v6050 = vmax.f32 %v6049, %v4855
        %v6051 = vmax.f32 %v6050, %v4859
        %v6052 = vrot.slane %v6051, 4
        %v6053 = vmax.f32 %v6051, %v6052
        %v6054 = vrot.slane %v6053, 2
        %v6055 = vmax.f32 %v6053, %v6054
        %v6056 = vrot.slane %v6055, 1
        %v6057 = vmax.f32 %v6055, %v6056
        %v6058 = vmax.f32 %v4707, %v4711
        %v6059 = vmax.f32 %v6058, %v4717
        %v6060 = vmax.f32 %v6059, %v4721
        %v6061 = vmax.f32 %v6060, %v4727
        %v6062 = vmax.f32 %v6061, %v4731
        %v6063 = vmax.f32 %v6062, %v4737
        %v6064 = vmax.f32 %v6063, %v4741
        %v6065 = vmax.f32 %v6064, %v4747
        %v6066 = vmax.f32 %v6065, %v4751
        %v6067 = vmax.f32 %v6066, %v4757
        %v6068 = vmax.f32 %v6067, %v4761
        %v6069 = vmax.f32 %v6068, %v4767
        %v6070 = vmax.f32 %v6069, %v4771
        %v6071 = vmax.f32 %v6070, %v4777
        %v6072 = vmax.f32 %v6071, %v4781
        %v6073 = vmax.f32 %v6072, %v4787
        %v6074 = vmax.f32 %v6073, %v4791
        %v6075 = vmax.f32 %v6074, %v4797
        %v6076 = vmax.f32 %v6075, %v4801
        %v6077 = vmax.f32 %v6076, %v4807
        %v6078 = vmax.f32 %v6077, %v4811
        %v6079 = vmax.f32 %v6078, %v4817
        %v6080 = vmax.f32 %v6079, %v4821
        %v6081 = vmax.f32 %v6080, %v4827
        %v6082 = vmax.f32 %v6081, %v4831
        %v6083 = vmax.f32 %v6082, %v4837
        %v6084 = vmax.f32 %v6083, %v4841
        %v6085 = vmax.f32 %v6084, %v4847
        %v6086 = vmax.f32 %v6085, %v4851
        %v6087 = vmax.f32 %v6086, %v4857
        %v6088 = vmax.f32 %v6087, %v4861
        %v6089 = vrot.slane %v6088, 4
        %v6090 = vmax.f32 %v6088, %v6089
        %v6091 = vrot.slane %v6090, 2
        %v6092 = vmax.f32 %v6090, %v6091
        %v6093 = vrot.slane %v6092, 1
        %v6094 = vmax.f32 %v6092, %v6093
        %v6095 = vmax.f32 %v5091, %v5095
        %v6096 = vmax.f32 %v6095, %v5101
        %v6097 = vmax.f32 %v6096, %v5105
        %v6098 = vmax.f32 %v6097, %v5111
        %v6099 = vmax.f32 %v6098, %v5115
        %v6100 = vmax.f32 %v6099, %v5121
        %v6101 = vmax.f32 %v6100, %v5125
        %v6102 = vmax.f32 %v6101, %v5131
        %v6103 = vmax.f32 %v6102, %v5135
        %v6104 = vmax.f32 %v6103, %v5141
        %v6105 = vmax.f32 %v6104, %v5145
        %v6106 = vmax.f32 %v6105, %v5151
        %v6107 = vmax.f32 %v6106, %v5155
        %v6108 = vmax.f32 %v6107, %v5161
        %v6109 = vmax.f32 %v6108, %v5165
        %v6110 = vmax.f32 %v6109, %v5171
        %v6111 = vmax.f32 %v6110, %v5175
        %v6112 = vmax.f32 %v6111, %v5181
        %v6113 = vmax.f32 %v6112, %v5185
        %v6114 = vmax.f32 %v6113, %v5191
        %v6115 = vmax.f32 %v6114, %v5195
        %v6116 = vmax.f32 %v6115, %v5201
        %v6117 = vmax.f32 %v6116, %v5205
        %v6118 = vmax.f32 %v6117, %v5211
        %v6119 = vmax.f32 %v6118, %v5215
        %v6120 = vmax.f32 %v6119, %v5221
        %v6121 = vmax.f32 %v6120, %v5225
        %v6122 = vmax.f32 %v6121, %v5231
        %v6123 = vmax.f32 %v6122, %v5235
        %v6124 = vmax.f32 %v6123, %v5241
        %v6125 = vmax.f32 %v6124, %v5245
        %v6126 = vrot.slane %v6125, 4
        %v6127 = vmax.f32 %v6125, %v6126
        %v6128 = vrot.slane %v6127, 2
        %v6129 = vmax.f32 %v6127, %v6128
        %v6130 = vrot.slane %v6129, 1
        %v6131 = vmax.f32 %v6129, %v6130
        %v6132 = vmax.f32 %v5093, %v5097
        %v6133 = vmax.f32 %v6132, %v5103
        %v6134 = vmax.f32 %v6133, %v5107
        %v6135 = vmax.f32 %v6134, %v5113
        %v6136 = vmax.f32 %v6135, %v5117
        %v6137 = vmax.f32 %v6136, %v5123
        %v6138 = vmax.f32 %v6137, %v5127
        %v6139 = vmax.f32 %v6138, %v5133
        %v6140 = vmax.f32 %v6139, %v5137
        %v6141 = vmax.f32 %v6140, %v5143
        %v6142 = vmax.f32 %v6141, %v5147
        %v6143 = vmax.f32 %v6142, %v5153
        %v6144 = vmax.f32 %v6143, %v5157
        %v6145 = vmax.f32 %v6144, %v5163
        %v6146 = vmax.f32 %v6145, %v5167
        %v6147 = vmax.f32 %v6146, %v5173
        %v6148 = vmax.f32 %v6147, %v5177
        %v6149 = vmax.f32 %v6148, %v5183
        %v6150 = vmax.f32 %v6149, %v5187
        %v6151 = vmax.f32 %v6150, %v5193
        %v6152 = vmax.f32 %v6151, %v5197
        %v6153 = vmax.f32 %v6152, %v5203
        %v6154 = vmax.f32 %v6153, %v5207
        %v6155 = vmax.f32 %v6154, %v5213
        %v6156 = vmax.f32 %v6155, %v5217
        %v6157 = vmax.f32 %v6156, %v5223
        %v6158 = vmax.f32 %v6157, %v5227
        %v6159 = vmax.f32 %v6158, %v5233
        %v6160 = vmax.f32 %v6159, %v5237
        %v6161 = vmax.f32 %v6160, %v5243
        %v6162 = vmax.f32 %v6161, %v5247
        %v6163 = vrot.slane %v6162, 4
        %v6164 = vmax.f32 %v6162, %v6163
        %v6165 = vrot.slane %v6164, 2
        %v6166 = vmax.f32 %v6164, %v6165
        %v6167 = vrot.slane %v6166, 1
        %v6168 = vmax.f32 %v6166, %v6167
        %v6169 = vmax.f32 %v5477, %v5481
        %v6170 = vmax.f32 %v6169, %v5487
        %v6171 = vmax.f32 %v6170, %v5491
        %v6172 = vmax.f32 %v6171, %v5497
        %v6173 = vmax.f32 %v6172, %v5501
        %v6174 = vmax.f32 %v6173, %v5507
        %v6175 = vmax.f32 %v6174, %v5511
        %v6176 = vmax.f32 %v6175, %v5517
        %v6177 = vmax.f32 %v6176, %v5521
        %v6178 = vmax.f32 %v6177, %v5527
        %v6179 = vmax.f32 %v6178, %v5531
        %v6180 = vmax.f32 %v6179, %v5537
        %v6181 = vmax.f32 %v6180, %v5541
        %v6182 = vmax.f32 %v6181, %v5547
        %v6183 = vmax.f32 %v6182, %v5551
        %v6184 = vmax.f32 %v6183, %v5557
        %v6185 = vmax.f32 %v6184, %v5561
        %v6186 = vmax.f32 %v6185, %v5567
        %v6187 = vmax.f32 %v6186, %v5571
        %v6188 = vmax.f32 %v6187, %v5577
        %v6189 = vmax.f32 %v6188, %v5581
        %v6190 = vmax.f32 %v6189, %v5587
        %v6191 = vmax.f32 %v6190, %v5591
        %v6192 = vmax.f32 %v6191, %v5597
        %v6193 = vmax.f32 %v6192, %v5601
        %v6194 = vmax.f32 %v6193, %v5607
        %v6195 = vmax.f32 %v6194, %v5611
        %v6196 = vmax.f32 %v6195, %v5617
        %v6197 = vmax.f32 %v6196, %v5621
        %v6198 = vmax.f32 %v6197, %v5627
        %v6199 = vmax.f32 %v6198, %v5631
        %v6200 = vrot.slane %v6199, 4
        %v6201 = vmax.f32 %v6199, %v6200
        %v6202 = vrot.slane %v6201, 2
        %v6203 = vmax.f32 %v6201, %v6202
        %v6204 = vrot.slane %v6203, 1
        %v6205 = vmax.f32 %v6203, %v6204
        %v6206 = vmax.f32 %v5479, %v5483
        %v6207 = vmax.f32 %v6206, %v5489
        %v6208 = vmax.f32 %v6207, %v5493
        %v6209 = vmax.f32 %v6208, %v5499
        %v6210 = vmax.f32 %v6209, %v5503
        %v6211 = vmax.f32 %v6210, %v5509
        %v6212 = vmax.f32 %v6211, %v5513
        %v6213 = vmax.f32 %v6212, %v5519
        %v6214 = vmax.f32 %v6213, %v5523
        %v6215 = vmax.f32 %v6214, %v5529
        %v6216 = vmax.f32 %v6215, %v5533
        %v6217 = vmax.f32 %v6216, %v5539
        %v6218 = vmax.f32 %v6217, %v5543
        %v6219 = vmax.f32 %v6218, %v5549
        %v6220 = vmax.f32 %v6219, %v5553
        %v6221 = vmax.f32 %v6220, %v5559
        %v6222 = vmax.f32 %v6221, %v5563
        %v6223 = vmax.f32 %v6222, %v5569
        %v6224 = vmax.f32 %v6223, %v5573
        %v6225 = vmax.f32 %v6224, %v5579
        %v6226 = vmax.f32 %v6225, %v5583
        %v6227 = vmax.f32 %v6226, %v5589
        %v6228 = vmax.f32 %v6227, %v5593
        %v6229 = vmax.f32 %v6228, %v5599
        %v6230 = vmax.f32 %v6229, %v5603
        %v6231 = vmax.f32 %v6230, %v5609
        %v6232 = vmax.f32 %v6231, %v5613
        %v6233 = vmax.f32 %v6232, %v5619
        %v6234 = vmax.f32 %v6233, %v5623
        %v6235 = vmax.f32 %v6234, %v5629
        %v6236 = vmax.f32 %v6235, %v5633
        %v6237 = vrot.slane %v6236, 4
        %v6238 = vmax.f32 %v6236, %v6237
        %v6239 = vrot.slane %v6238, 2
        %v6240 = vmax.f32 %v6238, %v6239
        %v6241 = vrot.slane %v6240, 1
        %v6242 = vmax.f32 %v6240, %v6241
        %v6243 = vmax.f32 %v5863, %v5867
        %v6244 = vmax.f32 %v6243, %v5873
        %v6245 = vmax.f32 %v6244, %v5877
        %v6246 = vmax.f32 %v6245, %v5883
        %v6247 = vmax.f32 %v6246, %v5887
        %v6248 = vmax.f32 %v6247, %v5893
        %v6249 = vmax.f32 %v6248, %v5897
        %v6250 = vmax.f32 %v6249, %v5903
        %v6251 = vmax.f32 %v6250, %v5907
        %v6252 = vmax.f32 %v6251, %v5913
        %v6253 = vmax.f32 %v6252, %v5917
        %v6254 = vmax.f32 %v6253, %v5923
        %v6255 = vmax.f32 %v6254, %v5927
        %v6256 = vmax.f32 %v6255, %v5933
        %v6257 = vmax.f32 %v6256, %v5937
        %v6258 = vmax.f32 %v6257, %v5943
        %v6259 = vmax.f32 %v6258, %v5947
        %v6260 = vmax.f32 %v6259, %v5953
        %v6261 = vmax.f32 %v6260, %v5957
        %v6262 = vmax.f32 %v6261, %v5963
        %v6263 = vmax.f32 %v6262, %v5967
        %v6264 = vmax.f32 %v6263, %v5973
        %v6265 = vmax.f32 %v6264, %v5977
        %v6266 = vmax.f32 %v6265, %v5983
        %v6267 = vmax.f32 %v6266, %v5987
        %v6268 = vmax.f32 %v6267, %v5993
        %v6269 = vmax.f32 %v6268, %v5997
        %v6270 = vmax.f32 %v6269, %v6003
        %v6271 = vmax.f32 %v6270, %v6007
        %v6272 = vmax.f32 %v6271, %v6013
        %v6273 = vmax.f32 %v6272, %v6017
        %v6274 = vrot.slane %v6273, 4
        %v6275 = vmax.f32 %v6273, %v6274
        %v6276 = vrot.slane %v6275, 2
        %v6277 = vmax.f32 %v6275, %v6276
        %v6278 = vrot.slane %v6277, 1
        %v6279 = vmax.f32 %v6277, %v6278
        %v6280 = vmax.f32 %v5865, %v5869
        %v6281 = vmax.f32 %v6280, %v5875
        %v6282 = vmax.f32 %v6281, %v5879
        %v6283 = vmax.f32 %v6282, %v5885
        %v6284 = vmax.f32 %v6283, %v5889
        %v6285 = vmax.f32 %v6284, %v5895
        %v6286 = vmax.f32 %v6285, %v5899
        %v6287 = vmax.f32 %v6286, %v5905
        %v6288 = vmax.f32 %v6287, %v5909
        %v6289 = vmax.f32 %v6288, %v5915
        %v6290 = vmax.f32 %v6289, %v5919
        %v6291 = vmax.f32 %v6290, %v5925
        %v6292 = vmax.f32 %v6291, %v5929
        %v6293 = vmax.f32 %v6292, %v5935
        %v6294 = vmax.f32 %v6293, %v5939
        %v6295 = vmax.f32 %v6294, %v5945
        %v6296 = vmax.f32 %v6295, %v5949
        %v6297 = vmax.f32 %v6296, %v5955
        %v6298 = vmax.f32 %v6297, %v5959
        %v6299 = vmax.f32 %v6298, %v5965
        %v6300 = vmax.f32 %v6299, %v5969
        %v6301 = vmax.f32 %v6300, %v5975
        %v6302 = vmax.f32 %v6301, %v5979
        %v6303 = vmax.f32 %v6302, %v5985
        %v6304 = vmax.f32 %v6303, %v5989
        %v6305 = vmax.f32 %v6304, %v5995
        %v6306 = vmax.f32 %v6305, %v5999
        %v6307 = vmax.f32 %v6306, %v6005
        %v6308 = vmax.f32 %v6307, %v6009
        %v6309 = vmax.f32 %v6308, %v6015
        %v6310 = vmax.f32 %v6309, %v6019
        %v6311 = vrot.slane %v6310, 4
        %v6312 = vmax.f32 %v6310, %v6311
        %v6313 = vrot.slane %v6312, 2
        %v6314 = vmax.f32 %v6312, %v6313
        %v6315 = vrot.slane %v6314, 1
        %v6316 = vmax.f32 %v6314, %v6315
        // Predicated region
        $region117: #{ugaan_d_forward.3} parent=95 // pred_check
          %p6317 = pneg %p721
        $region118: #{ugaan_d_forward.3} parent=95 // pred_check_branch
          %6319 = sbr.rel (%p6317) target = $region120
        $region119: #{ugaan_d_forward.3} parent=95 // pred_region
          %v6328 = vcombine.low %v6057, %v6094
          %v6329 = vcombine.low %v6131, %v6168
          %v6330 = vcombine.low %v6205, %v6242
          %v6331 = vcombine.low %v6279, %v6316
          %v6333 = vunpack.c.l.s4 1966171168
          %v6334 = vunpack.c.0.s8 %v6333
          %v6335 = vlaneseq
          %v6336 = vshrl.u32 %v6335, 7
          %v6337 = vsub.s32 %v6334, %v6336
          %v6338 = vrot.slane %v6328, %v6337
          %v6340 = vunpack.c.l.s4 1966171168
          %v6341 = vunpack.c.0.s8 %v6340
          %v6342 = vlaneseq
          %v6343 = vshrl.u32 %v6342, 7
          %v6344 = vsub.s32 %v6341, %v6343
          %v6345 = vrot.slane %v6329, %v6344
          %v6347 = vunpack.c.l.s4 1966171168
          %v6348 = vunpack.c.0.s8 %v6347
          %v6349 = vlaneseq
          %v6350 = vshrl.u32 %v6349, 7
          %v6351 = vsub.s32 %v6348, %v6350
          %v6352 = vrot.slane %v6330, %v6351
          %v6354 = vunpack.c.l.s4 1966171168
          %v6355 = vunpack.c.0.s8 %v6354
          %v6356 = vlaneseq
          %v6357 = vshrl.u32 %v6356, 7
          %v6358 = vsub.s32 %v6355, %v6357
          %v6359 = vrot.slane %v6331, %v6358
          %v6360 = vcombine.low %v6338, %v6345
          %v6361 = vcombine.low %v6352, %v6359
          %v6363 = vunpack.c.l.s4 1966171168
          %v6364 = vunpack.c.0.s8 %v6363
          %v6365 = vlaneseq
          %v6366 = vshrl.u32 %v6365, 7
          %v6367 = vsub.s32 %v6364, %v6366
          %v6368 = vrot.slane %v6360, %v6367
          %v6370 = vunpack.c.l.s4 1966171168
          %v6371 = vunpack.c.0.s8 %v6370
          %v6372 = vlaneseq
          %v6373 = vshrl.u32 %v6372, 7
          %v6374 = vsub.s32 %v6371, %v6373
          %v6375 = vrot.slane %v6361, %v6374
          %v6376 = vcombine.low %v6368, %v6375
          %6378 = vst [vmem:[#allocation3] sm:$0xff] %v6376
        $region120: #{ugaan_d_forward.3} parent=95 // pred_fallthru
          _
        %p6379 = scmp.ne.s32.totalorder %s40, 0
        // Predicated region
        $region121: #{ugaan_d_forward.3} parent=95 // pred_check
          %p6380 = pneg %p6379
        $region122: #{ugaan_d_forward.3} parent=95 // pred_check_branch
          %6382 = sbr.rel (%p6380) target = $region124
        $region123: #{ugaan_d_forward.3} parent=95 // pred_region
          %v6383 = vld [vmem:[#allocation3] sm:$0xff]
          %v6392 = vcombine.low %v6057, %v6094
          %v6393 = vcombine.low %v6131, %v6168
          %v6394 = vcombine.low %v6205, %v6242
          %v6395 = vcombine.low %v6279, %v6316
          %v6397 = vunpack.c.l.s4 1966171168
          %v6398 = vunpack.c.0.s8 %v6397
          %v6399 = vlaneseq
          %v6400 = vshrl.u32 %v6399, 7
          %v6401 = vsub.s32 %v6398, %v6400
          %v6402 = vrot.slane %v6392, %v6401
          %v6404 = vunpack.c.l.s4 1966171168
          %v6405 = vunpack.c.0.s8 %v6404
          %v6406 = vlaneseq
          %v6407 = vshrl.u32 %v6406, 7
          %v6408 = vsub.s32 %v6405, %v6407
          %v6409 = vrot.slane %v6393, %v6408
          %v6411 = vunpack.c.l.s4 1966171168
          %v6412 = vunpack.c.0.s8 %v6411
          %v6413 = vlaneseq
          %v6414 = vshrl.u32 %v6413, 7
          %v6415 = vsub.s32 %v6412, %v6414
          %v6416 = vrot.slane %v6394, %v6415
          %v6418 = vunpack.c.l.s4 1966171168
          %v6419 = vunpack.c.0.s8 %v6418
          %v6420 = vlaneseq
          %v6421 = vshrl.u32 %v6420, 7
          %v6422 = vsub.s32 %v6419, %v6421
          %v6423 = vrot.slane %v6395, %v6422
          %v6424 = vcombine.low %v6402, %v6409
          %v6425 = vcombine.low %v6416, %v6423
          %v6427 = vunpack.c.l.s4 1966171168
          %v6428 = vunpack.c.0.s8 %v6427
          %v6429 = vlaneseq
          %v6430 = vshrl.u32 %v6429, 7
          %v6431 = vsub.s32 %v6428, %v6430
          %v6432 = vrot.slane %v6424, %v6431
          %v6434 = vunpack.c.l.s4 1966171168
          %v6435 = vunpack.c.0.s8 %v6434
          %v6436 = vlaneseq
          %v6437 = vshrl.u32 %v6436, 7
          %v6438 = vsub.s32 %v6435, %v6437
          %v6439 = vrot.slane %v6425, %v6438
          %v6440 = vcombine.low %v6432, %v6439
          %v6442 = vmax.f32 %v6383, %v6440
          %6443 = vst [vmem:[#allocation3] sm:$0xff] %v6442
        $region124: #{ugaan_d_forward.3} parent=95 // pred_fallthru
          _
        // Predicated region
        $region125: #{ugaan_d_forward.3} parent=95 // pred_check
          %p6444 = pneg %p721
        $region126: #{ugaan_d_forward.3} parent=95 // pred_check_branch
          %6446 = sbr.rel (%p6444) target = $region128
        $region127: #{ugaan_d_forward.3} parent=95 // pred_region
          %v6447 = vld [vmem:[#allocation3] sm:$0xff]
          %v6449 = vlaneseq
          %v6450 = vshrl.u32 %v6449, 7
          %v6451 = vsub.s32 0, %v6450
          %v6452 = vrot.slane %v6447, %v6451
          %v6453 = vlaneseq
          %v6454 = vshrl.u32 %v6453, 7
          %v6455 = vsub.s32 1, %v6454
          %v6456 = vrot.slane %v6447, %v6455
          %v6457 = vlaneseq
          %v6458 = vshrl.u32 %v6457, 7
          %v6459 = vsub.s32 2, %v6458
          %v6460 = vrot.slane %v6447, %v6459
          %v6461 = vlaneseq
          %v6462 = vshrl.u32 %v6461, 7
          %v6463 = vsub.s32 3, %v6462
          %v6464 = vrot.slane %v6447, %v6463
          %v6465 = vlaneseq
          %v6466 = vshrl.u32 %v6465, 7
          %v6467 = vsub.s32 4, %v6466
          %v6468 = vrot.slane %v6447, %v6467
          %v6469 = vlaneseq
          %v6470 = vshrl.u32 %v6469, 7
          %v6471 = vsub.s32 5, %v6470
          %v6472 = vrot.slane %v6447, %v6471
          %v6473 = vlaneseq
          %v6474 = vshrl.u32 %v6473, 7
          %v6475 = vsub.s32 6, %v6474
          %v6476 = vrot.slane %v6447, %v6475
          %v6477 = vlaneseq
          %v6478 = vshrl.u32 %v6477, 7
          %v6479 = vsub.s32 7, %v6478
          %v6480 = vrot.slane %v6447, %v6479
          %v6489 = vpack.c.bf16 %v6452, %v6452
          %v6490 = vpack.c.bf16 %v6456, %v6456
          %v6491 = vpack.c.bf16 %v6460, %v6460
          %v6492 = vpack.c.bf16 %v6464, %v6464
          %v6493 = vpack.c.bf16 %v6468, %v6468
          %v6494 = vpack.c.bf16 %v6472, %v6472
          %v6495 = vpack.c.bf16 %v6476, %v6476
          %v6496 = vpack.c.bf16 %v6480, %v6480
          %v6497 = vld [vmem:[%s716] sm:$0x3]
          %v6499 = vlaneseq
          %v6500 = vshrl.u32 %v6499, 7
          %v6501 = vsub.s32 0, %v6500
          %v6502 = vrot.slane %v6497, %v6501
          %v6503 = vlaneseq
          %v6504 = vshrl.u32 %v6503, 7
          %v6505 = vsub.s32 1, %v6504
          %v6506 = vrot.slane %v6497, %v6505
          %v6509 = vpack.c.bf16 %v6502, %v6502
          %v6510 = vpack.c.bf16 %v6506, %v6506
          %v6511 = vld [vmem:[%s12] sm:$0xf]
          %v6512 = vld [vmem:[%s12 + $0x4] sm:$0xf]
          %v6513 = vld [vmem:[%s12 + $0x8] sm:$0xf]
          %v6514 = vld [vmem:[%s12 + $0xc] sm:$0xf]
          %v6515 = vld [vmem:[%s12 + $0x10] sm:$0xf]
          %v6516 = vld [vmem:[%s12 + $0x14] sm:$0xf]
          %v6517 = vld [vmem:[%s12 + $0x18] sm:$0xf]
          %v6518 = vld [vmem:[%s12 + $0x1c] sm:$0xf]
          %v6519 = vld [vmem:[%s12 + $0x20] sm:$0xf]
          %v6520 = vld [vmem:[%s12 + $0x24] sm:$0xf]
          %v6521 = vld [vmem:[%s12 + $0x28] sm:$0xf]
          %v6522 = vld [vmem:[%s12 + $0x2c] sm:$0xf]
          %v6523 = vld [vmem:[%s12 + $0x30] sm:$0xf]
          %v6524 = vld [vmem:[%s12 + $0x34] sm:$0xf]
          %v6525 = vld [vmem:[%s12 + $0x38] sm:$0xf]
          %v6526 = vld [vmem:[%s12 + $0x3c] sm:$0xf]
          %v6527 = vld [vmem:[%s12 + $0x40] sm:$0xf]
          %v6528 = vld [vmem:[%s12 + $0x44] sm:$0xf]
          %v6529 = vld [vmem:[%s12 + $0x48] sm:$0xf]
          %v6530 = vld [vmem:[%s12 + $0x4c] sm:$0xf]
          %v6531 = vld [vmem:[%s12 + $0x50] sm:$0xf]
          %v6532 = vld [vmem:[%s12 + $0x54] sm:$0xf]
          %v6533 = vld [vmem:[%s12 + $0x58] sm:$0xf]
          %v6534 = vld [vmem:[%s12 + $0x5c] sm:$0xf]
          %v6535 = vld [vmem:[%s12 + $0x60] sm:$0xf]
          %v6536 = vld [vmem:[%s12 + $0x64] sm:$0xf]
          %v6537 = vld [vmem:[%s12 + $0x68] sm:$0xf]
          %v6538 = vld [vmem:[%s12 + $0x6c] sm:$0xf]
          %v6539 = vld [vmem:[%s12 + $0x70] sm:$0xf]
          %v6540 = vld [vmem:[%s12 + $0x74] sm:$0xf]
          %v6541 = vld [vmem:[%s12 + $0x78] sm:$0xf]
          %v6542 = vld [vmem:[%s12 + $0x7c] sm:$0xf]
          %v6543 = vld [vmem:[%s12 + $0x80] sm:$0xf]
          %v6544 = vld [vmem:[%s12 + $0x84] sm:$0xf]
          %v6545 = vld [vmem:[%s12 + $0x88] sm:$0xf]
          %v6546 = vld [vmem:[%s12 + $0x8c] sm:$0xf]
          %v6547 = vld [vmem:[%s12 + $0x90] sm:$0xf]
          %v6548 = vld [vmem:[%s12 + $0x94] sm:$0xf]
          %v6549 = vld [vmem:[%s12 + $0x98] sm:$0xf]
          %v6550 = vld [vmem:[%s12 + $0x9c] sm:$0xf]
          %v6551 = vld [vmem:[%s12 + $0xa0] sm:$0xf]
          %v6552 = vld [vmem:[%s12 + $0xa4] sm:$0xf]
          %v6553 = vld [vmem:[%s12 + $0xa8] sm:$0xf]
          %v6554 = vld [vmem:[%s12 + $0xac] sm:$0xf]
          %v6555 = vld [vmem:[%s12 + $0xb0] sm:$0xf]
          %v6556 = vld [vmem:[%s12 + $0xb4] sm:$0xf]
          %v6557 = vld [vmem:[%s12 + $0xb8] sm:$0xf]
          %v6558 = vld [vmem:[%s12 + $0xbc] sm:$0xf]
          %v6559 = vld [vmem:[%s12 + $0xc0] sm:$0xf]
          %v6560 = vld [vmem:[%s12 + $0xc4] sm:$0xf]
          %v6561 = vld [vmem:[%s12 + $0xc8] sm:$0xf]
          %v6562 = vld [vmem:[%s12 + $0xcc] sm:$0xf]
          %v6563 = vld [vmem:[%s12 + $0xd0] sm:$0xf]
          %v6564 = vld [vmem:[%s12 + $0xd4] sm:$0xf]
          %v6565 = vld [vmem:[%s12 + $0xd8] sm:$0xf]
          %v6566 = vld [vmem:[%s12 + $0xdc] sm:$0xf]
          %v6567 = vld [vmem:[%s12 + $0xe0] sm:$0xf]
          %v6568 = vld [vmem:[%s12 + $0xe4] sm:$0xf]
          %v6569 = vld [vmem:[%s12 + $0xe8] sm:$0xf]
          %v6570 = vld [vmem:[%s12 + $0xec] sm:$0xf]
          %v6571 = vld [vmem:[%s12 + $0xf0] sm:$0xf]
          %v6572 = vld [vmem:[%s12 + $0xf4] sm:$0xf]
          %v6573 = vld [vmem:[%s12 + $0xf8] sm:$0xf]
          %v6574 = vld [vmem:[%s12 + $0xfc] sm:$0xf]
          %v6575 = vld [vmem:[%s12 + $0x100] sm:$0xf]
          %v6576 = vld [vmem:[%s12 + $0x104] sm:$0xf]
          %v6577 = vld [vmem:[%s12 + $0x108] sm:$0xf]
          %v6578 = vld [vmem:[%s12 + $0x10c] sm:$0xf]
          %v6579 = vld [vmem:[%s12 + $0x110] sm:$0xf]
          %v6580 = vld [vmem:[%s12 + $0x114] sm:$0xf]
          %v6581 = vld [vmem:[%s12 + $0x118] sm:$0xf]
          %v6582 = vld [vmem:[%s12 + $0x11c] sm:$0xf]
          %v6583 = vld [vmem:[%s12 + $0x120] sm:$0xf]
          %v6584 = vld [vmem:[%s12 + $0x124] sm:$0xf]
          %v6585 = vld [vmem:[%s12 + $0x128] sm:$0xf]
          %v6586 = vld [vmem:[%s12 + $0x12c] sm:$0xf]
          %v6587 = vld [vmem:[%s12 + $0x130] sm:$0xf]
          %v6588 = vld [vmem:[%s12 + $0x134] sm:$0xf]
          %v6589 = vld [vmem:[%s12 + $0x138] sm:$0xf]
          %v6590 = vld [vmem:[%s12 + $0x13c] sm:$0xf]
          %v6591 = vld [vmem:[%s12 + $0x140] sm:$0xf]
          %v6592 = vld [vmem:[%s12 + $0x144] sm:$0xf]
          %v6593 = vld [vmem:[%s12 + $0x148] sm:$0xf]
          %v6594 = vld [vmem:[%s12 + $0x14c] sm:$0xf]
          %v6595 = vld [vmem:[%s12 + $0x150] sm:$0xf]
          %v6596 = vld [vmem:[%s12 + $0x154] sm:$0xf]
          %v6597 = vld [vmem:[%s12 + $0x158] sm:$0xf]
          %v6598 = vld [vmem:[%s12 + $0x15c] sm:$0xf]
          %v6599 = vld [vmem:[%s12 + $0x160] sm:$0xf]
          %v6600 = vld [vmem:[%s12 + $0x164] sm:$0xf]
          %v6601 = vld [vmem:[%s12 + $0x168] sm:$0xf]
          %v6602 = vld [vmem:[%s12 + $0x16c] sm:$0xf]
          %v6603 = vld [vmem:[%s12 + $0x170] sm:$0xf]
          %v6604 = vld [vmem:[%s12 + $0x174] sm:$0xf]
          %v6605 = vld [vmem:[%s12 + $0x178] sm:$0xf]
          %v6606 = vld [vmem:[%s12 + $0x17c] sm:$0xf]
          %v6607 = vld [vmem:[%s12 + $0x180] sm:$0xf]
          %v6608 = vld [vmem:[%s12 + $0x184] sm:$0xf]
          %v6609 = vld [vmem:[%s12 + $0x188] sm:$0xf]
          %v6610 = vld [vmem:[%s12 + $0x18c] sm:$0xf]
          %v6611 = vld [vmem:[%s12 + $0x190] sm:$0xf]
          %v6612 = vld [vmem:[%s12 + $0x194] sm:$0xf]
          %v6613 = vld [vmem:[%s12 + $0x198] sm:$0xf]
          %v6614 = vld [vmem:[%s12 + $0x19c] sm:$0xf]
          %v6615 = vld [vmem:[%s12 + $0x1a0] sm:$0xf]
          %v6616 = vld [vmem:[%s12 + $0x1a4] sm:$0xf]
          %v6617 = vld [vmem:[%s12 + $0x1a8] sm:$0xf]
          %v6618 = vld [vmem:[%s12 + $0x1ac] sm:$0xf]
          %v6619 = vld [vmem:[%s12 + $0x1b0] sm:$0xf]
          %v6620 = vld [vmem:[%s12 + $0x1b4] sm:$0xf]
          %v6621 = vld [vmem:[%s12 + $0x1b8] sm:$0xf]
          %v6622 = vld [vmem:[%s12 + $0x1bc] sm:$0xf]
          %v6623 = vld [vmem:[%s12 + $0x1c0] sm:$0xf]
          %v6624 = vld [vmem:[%s12 + $0x1c4] sm:$0xf]
          %v6625 = vld [vmem:[%s12 + $0x1c8] sm:$0xf]
          %v6626 = vld [vmem:[%s12 + $0x1cc] sm:$0xf]
          %v6627 = vld [vmem:[%s12 + $0x1d0] sm:$0xf]
          %v6628 = vld [vmem:[%s12 + $0x1d4] sm:$0xf]
          %v6629 = vld [vmem:[%s12 + $0x1d8] sm:$0xf]
          %v6630 = vld [vmem:[%s12 + $0x1dc] sm:$0xf]
          %v6631 = vld [vmem:[%s12 + $0x1e0] sm:$0xf]
          %v6632 = vld [vmem:[%s12 + $0x1e4] sm:$0xf]
          %v6633 = vld [vmem:[%s12 + $0x1e8] sm:$0xf]
          %v6634 = vld [vmem:[%s12 + $0x1ec] sm:$0xf]
          %v6635 = vld [vmem:[%s12 + $0x1f0] sm:$0xf]
          %v6636 = vld [vmem:[%s12 + $0x1f4] sm:$0xf]
          %v6637 = vld [vmem:[%s12 + $0x1f8] sm:$0xf]
          %v6638 = vld [vmem:[%s12 + $0x1fc] sm:$0xf]
          %v6639 = vld [vmem:[%s13] sm:$0xf]
          %v6640 = vld [vmem:[%s13 + $0x4] sm:$0xf]
          %v6641 = vld [vmem:[%s13 + $0x8] sm:$0xf]
          %v6642 = vld [vmem:[%s13 + $0xc] sm:$0xf]
          %v6643 = vld [vmem:[%s13 + $0x10] sm:$0xf]
          %v6644 = vld [vmem:[%s13 + $0x14] sm:$0xf]
          %v6645 = vld [vmem:[%s13 + $0x18] sm:$0xf]
          %v6646 = vld [vmem:[%s13 + $0x1c] sm:$0xf]
          %v6647 = vld [vmem:[%s13 + $0x20] sm:$0xf]
          %v6648 = vld [vmem:[%s13 + $0x24] sm:$0xf]
          %v6649 = vld [vmem:[%s13 + $0x28] sm:$0xf]
          %v6650 = vld [vmem:[%s13 + $0x2c] sm:$0xf]
          %v6651 = vld [vmem:[%s13 + $0x30] sm:$0xf]
          %v6652 = vld [vmem:[%s13 + $0x34] sm:$0xf]
          %v6653 = vld [vmem:[%s13 + $0x38] sm:$0xf]
          %v6654 = vld [vmem:[%s13 + $0x3c] sm:$0xf]
          %v6655 = vld [vmem:[%s13 + $0x40] sm:$0xf]
          %v6656 = vld [vmem:[%s13 + $0x44] sm:$0xf]
          %v6657 = vld [vmem:[%s13 + $0x48] sm:$0xf]
          %v6658 = vld [vmem:[%s13 + $0x4c] sm:$0xf]
          %v6659 = vld [vmem:[%s13 + $0x50] sm:$0xf]
          %v6660 = vld [vmem:[%s13 + $0x54] sm:$0xf]
          %v6661 = vld [vmem:[%s13 + $0x58] sm:$0xf]
          %v6662 = vld [vmem:[%s13 + $0x5c] sm:$0xf]
          %v6663 = vld [vmem:[%s13 + $0x60] sm:$0xf]
          %v6664 = vld [vmem:[%s13 + $0x64] sm:$0xf]
          %v6665 = vld [vmem:[%s13 + $0x68] sm:$0xf]
          %v6666 = vld [vmem:[%s13 + $0x6c] sm:$0xf]
          %v6667 = vld [vmem:[%s13 + $0x70] sm:$0xf]
          %v6668 = vld [vmem:[%s13 + $0x74] sm:$0xf]
          %v6669 = vld [vmem:[%s13 + $0x78] sm:$0xf]
          %v6670 = vld [vmem:[%s13 + $0x7c] sm:$0xf]
          %v6703 = vunpack.c.l.b16 %v6639
          %v6704 = vunpack.c.l.b16 %v6640
          %v6705 = vunpack.c.l.b16 %v6641
          %v6706 = vunpack.c.l.b16 %v6642
          %v6707 = vunpack.c.l.b16 %v6643
          %v6708 = vunpack.c.l.b16 %v6644
          %v6709 = vunpack.c.l.b16 %v6645
          %v6710 = vunpack.c.l.b16 %v6646
          %v6711 = vunpack.c.l.b16 %v6647
          %v6712 = vunpack.c.l.b16 %v6648
          %v6713 = vunpack.c.l.b16 %v6649
          %v6714 = vunpack.c.l.b16 %v6650
          %v6715 = vunpack.c.l.b16 %v6651
          %v6716 = vunpack.c.l.b16 %v6652
          %v6717 = vunpack.c.l.b16 %v6653
          %v6718 = vunpack.c.l.b16 %v6654
          %v6719 = vunpack.c.l.b16 %v6655
          %v6720 = vunpack.c.l.b16 %v6656
          %v6721 = vunpack.c.l.b16 %v6657
          %v6722 = vunpack.c.l.b16 %v6658
          %v6723 = vunpack.c.l.b16 %v6659
          %v6724 = vunpack.c.l.b16 %v6660
          %v6725 = vunpack.c.l.b16 %v6661
          %v6726 = vunpack.c.l.b16 %v6662
          %v6727 = vunpack.c.l.b16 %v6663
          %v6728 = vunpack.c.l.b16 %v6664
          %v6729 = vunpack.c.l.b16 %v6665
          %v6730 = vunpack.c.l.b16 %v6666
          %v6731 = vunpack.c.l.b16 %v6667
          %v6732 = vunpack.c.l.b16 %v6668
          %v6733 = vunpack.c.l.b16 %v6669
          %v6734 = vunpack.c.l.b16 %v6670
          %v6735 = vpack.c.b16 %v6704, %v6703
          %v6736 = vpack.c.b16 %v6706, %v6705
          %v6737 = vpack.c.b16 %v6708, %v6707
          %v6738 = vpack.c.b16 %v6710, %v6709
          %v6739 = vpack.c.b16 %v6712, %v6711
          %v6740 = vpack.c.b16 %v6714, %v6713
          %v6741 = vpack.c.b16 %v6716, %v6715
          %v6742 = vpack.c.b16 %v6718, %v6717
          %v6743 = vpack.c.b16 %v6720, %v6719
          %v6744 = vpack.c.b16 %v6722, %v6721
          %v6745 = vpack.c.b16 %v6724, %v6723
          %v6746 = vpack.c.b16 %v6726, %v6725
          %v6747 = vpack.c.b16 %v6728, %v6727
          %v6748 = vpack.c.b16 %v6730, %v6729
          %v6749 = vpack.c.b16 %v6732, %v6731
          %v6750 = vpack.c.b16 %v6734, %v6733
          %6767 = vmatprep.subr.bf16.mxu0 0
          %6768 = vmatpush1.bf16.msra.mxu0 %v6735
          %6769 = vmatprep.subr.bf16.mxu0 0
          %6770 = vmatpush1.bf16.msra.mxu0 %v6736
          %6771 = vmatprep.subr.bf16.mxu0 0
          %6772 = vmatpush1.bf16.msra.mxu0 %v6737
          %6773 = vmatprep.subr.bf16.mxu0 0
          %6774 = vmatpush1.bf16.msra.mxu0 %v6738
          %6775 = vmatprep.subr.bf16.mxu0 0
          %6776 = vmatpush1.bf16.msra.mxu0 %v6739
          %6777 = vmatprep.subr.bf16.mxu0 0
          %6778 = vmatpush1.bf16.msra.mxu0 %v6740
          %6779 = vmatprep.subr.bf16.mxu0 0
          %6780 = vmatpush1.bf16.msra.mxu0 %v6741
          %6781 = vmatprep.subr.bf16.mxu0 0
          %6782 = vmatpush1.bf16.msra.mxu0 %v6742
          %6783 = vmatprep.subr.bf16.mxu0 0
          %6784 = vmatpush1.bf16.msra.mxu0 %v6743
          %6785 = vmatprep.subr.bf16.mxu0 0
          %6786 = vmatpush1.bf16.msra.mxu0 %v6744
          %6787 = vmatprep.subr.bf16.mxu0 0
          %6788 = vmatpush1.bf16.msra.mxu0 %v6745
          %6789 = vmatprep.subr.bf16.mxu0 0
          %6790 = vmatpush1.bf16.msra.mxu0 %v6746
          %6791 = vmatprep.subr.bf16.mxu0 0
          %6792 = vmatpush1.bf16.msra.mxu0 %v6747
          %6793 = vmatprep.subr.bf16.mxu0 0
          %6794 = vmatpush1.bf16.msra.mxu0 %v6748
          %6795 = vmatprep.subr.bf16.mxu0 0
          %6796 = vmatpush1.bf16.msra.mxu0 %v6749
          %6797 = vmatprep.subr.bf16.mxu0 0
          %6798 = vmatpush1.bf16.msra.mxu0 %v6750
          %6799 = vmatprep.mubr.bf16.mxu0 %v6510
          %6800 = vmatmul.mubr.bf16.gmra.mrb[0].mxu0 %v6509
          %v6801 = vpop.f32.mrb[0].mxu0
          %v6802 = vadd.f32 0.0, %v6801
          %v6803 = vpop.f32.mrb[0].mxu0
          %v6804 = vpop.f32.mrb[0].mxu0
          %v6805 = vpop.f32.mrb[0].mxu0
          %6806 = vdwg.mxu0
          %v6935 = vunpack.c.l.b16 %v6511
          %v6936 = vunpack.c.l.b16 %v6512
          %v6937 = vunpack.c.l.b16 %v6513
          %v6938 = vunpack.c.l.b16 %v6514
          %v6939 = vunpack.c.l.b16 %v6515
          %v6940 = vunpack.c.l.b16 %v6516
          %v6941 = vunpack.c.l.b16 %v6517
          %v6942 = vunpack.c.l.b16 %v6518
          %v6943 = vunpack.c.l.b16 %v6519
          %v6944 = vunpack.c.l.b16 %v6520
          %v6945 = vunpack.c.l.b16 %v6521
          %v6946 = vunpack.c.l.b16 %v6522
          %v6947 = vunpack.c.l.b16 %v6523
          %v6948 = vunpack.c.l.b16 %v6524
          %v6949 = vunpack.c.l.b16 %v6525
          %v6950 = vunpack.c.l.b16 %v6526
          %v6951 = vunpack.c.l.b16 %v6527
          %v6952 = vunpack.c.l.b16 %v6528
          %v6953 = vunpack.c.l.b16 %v6529
          %v6954 = vunpack.c.l.b16 %v6530
          %v6955 = vunpack.c.l.b16 %v6531
          %v6956 = vunpack.c.l.b16 %v6532
          %v6957 = vunpack.c.l.b16 %v6533
          %v6958 = vunpack.c.l.b16 %v6534
          %v6959 = vunpack.c.l.b16 %v6535
          %v6960 = vunpack.c.l.b16 %v6536
          %v6961 = vunpack.c.l.b16 %v6537
          %v6962 = vunpack.c.l.b16 %v6538
          %v6963 = vunpack.c.l.b16 %v6539
          %v6964 = vunpack.c.l.b16 %v6540
          %v6965 = vunpack.c.l.b16 %v6541
          %v6966 = vunpack.c.l.b16 %v6542
          %v6967 = vunpack.c.l.b16 %v6543
          %v6968 = vunpack.c.l.b16 %v6544
          %v6969 = vunpack.c.l.b16 %v6545
          %v6970 = vunpack.c.l.b16 %v6546
          %v6971 = vunpack.c.l.b16 %v6547
          %v6972 = vunpack.c.l.b16 %v6548
          %v6973 = vunpack.c.l.b16 %v6549
          %v6974 = vunpack.c.l.b16 %v6550
          %v6975 = vunpack.c.l.b16 %v6551
          %v6976 = vunpack.c.l.b16 %v6552
          %v6977 = vunpack.c.l.b16 %v6553
          %v6978 = vunpack.c.l.b16 %v6554
          %v6979 = vunpack.c.l.b16 %v6555
          %v6980 = vunpack.c.l.b16 %v6556
          %v6981 = vunpack.c.l.b16 %v6557
          %v6982 = vunpack.c.l.b16 %v6558
          %v6983 = vunpack.c.l.b16 %v6559
          %v6984 = vunpack.c.l.b16 %v6560
          %v6985 = vunpack.c.l.b16 %v6561
          %v6986 = vunpack.c.l.b16 %v6562
          %v6987 = vunpack.c.l.b16 %v6563
          %v6988 = vunpack.c.l.b16 %v6564
          %v6989 = vunpack.c.l.b16 %v6565
          %v6990 = vunpack.c.l.b16 %v6566
          %v6991 = vunpack.c.l.b16 %v6567
          %v6992 = vunpack.c.l.b16 %v6568
          %v6993 = vunpack.c.l.b16 %v6569
          %v6994 = vunpack.c.l.b16 %v6570
          %v6995 = vunpack.c.l.b16 %v6571
          %v6996 = vunpack.c.l.b16 %v6572
          %v6997 = vunpack.c.l.b16 %v6573
          %v6998 = vunpack.c.l.b16 %v6574
          %v6999 = vunpack.c.l.b16 %v6575
          %v7000 = vunpack.c.l.b16 %v6576
          %v7001 = vunpack.c.l.b16 %v6577
          %v7002 = vunpack.c.l.b16 %v6578
          %v7003 = vunpack.c.l.b16 %v6579
          %v7004 = vunpack.c.l.b16 %v6580
          %v7005 = vunpack.c.l.b16 %v6581
          %v7006 = vunpack.c.l.b16 %v6582
          %v7007 = vunpack.c.l.b16 %v6583
          %v7008 = vunpack.c.l.b16 %v6584
          %v7009 = vunpack.c.l.b16 %v6585
          %v7010 = vunpack.c.l.b16 %v6586
          %v7011 = vunpack.c.l.b16 %v6587
          %v7012 = vunpack.c.l.b16 %v6588
          %v7013 = vunpack.c.l.b16 %v6589
          %v7014 = vunpack.c.l.b16 %v6590
          %v7015 = vunpack.c.l.b16 %v6591
          %v7016 = vunpack.c.l.b16 %v6592
          %v7017 = vunpack.c.l.b16 %v6593
          %v7018 = vunpack.c.l.b16 %v6594
          %v7019 = vunpack.c.l.b16 %v6595
          %v7020 = vunpack.c.l.b16 %v6596
          %v7021 = vunpack.c.l.b16 %v6597
          %v7022 = vunpack.c.l.b16 %v6598
          %v7023 = vunpack.c.l.b16 %v6599
          %v7024 = vunpack.c.l.b16 %v6600
          %v7025 = vunpack.c.l.b16 %v6601
          %v7026 = vunpack.c.l.b16 %v6602
          %v7027 = vunpack.c.l.b16 %v6603
          %v7028 = vunpack.c.l.b16 %v6604
          %v7029 = vunpack.c.l.b16 %v6605
          %v7030 = vunpack.c.l.b16 %v6606
          %v7031 = vunpack.c.l.b16 %v6607
          %v7032 = vunpack.c.l.b16 %v6608
          %v7033 = vunpack.c.l.b16 %v6609
          %v7034 = vunpack.c.l.b16 %v6610
          %v7035 = vunpack.c.l.b16 %v6611
          %v7036 = vunpack.c.l.b16 %v6612
          %v7037 = vunpack.c.l.b16 %v6613
          %v7038 = vunpack.c.l.b16 %v6614
          %v7039 = vunpack.c.l.b16 %v6615
          %v7040 = vunpack.c.l.b16 %v6616
          %v7041 = vunpack.c.l.b16 %v6617
          %v7042 = vunpack.c.l.b16 %v6618
          %v7043 = vunpack.c.l.b16 %v6619
          %v7044 = vunpack.c.l.b16 %v6620
          %v7045 = vunpack.c.l.b16 %v6621
          %v7046 = vunpack.c.l.b16 %v6622
          %v7047 = vunpack.c.l.b16 %v6623
          %v7048 = vunpack.c.l.b16 %v6624
          %v7049 = vunpack.c.l.b16 %v6625
          %v7050 = vunpack.c.l.b16 %v6626
          %v7051 = vunpack.c.l.b16 %v6627
          %v7052 = vunpack.c.l.b16 %v6628
          %v7053 = vunpack.c.l.b16 %v6629
          %v7054 = vunpack.c.l.b16 %v6630
          %v7055 = vunpack.c.l.b16 %v6631
          %v7056 = vunpack.c.l.b16 %v6632
          %v7057 = vunpack.c.l.b16 %v6633
          %v7058 = vunpack.c.l.b16 %v6634
          %v7059 = vunpack.c.l.b16 %v6635
          %v7060 = vunpack.c.l.b16 %v6636
          %v7061 = vunpack.c.l.b16 %v6637
          %v7062 = vunpack.c.l.b16 %v6638
          %v7063 = vpack.c.b16 %v6936, %v6935
          %v7064 = vpack.c.b16 %v6938, %v6937
          %v7065 = vpack.c.b16 %v6940, %v6939
          %v7066 = vpack.c.b16 %v6942, %v6941
          %v7067 = vpack.c.b16 %v6944, %v6943
          %v7068 = vpack.c.b16 %v6946, %v6945
          %v7069 = vpack.c.b16 %v6948, %v6947
          %v7070 = vpack.c.b16 %v6950, %v6949
          %v7071 = vpack.c.b16 %v6952, %v6951
          %v7072 = vpack.c.b16 %v6954, %v6953
          %v7073 = vpack.c.b16 %v6956, %v6955
          %v7074 = vpack.c.b16 %v6958, %v6957
          %v7075 = vpack.c.b16 %v6960, %v6959
          %v7076 = vpack.c.b16 %v6962, %v6961
          %v7077 = vpack.c.b16 %v6964, %v6963
          %v7078 = vpack.c.b16 %v6966, %v6965
          %v7079 = vpack.c.b16 %v6968, %v6967
          %v7080 = vpack.c.b16 %v6970, %v6969
          %v7081 = vpack.c.b16 %v6972, %v6971
          %v7082 = vpack.c.b16 %v6974, %v6973
          %v7083 = vpack.c.b16 %v6976, %v6975
          %v7084 = vpack.c.b16 %v6978, %v6977
          %v7085 = vpack.c.b16 %v6980, %v6979
          %v7086 = vpack.c.b16 %v6982, %v6981
          %v7087 = vpack.c.b16 %v6984, %v6983
          %v7088 = vpack.c.b16 %v6986, %v6985
          %v7089 = vpack.c.b16 %v6988, %v6987
          %v7090 = vpack.c.b16 %v6990, %v6989
          %v7091 = vpack.c.b16 %v6992, %v6991
          %v7092 = vpack.c.b16 %v6994, %v6993
          %v7093 = vpack.c.b16 %v6996, %v6995
          %v7094 = vpack.c.b16 %v6998, %v6997
          %v7095 = vpack.c.b16 %v7000, %v6999
          %v7096 = vpack.c.b16 %v7002, %v7001
          %v7097 = vpack.c.b16 %v7004, %v7003
          %v7098 = vpack.c.b16 %v7006, %v7005
          %v7099 = vpack.c.b16 %v7008, %v7007
          %v7100 = vpack.c.b16 %v7010, %v7009
          %v7101 = vpack.c.b16 %v7012, %v7011
          %v7102 = vpack.c.b16 %v7014, %v7013
          %v7103 = vpack.c.b16 %v7016, %v7015
          %v7104 = vpack.c.b16 %v7018, %v7017
          %v7105 = vpack.c.b16 %v7020, %v7019
          %v7106 = vpack.c.b16 %v7022, %v7021
          %v7107 = vpack.c.b16 %v7024, %v7023
          %v7108 = vpack.c.b16 %v7026, %v7025
          %v7109 = vpack.c.b16 %v7028, %v7027
          %v7110 = vpack.c.b16 %v7030, %v7029
          %v7111 = vpack.c.b16 %v7032, %v7031
          %v7112 = vpack.c.b16 %v7034, %v7033
          %v7113 = vpack.c.b16 %v7036, %v7035
          %v7114 = vpack.c.b16 %v7038, %v7037
          %v7115 = vpack.c.b16 %v7040, %v7039
          %v7116 = vpack.c.b16 %v7042, %v7041
          %v7117 = vpack.c.b16 %v7044, %v7043
          %v7118 = vpack.c.b16 %v7046, %v7045
          %v7119 = vpack.c.b16 %v7048, %v7047
          %v7120 = vpack.c.b16 %v7050, %v7049
          %v7121 = vpack.c.b16 %v7052, %v7051
          %v7122 = vpack.c.b16 %v7054, %v7053
          %v7123 = vpack.c.b16 %v7056, %v7055
          %v7124 = vpack.c.b16 %v7058, %v7057
          %v7125 = vpack.c.b16 %v7060, %v7059
          %v7126 = vpack.c.b16 %v7062, %v7061
          %7191 = vmatprep.subr.bf16.mxu0 0
          %7192 = vmatpush1.bf16.msra.mxu0 %v7063
          %7193 = vmatprep.subr.bf16.mxu0 0
          %7194 = vmatpush1.bf16.msra.mxu0 %v7064
          %7195 = vmatprep.subr.bf16.mxu0 0
          %7196 = vmatpush1.bf16.msra.mxu0 %v7065
          %7197 = vmatprep.subr.bf16.mxu0 0
          %7198 = vmatpush1.bf16.msra.mxu0 %v7066
          %7199 = vmatprep.subr.bf16.mxu0 0
          %7200 = vmatpush1.bf16.msra.mxu0 %v7067
          %7201 = vmatprep.subr.bf16.mxu0 0
          %7202 = vmatpush1.bf16.msra.mxu0 %v7068
          %7203 = vmatprep.subr.bf16.mxu0 0
          %7204 = vmatpush1.bf16.msra.mxu0 %v7069
          %7205 = vmatprep.subr.bf16.mxu0 0
          %7206 = vmatpush1.bf16.msra.mxu0 %v7070
          %7207 = vmatprep.subr.bf16.mxu0 0
          %7208 = vmatpush1.bf16.msra.mxu0 %v7071
          %7209 = vmatprep.subr.bf16.mxu0 0
          %7210 = vmatpush1.bf16.msra.mxu0 %v7072
          %7211 = vmatprep.subr.bf16.mxu0 0
          %7212 = vmatpush1.bf16.msra.mxu0 %v7073
          %7213 = vmatprep.subr.bf16.mxu0 0
          %7214 = vmatpush1.bf16.msra.mxu0 %v7074
          %7215 = vmatprep.subr.bf16.mxu0 0
          %7216 = vmatpush1.bf16.msra.mxu0 %v7075
          %7217 = vmatprep.subr.bf16.mxu0 0
          %7218 = vmatpush1.bf16.msra.mxu0 %v7076
          %7219 = vmatprep.subr.bf16.mxu0 0
          %7220 = vmatpush1.bf16.msra.mxu0 %v7077
          %7221 = vmatprep.subr.bf16.mxu0 0
          %7222 = vmatpush1.bf16.msra.mxu0 %v7078
          %7223 = vmatprep.mubr.bf16.mxu0 %v6490
          %7224 = vmatmul.mubr.bf16.gmra.mrb[0].mxu0 %v6489
          %v7225 = vpop.f32.mrb[0].mxu0
          %v7226 = vadd.f32 %v6802, %v7225
          %v7227 = vpop.f32.mrb[0].mxu0
          %v7228 = vpop.f32.mrb[0].mxu0
          %v7229 = vpop.f32.mrb[0].mxu0
          %7230 = vdwg.mxu0
          %7231 = vmatprep.subr.bf16.mxu0 0
          %7232 = vmatpush1.bf16.msra.mxu0 %v7079
          %7233 = vmatprep.subr.bf16.mxu0 0
          %7234 = vmatpush1.bf16.msra.mxu0 %v7080
          %7235 = vmatprep.subr.bf16.mxu0 0
          %7236 = vmatpush1.bf16.msra.mxu0 %v7081
          %7237 = vmatprep.subr.bf16.mxu0 0
          %7238 = vmatpush1.bf16.msra.mxu0 %v7082
          %7239 = vmatprep.subr.bf16.mxu0 0
          %7240 = vmatpush1.bf16.msra.mxu0 %v7083
          %7241 = vmatprep.subr.bf16.mxu0 0
          %7242 = vmatpush1.bf16.msra.mxu0 %v7084
          %7243 = vmatprep.subr.bf16.mxu0 0
          %7244 = vmatpush1.bf16.msra.mxu0 %v7085
          %7245 = vmatprep.subr.bf16.mxu0 0
          %7246 = vmatpush1.bf16.msra.mxu0 %v7086
          %7247 = vmatprep.subr.bf16.mxu0 0
          %7248 = vmatpush1.bf16.msra.mxu0 %v7087
          %7249 = vmatprep.subr.bf16.mxu0 0
          %7250 = vmatpush1.bf16.msra.mxu0 %v7088
          %7251 = vmatprep.subr.bf16.mxu0 0
          %7252 = vmatpush1.bf16.msra.mxu0 %v7089
          %7253 = vmatprep.subr.bf16.mxu0 0
          %7254 = vmatpush1.bf16.msra.mxu0 %v7090
          %7255 = vmatprep.subr.bf16.mxu0 0
          %7256 = vmatpush1.bf16.msra.mxu0 %v7091
          %7257 = vmatprep.subr.bf16.mxu0 0
          %7258 = vmatpush1.bf16.msra.mxu0 %v7092
          %7259 = vmatprep.subr.bf16.mxu0 0
          %7260 = vmatpush1.bf16.msra.mxu0 %v7093
          %7261 = vmatprep.subr.bf16.mxu0 0
          %7262 = vmatpush1.bf16.msra.mxu0 %v7094
          %7263 = vmatprep.mubr.bf16.mxu0 %v6492
          %7264 = vmatmul.mubr.bf16.gmra.mrb[0].mxu0 %v6491
          %v7265 = vpop.f32.mrb[0].mxu0
          %v7266 = vadd.f32 %v7226, %v7265
          %v7267 = vpop.f32.mrb[0].mxu0
          %v7268 = vpop.f32.mrb[0].mxu0
          %v7269 = vpop.f32.mrb[0].mxu0
          %7270 = vdwg.mxu0
          %7271 = vmatprep.subr.bf16.mxu0 0
          %7272 = vmatpush1.bf16.msra.mxu0 %v7095
          %7273 = vmatprep.subr.bf16.mxu0 0
          %7274 = vmatpush1.bf16.msra.mxu0 %v7096
          %7275 = vmatprep.subr.bf16.mxu0 0
          %7276 = vmatpush1.bf16.msra.mxu0 %v7097
          %7277 = vmatprep.subr.bf16.mxu0 0
          %7278 = vmatpush1.bf16.msra.mxu0 %v7098
          %7279 = vmatprep.subr.bf16.mxu0 0
          %7280 = vmatpush1.bf16.msra.mxu0 %v7099
          %7281 = vmatprep.subr.bf16.mxu0 0
          %7282 = vmatpush1.bf16.msra.mxu0 %v7100
          %7283 = vmatprep.subr.bf16.mxu0 0
          %7284 = vmatpush1.bf16.msra.mxu0 %v7101
          %7285 = vmatprep.subr.bf16.mxu0 0
          %7286 = vmatpush1.bf16.msra.mxu0 %v7102
          %7287 = vmatprep.subr.bf16.mxu0 0
          %7288 = vmatpush1.bf16.msra.mxu0 %v7103
          %7289 = vmatprep.subr.bf16.mxu0 0
          %7290 = vmatpush1.bf16.msra.mxu0 %v7104
          %7291 = vmatprep.subr.bf16.mxu0 0
          %7292 = vmatpush1.bf16.msra.mxu0 %v7105
          %7293 = vmatprep.subr.bf16.mxu0 0
          %7294 = vmatpush1.bf16.msra.mxu0 %v7106
          %7295 = vmatprep.subr.bf16.mxu0 0
          %7296 = vmatpush1.bf16.msra.mxu0 %v7107
          %7297 = vmatprep.subr.bf16.mxu0 0
          %7298 = vmatpush1.bf16.msra.mxu0 %v7108
          %7299 = vmatprep.subr.bf16.mxu0 0
          %7300 = vmatpush1.bf16.msra.mxu0 %v7109
          %7301 = vmatprep.subr.bf16.mxu0 0
          %7302 = vmatpush1.bf16.msra.mxu0 %v7110
          %7303 = vmatprep.mubr.bf16.mxu0 %v6494
          %7304 = vmatmul.mubr.bf16.gmra.mrb[0].mxu0 %v6493
          %v7305 = vpop.f32.mrb[0].mxu0
          %v7306 = vadd.f32 %v7266, %v7305
          %v7307 = vpop.f32.mrb[0].mxu0
          %v7308 = vpop.f32.mrb[0].mxu0
          %v7309 = vpop.f32.mrb[0].mxu0
          %7310 = vdwg.mxu0
          %7311 = vmatprep.subr.bf16.mxu0 0
          %7312 = vmatpush1.bf16.msra.mxu0 %v7111
          %7313 = vmatprep.subr.bf16.mxu0 0
          %7314 = vmatpush1.bf16.msra.mxu0 %v7112
          %7315 = vmatprep.subr.bf16.mxu0 0
          %7316 = vmatpush1.bf16.msra.mxu0 %v7113
          %7317 = vmatprep.subr.bf16.mxu0 0
          %7318 = vmatpush1.bf16.msra.mxu0 %v7114
          %7319 = vmatprep.subr.bf16.mxu0 0
          %7320 = vmatpush1.bf16.msra.mxu0 %v7115
          %7321 = vmatprep.subr.bf16.mxu0 0
          %7322 = vmatpush1.bf16.msra.mxu0 %v7116
          %7323 = vmatprep.subr.bf16.mxu0 0
          %7324 = vmatpush1.bf16.msra.mxu0 %v7117
          %7325 = vmatprep.subr.bf16.mxu0 0
          %7326 = vmatpush1.bf16.msra.mxu0 %v7118
          %7327 = vmatprep.subr.bf16.mxu0 0
          %7328 = vmatpush1.bf16.msra.mxu0 %v7119
          %7329 = vmatprep.subr.bf16.mxu0 0
          %7330 = vmatpush1.bf16.msra.mxu0 %v7120
          %7331 = vmatprep.subr.bf16.mxu0 0
          %7332 = vmatpush1.bf16.msra.mxu0 %v7121
          %7333 = vmatprep.subr.bf16.mxu0 0
          %7334 = vmatpush1.bf16.msra.mxu0 %v7122
          %7335 = vmatprep.subr.bf16.mxu0 0
          %7336 = vmatpush1.bf16.msra.mxu0 %v7123
          %7337 = vmatprep.subr.bf16.mxu0 0
          %7338 = vmatpush1.bf16.msra.mxu0 %v7124
          %7339 = vmatprep.subr.bf16.mxu0 0
          %7340 = vmatpush1.bf16.msra.mxu0 %v7125
          %7341 = vmatprep.subr.bf16.mxu0 0
          %7342 = vmatpush1.bf16.msra.mxu0 %v7126
          %7343 = vmatprep.mubr.bf16.mxu0 %v6496
          %7344 = vmatmul.mubr.bf16.gmra.mrb[0].mxu0 %v6495
          %v7345 = vpop.f32.mrb[0].mxu0
          %v7346 = vadd.f32 %v7306, %v7345
          %v7347 = vpop.f32.mrb[0].mxu0
          %v7348 = vpop.f32.mrb[0].mxu0
          %v7349 = vpop.f32.mrb[0].mxu0
          %7350 = vdwg.mxu0
          %v7351 = vld [vmem:[%s14] sm:$0x1]
          %v7352 = vadd.f32 %v7346, %v7351
          %v7353 = vmax.f32 %v7352, 0.0
          %v7354 = vpack.c.bf16 %v7353, %v7353
          %v7355 = vld [vmem:[#allocation10] sm:$0xf]
          %v7356 = vld [vmem:[#allocation10 + $0x4] sm:$0xf]
          %v7357 = vld [vmem:[#allocation10 + $0x8] sm:$0xf]
          %v7358 = vld [vmem:[#allocation10 + $0xc] sm:$0xf]
          %v7359 = vld [vmem:[#allocation10 + $0x10] sm:$0xf]
          %v7360 = vld [vmem:[#allocation10 + $0x14] sm:$0xf]
          %v7361 = vld [vmem:[#allocation10 + $0x18] sm:$0xf]
          %v7362 = vld [vmem:[#allocation10 + $0x1c] sm:$0xf]
          %v7363 = vld [vmem:[%s16] sm:$0x1]
          %v7372 = vunpack.c.l.b16 %v7355
          %v7373 = vunpack.c.l.b16 %v7356
          %v7374 = vunpack.c.l.b16 %v7357
          %v7375 = vunpack.c.l.b16 %v7358
          %v7376 = vunpack.c.l.b16 %v7359
          %v7377 = vunpack.c.l.b16 %v7360
          %v7378 = vunpack.c.l.b16 %v7361
          %v7379 = vunpack.c.l.b16 %v7362
          %v7380 = vpack.c.b16 %v7373, %v7372
          %v7381 = vpack.c.b16 %v7375, %v7374
          %v7382 = vpack.c.b16 %v7377, %v7376
          %v7383 = vpack.c.b16 %v7379, %v7378
          %vm7388 = vcmask 523264
          %v7390 = vsel %vm7388, %v7354, 0
          %7392 = vmatprep.subr.bf16.mxu0 0
          %7393 = vmatpush1.bf16.msra.mxu0 %v7380
          %7394 = vmatprep.subr.bf16.mxu0 0
          %7395 = vmatpush1.bf16.msra.mxu0 %v7381
          %7396 = vmatprep.subr.bf16.mxu0 0
          %7397 = vmatpush1.bf16.msra.mxu0 %v7382
          %7398 = vmatprep.subr.bf16.mxu0 0
          %7399 = vmatpush1.bf16.msra.mxu0 %v7383
          %7400 = vmatprep.subr.bf16.mxu0 0
          %7401 = vmatpush1.bf16.msra.mxu0 0
          %7402 = vmatprep.subr.bf16.mxu0 0
          %7403 = vmatpush1.bf16.msra.mxu0 0
          %7404 = vmatprep.subr.bf16.mxu0 0
          %7405 = vmatpush1.bf16.msra.mxu0 0
          %7406 = vmatprep.subr.bf16.mxu0 0
          %7407 = vmatpush1.bf16.msra.mxu0 0
          %7408 = vmatprep.subr.bf16.mxu0 0
          %7409 = vmatpush1.bf16.msra.mxu0 0
          %7410 = vmatprep.subr.bf16.mxu0 0
          %7411 = vmatpush1.bf16.msra.mxu0 0
          %7412 = vmatprep.subr.bf16.mxu0 0
          %7413 = vmatpush1.bf16.msra.mxu0 0
          %7414 = vmatprep.subr.bf16.mxu0 0
          %7415 = vmatpush1.bf16.msra.mxu0 0
          %7416 = vmatprep.subr.bf16.mxu0 0
          %7417 = vmatpush1.bf16.msra.mxu0 0
          %7418 = vmatprep.subr.bf16.mxu0 0
          %7419 = vmatpush1.bf16.msra.mxu0 0
          %7420 = vmatprep.subr.bf16.mxu0 0
          %7421 = vmatpush1.bf16.msra.mxu0 0
          %7422 = vmatprep.subr.bf16.mxu0 0
          %7423 = vmatpush1.bf16.msra.mxu0 0
          %7424 = vmatprep.mubr.bf16.mxu0 0
          %7425 = vmatmul.mubr.bf16.gmra.mrb[0].mxu0 %v7390
          %v7426 = vpop.f32.mrb[0].mxu0
          %v7427 = vadd.f32 %v7363, %v7426
          %v7428 = vpop.f32.mrb[0].mxu0
          %v7429 = vpop.f32.mrb[0].mxu0
          %v7430 = vpop.f32.mrb[0].mxu0
          %7431 = vdwg.mxu0
          %v7432 = vmax.f32 %v7427, 0.0
          %v7433 = vpack.c.bf16 %v7432, %v7432
          %v7434 = vld [vmem:[%s17] sm:$0xf]
          %v7435 = vld [vmem:[%s17 + $0x4] sm:$0xf]
          %v7436 = vld [vmem:[%s17 + $0x8] sm:$0xf]
          %v7437 = vld [vmem:[%s17 + $0xc] sm:$0xf]
          %v7438 = vld [vmem:[%s17 + $0x10] sm:$0xf]
          %v7439 = vld [vmem:[%s17 + $0x14] sm:$0xf]
          %v7440 = vld [vmem:[%s17 + $0x18] sm:$0xf]
          %v7441 = vld [vmem:[%s17 + $0x1c] sm:$0xf]
          %v7442 = vld [vmem:[#allocation4] sm:$0x1]
          %v7451 = vunpack.c.l.b16 %v7434
          %v7452 = vunpack.c.l.b16 %v7435
          %v7453 = vunpack.c.l.b16 %v7436
          %v7454 = vunpack.c.l.b16 %v7437
          %v7455 = vunpack.c.l.b16 %v7438
          %v7456 = vunpack.c.l.b16 %v7439
          %v7457 = vunpack.c.l.b16 %v7440
          %v7458 = vunpack.c.l.b16 %v7441
          %v7459 = vpack.c.b16 %v7452, %v7451
          %v7460 = vpack.c.b16 %v7454, %v7453
          %v7461 = vpack.c.b16 %v7456, %v7455
          %v7462 = vpack.c.b16 %v7458, %v7457
          %v7468 = vsel %vm7388, %v7433, 0
          %7470 = vmatprep.subr.bf16.mxu0 0
          %7471 = vmatpush1.bf16.msra.mxu0 %v7459
          %7472 = vmatprep.subr.bf16.mxu0 0
          %7473 = vmatpush1.bf16.msra.mxu0 %v7460
          %7474 = vmatprep.subr.bf16.mxu0 0
          %7475 = vmatpush1.bf16.msra.mxu0 %v7461
          %7476 = vmatprep.subr.bf16.mxu0 0
          %7477 = vmatpush1.bf16.msra.mxu0 %v7462
          %7478 = vmatprep.subr.bf16.mxu0 0
          %7479 = vmatpush1.bf16.msra.mxu0 0
          %7480 = vmatprep.subr.bf16.mxu0 0
          %7481 = vmatpush1.bf16.msra.mxu0 0
          %7482 = vmatprep.subr.bf16.mxu0 0
          %7483 = vmatpush1.bf16.msra.mxu0 0
          %7484 = vmatprep.subr.bf16.mxu0 0
          %7485 = vmatpush1.bf16.msra.mxu0 0
          %7486 = vmatprep.subr.bf16.mxu0 0
          %7487 = vmatpush1.bf16.msra.mxu0 0
          %7488 = vmatprep.subr.bf16.mxu0 0
          %7489 = vmatpush1.bf16.msra.mxu0 0
          %7490 = vmatprep.subr.bf16.mxu0 0
          %7491 = vmatpush1.bf16.msra.mxu0 0
          %7492 = vmatprep.subr.bf16.mxu0 0
          %7493 = vmatpush1.bf16.msra.mxu0 0
          %7494 = vmatprep.subr.bf16.mxu0 0
          %7495 = vmatpush1.bf16.msra.mxu0 0
          %7496 = vmatprep.subr.bf16.mxu0 0
          %7497 = vmatpush1.bf16.msra.mxu0 0
          %7498 = vmatprep.subr.bf16.mxu0 0
          %7499 = vmatpush1.bf16.msra.mxu0 0
          %7500 = vmatprep.subr.bf16.mxu0 0
          %7501 = vmatpush1.bf16.msra.mxu0 0
          %7502 = vmatprep.mubr.bf16.mxu0 0
          %7503 = vmatmul.mubr.bf16.gmra.mrb[0].mxu0 %v7468
          %v7504 = vpop.f32.mrb[0].mxu0
          %v7505 = vadd.f32 %v7442, %v7504
          %v7506 = vpop.f32.mrb[0].mxu0
          %v7507 = vpop.f32.mrb[0].mxu0
          %v7508 = vpop.f32.mrb[0].mxu0
          %7509 = vdwg.mxu0
          %v7510 = vxor.u32 %v7505, 2147483648
          %v7511 = vmul.f32 %v7510, 1.442695
          %v7512 = vpow.pop %v7511
          %v7513 = vadd.f32 %v7512, 1.0
          %v7514 = vrcp.pop %v7513
          %v7515 = vmul.f32 1.0, %v7514
          %vm7516 = vcmask 0
          %7517 = vst.msk [vmem:[%s719] sm:$0x1] %vm7516, %v7515
        $region128: #{ugaan_d_forward.3} parent=95 // pred_fallthru
          _
        %p7518 = scmp.lt.s32.totalorder %s39, 1
        %s7519 = scalar_select %p7518, %s39, 1
        %s7520 = scalar_lea.vmem %s19, %s7519
        // Predicated region
        $region129: #{ugaan_d_forward.3} parent=95 // pred_check
          %p7521 = pneg %p481
        $region130: #{ugaan_d_forward.3} parent=95 // pred_check_branch
          %7523 = sbr.rel (%p7521) target = $region132
        $region131: #{ugaan_d_forward.3} parent=95 // pred_region
          _
        $region132: #{ugaan_d_forward.3} parent=95 // pred_fallthru
          _
      $region96: #{ugaan_d_forward.3} parent=5 // pred_fallthru
        _
      %p7524 = scmp.le.s32.totalorder 2, %s30
      // Predicated region
      $region133: #{ugaan_d_forward.3} parent=5 // pred_check
        %p7525 = pneg %p7524
      $region134: #{ugaan_d_forward.3} parent=5 // pred_check_branch
        %7527 = sbr.rel (%p7525) target = $region136
      $region135: #{ugaan_d_forward.3} parent=5 // pred_region
        %s7528 = ssub.s32 %s30, 2
        // Predicated region
        $region137: #{ugaan_d_forward.3} parent=135 // pred_check
          %p7529 = pneg %p487
        $region138: #{ugaan_d_forward.3} parent=135 // pred_check_branch
          %7531 = sbr.rel (%p7529) target = $region140
        $region139: #{ugaan_d_forward.3} parent=135 // pred_region
          %p7532 = scmp.lt.s32.totalorder %s41, 1
          %s7533 = scalar_select %p7532, %s41, 1
          %s7534 = scalar_lea.vmem %s19, %s7533
        $region140: #{ugaan_d_forward.3} parent=135 // pred_fallthru
          _
      $region136: #{ugaan_d_forward.3} parent=5 // pred_fallthru
        _
    $region6: #{ugaan_d_forward.3} parent=1 // loop_footer
      %s34 = sadd.s32 1, %s30
    $region7: #{ugaan_d_forward.3} parent=1 // loop_footer_branch
      %29 = sbr.rel target = $region3
    $region8: #{ugaan_d_forward.3} parent=1 // loop_exit
      _
    %7535 = vsyncpa [#allocation6], 1
    %s7536 = scalar_lea.sflag [#allocation6], 1
    %7537 = vsyncpa %s7536, 1
    %7538 = vsyncpa [#allocation8], 1
    %7539 = vsyncpa [#allocation11], 1

</llo_original>
